<compile_context>
chip_gen: v6e
topology: v6e:2x2x1
jax: 0.10.0
libtpu: 0.0.40
codegen_flags: <defaults>
</compile_context>

<pallas_src>
import functools

import numpy as np

import jax
import jax.numpy as jnp
from jax.experimental import pallas as pl
from jax.experimental.pallas import tpu as pltpu


NCLS_PAD = 128  # lane-dense logits width stored by the kernel


# ----------------------------------------------------------------------------
# Weight preparation (host/numpy, runs once at init — NOT on the forward path)
# ----------------------------------------------------------------------------
def _lower_conv_relu_pool(w_oihw, b, H, W, input_order):
    """Lower Conv2d(3x3, pad=1, stride=1) [+bias] + MaxPool2d(2) to a dense matmul.

    Returns (D, b_exp) with D: [Cin*H*W, 4*Ho*Wo*Cout], b_exp: [1, 4*Ho*Wo*Cout].
    Rows of D follow `input_order` ("chw" or "hwc") flattening of the input.
    Columns are ordered (k, h_out, w_out, c_out) where k = 2*dh + dw is the
    position inside the 2x2 pool window, so the pooled activation is the
    elementwise max over the four contiguous column blocks of size Q=Ho*Wo*Cout
    and is itself ordered (h_out, w_out, c_out).
    """
    w = np.asarray(w_oihw, np.float32)          # [Cout, Cin, 3, 3] (PyTorch OIHW)
    b = np.asarray(b, np.float32)
    Cout, Cin, KH, KW = w.shape
    Ho, Wo = H // 2, W // 2
    D = np.zeros((Cin, H, W, 4, Ho, Wo, Cout), np.float32)
    for k in range(4):
        dh, dw = k // 2, k % 2                  # position inside the pool window
        for kh in range(KH):
            for kw in range(KW):
                tap = w[:, :, kh, kw].T         # [Cin, Cout]
                for io in range(Ho):
                    hi = 2 * io + dh + kh - 1   # input row feeding this tap (pad=1)
                    if hi < 0 or hi >= H:
                        continue
                    for jo in range(Wo):
                        wi = 2 * jo + dw + kw - 1
                        if wi < 0 or wi >= W:
                            continue
                        D[:, hi, wi, k, io, jo, :] += tap
    if input_order == "chw":
        D = D.reshape(Cin * H * W, 4 * Ho * Wo * Cout)
    elif input_order == "hwc":
        D = D.transpose(1, 2, 0, 3, 4, 5, 6).reshape(Cin * H * W, 4 * Ho * Wo * Cout)
    else:
        raise ValueError(input_order)
    b_exp = np.tile(b[None, None, None, :], (4, Ho, Wo, 1)).reshape(1, -1)
    return D, b_exp


def init_torch_params(key, cin=4, c1=8, c2=16, hid=32, n_classes=3, hw=16):
    """Synthetic parameters in native PyTorch layouts (OIHW conv, [out,in] linear)."""
    ks = jax.random.split(key, 8)
    feat = c2 * (hw // 4) * (hw // 4)
    return {
        "conv1_w": jax.random.normal(ks[0], (c1, cin, 3, 3), jnp.float32) * 0.25,
        "conv1_b": jax.random.normal(ks[1], (c1,), jnp.float32) * 0.01,
        "conv2_w": jax.random.normal(ks[2], (c2, c1, 3, 3), jnp.float32) * 0.25,
        "conv2_b": jax.random.normal(ks[3], (c2,), jnp.float32) * 0.01,
        "fc1_w": jax.random.normal(ks[4], (hid, feat), jnp.float32) * 0.1,
        "fc1_b": jax.random.normal(ks[5], (hid,), jnp.float32) * 0.01,
        "fc2_w": jax.random.normal(ks[6], (n_classes, hid), jnp.float32) * 0.3,
        "fc2_b": jax.random.normal(ks[7], (n_classes,), jnp.float32) * 0.01,
    }


def prepare_params(tp, H=16, W=16):
    """PyTorch-layout params -> fused-kernel params (lowered dense conv matrices)."""
    c2 = tp["conv2_w"].shape[0]
    # Stage 1 consumes the NCHW-flattened input directly -> rows in (c, h, w) order.
    D1, b1e = _lower_conv_relu_pool(tp["conv1_w"], tp["conv1_b"], H, W, "chw")
    # Stage 2 consumes the pooled output of stage 1 -> rows in (h, w, c) order.
    D2, b2e = _lower_conv_relu_pool(tp["conv2_w"], tp["conv2_b"], H // 2, W // 2, "hwc")
    # fc1: fold the PyTorch nn.Flatten (NCHW -> c,h,w) ordering into the weight rows,
    # since the kernel's pooled activation is in (h, w, c) order.
    Hp, Wp = H // 4, W // 4
    feat = c2 * Hp * Wp
    perm = np.arange(feat).reshape(c2, Hp, Wp).transpose(1, 2, 0).reshape(-1)
    wfc1 = np.asarray(tp["fc1_w"], np.float32).T[perm, :]      # [feat (h,w,c), hid]
    wfc2 = np.asarray(tp["fc2_w"], np.float32).T               # [hid, n_classes]
    return {
        "wc1": jnp.asarray(D1, jnp.bfloat16),                  # [Cin*H*W, 4*Q1] bf16
        "bc1": jnp.asarray(b1e, jnp.float32),                  # [1, 4*Q1]
        "wc2": jnp.asarray(D2, jnp.bfloat16),                  # [Q1, 4*Q2] bf16
        "bc2": jnp.asarray(b2e, jnp.float32),                  # [1, 4*Q2]
        "wfc1": jnp.asarray(wfc1, jnp.float32),                # [Q2, hid]
        "bfc1": jnp.asarray(tp["fc1_b"], jnp.float32).reshape(1, -1),
        "wfc2": jnp.asarray(wfc2, jnp.float32),                # [hid, n_classes]
        "bfc2": jnp.asarray(tp["fc2_b"], jnp.float32).reshape(1, -1),
    }


# ----------------------------------------------------------------------------
# The single fused Pallas kernel
# ----------------------------------------------------------------------------
def _fused_convnet_kernel(x_ref, wc1_ref, bc1_ref, wc2_ref, bc2_ref,
                          wfc1_ref, bfc1_ref, wfc2_ref, bfc2_ref, out_ref,
                          *, q1, q2):
    # Stage 1: conv1 + bias + ReLU (MXU matmul, bf16 operands, f32 accumulate)
    x = x_ref[...]                                                         # [TB, K0] bf16
    y1 = jnp.dot(x, wc1_ref[...], preferred_element_type=jnp.float32)     # [TB, 4*q1]
    y1 = jnp.maximum(y1 + bc1_ref[...], 0.0)
    # 2x2 max-pool == max over the four lane-dense column blocks (epilogue, VPU)
    p1 = jnp.maximum(jnp.maximum(y1[:, 0 * q1:1 * q1], y1[:, 1 * q1:2 * q1]),
                     jnp.maximum(y1[:, 2 * q1:3 * q1], y1[:, 3 * q1:4 * q1]))

    # Stage 2: conv2 + bias + ReLU + pool
    y2 = jnp.dot(p1.astype(jnp.bfloat16), wc2_ref[...],
                 preferred_element_type=jnp.float32)                      # [TB, 4*q2]
    y2 = jnp.maximum(y2 + bc2_ref[...], 0.0)
    p2 = jnp.maximum(jnp.maximum(y2[:, 0 * q2:1 * q2], y2[:, 1 * q2:2 * q2]),
                     jnp.maximum(y2[:, 2 * q2:3 * q2], y2[:, 3 * q2:4 * q2]))

    # FC head (tiny, f32).  wfc2/bfc2 are zero-padded to 128 lanes -> lane-dense store.
    h = jnp.dot(p2, wfc1_ref[...], preferred_element_type=jnp.float32) + bfc1_ref[...]
    h = jnp.maximum(h, 0.0)
    logits = jnp.dot(h, wfc2_ref[...], preferred_element_type=jnp.float32) + bfc2_ref[...]
    out_ref[...] = logits.astype(out_ref.dtype)


def _round_up(n, m):
    return ((n + m - 1) // m) * m


def convnet_forward(kp, x_nchw, *, batch_block=None):
    """ConvNet.forward(X) == model(X.float()) — whole network in one pallas_call."""
    N, Cin, H, W = x_nchw.shape
    # NCHW flatten is a zero-cost reshape; the (c,h,w) ordering is already folded
    # into the rows of wc1, so no transpose is needed.  Feed bf16: the stage-1 matmul
    # operand is bf16 anyway, and it halves the only per-grid-step HBM stream.
    x = x_nchw.astype(jnp.bfloat16).reshape(N, Cin * H * W)

    if batch_block is not None:
        if batch_block % 8 != 0 or batch_block <= 0:
            raise ValueError("batch_block must be a positive multiple of 8 "
                             f"(got {batch_block})")
        TB = batch_block
    else:
        # Big enough to amortize per-step overhead / MXU fill, small enough that
        # the f32 intermediates + double-buffered input fit v7x's 64 MiB VMEM.
        TB = min(512, _round_up(N, 8))
    N_pad = _round_up(N, TB)
    if N_pad != N:
        x = jnp.pad(x, ((0, N_pad - N), (0, 0)))

    K0 = x.shape[1]
    q1 = kp["bc1"].shape[1] // 4
    q2 = kp["bc2"].shape[1] // 4
    hid = kp["wfc1"].shape[1]
    ncls = kp["wfc2"].shape[1]
    # Zero-pad the final-layer columns to 128 lanes so the output store is an
    # unmasked, lane-dense vst (padded logit columns are exactly 0).
    wfc2p = jnp.pad(kp["wfc2"], ((0, 0), (0, NCLS_PAD - ncls)))
    bfc2p = jnp.pad(kp["bfc2"], ((0, 0), (0, NCLS_PAD - ncls)))
    grid = (N_pad // TB,)

    flops = 2 * N_pad * (K0 * 4 * q1 + q1 * 4 * q2 + q2 * hid + hid * NCLS_PAD)
    weight_bytes = sum(int(a.size) * a.dtype.itemsize
                       for a in (kp["wc1"], kp["bc1"], kp["wc2"], kp["bc2"],
                                 kp["wfc1"], kp["bfc1"], wfc2p, bfc2p))
    bytes_accessed = int(N_pad * K0 * 2 + N_pad * NCLS_PAD * 4 + weight_bytes)

    out = pl.pallas_call(
        functools.partial(_fused_convnet_kernel, q1=q1, q2=q2),
        out_shape=jax.ShapeDtypeStruct((N_pad, NCLS_PAD), jnp.float32),
        grid=grid,
        in_specs=[
            pl.BlockSpec((TB, K0), lambda i: (i, 0)),           # x: tiled over batch
            pl.BlockSpec((K0, 4 * q1), lambda i: (0, 0)),       # weights: constant index
            pl.BlockSpec((1, 4 * q1), lambda i: (0, 0)),        #  -> fetched once,
            pl.BlockSpec((q1, 4 * q2), lambda i: (0, 0)),       #     VMEM-resident
            pl.BlockSpec((1, 4 * q2), lambda i: (0, 0)),
            pl.BlockSpec((q2, hid), lambda i: (0, 0)),
            pl.BlockSpec((1, hid), lambda i: (0, 0)),
            pl.BlockSpec((hid, NCLS_PAD), lambda i: (0, 0)),
            pl.BlockSpec((1, NCLS_PAD), lambda i: (0, 0)),
        ],
        out_specs=pl.BlockSpec((TB, NCLS_PAD), lambda i: (i, 0)),
        compiler_params=pltpu.CompilerParams(
            dimension_semantics=("parallel",),                  # megacore / dual-TC
            vmem_limit_bytes=48 * 1024 * 1024,                  # fits v7x's 64 MiB TC
        ),
        cost_estimate=pl.CostEstimate(flops=flops, transcendentals=0,
                                      bytes_accessed=bytes_accessed),
    )(x, kp["wc1"], kp["bc1"], kp["wc2"], kp["bc2"],
      kp["wfc1"], kp["bfc1"], wfc2p, bfc2p)
    # Drop the zero-padded batch rows (garbage logits from relu(bias)) and lanes.
    return out[:N, :ncls]


# ----------------------------------------------------------------------------
# Pure-JAX reference (only used for a one-off sanity check in __main__)
# ----------------------------------------------------------------------------
def _reference_forward(tp, x_nchw):
    x = x_nchw.astype(jnp.float32)

    def conv_relu(x, w, b):
        y = jax.lax.conv_general_dilated(
            x, w, window_strides=(1, 1), padding=((1, 1), (1, 1)),
            dimension_numbers=("NCHW", "OIHW", "NCHW"))
        return jax.nn.relu(y + b[None, :, None, None])

    def pool(x):
        return jnp.maximum(jnp.maximum(x[:, :, 0::2, 0::2], x[:, :, 0::2, 1::2]),
                           jnp.maximum(x[:, :, 1::2, 0::2], x[:, :, 1::2, 1::2]))

    x = pool(conv_relu(x, tp["conv1_w"], tp["conv1_b"]))
    x = pool(conv_relu(x, tp["conv2_w"], tp["conv2_b"]))
    x = x.reshape(x.shape[0], -1)                               # nn.Flatten (NCHW)
    x = jax.nn.relu(x @ tp["fc1_w"].T + tp["fc1_b"])
    return x @ tp["fc2_w"].T + tp["fc2_b"]


if __name__ == "__main__":
    key = jax.random.PRNGKey(0)
    k_x, k_x2, k_p = jax.random.split(key, 3)

    torch_params = init_torch_params(k_p)
    kparams = prepare_params(torch_params, H=16, W=16)
    fwd = jax.jit(convnet_forward)

    # Small deterministic input, NCHW, matching the module's forward.
    x = jax.random.normal(k_x, (2, 4, 16, 16), jnp.float32)
    out = jax.block_until_ready(fwd(kparams, x))
    assert out.shape == (2, 3) and out.dtype == jnp.float32

    # Loose (bf16-level) sanity check against an independent XLA reference.
    # NOTE: bf16 conv weights/activations give ~1e-2-level relative error vs the
    # f32 PyTorch reference — acceptable for inference parity, hence tol=0.25.
    ref = jax.block_until_ready(_reference_forward(torch_params, x))
    err = float(jnp.max(jnp.abs(out - ref)))
    assert err < 0.25, f"kernel vs reference mismatch: max|diff|={err}"

    # Second check exercising the batch-padding / row-slicing path (N not mult. of 8).
    x2 = jax.random.normal(k_x2, (10, 4, 16, 16), jnp.float32)
    out2 = jax.block_until_ready(fwd(kparams, x2))
    ref2 = jax.block_until_ready(_reference_forward(torch_params, x2))
    err2 = float(jnp.max(jnp.abs(out2 - ref2)))
    assert out2.shape == (10, 3) and err2 < 0.25, f"padded-batch mismatch: {err2}"

    print("KERNEL_OK")
</pallas_src>

<mosaic_0001>
module attributes {stable_mosaic.version = 11 : i64} {
  func.func @_fused_convnet_kernel(%arg0: i32, %arg1: memref<8x1024xbf16, #tpu.memory_space<vmem>>, %arg2: memref<1024x2048xbf16, #tpu.memory_space<vmem>>, %arg3: memref<1x2048xf32, #tpu.memory_space<vmem>>, %arg4: memref<512x1024xbf16, #tpu.memory_space<vmem>>, %arg5: memref<1x1024xf32, #tpu.memory_space<vmem>>, %arg6: memref<256x32xf32, #tpu.memory_space<vmem>>, %arg7: memref<1x32xf32, #tpu.memory_space<vmem>>, %arg8: memref<32x128xf32, #tpu.memory_space<vmem>>, %arg9: memref<1x128xf32, #tpu.memory_space<vmem>>, %arg10: memref<8x128xf32, #tpu.memory_space<vmem>>) attributes {dimension_semantics = [#tpu.dimension_semantics<parallel>], iteration_bounds = array<i64: 1>, scalar_prefetch = 0 : i64, scratch_operands = 0 : i64, tpu.core_type = #tpu.core_type<tc>, window_params = [{transform_indices = @transform_0, window_bounds = array<i64: 8, 1024>}, {pipeline_mode = #tpu.pipeline_mode<synchronous>, transform_indices = @transform_1, window_bounds = array<i64: 1024, 2048>}, {pipeline_mode = #tpu.pipeline_mode<synchronous>, transform_indices = @transform_2, window_bounds = array<i64: 1, 2048>}, {pipeline_mode = #tpu.pipeline_mode<synchronous>, transform_indices = @transform_3, window_bounds = array<i64: 512, 1024>}, {pipeline_mode = #tpu.pipeline_mode<synchronous>, transform_indices = @transform_4, window_bounds = array<i64: 1, 1024>}, {pipeline_mode = #tpu.pipeline_mode<synchronous>, transform_indices = @transform_5, window_bounds = array<i64: 256, 32>}, {pipeline_mode = #tpu.pipeline_mode<synchronous>, transform_indices = @transform_6, window_bounds = array<i64: 1, 32>}, {pipeline_mode = #tpu.pipeline_mode<synchronous>, transform_indices = @transform_7, window_bounds = array<i64: 32, 128>}, {pipeline_mode = #tpu.pipeline_mode<synchronous>, transform_indices = @transform_8, window_bounds = array<i64: 1, 128>}, {transform_indices = @transform_9, window_bounds = array<i64: 8, 128>}]} {
    %c0 = arith.constant 0 : index
    %c0_0 = arith.constant 0 : index
    %0 = vector.load %arg1[%c0, %c0_0] : memref<8x1024xbf16, #tpu.memory_space<vmem>>, vector<8x1024xbf16>
    %c0_1 = arith.constant 0 : index
    %c0_2 = arith.constant 0 : index
    %1 = vector.load %arg2[%c0_1, %c0_2] : memref<1024x2048xbf16, #tpu.memory_space<vmem>>, vector<1024x2048xbf16>
    %cst = arith.constant dense<0.000000e+00> : vector<8x2048xf32>
    %2 = tpu.matmul %0, %1, %cst {dimension_numbers = #tpu.dot_dimension_numbers<[1], [0], [0], [1], [0, 0, 1, 1], [], []>} : vector<8x1024xbf16>, vector<1024x2048xbf16>, vector<8x2048xf32> -> vector<8x2048xf32>
    %c0_3 = arith.constant 0 : index
    %c0_4 = arith.constant 0 : index
    %3 = vector.load %arg3[%c0_3, %c0_4] : memref<1x2048xf32, #tpu.memory_space<vmem>>, vector<1x2048xf32>
    %4 = vector.broadcast %3 : vector<1x2048xf32> to vector<8x2048xf32>
    %5 = arith.addf %2, %4 : vector<8x2048xf32>
    %cst_5 = arith.constant 0.000000e+00 : f32
    %6 = vector.broadcast %cst_5 : f32 to vector<8x2048xf32>
    %7 = arith.maximumf %5, %6 : vector<8x2048xf32>
    %8 = vector.extract_strided_slice %7 {offsets = [0, 0], sizes = [8, 512], strides = [1, 1]} : vector<8x2048xf32> to vector<8x512xf32>
    %9 = vector.extract_strided_slice %7 {offsets = [0, 512], sizes = [8, 512], strides = [1, 1]} : vector<8x2048xf32> to vector<8x512xf32>
    %10 = arith.maximumf %8, %9 : vector<8x512xf32>
    %11 = vector.extract_strided_slice %7 {offsets = [0, 1024], sizes = [8, 512], strides = [1, 1]} : vector<8x2048xf32> to vector<8x512xf32>
    %12 = vector.extract_strided_slice %7 {offsets = [0, 1536], sizes = [8, 512], strides = [1, 1]} : vector<8x2048xf32> to vector<8x512xf32>
    %13 = arith.maximumf %11, %12 : vector<8x512xf32>
    %14 = arith.maximumf %10, %13 : vector<8x512xf32>
    %15 = arith.truncf %14 : vector<8x512xf32> to vector<8x512xbf16>
    %c0_6 = arith.constant 0 : index
    %c0_7 = arith.constant 0 : index
    %16 = vector.load %arg4[%c0_6, %c0_7] : memref<512x1024xbf16, #tpu.memory_space<vmem>>, vector<512x1024xbf16>
    %cst_8 = arith.constant dense<0.000000e+00> : vector<8x1024xf32>
    %17 = tpu.matmul %15, %16, %cst_8 {dimension_numbers = #tpu.dot_dimension_numbers<[1], [0], [0], [1], [0, 0, 1, 1], [], []>} : vector<8x512xbf16>, vector<512x1024xbf16>, vector<8x1024xf32> -> vector<8x1024xf32>
    %c0_9 = arith.constant 0 : index
    %c0_10 = arith.constant 0 : index
    %18 = vector.load %arg5[%c0_9, %c0_10] : memref<1x1024xf32, #tpu.memory_space<vmem>>, vector<1x1024xf32>
    %19 = vector.broadcast %18 : vector<1x1024xf32> to vector<8x1024xf32>
    %20 = arith.addf %17, %19 : vector<8x1024xf32>
    %cst_11 = arith.constant 0.000000e+00 : f32
    %21 = vector.broadcast %cst_11 : f32 to vector<8x1024xf32>
    %22 = arith.maximumf %20, %21 : vector<8x1024xf32>
    %23 = vector.extract_strided_slice %22 {offsets = [0, 0], sizes = [8, 256], strides = [1, 1]} : vector<8x1024xf32> to vector<8x256xf32>
    %24 = vector.extract_strided_slice %22 {offsets = [0, 256], sizes = [8, 256], strides = [1, 1]} : vector<8x1024xf32> to vector<8x256xf32>
    %25 = arith.maximumf %23, %24 : vector<8x256xf32>
    %26 = vector.extract_strided_slice %22 {offsets = [0, 512], sizes = [8, 256], strides = [1, 1]} : vector<8x1024xf32> to vector<8x256xf32>
    %27 = vector.extract_strided_slice %22 {offsets = [0, 768], sizes = [8, 256], strides = [1, 1]} : vector<8x1024xf32> to vector<8x256xf32>
    %28 = arith.maximumf %26, %27 : vector<8x256xf32>
    %29 = arith.maximumf %25, %28 : vector<8x256xf32>
    %c0_12 = arith.constant 0 : index
    %c0_13 = arith.constant 0 : index
    %30 = vector.load %arg6[%c0_12, %c0_13] : memref<256x32xf32, #tpu.memory_space<vmem>>, vector<256x32xf32>
    %cst_14 = arith.constant dense<0.000000e+00> : vector<8x32xf32>
    %31 = tpu.matmul %29, %30, %cst_14 {dimension_numbers = #tpu.dot_dimension_numbers<[1], [0], [0], [1], [0, 0, 1, 1], [], []>} : vector<8x256xf32>, vector<256x32xf32>, vector<8x32xf32> -> vector<8x32xf32>
    %c0_15 = arith.constant 0 : index
    %c0_16 = arith.constant 0 : index
    %32 = vector.load %arg7[%c0_15, %c0_16] : memref<1x32xf32, #tpu.memory_space<vmem>>, vector<1x32xf32>
    %33 = vector.broadcast %32 : vector<1x32xf32> to vector<8x32xf32>
    %34 = arith.addf %31, %33 : vector<8x32xf32>
    %cst_17 = arith.constant 0.000000e+00 : f32
    %35 = vector.broadcast %cst_17 : f32 to vector<8x32xf32>
    %36 = arith.maximumf %34, %35 : vector<8x32xf32>
    %c0_18 = arith.constant 0 : index
    %c0_19 = arith.constant 0 : index
    %37 = vector.load %arg8[%c0_18, %c0_19] : memref<32x128xf32, #tpu.memory_space<vmem>>, vector<32x128xf32>
    %cst_20 = arith.constant dense<0.000000e+00> : vector<8x128xf32>
    %38 = tpu.matmul %36, %37, %cst_20 {dimension_numbers = #tpu.dot_dimension_numbers<[1], [0], [0], [1], [0, 0, 1, 1], [], []>} : vector<8x32xf32>, vector<32x128xf32>, vector<8x128xf32> -> vector<8x128xf32>
    %c0_21 = arith.constant 0 : index
    %c0_22 = arith.constant 0 : index
    %39 = vector.load %arg9[%c0_21, %c0_22] : memref<1x128xf32, #tpu.memory_space<vmem>>, vector<1x128xf32>
    %40 = vector.broadcast %39 : vector<1x128xf32> to vector<8x128xf32>
    %41 = arith.addf %38, %40 : vector<8x128xf32>
    %c0_23 = arith.constant 0 : index
    %c0_24 = arith.constant 0 : index
    %42 = vector.load %arg10[%c0_23, %c0_24] : memref<8x128xf32, #tpu.memory_space<vmem>>, vector<8x128xf32>
    tpu.vector_store %arg10[%c0_23, %c0_24], %41 {strides = array<i32>} : memref<8x128xf32, #tpu.memory_space<vmem>>, vector<8x128xf32>,
    return
  }
  func.func @transform_0(%arg0: i32) -> (i32, i32) {
    %c0_i32 = arith.constant 0 : i32
    %c0_i32_0 = arith.constant 0 : i32
    return %arg0, %c0_i32 : i32, i32
  }
  func.func @transform_1(%arg0: i32) -> (i32, i32) {
    %c0_i32 = arith.constant 0 : i32
    %c0_i32_0 = arith.constant 0 : i32
    %c0_i32_1 = arith.constant 0 : i32
    return %c0_i32, %c0_i32_0 : i32, i32
  }
  func.func @transform_2(%arg0: i32) -> (i32, i32) {
    %c0_i32 = arith.constant 0 : i32
    %c0_i32_0 = arith.constant 0 : i32
    %c0_i32_1 = arith.constant 0 : i32
    return %c0_i32, %c0_i32_0 : i32, i32
  }
  func.func @transform_3(%arg0: i32) -> (i32, i32) {
    %c0_i32 = arith.constant 0 : i32
    %c0_i32_0 = arith.constant 0 : i32
    %c0_i32_1 = arith.constant 0 : i32
    return %c0_i32, %c0_i32_0 : i32, i32
  }
  func.func @transform_4(%arg0: i32) -> (i32, i32) {
    %c0_i32 = arith.constant 0 : i32
    %c0_i32_0 = arith.constant 0 : i32
    %c0_i32_1 = arith.constant 0 : i32
    return %c0_i32, %c0_i32_0 : i32, i32
  }
  func.func @transform_5(%arg0: i32) -> (i32, i32) {
    %c0_i32 = arith.constant 0 : i32
    %c0_i32_0 = arith.constant 0 : i32
    %c0_i32_1 = arith.constant 0 : i32
    return %c0_i32, %c0_i32_0 : i32, i32
  }
  func.func @transform_6(%arg0: i32) -> (i32, i32) {
    %c0_i32 = arith.constant 0 : i32
    %c0_i32_0 = arith.constant 0 : i32
    %c0_i32_1 = arith.constant 0 : i32
    return %c0_i32, %c0_i32_0 : i32, i32
  }
  func.func @transform_7(%arg0: i32) -> (i32, i32) {
    %c0_i32 = arith.constant 0 : i32
    %c0_i32_0 = arith.constant 0 : i32
    %c0_i32_1 = arith.constant 0 : i32
    return %c0_i32, %c0_i32_0 : i32, i32
  }
  func.func @transform_8(%arg0: i32) -> (i32, i32) {
    %c0_i32 = arith.constant 0 : i32
    %c0_i32_0 = arith.constant 0 : i32
    %c0_i32_1 = arith.constant 0 : i32
    return %c0_i32, %c0_i32_0 : i32, i32
  }
  func.func @transform_9(%arg0: i32) -> (i32, i32) {
    %c0_i32 = arith.constant 0 : i32
    %c0_i32_0 = arith.constant 0 : i32
    return %arg0, %c0_i32 : i32, i32
  }
}

</mosaic_0001>

<llo_original>
// kernel: convnet_forward.1
$region0: #{convnet_forward.1}
  #allocation0 [shape = 'u32[]', space=smem, size = 0x4, offset = 0x4, fixed_abs, tag = 'smem constant byte address 0x4 - core index']
  #allocation1 [shape = 'u32[144,128]{1,0:T(1,128)}', space=vmem, size = 0x12000, scoped, tag = 'internal scratch']
  %s0 = inlined_call_operand.vmem [shape: bf16[8,1024], index: 0, kind: input, shape index: {}]
  %s1 = inlined_call_operand.hbm [shape: bf16[1024,2048], index: 1, kind: input, shape index: {}]
  %s2 = inlined_call_operand.hbm [shape: f32[1,2048], index: 2, kind: input, shape index: {}]
  %s3 = inlined_call_operand.hbm [shape: bf16[512,1024], index: 3, kind: input, shape index: {}]
  %s4 = inlined_call_operand.hbm [shape: f32[1,1024], index: 4, kind: input, shape index: {}]
  %s5 = inlined_call_operand.vmem [shape: f32[256,32], index: 5, kind: input, shape index: {}]
  %s6 = inlined_call_operand.hbm [shape: f32[1,32], index: 6, kind: input, shape index: {}]
  %s7 = inlined_call_operand.vmem [shape: f32[32,128], index: 7, kind: input, shape index: {}]
  %s8 = inlined_call_operand.vmem [shape: f32[1,128], index: 8, kind: input, shape index: {}]
  %s9 = inlined_call_operand.vmem [shape: f32[8,128], index: 9, kind: output, shape index: {}]
  %s10 = sld [smem:[#allocation0]]
  $region66: #{convnet_forward.1} parent=0
    _
  %s12 = ssub.s32 1, %s10
  %s13 = scalar_select 0, %s12, %s10
  $region1: #{convnet_forward.1} parent=0
    #allocation2 [shape = 'u8[4194304]{0}', space=vmem, size = 0x400000, scoped, tag = 'input window, operand 1, single buffered']
    #allocation3 [shape = 's32[1]{0}', space=sflag, size = 0x4, scoped, tag = 'scoped memory for convnet_forward.1']
    #allocation4 [shape = 'u8[8192]{0}', space=vmem, size = 0x2000, scoped, tag = 'input window, operand 2, single buffered']
    #allocation5 [shape = 's32[1]{0}', space=sflag, size = 0x4, scoped, tag = 'scoped memory for convnet_forward.1']
    #allocation6 [shape = 'u8[1048576]{0}', space=vmem, size = 0x100000, scoped, tag = 'input window, operand 3, single buffered']
    #allocation7 [shape = 'u8[4096]{0}', space=vmem, size = 0x1000, scoped, tag = 'input window, operand 4, single buffered']
    #allocation8 [shape = 's32[1]{0}', space=sflag, size = 0x4, scoped, tag = 'scoped memory for convnet_forward.1']
    #allocation9 [shape = 'u8[512]{0}', space=vmem, size = 0x400, scoped, tag = 'input window, operand 6, single buffered']
    %14 = vsyncpa [#allocation3], 0
    %15 = vsyncpa [#allocation5], 0
    %16 = vsyncpa [#allocation8], 0
    // Predicated region
    $region2: #{convnet_forward.1} parent=1 // pred_check
      _
    $region3: #{convnet_forward.1} parent=1 // pred_check_branch
      %18 = sbr.rel (0) target = $region5
    $region4: #{convnet_forward.1} parent=1 // pred_region
      _
    $region5: #{convnet_forward.1} parent=1 // pred_fallthru
      _
    // Predicated region
    $region6: #{convnet_forward.1} parent=1 // pred_check
      _
    $region7: #{convnet_forward.1} parent=1 // pred_check_branch
      %20 = sbr.rel (0) target = $region9
    $region8: #{convnet_forward.1} parent=1 // pred_region
      %s22 = ssub.s32 131072, 131072
      %23 = vsyncadd [#allocation3], %s22
      %s24 = sshll.u32 [#allocation2], 4
      %s25 = int_to_ptr.vmem [resolvable:$true] %s24
      %30 = dma.hbm_to_vmem [thread:$0]  %s1, 131072, %s25, [#allocation3], 1024, 1024, 64
    $region9: #{convnet_forward.1} parent=1 // pred_fallthru
      _
    // Predicated region
    $region10: #{convnet_forward.1} parent=1 // pred_check
      _
    $region11: #{convnet_forward.1} parent=1 // pred_check_branch
      %32 = sbr.rel (0) target = $region13
    $region12: #{convnet_forward.1} parent=1 // pred_region
      %s34 = ssub.s32 256, 256
      %35 = vsyncadd [#allocation5], %s34
      %s37 = sshll.u32 [#allocation4], 4
      %s38 = int_to_ptr.vmem [resolvable:$true] %s37
      %40 = dma.hbm_to_vmem [thread:$0]  %s2, 256, %s38, [#allocation5]
    $region13: #{convnet_forward.1} parent=1 // pred_fallthru
      _
    // Predicated region
    $region14: #{convnet_forward.1} parent=1 // pred_check
      _
    $region15: #{convnet_forward.1} parent=1 // pred_check_branch
      %42 = sbr.rel (0) target = $region17
    $region16: #{convnet_forward.1} parent=1 // pred_region
      %s44 = ssub.s32 32768, 32768
      %45 = vsyncadd [#allocation5], %s44
      %s46 = sshll.u32 [#allocation6], 4
      %s47 = int_to_ptr.vmem [resolvable:$true] %s46
      %52 = dma.hbm_to_vmem [thread:$0]  %s3, 32768, %s47, [#allocation5], 512, 512, 32
    $region17: #{convnet_forward.1} parent=1 // pred_fallthru
      _
    // Predicated region
    $region18: #{convnet_forward.1} parent=1 // pred_check
      _
    $region19: #{convnet_forward.1} parent=1 // pred_check_branch
      %54 = sbr.rel (0) target = $region21
    $region20: #{convnet_forward.1} parent=1 // pred_region
      %s56 = ssub.s32 128, 128
      %57 = vsyncadd [#allocation8], %s56
      %s59 = sshll.u32 [#allocation7], 4
      %s60 = int_to_ptr.vmem [resolvable:$true] %s59
      %62 = dma.hbm_to_vmem [thread:$0]  %s4, 128, %s60, [#allocation8]
    $region21: #{convnet_forward.1} parent=1 // pred_fallthru
      _
    // Predicated region
    $region22: #{convnet_forward.1} parent=1 // pred_check
      _
    $region23: #{convnet_forward.1} parent=1 // pred_check_branch
      %64 = sbr.rel (0) target = $region25
    $region24: #{convnet_forward.1} parent=1 // pred_region
      _
    $region25: #{convnet_forward.1} parent=1 // pred_fallthru
      _
    // Predicated region
    $region26: #{convnet_forward.1} parent=1 // pred_check
      _
    $region27: #{convnet_forward.1} parent=1 // pred_check_branch
      %66 = sbr.rel (0) target = $region29
    $region28: #{convnet_forward.1} parent=1 // pred_region
      %s68 = ssub.s32 16, 16
      %69 = vsyncadd [#allocation8], %s68
      %s71 = sshll.u32 [#allocation9], 4
      %s72 = int_to_ptr.vmem [resolvable:$true] %s71
      %74 = dma.hbm_to_vmem [thread:$0]  %s6, 16, %s72, [#allocation8]
    $region29: #{convnet_forward.1} parent=1 // pred_fallthru
      _
    // Predicated region
    $region30: #{convnet_forward.1} parent=1 // pred_check
      _
    $region31: #{convnet_forward.1} parent=1 // pred_check_branch
      %76 = sbr.rel (0) target = $region33
    $region32: #{convnet_forward.1} parent=1 // pred_region
      _
    $region33: #{convnet_forward.1} parent=1 // pred_fallthru
      _
    // Predicated region
    $region34: #{convnet_forward.1} parent=1 // pred_check
      _
    $region35: #{convnet_forward.1} parent=1 // pred_check_branch
      %78 = sbr.rel (0) target = $region37
    $region36: #{convnet_forward.1} parent=1 // pred_region
      _
    $region37: #{convnet_forward.1} parent=1 // pred_fallthru
      _
    // Predicated region
    $region38: #{convnet_forward.1} parent=1 // pred_check
      _
    $region39: #{convnet_forward.1} parent=1 // pred_check_branch
      %80 = sbr.rel (0) target = $region41
    $region40: #{convnet_forward.1} parent=1 // pred_region
      %81 = dma.done [#allocation3], 131072
    $region41: #{convnet_forward.1} parent=1 // pred_fallthru
      _
    // Predicated region
    $region42: #{convnet_forward.1} parent=1 // pred_check
      _
    $region43: #{convnet_forward.1} parent=1 // pred_check_branch
      %83 = sbr.rel (0) target = $region45
    $region44: #{convnet_forward.1} parent=1 // pred_region
      %84 = dma.done [#allocation5], 256
    $region45: #{convnet_forward.1} parent=1 // pred_fallthru
      _
    // Predicated region
    $region46: #{convnet_forward.1} parent=1 // pred_check
      _
    $region47: #{convnet_forward.1} parent=1 // pred_check_branch
      %86 = sbr.rel (0) target = $region49
    $region48: #{convnet_forward.1} parent=1 // pred_region
      %87 = dma.done [#allocation5], 32768
    $region49: #{convnet_forward.1} parent=1 // pred_fallthru
      _
    // Predicated region
    $region50: #{convnet_forward.1} parent=1 // pred_check
      _
    $region51: #{convnet_forward.1} parent=1 // pred_check_branch
      %89 = sbr.rel (0) target = $region53
    $region52: #{convnet_forward.1} parent=1 // pred_region
      %90 = dma.done [#allocation8], 128
    $region53: #{convnet_forward.1} parent=1 // pred_fallthru
      _
    // Predicated region
    $region54: #{convnet_forward.1} parent=1 // pred_check
      _
    $region55: #{convnet_forward.1} parent=1 // pred_check_branch
      %92 = sbr.rel (0) target = $region57
    $region56: #{convnet_forward.1} parent=1 // pred_region
      %93 = dma.done [#allocation8], 16
    $region57: #{convnet_forward.1} parent=1 // pred_fallthru
      _
    %v94 = vld [vmem:[%s0] sm:$0xff]
    %v95 = vld [vmem:[%s0 + $0x8] sm:$0xff]
    %v96 = vld [vmem:[%s0 + $0x10] sm:$0xff]
    %v97 = vld [vmem:[%s0 + $0x18] sm:$0xff]
    %v98 = vld [vmem:[#allocation2] sm:$0xff]
    %v99 = vld [vmem:[#allocation2 + $0x8] sm:$0xff]
    %v100 = vld [vmem:[#allocation2 + $0x10] sm:$0xff]
    %v101 = vld [vmem:[#allocation2 + $0x18] sm:$0xff]
    %v102 = vld [vmem:[#allocation2 + $0x20] sm:$0xff]
    %v103 = vld [vmem:[#allocation2 + $0x28] sm:$0xff]
    %v104 = vld [vmem:[#allocation2 + $0x30] sm:$0xff]
    %v105 = vld [vmem:[#allocation2 + $0x38] sm:$0xff]
    %v106 = vld [vmem:[#allocation2 + $0x40] sm:$0xff]
    %v107 = vld [vmem:[#allocation2 + $0x48] sm:$0xff]
    %v108 = vld [vmem:[#allocation2 + $0x50] sm:$0xff]
    %v109 = vld [vmem:[#allocation2 + $0x58] sm:$0xff]
    %v110 = vld [vmem:[#allocation2 + $0x60] sm:$0xff]
    %v111 = vld [vmem:[#allocation2 + $0x68] sm:$0xff]
    %v112 = vld [vmem:[#allocation2 + $0x70] sm:$0xff]
    %v113 = vld [vmem:[#allocation2 + $0x78] sm:$0xff]
    %v114 = vld [vmem:[#allocation2 + $0x80] sm:$0xff]
    %v115 = vld [vmem:[#allocation2 + $0x88] sm:$0xff]
    %v116 = vld [vmem:[#allocation2 + $0x90] sm:$0xff]
    %v117 = vld [vmem:[#allocation2 + $0x98] sm:$0xff]
    %v118 = vld [vmem:[#allocation2 + $0xa0] sm:$0xff]
    %v119 = vld [vmem:[#allocation2 + $0xa8] sm:$0xff]
    %v120 = vld [vmem:[#allocation2 + $0xb0] sm:$0xff]
    %v121 = vld [vmem:[#allocation2 + $0xb8] sm:$0xff]
    %v122 = vld [vmem:[#allocation2 + $0xc0] sm:$0xff]
    %v123 = vld [vmem:[#allocation2 + $0xc8] sm:$0xff]
    %v124 = vld [vmem:[#allocation2 + $0xd0] sm:$0xff]
    %v125 = vld [vmem:[#allocation2 + $0xd8] sm:$0xff]
    %v126 = vld [vmem:[#allocation2 + $0xe0] sm:$0xff]
    %v127 = vld [vmem:[#allocation2 + $0xe8] sm:$0xff]
    %v128 = vld [vmem:[#allocation2 + $0xf0] sm:$0xff]
    %v129 = vld [vmem:[#allocation2 + $0xf8] sm:$0xff]
    %v130 = vld [vmem:[#allocation2 + $0x100] sm:$0xff]
    %v131 = vld [vmem:[#allocation2 + $0x108] sm:$0xff]
    %v132 = vld [vmem:[#allocation2 + $0x110] sm:$0xff]
    %v133 = vld [vmem:[#allocation2 + $0x118] sm:$0xff]
    %v134 = vld [vmem:[#allocation2 + $0x120] sm:$0xff]
    %v135 = vld [vmem:[#allocation2 + $0x128] sm:$0xff]
    %v136 = vld [vmem:[#allocation2 + $0x130] sm:$0xff]
    %v137 = vld [vmem:[#allocation2 + $0x138] sm:$0xff]
    %v138 = vld [vmem:[#allocation2 + $0x140] sm:$0xff]
    %v139 = vld [vmem:[#allocation2 + $0x148] sm:$0xff]
    %v140 = vld [vmem:[#allocation2 + $0x150] sm:$0xff]
    %v141 = vld [vmem:[#allocation2 + $0x158] sm:$0xff]
    %v142 = vld [vmem:[#allocation2 + $0x160] sm:$0xff]
    %v143 = vld [vmem:[#allocation2 + $0x168] sm:$0xff]
    %v144 = vld [vmem:[#allocation2 + $0x170] sm:$0xff]
    %v145 = vld [vmem:[#allocation2 + $0x178] sm:$0xff]
    %v146 = vld [vmem:[#allocation2 + $0x180] sm:$0xff]
    %v147 = vld [vmem:[#allocation2 + $0x188] sm:$0xff]
    %v148 = vld [vmem:[#allocation2 + $0x190] sm:$0xff]
    %v149 = vld [vmem:[#allocation2 + $0x198] sm:$0xff]
    %v150 = vld [vmem:[#allocation2 + $0x1a0] sm:$0xff]
    %v151 = vld [vmem:[#allocation2 + $0x1a8] sm:$0xff]
    %v152 = vld [vmem:[#allocation2 + $0x1b0] sm:$0xff]
    %v153 = vld [vmem:[#allocation2 + $0x1b8] sm:$0xff]
    %v154 = vld [vmem:[#allocation2 + $0x1c0] sm:$0xff]
    %v155 = vld [vmem:[#allocation2 + $0x1c8] sm:$0xff]
    %v156 = vld [vmem:[#allocation2 + $0x1d0] sm:$0xff]
    %v157 = vld [vmem:[#allocation2 + $0x1d8] sm:$0xff]
    %v158 = vld [vmem:[#allocation2 + $0x1e0] sm:$0xff]
    %v159 = vld [vmem:[#allocation2 + $0x1e8] sm:$0xff]
    %v160 = vld [vmem:[#allocation2 + $0x1f0] sm:$0xff]
    %v161 = vld [vmem:[#allocation2 + $0x1f8] sm:$0xff]
    %v162 = vld [vmem:[#allocation2 + $0x200] sm:$0xff]
    %v163 = vld [vmem:[#allocation2 + $0x208] sm:$0xff]
    %v164 = vld [vmem:[#allocation2 + $0x210] sm:$0xff]
    %v165 = vld [vmem:[#allocation2 + $0x218] sm:$0xff]
    %v166 = vld [vmem:[#allocation2 + $0x220] sm:$0xff]
    %v167 = vld [vmem:[#allocation2 + $0x228] sm:$0xff]
    %v168 = vld [vmem:[#allocation2 + $0x230] sm:$0xff]
    %v169 = vld [vmem:[#allocation2 + $0x238] sm:$0xff]
    %v170 = vld [vmem:[#allocation2 + $0x240] sm:$0xff]
    %v171 = vld [vmem:[#allocation2 + $0x248] sm:$0xff]
    %v172 = vld [vmem:[#allocation2 + $0x250] sm:$0xff]
    %v173 = vld [vmem:[#allocation2 + $0x258] sm:$0xff]
    %v174 = vld [vmem:[#allocation2 + $0x260] sm:$0xff]
    %v175 = vld [vmem:[#allocation2 + $0x268] sm:$0xff]
    %v176 = vld [vmem:[#allocation2 + $0x270] sm:$0xff]
    %v177 = vld [vmem:[#allocation2 + $0x278] sm:$0xff]
    %v178 = vld [vmem:[#allocation2 + $0x280] sm:$0xff]
    %v179 = vld [vmem:[#allocation2 + $0x288] sm:$0xff]
    %v180 = vld [vmem:[#allocation2 + $0x290] sm:$0xff]
    %v181 = vld [vmem:[#allocation2 + $0x298] sm:$0xff]
    %v182 = vld [vmem:[#allocation2 + $0x2a0] sm:$0xff]
    %v183 = vld [vmem:[#allocation2 + $0x2a8] sm:$0xff]
    %v184 = vld [vmem:[#allocation2 + $0x2b0] sm:$0xff]
    %v185 = vld [vmem:[#allocation2 + $0x2b8] sm:$0xff]
    %v186 = vld [vmem:[#allocation2 + $0x2c0] sm:$0xff]
    %v187 = vld [vmem:[#allocation2 + $0x2c8] sm:$0xff]
    %v188 = vld [vmem:[#allocation2 + $0x2d0] sm:$0xff]
    %v189 = vld [vmem:[#allocation2 + $0x2d8] sm:$0xff]
    %v190 = vld [vmem:[#allocation2 + $0x2e0] sm:$0xff]
    %v191 = vld [vmem:[#allocation2 + $0x2e8] sm:$0xff]
    %v192 = vld [vmem:[#allocation2 + $0x2f0] sm:$0xff]
    %v193 = vld [vmem:[#allocation2 + $0x2f8] sm:$0xff]
    %v194 = vld [vmem:[#allocation2 + $0x300] sm:$0xff]
    %v195 = vld [vmem:[#allocation2 + $0x308] sm:$0xff]
    %v196 = vld [vmem:[#allocation2 + $0x310] sm:$0xff]
    %v197 = vld [vmem:[#allocation2 + $0x318] sm:$0xff]
    %v198 = vld [vmem:[#allocation2 + $0x320] sm:$0xff]
    %v199 = vld [vmem:[#allocation2 + $0x328] sm:$0xff]
    %v200 = vld [vmem:[#allocation2 + $0x330] sm:$0xff]
    %v201 = vld [vmem:[#allocation2 + $0x338] sm:$0xff]
    %v202 = vld [vmem:[#allocation2 + $0x340] sm:$0xff]
    %v203 = vld [vmem:[#allocation2 + $0x348] sm:$0xff]
    %v204 = vld [vmem:[#allocation2 + $0x350] sm:$0xff]
    %v205 = vld [vmem:[#allocation2 + $0x358] sm:$0xff]
    %v206 = vld [vmem:[#allocation2 + $0x360] sm:$0xff]
    %v207 = vld [vmem:[#allocation2 + $0x368] sm:$0xff]
    %v208 = vld [vmem:[#allocation2 + $0x370] sm:$0xff]
    %v209 = vld [vmem:[#allocation2 + $0x378] sm:$0xff]
    %v210 = vld [vmem:[#allocation2 + $0x380] sm:$0xff]
    %v211 = vld [vmem:[#allocation2 + $0x388] sm:$0xff]
    %v212 = vld [vmem:[#allocation2 + $0x390] sm:$0xff]
    %v213 = vld [vmem:[#allocation2 + $0x398] sm:$0xff]
    %v214 = vld [vmem:[#allocation2 + $0x3a0] sm:$0xff]
    %v215 = vld [vmem:[#allocation2 + $0x3a8] sm:$0xff]
    %v216 = vld [vmem:[#allocation2 + $0x3b0] sm:$0xff]
    %v217 = vld [vmem:[#allocation2 + $0x3b8] sm:$0xff]
    %v218 = vld [vmem:[#allocation2 + $0x3c0] sm:$0xff]
    %v219 = vld [vmem:[#allocation2 + $0x3c8] sm:$0xff]
    %v220 = vld [vmem:[#allocation2 + $0x3d0] sm:$0xff]
    %v221 = vld [vmem:[#allocation2 + $0x3d8] sm:$0xff]
    %v222 = vld [vmem:[#allocation2 + $0x3e0] sm:$0xff]
    %v223 = vld [vmem:[#allocation2 + $0x3e8] sm:$0xff]
    %v224 = vld [vmem:[#allocation2 + $0x3f0] sm:$0xff]
    %v225 = vld [vmem:[#allocation2 + $0x3f8] sm:$0xff]
    %v226 = vld [vmem:[#allocation2 + $0x400] sm:$0xff]
    %v227 = vld [vmem:[#allocation2 + $0x408] sm:$0xff]
    %v228 = vld [vmem:[#allocation2 + $0x410] sm:$0xff]
    %v229 = vld [vmem:[#allocation2 + $0x418] sm:$0xff]
    %v230 = vld [vmem:[#allocation2 + $0x420] sm:$0xff]
    %v231 = vld [vmem:[#allocation2 + $0x428] sm:$0xff]
    %v232 = vld [vmem:[#allocation2 + $0x430] sm:$0xff]
    %v233 = vld [vmem:[#allocation2 + $0x438] sm:$0xff]
    %v234 = vld [vmem:[#allocation2 + $0x440] sm:$0xff]
    %v235 = vld [vmem:[#allocation2 + $0x448] sm:$0xff]
    %v236 = vld [vmem:[#allocation2 + $0x450] sm:$0xff]
    %v237 = vld [vmem:[#allocation2 + $0x458] sm:$0xff]
    %v238 = vld [vmem:[#allocation2 + $0x460] sm:$0xff]
    %v239 = vld [vmem:[#allocation2 + $0x468] sm:$0xff]
    %v240 = vld [vmem:[#allocation2 + $0x470] sm:$0xff]
    %v241 = vld [vmem:[#allocation2 + $0x478] sm:$0xff]
    %v242 = vld [vmem:[#allocation2 + $0x480] sm:$0xff]
    %v243 = vld [vmem:[#allocation2 + $0x488] sm:$0xff]
    %v244 = vld [vmem:[#allocation2 + $0x490] sm:$0xff]
    %v245 = vld [vmem:[#allocation2 + $0x498] sm:$0xff]
    %v246 = vld [vmem:[#allocation2 + $0x4a0] sm:$0xff]
    %v247 = vld [vmem:[#allocation2 + $0x4a8] sm:$0xff]
    %v248 = vld [vmem:[#allocation2 + $0x4b0] sm:$0xff]
    %v249 = vld [vmem:[#allocation2 + $0x4b8] sm:$0xff]
    %v250 = vld [vmem:[#allocation2 + $0x4c0] sm:$0xff]
    %v251 = vld [vmem:[#allocation2 + $0x4c8] sm:$0xff]
    %v252 = vld [vmem:[#allocation2 + $0x4d0] sm:$0xff]
    %v253 = vld [vmem:[#allocation2 + $0x4d8] sm:$0xff]
    %v254 = vld [vmem:[#allocation2 + $0x4e0] sm:$0xff]
    %v255 = vld [vmem:[#allocation2 + $0x4e8] sm:$0xff]
    %v256 = vld [vmem:[#allocation2 + $0x4f0] sm:$0xff]
    %v257 = vld [vmem:[#allocation2 + $0x4f8] sm:$0xff]
    %v258 = vld [vmem:[#allocation2 + $0x500] sm:$0xff]
    %v259 = vld [vmem:[#allocation2 + $0x508] sm:$0xff]
    %v260 = vld [vmem:[#allocation2 + $0x510] sm:$0xff]
    %v261 = vld [vmem:[#allocation2 + $0x518] sm:$0xff]
    %v262 = vld [vmem:[#allocation2 + $0x520] sm:$0xff]
    %v263 = vld [vmem:[#allocation2 + $0x528] sm:$0xff]
    %v264 = vld [vmem:[#allocation2 + $0x530] sm:$0xff]
    %v265 = vld [vmem:[#allocation2 + $0x538] sm:$0xff]
    %v266 = vld [vmem:[#allocation2 + $0x540] sm:$0xff]
    %v267 = vld [vmem:[#allocation2 + $0x548] sm:$0xff]
    %v268 = vld [vmem:[#allocation2 + $0x550] sm:$0xff]
    %v269 = vld [vmem:[#allocation2 + $0x558] sm:$0xff]
    %v270 = vld [vmem:[#allocation2 + $0x560] sm:$0xff]
    %v271 = vld [vmem:[#allocation2 + $0x568] sm:$0xff]
    %v272 = vld [vmem:[#allocation2 + $0x570] sm:$0xff]
    %v273 = vld [vmem:[#allocation2 + $0x578] sm:$0xff]
    %v274 = vld [vmem:[#allocation2 + $0x580] sm:$0xff]
    %v275 = vld [vmem:[#allocation2 + $0x588] sm:$0xff]
    %v276 = vld [vmem:[#allocation2 + $0x590] sm:$0xff]
    %v277 = vld [vmem:[#allocation2 + $0x598] sm:$0xff]
    %v278 = vld [vmem:[#allocation2 + $0x5a0] sm:$0xff]
    %v279 = vld [vmem:[#allocation2 + $0x5a8] sm:$0xff]
    %v280 = vld [vmem:[#allocation2 + $0x5b0] sm:$0xff]
    %v281 = vld [vmem:[#allocation2 + $0x5b8] sm:$0xff]
    %v282 = vld [vmem:[#allocation2 + $0x5c0] sm:$0xff]
    %v283 = vld [vmem:[#allocation2 + $0x5c8] sm:$0xff]
    %v284 = vld [vmem:[#allocation2 + $0x5d0] sm:$0xff]
    %v285 = vld [vmem:[#allocation2 + $0x5d8] sm:$0xff]
    %v286 = vld [vmem:[#allocation2 + $0x5e0] sm:$0xff]
    %v287 = vld [vmem:[#allocation2 + $0x5e8] sm:$0xff]
    %v288 = vld [vmem:[#allocation2 + $0x5f0] sm:$0xff]
    %v289 = vld [vmem:[#allocation2 + $0x5f8] sm:$0xff]
    %v290 = vld [vmem:[#allocation2 + $0x600] sm:$0xff]
    %v291 = vld [vmem:[#allocation2 + $0x608] sm:$0xff]
    %v292 = vld [vmem:[#allocation2 + $0x610] sm:$0xff]
    %v293 = vld [vmem:[#allocation2 + $0x618] sm:$0xff]
    %v294 = vld [vmem:[#allocation2 + $0x620] sm:$0xff]
    %v295 = vld [vmem:[#allocation2 + $0x628] sm:$0xff]
    %v296 = vld [vmem:[#allocation2 + $0x630] sm:$0xff]
    %v297 = vld [vmem:[#allocation2 + $0x638] sm:$0xff]
    %v298 = vld [vmem:[#allocation2 + $0x640] sm:$0xff]
    %v299 = vld [vmem:[#allocation2 + $0x648] sm:$0xff]
    %v300 = vld [vmem:[#allocation2 + $0x650] sm:$0xff]
    %v301 = vld [vmem:[#allocation2 + $0x658] sm:$0xff]
    %v302 = vld [vmem:[#allocation2 + $0x660] sm:$0xff]
    %v303 = vld [vmem:[#allocation2 + $0x668] sm:$0xff]
    %v304 = vld [vmem:[#allocation2 + $0x670] sm:$0xff]
    %v305 = vld [vmem:[#allocation2 + $0x678] sm:$0xff]
    %v306 = vld [vmem:[#allocation2 + $0x680] sm:$0xff]
    %v307 = vld [vmem:[#allocation2 + $0x688] sm:$0xff]
    %v308 = vld [vmem:[#allocation2 + $0x690] sm:$0xff]
    %v309 = vld [vmem:[#allocation2 + $0x698] sm:$0xff]
    %v310 = vld [vmem:[#allocation2 + $0x6a0] sm:$0xff]
    %v311 = vld [vmem:[#allocation2 + $0x6a8] sm:$0xff]
    %v312 = vld [vmem:[#allocation2 + $0x6b0] sm:$0xff]
    %v313 = vld [vmem:[#allocation2 + $0x6b8] sm:$0xff]
    %v314 = vld [vmem:[#allocation2 + $0x6c0] sm:$0xff]
    %v315 = vld [vmem:[#allocation2 + $0x6c8] sm:$0xff]
    %v316 = vld [vmem:[#allocation2 + $0x6d0] sm:$0xff]
    %v317 = vld [vmem:[#allocation2 + $0x6d8] sm:$0xff]
    %v318 = vld [vmem:[#allocation2 + $0x6e0] sm:$0xff]
    %v319 = vld [vmem:[#allocation2 + $0x6e8] sm:$0xff]
    %v320 = vld [vmem:[#allocation2 + $0x6f0] sm:$0xff]
    %v321 = vld [vmem:[#allocation2 + $0x6f8] sm:$0xff]
    %v322 = vld [vmem:[#allocation2 + $0x700] sm:$0xff]
    %v323 = vld [vmem:[#allocation2 + $0x708] sm:$0xff]
    %v324 = vld [vmem:[#allocation2 + $0x710] sm:$0xff]
    %v325 = vld [vmem:[#allocation2 + $0x718] sm:$0xff]
    %v326 = vld [vmem:[#allocation2 + $0x720] sm:$0xff]
    %v327 = vld [vmem:[#allocation2 + $0x728] sm:$0xff]
    %v328 = vld [vmem:[#allocation2 + $0x730] sm:$0xff]
    %v329 = vld [vmem:[#allocation2 + $0x738] sm:$0xff]
    %v330 = vld [vmem:[#allocation2 + $0x740] sm:$0xff]
    %v331 = vld [vmem:[#allocation2 + $0x748] sm:$0xff]
    %v332 = vld [vmem:[#allocation2 + $0x750] sm:$0xff]
    %v333 = vld [vmem:[#allocation2 + $0x758] sm:$0xff]
    %v334 = vld [vmem:[#allocation2 + $0x760] sm:$0xff]
    %v335 = vld [vmem:[#allocation2 + $0x768] sm:$0xff]
    %v336 = vld [vmem:[#allocation2 + $0x770] sm:$0xff]
    %v337 = vld [vmem:[#allocation2 + $0x778] sm:$0xff]
    %v338 = vld [vmem:[#allocation2 + $0x780] sm:$0xff]
    %v339 = vld [vmem:[#allocation2 + $0x788] sm:$0xff]
    %v340 = vld [vmem:[#allocation2 + $0x790] sm:$0xff]
    %v341 = vld [vmem:[#allocation2 + $0x798] sm:$0xff]
    %v342 = vld [vmem:[#allocation2 + $0x7a0] sm:$0xff]
    %v343 = vld [vmem:[#allocation2 + $0x7a8] sm:$0xff]
    %v344 = vld [vmem:[#allocation2 + $0x7b0] sm:$0xff]
    %v345 = vld [vmem:[#allocation2 + $0x7b8] sm:$0xff]
    %v346 = vld [vmem:[#allocation2 + $0x7c0] sm:$0xff]
    %v347 = vld [vmem:[#allocation2 + $0x7c8] sm:$0xff]
    %v348 = vld [vmem:[#allocation2 + $0x7d0] sm:$0xff]
    %v349 = vld [vmem:[#allocation2 + $0x7d8] sm:$0xff]
    %v350 = vld [vmem:[#allocation2 + $0x7e0] sm:$0xff]
    %v351 = vld [vmem:[#allocation2 + $0x7e8] sm:$0xff]
    %v352 = vld [vmem:[#allocation2 + $0x7f0] sm:$0xff]
    %v353 = vld [vmem:[#allocation2 + $0x7f8] sm:$0xff]
    %v354 = vld [vmem:[#allocation2 + $0x800] sm:$0xff]
    %v355 = vld [vmem:[#allocation2 + $0x808] sm:$0xff]
    %v356 = vld [vmem:[#allocation2 + $0x810] sm:$0xff]
    %v357 = vld [vmem:[#allocation2 + $0x818] sm:$0xff]
    %v358 = vld [vmem:[#allocation2 + $0x820] sm:$0xff]
    %v359 = vld [vmem:[#allocation2 + $0x828] sm:$0xff]
    %v360 = vld [vmem:[#allocation2 + $0x830] sm:$0xff]
    %v361 = vld [vmem:[#allocation2 + $0x838] sm:$0xff]
    %v362 = vld [vmem:[#allocation2 + $0x840] sm:$0xff]
    %v363 = vld [vmem:[#allocation2 + $0x848] sm:$0xff]
    %v364 = vld [vmem:[#allocation2 + $0x850] sm:$0xff]
    %v365 = vld [vmem:[#allocation2 + $0x858] sm:$0xff]
    %v366 = vld [vmem:[#allocation2 + $0x860] sm:$0xff]
    %v367 = vld [vmem:[#allocation2 + $0x868] sm:$0xff]
    %v368 = vld [vmem:[#allocation2 + $0x870] sm:$0xff]
    %v369 = vld [vmem:[#allocation2 + $0x878] sm:$0xff]
    %v370 = vld [vmem:[#allocation2 + $0x880] sm:$0xff]
    %v371 = vld [vmem:[#allocation2 + $0x888] sm:$0xff]
    %v372 = vld [vmem:[#allocation2 + $0x890] sm:$0xff]
    %v373 = vld [vmem:[#allocation2 + $0x898] sm:$0xff]
    %v374 = vld [vmem:[#allocation2 + $0x8a0] sm:$0xff]
    %v375 = vld [vmem:[#allocation2 + $0x8a8] sm:$0xff]
    %v376 = vld [vmem:[#allocation2 + $0x8b0] sm:$0xff]
    %v377 = vld [vmem:[#allocation2 + $0x8b8] sm:$0xff]
    %v378 = vld [vmem:[#allocation2 + $0x8c0] sm:$0xff]
    %v379 = vld [vmem:[#allocation2 + $0x8c8] sm:$0xff]
    %v380 = vld [vmem:[#allocation2 + $0x8d0] sm:$0xff]
    %v381 = vld [vmem:[#allocation2 + $0x8d8] sm:$0xff]
    %v382 = vld [vmem:[#allocation2 + $0x8e0] sm:$0xff]
    %v383 = vld [vmem:[#allocation2 + $0x8e8] sm:$0xff]
    %v384 = vld [vmem:[#allocation2 + $0x8f0] sm:$0xff]
    %v385 = vld [vmem:[#allocation2 + $0x8f8] sm:$0xff]
    %v386 = vld [vmem:[#allocation2 + $0x900] sm:$0xff]
    %v387 = vld [vmem:[#allocation2 + $0x908] sm:$0xff]
    %v388 = vld [vmem:[#allocation2 + $0x910] sm:$0xff]
    %v389 = vld [vmem:[#allocation2 + $0x918] sm:$0xff]
    %v390 = vld [vmem:[#allocation2 + $0x920] sm:$0xff]
    %v391 = vld [vmem:[#allocation2 + $0x928] sm:$0xff]
    %v392 = vld [vmem:[#allocation2 + $0x930] sm:$0xff]
    %v393 = vld [vmem:[#allocation2 + $0x938] sm:$0xff]
    %v394 = vld [vmem:[#allocation2 + $0x940] sm:$0xff]
    %v395 = vld [vmem:[#allocation2 + $0x948] sm:$0xff]
    %v396 = vld [vmem:[#allocation2 + $0x950] sm:$0xff]
    %v397 = vld [vmem:[#allocation2 + $0x958] sm:$0xff]
    %v398 = vld [vmem:[#allocation2 + $0x960] sm:$0xff]
    %v399 = vld [vmem:[#allocation2 + $0x968] sm:$0xff]
    %v400 = vld [vmem:[#allocation2 + $0x970] sm:$0xff]
    %v401 = vld [vmem:[#allocation2 + $0x978] sm:$0xff]
    %v402 = vld [vmem:[#allocation2 + $0x980] sm:$0xff]
    %v403 = vld [vmem:[#allocation2 + $0x988] sm:$0xff]
    %v404 = vld [vmem:[#allocation2 + $0x990] sm:$0xff]
    %v405 = vld [vmem:[#allocation2 + $0x998] sm:$0xff]
    %v406 = vld [vmem:[#allocation2 + $0x9a0] sm:$0xff]
    %v407 = vld [vmem:[#allocation2 + $0x9a8] sm:$0xff]
    %v408 = vld [vmem:[#allocation2 + $0x9b0] sm:$0xff]
    %v409 = vld [vmem:[#allocation2 + $0x9b8] sm:$0xff]
    %v410 = vld [vmem:[#allocation2 + $0x9c0] sm:$0xff]
    %v411 = vld [vmem:[#allocation2 + $0x9c8] sm:$0xff]
    %v412 = vld [vmem:[#allocation2 + $0x9d0] sm:$0xff]
    %v413 = vld [vmem:[#allocation2 + $0x9d8] sm:$0xff]
    %v414 = vld [vmem:[#allocation2 + $0x9e0] sm:$0xff]
    %v415 = vld [vmem:[#allocation2 + $0x9e8] sm:$0xff]
    %v416 = vld [vmem:[#allocation2 + $0x9f0] sm:$0xff]
    %v417 = vld [vmem:[#allocation2 + $0x9f8] sm:$0xff]
    %v418 = vld [vmem:[#allocation2 + $0xa00] sm:$0xff]
    %v419 = vld [vmem:[#allocation2 + $0xa08] sm:$0xff]
    %v420 = vld [vmem:[#allocation2 + $0xa10] sm:$0xff]
    %v421 = vld [vmem:[#allocation2 + $0xa18] sm:$0xff]
    %v422 = vld [vmem:[#allocation2 + $0xa20] sm:$0xff]
    %v423 = vld [vmem:[#allocation2 + $0xa28] sm:$0xff]
    %v424 = vld [vmem:[#allocation2 + $0xa30] sm:$0xff]
    %v425 = vld [vmem:[#allocation2 + $0xa38] sm:$0xff]
    %v426 = vld [vmem:[#allocation2 + $0xa40] sm:$0xff]
    %v427 = vld [vmem:[#allocation2 + $0xa48] sm:$0xff]
    %v428 = vld [vmem:[#allocation2 + $0xa50] sm:$0xff]
    %v429 = vld [vmem:[#allocation2 + $0xa58] sm:$0xff]
    %v430 = vld [vmem:[#allocation2 + $0xa60] sm:$0xff]
    %v431 = vld [vmem:[#allocation2 + $0xa68] sm:$0xff]
    %v432 = vld [vmem:[#allocation2 + $0xa70] sm:$0xff]
    %v433 = vld [vmem:[#allocation2 + $0xa78] sm:$0xff]
    %v434 = vld [vmem:[#allocation2 + $0xa80] sm:$0xff]
    %v435 = vld [vmem:[#allocation2 + $0xa88] sm:$0xff]
    %v436 = vld [vmem:[#allocation2 + $0xa90] sm:$0xff]
    %v437 = vld [vmem:[#allocation2 + $0xa98] sm:$0xff]
    %v438 = vld [vmem:[#allocation2 + $0xaa0] sm:$0xff]
    %v439 = vld [vmem:[#allocation2 + $0xaa8] sm:$0xff]
    %v440 = vld [vmem:[#allocation2 + $0xab0] sm:$0xff]
    %v441 = vld [vmem:[#allocation2 + $0xab8] sm:$0xff]
    %v442 = vld [vmem:[#allocation2 + $0xac0] sm:$0xff]
    %v443 = vld [vmem:[#allocation2 + $0xac8] sm:$0xff]
    %v444 = vld [vmem:[#allocation2 + $0xad0] sm:$0xff]
    %v445 = vld [vmem:[#allocation2 + $0xad8] sm:$0xff]
    %v446 = vld [vmem:[#allocation2 + $0xae0] sm:$0xff]
    %v447 = vld [vmem:[#allocation2 + $0xae8] sm:$0xff]
    %v448 = vld [vmem:[#allocation2 + $0xaf0] sm:$0xff]
    %v449 = vld [vmem:[#allocation2 + $0xaf8] sm:$0xff]
    %v450 = vld [vmem:[#allocation2 + $0xb00] sm:$0xff]
    %v451 = vld [vmem:[#allocation2 + $0xb08] sm:$0xff]
    %v452 = vld [vmem:[#allocation2 + $0xb10] sm:$0xff]
    %v453 = vld [vmem:[#allocation2 + $0xb18] sm:$0xff]
    %v454 = vld [vmem:[#allocation2 + $0xb20] sm:$0xff]
    %v455 = vld [vmem:[#allocation2 + $0xb28] sm:$0xff]
    %v456 = vld [vmem:[#allocation2 + $0xb30] sm:$0xff]
    %v457 = vld [vmem:[#allocation2 + $0xb38] sm:$0xff]
    %v458 = vld [vmem:[#allocation2 + $0xb40] sm:$0xff]
    %v459 = vld [vmem:[#allocation2 + $0xb48] sm:$0xff]
    %v460 = vld [vmem:[#allocation2 + $0xb50] sm:$0xff]
    %v461 = vld [vmem:[#allocation2 + $0xb58] sm:$0xff]
    %v462 = vld [vmem:[#allocation2 + $0xb60] sm:$0xff]
    %v463 = vld [vmem:[#allocation2 + $0xb68] sm:$0xff]
    %v464 = vld [vmem:[#allocation2 + $0xb70] sm:$0xff]
    %v465 = vld [vmem:[#allocation2 + $0xb78] sm:$0xff]
    %v466 = vld [vmem:[#allocation2 + $0xb80] sm:$0xff]
    %v467 = vld [vmem:[#allocation2 + $0xb88] sm:$0xff]
    %v468 = vld [vmem:[#allocation2 + $0xb90] sm:$0xff]
    %v469 = vld [vmem:[#allocation2 + $0xb98] sm:$0xff]
    %v470 = vld [vmem:[#allocation2 + $0xba0] sm:$0xff]
    %v471 = vld [vmem:[#allocation2 + $0xba8] sm:$0xff]
    %v472 = vld [vmem:[#allocation2 + $0xbb0] sm:$0xff]
    %v473 = vld [vmem:[#allocation2 + $0xbb8] sm:$0xff]
    %v474 = vld [vmem:[#allocation2 + $0xbc0] sm:$0xff]
    %v475 = vld [vmem:[#allocation2 + $0xbc8] sm:$0xff]
    %v476 = vld [vmem:[#allocation2 + $0xbd0] sm:$0xff]
    %v477 = vld [vmem:[#allocation2 + $0xbd8] sm:$0xff]
    %v478 = vld [vmem:[#allocation2 + $0xbe0] sm:$0xff]
    %v479 = vld [vmem:[#allocation2 + $0xbe8] sm:$0xff]
    %v480 = vld [vmem:[#allocation2 + $0xbf0] sm:$0xff]
    %v481 = vld [vmem:[#allocation2 + $0xbf8] sm:$0xff]
    %v482 = vld [vmem:[#allocation2 + $0xc00] sm:$0xff]
    %v483 = vld [vmem:[#allocation2 + $0xc08] sm:$0xff]
    %v484 = vld [vmem:[#allocation2 + $0xc10] sm:$0xff]
    %v485 = vld [vmem:[#allocation2 + $0xc18] sm:$0xff]
    %v486 = vld [vmem:[#allocation2 + $0xc20] sm:$0xff]
    %v487 = vld [vmem:[#allocation2 + $0xc28] sm:$0xff]
    %v488 = vld [vmem:[#allocation2 + $0xc30] sm:$0xff]
    %v489 = vld [vmem:[#allocation2 + $0xc38] sm:$0xff]
    %v490 = vld [vmem:[#allocation2 + $0xc40] sm:$0xff]
    %v491 = vld [vmem:[#allocation2 + $0xc48] sm:$0xff]
    %v492 = vld [vmem:[#allocation2 + $0xc50] sm:$0xff]
    %v493 = vld [vmem:[#allocation2 + $0xc58] sm:$0xff]
    %v494 = vld [vmem:[#allocation2 + $0xc60] sm:$0xff]
    %v495 = vld [vmem:[#allocation2 + $0xc68] sm:$0xff]
    %v496 = vld [vmem:[#allocation2 + $0xc70] sm:$0xff]
    %v497 = vld [vmem:[#allocation2 + $0xc78] sm:$0xff]
    %v498 = vld [vmem:[#allocation2 + $0xc80] sm:$0xff]
    %v499 = vld [vmem:[#allocation2 + $0xc88] sm:$0xff]
    %v500 = vld [vmem:[#allocation2 + $0xc90] sm:$0xff]
    %v501 = vld [vmem:[#allocation2 + $0xc98] sm:$0xff]
    %v502 = vld [vmem:[#allocation2 + $0xca0] sm:$0xff]
    %v503 = vld [vmem:[#allocation2 + $0xca8] sm:$0xff]
    %v504 = vld [vmem:[#allocation2 + $0xcb0] sm:$0xff]
    %v505 = vld [vmem:[#allocation2 + $0xcb8] sm:$0xff]
    %v506 = vld [vmem:[#allocation2 + $0xcc0] sm:$0xff]
    %v507 = vld [vmem:[#allocation2 + $0xcc8] sm:$0xff]
    %v508 = vld [vmem:[#allocation2 + $0xcd0] sm:$0xff]
    %v509 = vld [vmem:[#allocation2 + $0xcd8] sm:$0xff]
    %v510 = vld [vmem:[#allocation2 + $0xce0] sm:$0xff]
    %v511 = vld [vmem:[#allocation2 + $0xce8] sm:$0xff]
    %v512 = vld [vmem:[#allocation2 + $0xcf0] sm:$0xff]
    %v513 = vld [vmem:[#allocation2 + $0xcf8] sm:$0xff]
    %v514 = vld [vmem:[#allocation2 + $0xd00] sm:$0xff]
    %v515 = vld [vmem:[#allocation2 + $0xd08] sm:$0xff]
    %v516 = vld [vmem:[#allocation2 + $0xd10] sm:$0xff]
    %v517 = vld [vmem:[#allocation2 + $0xd18] sm:$0xff]
    %v518 = vld [vmem:[#allocation2 + $0xd20] sm:$0xff]
    %v519 = vld [vmem:[#allocation2 + $0xd28] sm:$0xff]
    %v520 = vld [vmem:[#allocation2 + $0xd30] sm:$0xff]
    %v521 = vld [vmem:[#allocation2 + $0xd38] sm:$0xff]
    %v522 = vld [vmem:[#allocation2 + $0xd40] sm:$0xff]
    %v523 = vld [vmem:[#allocation2 + $0xd48] sm:$0xff]
    %v524 = vld [vmem:[#allocation2 + $0xd50] sm:$0xff]
    %v525 = vld [vmem:[#allocation2 + $0xd58] sm:$0xff]
    %v526 = vld [vmem:[#allocation2 + $0xd60] sm:$0xff]
    %v527 = vld [vmem:[#allocation2 + $0xd68] sm:$0xff]
    %v528 = vld [vmem:[#allocation2 + $0xd70] sm:$0xff]
    %v529 = vld [vmem:[#allocation2 + $0xd78] sm:$0xff]
    %v530 = vld [vmem:[#allocation2 + $0xd80] sm:$0xff]
    %v531 = vld [vmem:[#allocation2 + $0xd88] sm:$0xff]
    %v532 = vld [vmem:[#allocation2 + $0xd90] sm:$0xff]
    %v533 = vld [vmem:[#allocation2 + $0xd98] sm:$0xff]
    %v534 = vld [vmem:[#allocation2 + $0xda0] sm:$0xff]
    %v535 = vld [vmem:[#allocation2 + $0xda8] sm:$0xff]
    %v536 = vld [vmem:[#allocation2 + $0xdb0] sm:$0xff]
    %v537 = vld [vmem:[#allocation2 + $0xdb8] sm:$0xff]
    %v538 = vld [vmem:[#allocation2 + $0xdc0] sm:$0xff]
    %v539 = vld [vmem:[#allocation2 + $0xdc8] sm:$0xff]
    %v540 = vld [vmem:[#allocation2 + $0xdd0] sm:$0xff]
    %v541 = vld [vmem:[#allocation2 + $0xdd8] sm:$0xff]
    %v542 = vld [vmem:[#allocation2 + $0xde0] sm:$0xff]
    %v543 = vld [vmem:[#allocation2 + $0xde8] sm:$0xff]
    %v544 = vld [vmem:[#allocation2 + $0xdf0] sm:$0xff]
    %v545 = vld [vmem:[#allocation2 + $0xdf8] sm:$0xff]
    %v546 = vld [vmem:[#allocation2 + $0xe00] sm:$0xff]
    %v547 = vld [vmem:[#allocation2 + $0xe08] sm:$0xff]
    %v548 = vld [vmem:[#allocation2 + $0xe10] sm:$0xff]
    %v549 = vld [vmem:[#allocation2 + $0xe18] sm:$0xff]
    %v550 = vld [vmem:[#allocation2 + $0xe20] sm:$0xff]
    %v551 = vld [vmem:[#allocation2 + $0xe28] sm:$0xff]
    %v552 = vld [vmem:[#allocation2 + $0xe30] sm:$0xff]
    %v553 = vld [vmem:[#allocation2 + $0xe38] sm:$0xff]
    %v554 = vld [vmem:[#allocation2 + $0xe40] sm:$0xff]
    %v555 = vld [vmem:[#allocation2 + $0xe48] sm:$0xff]
    %v556 = vld [vmem:[#allocation2 + $0xe50] sm:$0xff]
    %v557 = vld [vmem:[#allocation2 + $0xe58] sm:$0xff]
    %v558 = vld [vmem:[#allocation2 + $0xe60] sm:$0xff]
    %v559 = vld [vmem:[#allocation2 + $0xe68] sm:$0xff]
    %v560 = vld [vmem:[#allocation2 + $0xe70] sm:$0xff]
    %v561 = vld [vmem:[#allocation2 + $0xe78] sm:$0xff]
    %v562 = vld [vmem:[#allocation2 + $0xe80] sm:$0xff]
    %v563 = vld [vmem:[#allocation2 + $0xe88] sm:$0xff]
    %v564 = vld [vmem:[#allocation2 + $0xe90] sm:$0xff]
    %v565 = vld [vmem:[#allocation2 + $0xe98] sm:$0xff]
    %v566 = vld [vmem:[#allocation2 + $0xea0] sm:$0xff]
    %v567 = vld [vmem:[#allocation2 + $0xea8] sm:$0xff]
    %v568 = vld [vmem:[#allocation2 + $0xeb0] sm:$0xff]
    %v569 = vld [vmem:[#allocation2 + $0xeb8] sm:$0xff]
    %v570 = vld [vmem:[#allocation2 + $0xec0] sm:$0xff]
    %v571 = vld [vmem:[#allocation2 + $0xec8] sm:$0xff]
    %v572 = vld [vmem:[#allocation2 + $0xed0] sm:$0xff]
    %v573 = vld [vmem:[#allocation2 + $0xed8] sm:$0xff]
    %v574 = vld [vmem:[#allocation2 + $0xee0] sm:$0xff]
    %v575 = vld [vmem:[#allocation2 + $0xee8] sm:$0xff]
    %v576 = vld [vmem:[#allocation2 + $0xef0] sm:$0xff]
    %v577 = vld [vmem:[#allocation2 + $0xef8] sm:$0xff]
    %v578 = vld [vmem:[#allocation2 + $0xf00] sm:$0xff]
    %v579 = vld [vmem:[#allocation2 + $0xf08] sm:$0xff]
    %v580 = vld [vmem:[#allocation2 + $0xf10] sm:$0xff]
    %v581 = vld [vmem:[#allocation2 + $0xf18] sm:$0xff]
    %v582 = vld [vmem:[#allocation2 + $0xf20] sm:$0xff]
    %v583 = vld [vmem:[#allocation2 + $0xf28] sm:$0xff]
    %v584 = vld [vmem:[#allocation2 + $0xf30] sm:$0xff]
    %v585 = vld [vmem:[#allocation2 + $0xf38] sm:$0xff]
    %v586 = vld [vmem:[#allocation2 + $0xf40] sm:$0xff]
    %v587 = vld [vmem:[#allocation2 + $0xf48] sm:$0xff]
    %v588 = vld [vmem:[#allocation2 + $0xf50] sm:$0xff]
    %v589 = vld [vmem:[#allocation2 + $0xf58] sm:$0xff]
    %v590 = vld [vmem:[#allocation2 + $0xf60] sm:$0xff]
    %v591 = vld [vmem:[#allocation2 + $0xf68] sm:$0xff]
    %v592 = vld [vmem:[#allocation2 + $0xf70] sm:$0xff]
    %v593 = vld [vmem:[#allocation2 + $0xf78] sm:$0xff]
    %v594 = vld [vmem:[#allocation2 + $0xf80] sm:$0xff]
    %v595 = vld [vmem:[#allocation2 + $0xf88] sm:$0xff]
    %v596 = vld [vmem:[#allocation2 + $0xf90] sm:$0xff]
    %v597 = vld [vmem:[#allocation2 + $0xf98] sm:$0xff]
    %v598 = vld [vmem:[#allocation2 + $0xfa0] sm:$0xff]
    %v599 = vld [vmem:[#allocation2 + $0xfa8] sm:$0xff]
    %v600 = vld [vmem:[#allocation2 + $0xfb0] sm:$0xff]
    %v601 = vld [vmem:[#allocation2 + $0xfb8] sm:$0xff]
    %v602 = vld [vmem:[#allocation2 + $0xfc0] sm:$0xff]
    %v603 = vld [vmem:[#allocation2 + $0xfc8] sm:$0xff]
    %v604 = vld [vmem:[#allocation2 + $0xfd0] sm:$0xff]
    %v605 = vld [vmem:[#allocation2 + $0xfd8] sm:$0xff]
    %v606 = vld [vmem:[#allocation2 + $0xfe0] sm:$0xff]
    %v607 = vld [vmem:[#allocation2 + $0xfe8] sm:$0xff]
    %v608 = vld [vmem:[#allocation2 + $0xff0] sm:$0xff]
    %v609 = vld [vmem:[#allocation2 + $0xff8] sm:$0xff]
    %v610 = vld [vmem:[#allocation2 + $0x1000] sm:$0xff]
    %v611 = vld [vmem:[#allocation2 + $0x1008] sm:$0xff]
    %v612 = vld [vmem:[#allocation2 + $0x1010] sm:$0xff]
    %v613 = vld [vmem:[#allocation2 + $0x1018] sm:$0xff]
    %v614 = vld [vmem:[#allocation2 + $0x1020] sm:$0xff]
    %v615 = vld [vmem:[#allocation2 + $0x1028] sm:$0xff]
    %v616 = vld [vmem:[#allocation2 + $0x1030] sm:$0xff]
    %v617 = vld [vmem:[#allocation2 + $0x1038] sm:$0xff]
    %v618 = vld [vmem:[#allocation2 + $0x1040] sm:$0xff]
    %v619 = vld [vmem:[#allocation2 + $0x1048] sm:$0xff]
    %v620 = vld [vmem:[#allocation2 + $0x1050] sm:$0xff]
    %v621 = vld [vmem:[#allocation2 + $0x1058] sm:$0xff]
    %v622 = vld [vmem:[#allocation2 + $0x1060] sm:$0xff]
    %v623 = vld [vmem:[#allocation2 + $0x1068] sm:$0xff]
    %v624 = vld [vmem:[#allocation2 + $0x1070] sm:$0xff]
    %v625 = vld [vmem:[#allocation2 + $0x1078] sm:$0xff]
    %v626 = vld [vmem:[#allocation2 + $0x1080] sm:$0xff]
    %v627 = vld [vmem:[#allocation2 + $0x1088] sm:$0xff]
    %v628 = vld [vmem:[#allocation2 + $0x1090] sm:$0xff]
    %v629 = vld [vmem:[#allocation2 + $0x1098] sm:$0xff]
    %v630 = vld [vmem:[#allocation2 + $0x10a0] sm:$0xff]
    %v631 = vld [vmem:[#allocation2 + $0x10a8] sm:$0xff]
    %v632 = vld [vmem:[#allocation2 + $0x10b0] sm:$0xff]
    %v633 = vld [vmem:[#allocation2 + $0x10b8] sm:$0xff]
    %v634 = vld [vmem:[#allocation2 + $0x10c0] sm:$0xff]
    %v635 = vld [vmem:[#allocation2 + $0x10c8] sm:$0xff]
    %v636 = vld [vmem:[#allocation2 + $0x10d0] sm:$0xff]
    %v637 = vld [vmem:[#allocation2 + $0x10d8] sm:$0xff]
    %v638 = vld [vmem:[#allocation2 + $0x10e0] sm:$0xff]
    %v639 = vld [vmem:[#allocation2 + $0x10e8] sm:$0xff]
    %v640 = vld [vmem:[#allocation2 + $0x10f0] sm:$0xff]
    %v641 = vld [vmem:[#allocation2 + $0x10f8] sm:$0xff]
    %v642 = vld [vmem:[#allocation2 + $0x1100] sm:$0xff]
    %v643 = vld [vmem:[#allocation2 + $0x1108] sm:$0xff]
    %v644 = vld [vmem:[#allocation2 + $0x1110] sm:$0xff]
    %v645 = vld [vmem:[#allocation2 + $0x1118] sm:$0xff]
    %v646 = vld [vmem:[#allocation2 + $0x1120] sm:$0xff]
    %v647 = vld [vmem:[#allocation2 + $0x1128] sm:$0xff]
    %v648 = vld [vmem:[#allocation2 + $0x1130] sm:$0xff]
    %v649 = vld [vmem:[#allocation2 + $0x1138] sm:$0xff]
    %v650 = vld [vmem:[#allocation2 + $0x1140] sm:$0xff]
    %v651 = vld [vmem:[#allocation2 + $0x1148] sm:$0xff]
    %v652 = vld [vmem:[#allocation2 + $0x1150] sm:$0xff]
    %v653 = vld [vmem:[#allocation2 + $0x1158] sm:$0xff]
    %v654 = vld [vmem:[#allocation2 + $0x1160] sm:$0xff]
    %v655 = vld [vmem:[#allocation2 + $0x1168] sm:$0xff]
    %v656 = vld [vmem:[#allocation2 + $0x1170] sm:$0xff]
    %v657 = vld [vmem:[#allocation2 + $0x1178] sm:$0xff]
    %v658 = vld [vmem:[#allocation2 + $0x1180] sm:$0xff]
    %v659 = vld [vmem:[#allocation2 + $0x1188] sm:$0xff]
    %v660 = vld [vmem:[#allocation2 + $0x1190] sm:$0xff]
    %v661 = vld [vmem:[#allocation2 + $0x1198] sm:$0xff]
    %v662 = vld [vmem:[#allocation2 + $0x11a0] sm:$0xff]
    %v663 = vld [vmem:[#allocation2 + $0x11a8] sm:$0xff]
    %v664 = vld [vmem:[#allocation2 + $0x11b0] sm:$0xff]
    %v665 = vld [vmem:[#allocation2 + $0x11b8] sm:$0xff]
    %v666 = vld [vmem:[#allocation2 + $0x11c0] sm:$0xff]
    %v667 = vld [vmem:[#allocation2 + $0x11c8] sm:$0xff]
    %v668 = vld [vmem:[#allocation2 + $0x11d0] sm:$0xff]
    %v669 = vld [vmem:[#allocation2 + $0x11d8] sm:$0xff]
    %v670 = vld [vmem:[#allocation2 + $0x11e0] sm:$0xff]
    %v671 = vld [vmem:[#allocation2 + $0x11e8] sm:$0xff]
    %v672 = vld [vmem:[#allocation2 + $0x11f0] sm:$0xff]
    %v673 = vld [vmem:[#allocation2 + $0x11f8] sm:$0xff]
    %v674 = vld [vmem:[#allocation2 + $0x1200] sm:$0xff]
    %v675 = vld [vmem:[#allocation2 + $0x1208] sm:$0xff]
    %v676 = vld [vmem:[#allocation2 + $0x1210] sm:$0xff]
    %v677 = vld [vmem:[#allocation2 + $0x1218] sm:$0xff]
    %v678 = vld [vmem:[#allocation2 + $0x1220] sm:$0xff]
    %v679 = vld [vmem:[#allocation2 + $0x1228] sm:$0xff]
    %v680 = vld [vmem:[#allocation2 + $0x1230] sm:$0xff]
    %v681 = vld [vmem:[#allocation2 + $0x1238] sm:$0xff]
    %v682 = vld [vmem:[#allocation2 + $0x1240] sm:$0xff]
    %v683 = vld [vmem:[#allocation2 + $0x1248] sm:$0xff]
    %v684 = vld [vmem:[#allocation2 + $0x1250] sm:$0xff]
    %v685 = vld [vmem:[#allocation2 + $0x1258] sm:$0xff]
    %v686 = vld [vmem:[#allocation2 + $0x1260] sm:$0xff]
    %v687 = vld [vmem:[#allocation2 + $0x1268] sm:$0xff]
    %v688 = vld [vmem:[#allocation2 + $0x1270] sm:$0xff]
    %v689 = vld [vmem:[#allocation2 + $0x1278] sm:$0xff]
    %v690 = vld [vmem:[#allocation2 + $0x1280] sm:$0xff]
    %v691 = vld [vmem:[#allocation2 + $0x1288] sm:$0xff]
    %v692 = vld [vmem:[#allocation2 + $0x1290] sm:$0xff]
    %v693 = vld [vmem:[#allocation2 + $0x1298] sm:$0xff]
    %v694 = vld [vmem:[#allocation2 + $0x12a0] sm:$0xff]
    %v695 = vld [vmem:[#allocation2 + $0x12a8] sm:$0xff]
    %v696 = vld [vmem:[#allocation2 + $0x12b0] sm:$0xff]
    %v697 = vld [vmem:[#allocation2 + $0x12b8] sm:$0xff]
    %v698 = vld [vmem:[#allocation2 + $0x12c0] sm:$0xff]
    %v699 = vld [vmem:[#allocation2 + $0x12c8] sm:$0xff]
    %v700 = vld [vmem:[#allocation2 + $0x12d0] sm:$0xff]
    %v701 = vld [vmem:[#allocation2 + $0x12d8] sm:$0xff]
    %v702 = vld [vmem:[#allocation2 + $0x12e0] sm:$0xff]
    %v703 = vld [vmem:[#allocation2 + $0x12e8] sm:$0xff]
    %v704 = vld [vmem:[#allocation2 + $0x12f0] sm:$0xff]
    %v705 = vld [vmem:[#allocation2 + $0x12f8] sm:$0xff]
    %v706 = vld [vmem:[#allocation2 + $0x1300] sm:$0xff]
    %v707 = vld [vmem:[#allocation2 + $0x1308] sm:$0xff]
    %v708 = vld [vmem:[#allocation2 + $0x1310] sm:$0xff]
    %v709 = vld [vmem:[#allocation2 + $0x1318] sm:$0xff]
    %v710 = vld [vmem:[#allocation2 + $0x1320] sm:$0xff]
    %v711 = vld [vmem:[#allocation2 + $0x1328] sm:$0xff]
    %v712 = vld [vmem:[#allocation2 + $0x1330] sm:$0xff]
    %v713 = vld [vmem:[#allocation2 + $0x1338] sm:$0xff]
    %v714 = vld [vmem:[#allocation2 + $0x1340] sm:$0xff]
    %v715 = vld [vmem:[#allocation2 + $0x1348] sm:$0xff]
    %v716 = vld [vmem:[#allocation2 + $0x1350] sm:$0xff]
    %v717 = vld [vmem:[#allocation2 + $0x1358] sm:$0xff]
    %v718 = vld [vmem:[#allocation2 + $0x1360] sm:$0xff]
    %v719 = vld [vmem:[#allocation2 + $0x1368] sm:$0xff]
    %v720 = vld [vmem:[#allocation2 + $0x1370] sm:$0xff]
    %v721 = vld [vmem:[#allocation2 + $0x1378] sm:$0xff]
    %v722 = vld [vmem:[#allocation2 + $0x1380] sm:$0xff]
    %v723 = vld [vmem:[#allocation2 + $0x1388] sm:$0xff]
    %v724 = vld [vmem:[#allocation2 + $0x1390] sm:$0xff]
    %v725 = vld [vmem:[#allocation2 + $0x1398] sm:$0xff]
    %v726 = vld [vmem:[#allocation2 + $0x13a0] sm:$0xff]
    %v727 = vld [vmem:[#allocation2 + $0x13a8] sm:$0xff]
    %v728 = vld [vmem:[#allocation2 + $0x13b0] sm:$0xff]
    %v729 = vld [vmem:[#allocation2 + $0x13b8] sm:$0xff]
    %v730 = vld [vmem:[#allocation2 + $0x13c0] sm:$0xff]
    %v731 = vld [vmem:[#allocation2 + $0x13c8] sm:$0xff]
    %v732 = vld [vmem:[#allocation2 + $0x13d0] sm:$0xff]
    %v733 = vld [vmem:[#allocation2 + $0x13d8] sm:$0xff]
    %v734 = vld [vmem:[#allocation2 + $0x13e0] sm:$0xff]
    %v735 = vld [vmem:[#allocation2 + $0x13e8] sm:$0xff]
    %v736 = vld [vmem:[#allocation2 + $0x13f0] sm:$0xff]
    %v737 = vld [vmem:[#allocation2 + $0x13f8] sm:$0xff]
    %v738 = vld [vmem:[#allocation2 + $0x1400] sm:$0xff]
    %v739 = vld [vmem:[#allocation2 + $0x1408] sm:$0xff]
    %v740 = vld [vmem:[#allocation2 + $0x1410] sm:$0xff]
    %v741 = vld [vmem:[#allocation2 + $0x1418] sm:$0xff]
    %v742 = vld [vmem:[#allocation2 + $0x1420] sm:$0xff]
    %v743 = vld [vmem:[#allocation2 + $0x1428] sm:$0xff]
    %v744 = vld [vmem:[#allocation2 + $0x1430] sm:$0xff]
    %v745 = vld [vmem:[#allocation2 + $0x1438] sm:$0xff]
    %v746 = vld [vmem:[#allocation2 + $0x1440] sm:$0xff]
    %v747 = vld [vmem:[#allocation2 + $0x1448] sm:$0xff]
    %v748 = vld [vmem:[#allocation2 + $0x1450] sm:$0xff]
    %v749 = vld [vmem:[#allocation2 + $0x1458] sm:$0xff]
    %v750 = vld [vmem:[#allocation2 + $0x1460] sm:$0xff]
    %v751 = vld [vmem:[#allocation2 + $0x1468] sm:$0xff]
    %v752 = vld [vmem:[#allocation2 + $0x1470] sm:$0xff]
    %v753 = vld [vmem:[#allocation2 + $0x1478] sm:$0xff]
    %v754 = vld [vmem:[#allocation2 + $0x1480] sm:$0xff]
    %v755 = vld [vmem:[#allocation2 + $0x1488] sm:$0xff]
    %v756 = vld [vmem:[#allocation2 + $0x1490] sm:$0xff]
    %v757 = vld [vmem:[#allocation2 + $0x1498] sm:$0xff]
    %v758 = vld [vmem:[#allocation2 + $0x14a0] sm:$0xff]
    %v759 = vld [vmem:[#allocation2 + $0x14a8] sm:$0xff]
    %v760 = vld [vmem:[#allocation2 + $0x14b0] sm:$0xff]
    %v761 = vld [vmem:[#allocation2 + $0x14b8] sm:$0xff]
    %v762 = vld [vmem:[#allocation2 + $0x14c0] sm:$0xff]
    %v763 = vld [vmem:[#allocation2 + $0x14c8] sm:$0xff]
    %v764 = vld [vmem:[#allocation2 + $0x14d0] sm:$0xff]
    %v765 = vld [vmem:[#allocation2 + $0x14d8] sm:$0xff]
    %v766 = vld [vmem:[#allocation2 + $0x14e0] sm:$0xff]
    %v767 = vld [vmem:[#allocation2 + $0x14e8] sm:$0xff]
    %v768 = vld [vmem:[#allocation2 + $0x14f0] sm:$0xff]
    %v769 = vld [vmem:[#allocation2 + $0x14f8] sm:$0xff]
    %v770 = vld [vmem:[#allocation2 + $0x1500] sm:$0xff]
    %v771 = vld [vmem:[#allocation2 + $0x1508] sm:$0xff]
    %v772 = vld [vmem:[#allocation2 + $0x1510] sm:$0xff]
    %v773 = vld [vmem:[#allocation2 + $0x1518] sm:$0xff]
    %v774 = vld [vmem:[#allocation2 + $0x1520] sm:$0xff]
    %v775 = vld [vmem:[#allocation2 + $0x1528] sm:$0xff]
    %v776 = vld [vmem:[#allocation2 + $0x1530] sm:$0xff]
    %v777 = vld [vmem:[#allocation2 + $0x1538] sm:$0xff]
    %v778 = vld [vmem:[#allocation2 + $0x1540] sm:$0xff]
    %v779 = vld [vmem:[#allocation2 + $0x1548] sm:$0xff]
    %v780 = vld [vmem:[#allocation2 + $0x1550] sm:$0xff]
    %v781 = vld [vmem:[#allocation2 + $0x1558] sm:$0xff]
    %v782 = vld [vmem:[#allocation2 + $0x1560] sm:$0xff]
    %v783 = vld [vmem:[#allocation2 + $0x1568] sm:$0xff]
    %v784 = vld [vmem:[#allocation2 + $0x1570] sm:$0xff]
    %v785 = vld [vmem:[#allocation2 + $0x1578] sm:$0xff]
    %v786 = vld [vmem:[#allocation2 + $0x1580] sm:$0xff]
    %v787 = vld [vmem:[#allocation2 + $0x1588] sm:$0xff]
    %v788 = vld [vmem:[#allocation2 + $0x1590] sm:$0xff]
    %v789 = vld [vmem:[#allocation2 + $0x1598] sm:$0xff]
    %v790 = vld [vmem:[#allocation2 + $0x15a0] sm:$0xff]
    %v791 = vld [vmem:[#allocation2 + $0x15a8] sm:$0xff]
    %v792 = vld [vmem:[#allocation2 + $0x15b0] sm:$0xff]
    %v793 = vld [vmem:[#allocation2 + $0x15b8] sm:$0xff]
    %v794 = vld [vmem:[#allocation2 + $0x15c0] sm:$0xff]
    %v795 = vld [vmem:[#allocation2 + $0x15c8] sm:$0xff]
    %v796 = vld [vmem:[#allocation2 + $0x15d0] sm:$0xff]
    %v797 = vld [vmem:[#allocation2 + $0x15d8] sm:$0xff]
    %v798 = vld [vmem:[#allocation2 + $0x15e0] sm:$0xff]
    %v799 = vld [vmem:[#allocation2 + $0x15e8] sm:$0xff]
    %v800 = vld [vmem:[#allocation2 + $0x15f0] sm:$0xff]
    %v801 = vld [vmem:[#allocation2 + $0x15f8] sm:$0xff]
    %v802 = vld [vmem:[#allocation2 + $0x1600] sm:$0xff]
    %v803 = vld [vmem:[#allocation2 + $0x1608] sm:$0xff]
    %v804 = vld [vmem:[#allocation2 + $0x1610] sm:$0xff]
    %v805 = vld [vmem:[#allocation2 + $0x1618] sm:$0xff]
    %v806 = vld [vmem:[#allocation2 + $0x1620] sm:$0xff]
    %v807 = vld [vmem:[#allocation2 + $0x1628] sm:$0xff]
    %v808 = vld [vmem:[#allocation2 + $0x1630] sm:$0xff]
    %v809 = vld [vmem:[#allocation2 + $0x1638] sm:$0xff]
    %v810 = vld [vmem:[#allocation2 + $0x1640] sm:$0xff]
    %v811 = vld [vmem:[#allocation2 + $0x1648] sm:$0xff]
    %v812 = vld [vmem:[#allocation2 + $0x1650] sm:$0xff]
    %v813 = vld [vmem:[#allocation2 + $0x1658] sm:$0xff]
    %v814 = vld [vmem:[#allocation2 + $0x1660] sm:$0xff]
    %v815 = vld [vmem:[#allocation2 + $0x1668] sm:$0xff]
    %v816 = vld [vmem:[#allocation2 + $0x1670] sm:$0xff]
    %v817 = vld [vmem:[#allocation2 + $0x1678] sm:$0xff]
    %v818 = vld [vmem:[#allocation2 + $0x1680] sm:$0xff]
    %v819 = vld [vmem:[#allocation2 + $0x1688] sm:$0xff]
    %v820 = vld [vmem:[#allocation2 + $0x1690] sm:$0xff]
    %v821 = vld [vmem:[#allocation2 + $0x1698] sm:$0xff]
    %v822 = vld [vmem:[#allocation2 + $0x16a0] sm:$0xff]
    %v823 = vld [vmem:[#allocation2 + $0x16a8] sm:$0xff]
    %v824 = vld [vmem:[#allocation2 + $0x16b0] sm:$0xff]
    %v825 = vld [vmem:[#allocation2 + $0x16b8] sm:$0xff]
    %v826 = vld [vmem:[#allocation2 + $0x16c0] sm:$0xff]
    %v827 = vld [vmem:[#allocation2 + $0x16c8] sm:$0xff]
    %v828 = vld [vmem:[#allocation2 + $0x16d0] sm:$0xff]
    %v829 = vld [vmem:[#allocation2 + $0x16d8] sm:$0xff]
    %v830 = vld [vmem:[#allocation2 + $0x16e0] sm:$0xff]
    %v831 = vld [vmem:[#allocation2 + $0x16e8] sm:$0xff]
    %v832 = vld [vmem:[#allocation2 + $0x16f0] sm:$0xff]
    %v833 = vld [vmem:[#allocation2 + $0x16f8] sm:$0xff]
    %v834 = vld [vmem:[#allocation2 + $0x1700] sm:$0xff]
    %v835 = vld [vmem:[#allocation2 + $0x1708] sm:$0xff]
    %v836 = vld [vmem:[#allocation2 + $0x1710] sm:$0xff]
    %v837 = vld [vmem:[#allocation2 + $0x1718] sm:$0xff]
    %v838 = vld [vmem:[#allocation2 + $0x1720] sm:$0xff]
    %v839 = vld [vmem:[#allocation2 + $0x1728] sm:$0xff]
    %v840 = vld [vmem:[#allocation2 + $0x1730] sm:$0xff]
    %v841 = vld [vmem:[#allocation2 + $0x1738] sm:$0xff]
    %v842 = vld [vmem:[#allocation2 + $0x1740] sm:$0xff]
    %v843 = vld [vmem:[#allocation2 + $0x1748] sm:$0xff]
    %v844 = vld [vmem:[#allocation2 + $0x1750] sm:$0xff]
    %v845 = vld [vmem:[#allocation2 + $0x1758] sm:$0xff]
    %v846 = vld [vmem:[#allocation2 + $0x1760] sm:$0xff]
    %v847 = vld [vmem:[#allocation2 + $0x1768] sm:$0xff]
    %v848 = vld [vmem:[#allocation2 + $0x1770] sm:$0xff]
    %v849 = vld [vmem:[#allocation2 + $0x1778] sm:$0xff]
    %v850 = vld [vmem:[#allocation2 + $0x1780] sm:$0xff]
    %v851 = vld [vmem:[#allocation2 + $0x1788] sm:$0xff]
    %v852 = vld [vmem:[#allocation2 + $0x1790] sm:$0xff]
    %v853 = vld [vmem:[#allocation2 + $0x1798] sm:$0xff]
    %v854 = vld [vmem:[#allocation2 + $0x17a0] sm:$0xff]
    %v855 = vld [vmem:[#allocation2 + $0x17a8] sm:$0xff]
    %v856 = vld [vmem:[#allocation2 + $0x17b0] sm:$0xff]
    %v857 = vld [vmem:[#allocation2 + $0x17b8] sm:$0xff]
    %v858 = vld [vmem:[#allocation2 + $0x17c0] sm:$0xff]
    %v859 = vld [vmem:[#allocation2 + $0x17c8] sm:$0xff]
    %v860 = vld [vmem:[#allocation2 + $0x17d0] sm:$0xff]
    %v861 = vld [vmem:[#allocation2 + $0x17d8] sm:$0xff]
    %v862 = vld [vmem:[#allocation2 + $0x17e0] sm:$0xff]
    %v863 = vld [vmem:[#allocation2 + $0x17e8] sm:$0xff]
    %v864 = vld [vmem:[#allocation2 + $0x17f0] sm:$0xff]
    %v865 = vld [vmem:[#allocation2 + $0x17f8] sm:$0xff]
    %v866 = vld [vmem:[#allocation2 + $0x1800] sm:$0xff]
    %v867 = vld [vmem:[#allocation2 + $0x1808] sm:$0xff]
    %v868 = vld [vmem:[#allocation2 + $0x1810] sm:$0xff]
    %v869 = vld [vmem:[#allocation2 + $0x1818] sm:$0xff]
    %v870 = vld [vmem:[#allocation2 + $0x1820] sm:$0xff]
    %v871 = vld [vmem:[#allocation2 + $0x1828] sm:$0xff]
    %v872 = vld [vmem:[#allocation2 + $0x1830] sm:$0xff]
    %v873 = vld [vmem:[#allocation2 + $0x1838] sm:$0xff]
    %v874 = vld [vmem:[#allocation2 + $0x1840] sm:$0xff]
    %v875 = vld [vmem:[#allocation2 + $0x1848] sm:$0xff]
    %v876 = vld [vmem:[#allocation2 + $0x1850] sm:$0xff]
    %v877 = vld [vmem:[#allocation2 + $0x1858] sm:$0xff]
    %v878 = vld [vmem:[#allocation2 + $0x1860] sm:$0xff]
    %v879 = vld [vmem:[#allocation2 + $0x1868] sm:$0xff]
    %v880 = vld [vmem:[#allocation2 + $0x1870] sm:$0xff]
    %v881 = vld [vmem:[#allocation2 + $0x1878] sm:$0xff]
    %v882 = vld [vmem:[#allocation2 + $0x1880] sm:$0xff]
    %v883 = vld [vmem:[#allocation2 + $0x1888] sm:$0xff]
    %v884 = vld [vmem:[#allocation2 + $0x1890] sm:$0xff]
    %v885 = vld [vmem:[#allocation2 + $0x1898] sm:$0xff]
    %v886 = vld [vmem:[#allocation2 + $0x18a0] sm:$0xff]
    %v887 = vld [vmem:[#allocation2 + $0x18a8] sm:$0xff]
    %v888 = vld [vmem:[#allocation2 + $0x18b0] sm:$0xff]
    %v889 = vld [vmem:[#allocation2 + $0x18b8] sm:$0xff]
    %v890 = vld [vmem:[#allocation2 + $0x18c0] sm:$0xff]
    %v891 = vld [vmem:[#allocation2 + $0x18c8] sm:$0xff]
    %v892 = vld [vmem:[#allocation2 + $0x18d0] sm:$0xff]
    %v893 = vld [vmem:[#allocation2 + $0x18d8] sm:$0xff]
    %v894 = vld [vmem:[#allocation2 + $0x18e0] sm:$0xff]
    %v895 = vld [vmem:[#allocation2 + $0x18e8] sm:$0xff]
    %v896 = vld [vmem:[#allocation2 + $0x18f0] sm:$0xff]
    %v897 = vld [vmem:[#allocation2 + $0x18f8] sm:$0xff]
    %v898 = vld [vmem:[#allocation2 + $0x1900] sm:$0xff]
    %v899 = vld [vmem:[#allocation2 + $0x1908] sm:$0xff]
    %v900 = vld [vmem:[#allocation2 + $0x1910] sm:$0xff]
    %v901 = vld [vmem:[#allocation2 + $0x1918] sm:$0xff]
    %v902 = vld [vmem:[#allocation2 + $0x1920] sm:$0xff]
    %v903 = vld [vmem:[#allocation2 + $0x1928] sm:$0xff]
    %v904 = vld [vmem:[#allocation2 + $0x1930] sm:$0xff]
    %v905 = vld [vmem:[#allocation2 + $0x1938] sm:$0xff]
    %v906 = vld [vmem:[#allocation2 + $0x1940] sm:$0xff]
    %v907 = vld [vmem:[#allocation2 + $0x1948] sm:$0xff]
    %v908 = vld [vmem:[#allocation2 + $0x1950] sm:$0xff]
    %v909 = vld [vmem:[#allocation2 + $0x1958] sm:$0xff]
    %v910 = vld [vmem:[#allocation2 + $0x1960] sm:$0xff]
    %v911 = vld [vmem:[#allocation2 + $0x1968] sm:$0xff]
    %v912 = vld [vmem:[#allocation2 + $0x1970] sm:$0xff]
    %v913 = vld [vmem:[#allocation2 + $0x1978] sm:$0xff]
    %v914 = vld [vmem:[#allocation2 + $0x1980] sm:$0xff]
    %v915 = vld [vmem:[#allocation2 + $0x1988] sm:$0xff]
    %v916 = vld [vmem:[#allocation2 + $0x1990] sm:$0xff]
    %v917 = vld [vmem:[#allocation2 + $0x1998] sm:$0xff]
    %v918 = vld [vmem:[#allocation2 + $0x19a0] sm:$0xff]
    %v919 = vld [vmem:[#allocation2 + $0x19a8] sm:$0xff]
    %v920 = vld [vmem:[#allocation2 + $0x19b0] sm:$0xff]
    %v921 = vld [vmem:[#allocation2 + $0x19b8] sm:$0xff]
    %v922 = vld [vmem:[#allocation2 + $0x19c0] sm:$0xff]
    %v923 = vld [vmem:[#allocation2 + $0x19c8] sm:$0xff]
    %v924 = vld [vmem:[#allocation2 + $0x19d0] sm:$0xff]
    %v925 = vld [vmem:[#allocation2 + $0x19d8] sm:$0xff]
    %v926 = vld [vmem:[#allocation2 + $0x19e0] sm:$0xff]
    %v927 = vld [vmem:[#allocation2 + $0x19e8] sm:$0xff]
    %v928 = vld [vmem:[#allocation2 + $0x19f0] sm:$0xff]
    %v929 = vld [vmem:[#allocation2 + $0x19f8] sm:$0xff]
    %v930 = vld [vmem:[#allocation2 + $0x1a00] sm:$0xff]
    %v931 = vld [vmem:[#allocation2 + $0x1a08] sm:$0xff]
    %v932 = vld [vmem:[#allocation2 + $0x1a10] sm:$0xff]
    %v933 = vld [vmem:[#allocation2 + $0x1a18] sm:$0xff]
    %v934 = vld [vmem:[#allocation2 + $0x1a20] sm:$0xff]
    %v935 = vld [vmem:[#allocation2 + $0x1a28] sm:$0xff]
    %v936 = vld [vmem:[#allocation2 + $0x1a30] sm:$0xff]
    %v937 = vld [vmem:[#allocation2 + $0x1a38] sm:$0xff]
    %v938 = vld [vmem:[#allocation2 + $0x1a40] sm:$0xff]
    %v939 = vld [vmem:[#allocation2 + $0x1a48] sm:$0xff]
    %v940 = vld [vmem:[#allocation2 + $0x1a50] sm:$0xff]
    %v941 = vld [vmem:[#allocation2 + $0x1a58] sm:$0xff]
    %v942 = vld [vmem:[#allocation2 + $0x1a60] sm:$0xff]
    %v943 = vld [vmem:[#allocation2 + $0x1a68] sm:$0xff]
    %v944 = vld [vmem:[#allocation2 + $0x1a70] sm:$0xff]
    %v945 = vld [vmem:[#allocation2 + $0x1a78] sm:$0xff]
    %v946 = vld [vmem:[#allocation2 + $0x1a80] sm:$0xff]
    %v947 = vld [vmem:[#allocation2 + $0x1a88] sm:$0xff]
    %v948 = vld [vmem:[#allocation2 + $0x1a90] sm:$0xff]
    %v949 = vld [vmem:[#allocation2 + $0x1a98] sm:$0xff]
    %v950 = vld [vmem:[#allocation2 + $0x1aa0] sm:$0xff]
    %v951 = vld [vmem:[#allocation2 + $0x1aa8] sm:$0xff]
    %v952 = vld [vmem:[#allocation2 + $0x1ab0] sm:$0xff]
    %v953 = vld [vmem:[#allocation2 + $0x1ab8] sm:$0xff]
    %v954 = vld [vmem:[#allocation2 + $0x1ac0] sm:$0xff]
    %v955 = vld [vmem:[#allocation2 + $0x1ac8] sm:$0xff]
    %v956 = vld [vmem:[#allocation2 + $0x1ad0] sm:$0xff]
    %v957 = vld [vmem:[#allocation2 + $0x1ad8] sm:$0xff]
    %v958 = vld [vmem:[#allocation2 + $0x1ae0] sm:$0xff]
    %v959 = vld [vmem:[#allocation2 + $0x1ae8] sm:$0xff]
    %v960 = vld [vmem:[#allocation2 + $0x1af0] sm:$0xff]
    %v961 = vld [vmem:[#allocation2 + $0x1af8] sm:$0xff]
    %v962 = vld [vmem:[#allocation2 + $0x1b00] sm:$0xff]
    %v963 = vld [vmem:[#allocation2 + $0x1b08] sm:$0xff]
    %v964 = vld [vmem:[#allocation2 + $0x1b10] sm:$0xff]
    %v965 = vld [vmem:[#allocation2 + $0x1b18] sm:$0xff]
    %v966 = vld [vmem:[#allocation2 + $0x1b20] sm:$0xff]
    %v967 = vld [vmem:[#allocation2 + $0x1b28] sm:$0xff]
    %v968 = vld [vmem:[#allocation2 + $0x1b30] sm:$0xff]
    %v969 = vld [vmem:[#allocation2 + $0x1b38] sm:$0xff]
    %v970 = vld [vmem:[#allocation2 + $0x1b40] sm:$0xff]
    %v971 = vld [vmem:[#allocation2 + $0x1b48] sm:$0xff]
    %v972 = vld [vmem:[#allocation2 + $0x1b50] sm:$0xff]
    %v973 = vld [vmem:[#allocation2 + $0x1b58] sm:$0xff]
    %v974 = vld [vmem:[#allocation2 + $0x1b60] sm:$0xff]
    %v975 = vld [vmem:[#allocation2 + $0x1b68] sm:$0xff]
    %v976 = vld [vmem:[#allocation2 + $0x1b70] sm:$0xff]
    %v977 = vld [vmem:[#allocation2 + $0x1b78] sm:$0xff]
    %v978 = vld [vmem:[#allocation2 + $0x1b80] sm:$0xff]
    %v979 = vld [vmem:[#allocation2 + $0x1b88] sm:$0xff]
    %v980 = vld [vmem:[#allocation2 + $0x1b90] sm:$0xff]
    %v981 = vld [vmem:[#allocation2 + $0x1b98] sm:$0xff]
    %v982 = vld [vmem:[#allocation2 + $0x1ba0] sm:$0xff]
    %v983 = vld [vmem:[#allocation2 + $0x1ba8] sm:$0xff]
    %v984 = vld [vmem:[#allocation2 + $0x1bb0] sm:$0xff]
    %v985 = vld [vmem:[#allocation2 + $0x1bb8] sm:$0xff]
    %v986 = vld [vmem:[#allocation2 + $0x1bc0] sm:$0xff]
    %v987 = vld [vmem:[#allocation2 + $0x1bc8] sm:$0xff]
    %v988 = vld [vmem:[#allocation2 + $0x1bd0] sm:$0xff]
    %v989 = vld [vmem:[#allocation2 + $0x1bd8] sm:$0xff]
    %v990 = vld [vmem:[#allocation2 + $0x1be0] sm:$0xff]
    %v991 = vld [vmem:[#allocation2 + $0x1be8] sm:$0xff]
    %v992 = vld [vmem:[#allocation2 + $0x1bf0] sm:$0xff]
    %v993 = vld [vmem:[#allocation2 + $0x1bf8] sm:$0xff]
    %v994 = vld [vmem:[#allocation2 + $0x1c00] sm:$0xff]
    %v995 = vld [vmem:[#allocation2 + $0x1c08] sm:$0xff]
    %v996 = vld [vmem:[#allocation2 + $0x1c10] sm:$0xff]
    %v997 = vld [vmem:[#allocation2 + $0x1c18] sm:$0xff]
    %v998 = vld [vmem:[#allocation2 + $0x1c20] sm:$0xff]
    %v999 = vld [vmem:[#allocation2 + $0x1c28] sm:$0xff]
    %v1000 = vld [vmem:[#allocation2 + $0x1c30] sm:$0xff]
    %v1001 = vld [vmem:[#allocation2 + $0x1c38] sm:$0xff]
    %v1002 = vld [vmem:[#allocation2 + $0x1c40] sm:$0xff]
    %v1003 = vld [vmem:[#allocation2 + $0x1c48] sm:$0xff]
    %v1004 = vld [vmem:[#allocation2 + $0x1c50] sm:$0xff]
    %v1005 = vld [vmem:[#allocation2 + $0x1c58] sm:$0xff]
    %v1006 = vld [vmem:[#allocation2 + $0x1c60] sm:$0xff]
    %v1007 = vld [vmem:[#allocation2 + $0x1c68] sm:$0xff]
    %v1008 = vld [vmem:[#allocation2 + $0x1c70] sm:$0xff]
    %v1009 = vld [vmem:[#allocation2 + $0x1c78] sm:$0xff]
    %v1010 = vld [vmem:[#allocation2 + $0x1c80] sm:$0xff]
    %v1011 = vld [vmem:[#allocation2 + $0x1c88] sm:$0xff]
    %v1012 = vld [vmem:[#allocation2 + $0x1c90] sm:$0xff]
    %v1013 = vld [vmem:[#allocation2 + $0x1c98] sm:$0xff]
    %v1014 = vld [vmem:[#allocation2 + $0x1ca0] sm:$0xff]
    %v1015 = vld [vmem:[#allocation2 + $0x1ca8] sm:$0xff]
    %v1016 = vld [vmem:[#allocation2 + $0x1cb0] sm:$0xff]
    %v1017 = vld [vmem:[#allocation2 + $0x1cb8] sm:$0xff]
    %v1018 = vld [vmem:[#allocation2 + $0x1cc0] sm:$0xff]
    %v1019 = vld [vmem:[#allocation2 + $0x1cc8] sm:$0xff]
    %v1020 = vld [vmem:[#allocation2 + $0x1cd0] sm:$0xff]
    %v1021 = vld [vmem:[#allocation2 + $0x1cd8] sm:$0xff]
    %v1022 = vld [vmem:[#allocation2 + $0x1ce0] sm:$0xff]
    %v1023 = vld [vmem:[#allocation2 + $0x1ce8] sm:$0xff]
    %v1024 = vld [vmem:[#allocation2 + $0x1cf0] sm:$0xff]
    %v1025 = vld [vmem:[#allocation2 + $0x1cf8] sm:$0xff]
    %v1026 = vld [vmem:[#allocation2 + $0x1d00] sm:$0xff]
    %v1027 = vld [vmem:[#allocation2 + $0x1d08] sm:$0xff]
    %v1028 = vld [vmem:[#allocation2 + $0x1d10] sm:$0xff]
    %v1029 = vld [vmem:[#allocation2 + $0x1d18] sm:$0xff]
    %v1030 = vld [vmem:[#allocation2 + $0x1d20] sm:$0xff]
    %v1031 = vld [vmem:[#allocation2 + $0x1d28] sm:$0xff]
    %v1032 = vld [vmem:[#allocation2 + $0x1d30] sm:$0xff]
    %v1033 = vld [vmem:[#allocation2 + $0x1d38] sm:$0xff]
    %v1034 = vld [vmem:[#allocation2 + $0x1d40] sm:$0xff]
    %v1035 = vld [vmem:[#allocation2 + $0x1d48] sm:$0xff]
    %v1036 = vld [vmem:[#allocation2 + $0x1d50] sm:$0xff]
    %v1037 = vld [vmem:[#allocation2 + $0x1d58] sm:$0xff]
    %v1038 = vld [vmem:[#allocation2 + $0x1d60] sm:$0xff]
    %v1039 = vld [vmem:[#allocation2 + $0x1d68] sm:$0xff]
    %v1040 = vld [vmem:[#allocation2 + $0x1d70] sm:$0xff]
    %v1041 = vld [vmem:[#allocation2 + $0x1d78] sm:$0xff]
    %v1042 = vld [vmem:[#allocation2 + $0x1d80] sm:$0xff]
    %v1043 = vld [vmem:[#allocation2 + $0x1d88] sm:$0xff]
    %v1044 = vld [vmem:[#allocation2 + $0x1d90] sm:$0xff]
    %v1045 = vld [vmem:[#allocation2 + $0x1d98] sm:$0xff]
    %v1046 = vld [vmem:[#allocation2 + $0x1da0] sm:$0xff]
    %v1047 = vld [vmem:[#allocation2 + $0x1da8] sm:$0xff]
    %v1048 = vld [vmem:[#allocation2 + $0x1db0] sm:$0xff]
    %v1049 = vld [vmem:[#allocation2 + $0x1db8] sm:$0xff]
    %v1050 = vld [vmem:[#allocation2 + $0x1dc0] sm:$0xff]
    %v1051 = vld [vmem:[#allocation2 + $0x1dc8] sm:$0xff]
    %v1052 = vld [vmem:[#allocation2 + $0x1dd0] sm:$0xff]
    %v1053 = vld [vmem:[#allocation2 + $0x1dd8] sm:$0xff]
    %v1054 = vld [vmem:[#allocation2 + $0x1de0] sm:$0xff]
    %v1055 = vld [vmem:[#allocation2 + $0x1de8] sm:$0xff]
    %v1056 = vld [vmem:[#allocation2 + $0x1df0] sm:$0xff]
    %v1057 = vld [vmem:[#allocation2 + $0x1df8] sm:$0xff]
    %v1058 = vld [vmem:[#allocation2 + $0x1e00] sm:$0xff]
    %v1059 = vld [vmem:[#allocation2 + $0x1e08] sm:$0xff]
    %v1060 = vld [vmem:[#allocation2 + $0x1e10] sm:$0xff]
    %v1061 = vld [vmem:[#allocation2 + $0x1e18] sm:$0xff]
    %v1062 = vld [vmem:[#allocation2 + $0x1e20] sm:$0xff]
    %v1063 = vld [vmem:[#allocation2 + $0x1e28] sm:$0xff]
    %v1064 = vld [vmem:[#allocation2 + $0x1e30] sm:$0xff]
    %v1065 = vld [vmem:[#allocation2 + $0x1e38] sm:$0xff]
    %v1066 = vld [vmem:[#allocation2 + $0x1e40] sm:$0xff]
    %v1067 = vld [vmem:[#allocation2 + $0x1e48] sm:$0xff]
    %v1068 = vld [vmem:[#allocation2 + $0x1e50] sm:$0xff]
    %v1069 = vld [vmem:[#allocation2 + $0x1e58] sm:$0xff]
    %v1070 = vld [vmem:[#allocation2 + $0x1e60] sm:$0xff]
    %v1071 = vld [vmem:[#allocation2 + $0x1e68] sm:$0xff]
    %v1072 = vld [vmem:[#allocation2 + $0x1e70] sm:$0xff]
    %v1073 = vld [vmem:[#allocation2 + $0x1e78] sm:$0xff]
    %v1074 = vld [vmem:[#allocation2 + $0x1e80] sm:$0xff]
    %v1075 = vld [vmem:[#allocation2 + $0x1e88] sm:$0xff]
    %v1076 = vld [vmem:[#allocation2 + $0x1e90] sm:$0xff]
    %v1077 = vld [vmem:[#allocation2 + $0x1e98] sm:$0xff]
    %v1078 = vld [vmem:[#allocation2 + $0x1ea0] sm:$0xff]
    %v1079 = vld [vmem:[#allocation2 + $0x1ea8] sm:$0xff]
    %v1080 = vld [vmem:[#allocation2 + $0x1eb0] sm:$0xff]
    %v1081 = vld [vmem:[#allocation2 + $0x1eb8] sm:$0xff]
    %v1082 = vld [vmem:[#allocation2 + $0x1ec0] sm:$0xff]
    %v1083 = vld [vmem:[#allocation2 + $0x1ec8] sm:$0xff]
    %v1084 = vld [vmem:[#allocation2 + $0x1ed0] sm:$0xff]
    %v1085 = vld [vmem:[#allocation2 + $0x1ed8] sm:$0xff]
    %v1086 = vld [vmem:[#allocation2 + $0x1ee0] sm:$0xff]
    %v1087 = vld [vmem:[#allocation2 + $0x1ee8] sm:$0xff]
    %v1088 = vld [vmem:[#allocation2 + $0x1ef0] sm:$0xff]
    %v1089 = vld [vmem:[#allocation2 + $0x1ef8] sm:$0xff]
    %v1090 = vld [vmem:[#allocation2 + $0x1f00] sm:$0xff]
    %v1091 = vld [vmem:[#allocation2 + $0x1f08] sm:$0xff]
    %v1092 = vld [vmem:[#allocation2 + $0x1f10] sm:$0xff]
    %v1093 = vld [vmem:[#allocation2 + $0x1f18] sm:$0xff]
    %v1094 = vld [vmem:[#allocation2 + $0x1f20] sm:$0xff]
    %v1095 = vld [vmem:[#allocation2 + $0x1f28] sm:$0xff]
    %v1096 = vld [vmem:[#allocation2 + $0x1f30] sm:$0xff]
    %v1097 = vld [vmem:[#allocation2 + $0x1f38] sm:$0xff]
    %v1098 = vld [vmem:[#allocation2 + $0x1f40] sm:$0xff]
    %v1099 = vld [vmem:[#allocation2 + $0x1f48] sm:$0xff]
    %v1100 = vld [vmem:[#allocation2 + $0x1f50] sm:$0xff]
    %v1101 = vld [vmem:[#allocation2 + $0x1f58] sm:$0xff]
    %v1102 = vld [vmem:[#allocation2 + $0x1f60] sm:$0xff]
    %v1103 = vld [vmem:[#allocation2 + $0x1f68] sm:$0xff]
    %v1104 = vld [vmem:[#allocation2 + $0x1f70] sm:$0xff]
    %v1105 = vld [vmem:[#allocation2 + $0x1f78] sm:$0xff]
    %v1106 = vld [vmem:[#allocation2 + $0x1f80] sm:$0xff]
    %v1107 = vld [vmem:[#allocation2 + $0x1f88] sm:$0xff]
    %v1108 = vld [vmem:[#allocation2 + $0x1f90] sm:$0xff]
    %v1109 = vld [vmem:[#allocation2 + $0x1f98] sm:$0xff]
    %v1110 = vld [vmem:[#allocation2 + $0x1fa0] sm:$0xff]
    %v1111 = vld [vmem:[#allocation2 + $0x1fa8] sm:$0xff]
    %v1112 = vld [vmem:[#allocation2 + $0x1fb0] sm:$0xff]
    %v1113 = vld [vmem:[#allocation2 + $0x1fb8] sm:$0xff]
    %v1114 = vld [vmem:[#allocation2 + $0x1fc0] sm:$0xff]
    %v1115 = vld [vmem:[#allocation2 + $0x1fc8] sm:$0xff]
    %v1116 = vld [vmem:[#allocation2 + $0x1fd0] sm:$0xff]
    %v1117 = vld [vmem:[#allocation2 + $0x1fd8] sm:$0xff]
    %v1118 = vld [vmem:[#allocation2 + $0x1fe0] sm:$0xff]
    %v1119 = vld [vmem:[#allocation2 + $0x1fe8] sm:$0xff]
    %v1120 = vld [vmem:[#allocation2 + $0x1ff0] sm:$0xff]
    %v1121 = vld [vmem:[#allocation2 + $0x1ff8] sm:$0xff]
    %v1122 = vld [vmem:[#allocation4] sm:$0xff]
    %v1123 = vld [vmem:[#allocation4 + $0x8] sm:$0xff]
    %v1126 = vlaneseq
    %v1127 = vshrl.u32 %v1126, 7
    %v1128 = vsub.s32 0, %v1127
    %v1129 = vrot.slane %v1122, %v1128
    %v1130 = vlaneseq
    %v1131 = vshrl.u32 %v1130, 7
    %v1132 = vsub.s32 1, %v1131
    %v1133 = vrot.slane %v1122, %v1132
    %v1134 = vlaneseq
    %v1135 = vshrl.u32 %v1134, 7
    %v1136 = vsub.s32 2, %v1135
    %v1137 = vrot.slane %v1122, %v1136
    %v1138 = vlaneseq
    %v1139 = vshrl.u32 %v1138, 7
    %v1140 = vsub.s32 3, %v1139
    %v1141 = vrot.slane %v1122, %v1140
    %v1142 = vlaneseq
    %v1143 = vshrl.u32 %v1142, 7
    %v1144 = vsub.s32 4, %v1143
    %v1145 = vrot.slane %v1122, %v1144
    %v1146 = vlaneseq
    %v1147 = vshrl.u32 %v1146, 7
    %v1148 = vsub.s32 5, %v1147
    %v1149 = vrot.slane %v1122, %v1148
    %v1150 = vlaneseq
    %v1151 = vshrl.u32 %v1150, 7
    %v1152 = vsub.s32 6, %v1151
    %v1153 = vrot.slane %v1122, %v1152
    %v1154 = vlaneseq
    %v1155 = vshrl.u32 %v1154, 7
    %v1156 = vsub.s32 7, %v1155
    %v1157 = vrot.slane %v1122, %v1156
    %v1158 = vlaneseq
    %v1159 = vshrl.u32 %v1158, 7
    %v1160 = vsub.s32 0, %v1159
    %v1161 = vrot.slane %v1123, %v1160
    %v1162 = vlaneseq
    %v1163 = vshrl.u32 %v1162, 7
    %v1164 = vsub.s32 1, %v1163
    %v1165 = vrot.slane %v1123, %v1164
    %v1166 = vlaneseq
    %v1167 = vshrl.u32 %v1166, 7
    %v1168 = vsub.s32 2, %v1167
    %v1169 = vrot.slane %v1123, %v1168
    %v1170 = vlaneseq
    %v1171 = vshrl.u32 %v1170, 7
    %v1172 = vsub.s32 3, %v1171
    %v1173 = vrot.slane %v1123, %v1172
    %v1174 = vlaneseq
    %v1175 = vshrl.u32 %v1174, 7
    %v1176 = vsub.s32 4, %v1175
    %v1177 = vrot.slane %v1123, %v1176
    %v1178 = vlaneseq
    %v1179 = vshrl.u32 %v1178, 7
    %v1180 = vsub.s32 5, %v1179
    %v1181 = vrot.slane %v1123, %v1180
    %v1182 = vlaneseq
    %v1183 = vshrl.u32 %v1182, 7
    %v1184 = vsub.s32 6, %v1183
    %v1185 = vrot.slane %v1123, %v1184
    %v1186 = vlaneseq
    %v1187 = vshrl.u32 %v1186, 7
    %v1188 = vsub.s32 7, %v1187
    %v1189 = vrot.slane %v1123, %v1188
    %v1210 = vunpack.c.l.b16 %v94
    %v1211 = vunpack.c.h.b16 %v94
    %v1212 = vunpack.c.l.b16 %v95
    %v1213 = vunpack.c.h.b16 %v95
    %v1214 = vunpack.c.l.b16 %v96
    %v1215 = vunpack.c.h.b16 %v96
    %v1216 = vunpack.c.l.b16 %v97
    %v1217 = vunpack.c.h.b16 %v97
    %v1218 = vpack.c.b16 %v1210, %v1210
    %v1219 = vpack.c.b16 %v1211, %v1211
    %v1220 = vpack.c.b16 %v1212, %v1212
    %v1221 = vpack.c.b16 %v1213, %v1213
    %v1222 = vpack.c.b16 %v1214, %v1214
    %v1223 = vpack.c.b16 %v1215, %v1215
    %v1224 = vpack.c.b16 %v1216, %v1216
    %v1225 = vpack.c.b16 %v1217, %v1217
    %v2258 = vunpack.c.l.b16 %v98
    %v2259 = vunpack.c.h.b16 %v98
    %v2260 = vunpack.c.l.b16 %v99
    %v2261 = vunpack.c.h.b16 %v99
    %v2262 = vunpack.c.l.b16 %v100
    %v2263 = vunpack.c.h.b16 %v100
    %v2264 = vunpack.c.l.b16 %v101
    %v2265 = vunpack.c.h.b16 %v101
    %v2266 = vunpack.c.l.b16 %v102
    %v2267 = vunpack.c.h.b16 %v102
    %v2268 = vunpack.c.l.b16 %v103
    %v2269 = vunpack.c.h.b16 %v103
    %v2270 = vunpack.c.l.b16 %v104
    %v2271 = vunpack.c.h.b16 %v104
    %v2272 = vunpack.c.l.b16 %v105
    %v2273 = vunpack.c.h.b16 %v105
    %v2274 = vunpack.c.l.b16 %v106
    %v2275 = vunpack.c.h.b16 %v106
    %v2276 = vunpack.c.l.b16 %v107
    %v2277 = vunpack.c.h.b16 %v107
    %v2278 = vunpack.c.l.b16 %v108
    %v2279 = vunpack.c.h.b16 %v108
    %v2280 = vunpack.c.l.b16 %v109
    %v2281 = vunpack.c.h.b16 %v109
    %v2282 = vunpack.c.l.b16 %v110
    %v2283 = vunpack.c.h.b16 %v110
    %v2284 = vunpack.c.l.b16 %v111
    %v2285 = vunpack.c.h.b16 %v111
    %v2286 = vunpack.c.l.b16 %v112
    %v2287 = vunpack.c.h.b16 %v112
    %v2288 = vunpack.c.l.b16 %v113
    %v2289 = vunpack.c.h.b16 %v113
    %v2290 = vunpack.c.l.b16 %v114
    %v2291 = vunpack.c.h.b16 %v114
    %v2292 = vunpack.c.l.b16 %v115
    %v2293 = vunpack.c.h.b16 %v115
    %v2294 = vunpack.c.l.b16 %v116
    %v2295 = vunpack.c.h.b16 %v116
    %v2296 = vunpack.c.l.b16 %v117
    %v2297 = vunpack.c.h.b16 %v117
    %v2298 = vunpack.c.l.b16 %v118
    %v2299 = vunpack.c.h.b16 %v118
    %v2300 = vunpack.c.l.b16 %v119
    %v2301 = vunpack.c.h.b16 %v119
    %v2302 = vunpack.c.l.b16 %v120
    %v2303 = vunpack.c.h.b16 %v120
    %v2304 = vunpack.c.l.b16 %v121
    %v2305 = vunpack.c.h.b16 %v121
    %v2306 = vunpack.c.l.b16 %v122
    %v2307 = vunpack.c.h.b16 %v122
    %v2308 = vunpack.c.l.b16 %v123
    %v2309 = vunpack.c.h.b16 %v123
    %v2310 = vunpack.c.l.b16 %v124
    %v2311 = vunpack.c.h.b16 %v124
    %v2312 = vunpack.c.l.b16 %v125
    %v2313 = vunpack.c.h.b16 %v125
    %v2314 = vunpack.c.l.b16 %v126
    %v2315 = vunpack.c.h.b16 %v126
    %v2316 = vunpack.c.l.b16 %v127
    %v2317 = vunpack.c.h.b16 %v127
    %v2318 = vunpack.c.l.b16 %v128
    %v2319 = vunpack.c.h.b16 %v128
    %v2320 = vunpack.c.l.b16 %v129
    %v2321 = vunpack.c.h.b16 %v129
    %v2322 = vunpack.c.l.b16 %v130
    %v2323 = vunpack.c.h.b16 %v130
    %v2324 = vunpack.c.l.b16 %v131
    %v2325 = vunpack.c.h.b16 %v131
    %v2326 = vunpack.c.l.b16 %v132
    %v2327 = vunpack.c.h.b16 %v132
    %v2328 = vunpack.c.l.b16 %v133
    %v2329 = vunpack.c.h.b16 %v133
    %v2330 = vunpack.c.l.b16 %v134
    %v2331 = vunpack.c.h.b16 %v134
    %v2332 = vunpack.c.l.b16 %v135
    %v2333 = vunpack.c.h.b16 %v135
    %v2334 = vunpack.c.l.b16 %v136
    %v2335 = vunpack.c.h.b16 %v136
    %v2336 = vunpack.c.l.b16 %v137
    %v2337 = vunpack.c.h.b16 %v137
    %v2338 = vunpack.c.l.b16 %v138
    %v2339 = vunpack.c.h.b16 %v138
    %v2340 = vunpack.c.l.b16 %v139
    %v2341 = vunpack.c.h.b16 %v139
    %v2342 = vunpack.c.l.b16 %v140
    %v2343 = vunpack.c.h.b16 %v140
    %v2344 = vunpack.c.l.b16 %v141
    %v2345 = vunpack.c.h.b16 %v141
    %v2346 = vunpack.c.l.b16 %v142
    %v2347 = vunpack.c.h.b16 %v142
    %v2348 = vunpack.c.l.b16 %v143
    %v2349 = vunpack.c.h.b16 %v143
    %v2350 = vunpack.c.l.b16 %v144
    %v2351 = vunpack.c.h.b16 %v144
    %v2352 = vunpack.c.l.b16 %v145
    %v2353 = vunpack.c.h.b16 %v145
    %v2354 = vunpack.c.l.b16 %v146
    %v2355 = vunpack.c.h.b16 %v146
    %v2356 = vunpack.c.l.b16 %v147
    %v2357 = vunpack.c.h.b16 %v147
    %v2358 = vunpack.c.l.b16 %v148
    %v2359 = vunpack.c.h.b16 %v148
    %v2360 = vunpack.c.l.b16 %v149
    %v2361 = vunpack.c.h.b16 %v149
    %v2362 = vunpack.c.l.b16 %v150
    %v2363 = vunpack.c.h.b16 %v150
    %v2364 = vunpack.c.l.b16 %v151
    %v2365 = vunpack.c.h.b16 %v151
    %v2366 = vunpack.c.l.b16 %v152
    %v2367 = vunpack.c.h.b16 %v152
    %v2368 = vunpack.c.l.b16 %v153
    %v2369 = vunpack.c.h.b16 %v153
    %v2370 = vunpack.c.l.b16 %v154
    %v2371 = vunpack.c.h.b16 %v154
    %v2372 = vunpack.c.l.b16 %v155
    %v2373 = vunpack.c.h.b16 %v155
    %v2374 = vunpack.c.l.b16 %v156
    %v2375 = vunpack.c.h.b16 %v156
    %v2376 = vunpack.c.l.b16 %v157
    %v2377 = vunpack.c.h.b16 %v157
    %v2378 = vunpack.c.l.b16 %v158
    %v2379 = vunpack.c.h.b16 %v158
    %v2380 = vunpack.c.l.b16 %v159
    %v2381 = vunpack.c.h.b16 %v159
    %v2382 = vunpack.c.l.b16 %v160
    %v2383 = vunpack.c.h.b16 %v160
    %v2384 = vunpack.c.l.b16 %v161
    %v2385 = vunpack.c.h.b16 %v161
    %v2386 = vunpack.c.l.b16 %v162
    %v2387 = vunpack.c.h.b16 %v162
    %v2388 = vunpack.c.l.b16 %v163
    %v2389 = vunpack.c.h.b16 %v163
    %v2390 = vunpack.c.l.b16 %v164
    %v2391 = vunpack.c.h.b16 %v164
    %v2392 = vunpack.c.l.b16 %v165
    %v2393 = vunpack.c.h.b16 %v165
    %v2394 = vunpack.c.l.b16 %v166
    %v2395 = vunpack.c.h.b16 %v166
    %v2396 = vunpack.c.l.b16 %v167
    %v2397 = vunpack.c.h.b16 %v167
    %v2398 = vunpack.c.l.b16 %v168
    %v2399 = vunpack.c.h.b16 %v168
    %v2400 = vunpack.c.l.b16 %v169
    %v2401 = vunpack.c.h.b16 %v169
    %v2402 = vunpack.c.l.b16 %v170
    %v2403 = vunpack.c.h.b16 %v170
    %v2404 = vunpack.c.l.b16 %v171
    %v2405 = vunpack.c.h.b16 %v171
    %v2406 = vunpack.c.l.b16 %v172
    %v2407 = vunpack.c.h.b16 %v172
    %v2408 = vunpack.c.l.b16 %v173
    %v2409 = vunpack.c.h.b16 %v173
    %v2410 = vunpack.c.l.b16 %v174
    %v2411 = vunpack.c.h.b16 %v174
    %v2412 = vunpack.c.l.b16 %v175
    %v2413 = vunpack.c.h.b16 %v175
    %v2414 = vunpack.c.l.b16 %v176
    %v2415 = vunpack.c.h.b16 %v176
    %v2416 = vunpack.c.l.b16 %v177
    %v2417 = vunpack.c.h.b16 %v177
    %v2418 = vunpack.c.l.b16 %v178
    %v2419 = vunpack.c.h.b16 %v178
    %v2420 = vunpack.c.l.b16 %v179
    %v2421 = vunpack.c.h.b16 %v179
    %v2422 = vunpack.c.l.b16 %v180
    %v2423 = vunpack.c.h.b16 %v180
    %v2424 = vunpack.c.l.b16 %v181
    %v2425 = vunpack.c.h.b16 %v181
    %v2426 = vunpack.c.l.b16 %v182
    %v2427 = vunpack.c.h.b16 %v182
    %v2428 = vunpack.c.l.b16 %v183
    %v2429 = vunpack.c.h.b16 %v183
    %v2430 = vunpack.c.l.b16 %v184
    %v2431 = vunpack.c.h.b16 %v184
    %v2432 = vunpack.c.l.b16 %v185
    %v2433 = vunpack.c.h.b16 %v185
    %v2434 = vunpack.c.l.b16 %v186
    %v2435 = vunpack.c.h.b16 %v186
    %v2436 = vunpack.c.l.b16 %v187
    %v2437 = vunpack.c.h.b16 %v187
    %v2438 = vunpack.c.l.b16 %v188
    %v2439 = vunpack.c.h.b16 %v188
    %v2440 = vunpack.c.l.b16 %v189
    %v2441 = vunpack.c.h.b16 %v189
    %v2442 = vunpack.c.l.b16 %v190
    %v2443 = vunpack.c.h.b16 %v190
    %v2444 = vunpack.c.l.b16 %v191
    %v2445 = vunpack.c.h.b16 %v191
    %v2446 = vunpack.c.l.b16 %v192
    %v2447 = vunpack.c.h.b16 %v192
    %v2448 = vunpack.c.l.b16 %v193
    %v2449 = vunpack.c.h.b16 %v193
    %v2450 = vunpack.c.l.b16 %v194
    %v2451 = vunpack.c.h.b16 %v194
    %v2452 = vunpack.c.l.b16 %v195
    %v2453 = vunpack.c.h.b16 %v195
    %v2454 = vunpack.c.l.b16 %v196
    %v2455 = vunpack.c.h.b16 %v196
    %v2456 = vunpack.c.l.b16 %v197
    %v2457 = vunpack.c.h.b16 %v197
    %v2458 = vunpack.c.l.b16 %v198
    %v2459 = vunpack.c.h.b16 %v198
    %v2460 = vunpack.c.l.b16 %v199
    %v2461 = vunpack.c.h.b16 %v199
    %v2462 = vunpack.c.l.b16 %v200
    %v2463 = vunpack.c.h.b16 %v200
    %v2464 = vunpack.c.l.b16 %v201
    %v2465 = vunpack.c.h.b16 %v201
    %v2466 = vunpack.c.l.b16 %v202
    %v2467 = vunpack.c.h.b16 %v202
    %v2468 = vunpack.c.l.b16 %v203
    %v2469 = vunpack.c.h.b16 %v203
    %v2470 = vunpack.c.l.b16 %v204
    %v2471 = vunpack.c.h.b16 %v204
    %v2472 = vunpack.c.l.b16 %v205
    %v2473 = vunpack.c.h.b16 %v205
    %v2474 = vunpack.c.l.b16 %v206
    %v2475 = vunpack.c.h.b16 %v206
    %v2476 = vunpack.c.l.b16 %v207
    %v2477 = vunpack.c.h.b16 %v207
    %v2478 = vunpack.c.l.b16 %v208
    %v2479 = vunpack.c.h.b16 %v208
    %v2480 = vunpack.c.l.b16 %v209
    %v2481 = vunpack.c.h.b16 %v209
    %v2482 = vunpack.c.l.b16 %v210
    %v2483 = vunpack.c.h.b16 %v210
    %v2484 = vunpack.c.l.b16 %v211
    %v2485 = vunpack.c.h.b16 %v211
    %v2486 = vunpack.c.l.b16 %v212
    %v2487 = vunpack.c.h.b16 %v212
    %v2488 = vunpack.c.l.b16 %v213
    %v2489 = vunpack.c.h.b16 %v213
    %v2490 = vunpack.c.l.b16 %v214
    %v2491 = vunpack.c.h.b16 %v214
    %v2492 = vunpack.c.l.b16 %v215
    %v2493 = vunpack.c.h.b16 %v215
    %v2494 = vunpack.c.l.b16 %v216
    %v2495 = vunpack.c.h.b16 %v216
    %v2496 = vunpack.c.l.b16 %v217
    %v2497 = vunpack.c.h.b16 %v217
    %v2498 = vunpack.c.l.b16 %v218
    %v2499 = vunpack.c.h.b16 %v218
    %v2500 = vunpack.c.l.b16 %v219
    %v2501 = vunpack.c.h.b16 %v219
    %v2502 = vunpack.c.l.b16 %v220
    %v2503 = vunpack.c.h.b16 %v220
    %v2504 = vunpack.c.l.b16 %v221
    %v2505 = vunpack.c.h.b16 %v221
    %v2506 = vunpack.c.l.b16 %v222
    %v2507 = vunpack.c.h.b16 %v222
    %v2508 = vunpack.c.l.b16 %v223
    %v2509 = vunpack.c.h.b16 %v223
    %v2510 = vunpack.c.l.b16 %v224
    %v2511 = vunpack.c.h.b16 %v224
    %v2512 = vunpack.c.l.b16 %v225
    %v2513 = vunpack.c.h.b16 %v225
    %v2514 = vunpack.c.l.b16 %v226
    %v2515 = vunpack.c.h.b16 %v226
    %v2516 = vunpack.c.l.b16 %v227
    %v2517 = vunpack.c.h.b16 %v227
    %v2518 = vunpack.c.l.b16 %v228
    %v2519 = vunpack.c.h.b16 %v228
    %v2520 = vunpack.c.l.b16 %v229
    %v2521 = vunpack.c.h.b16 %v229
    %v2522 = vunpack.c.l.b16 %v230
    %v2523 = vunpack.c.h.b16 %v230
    %v2524 = vunpack.c.l.b16 %v231
    %v2525 = vunpack.c.h.b16 %v231
    %v2526 = vunpack.c.l.b16 %v232
    %v2527 = vunpack.c.h.b16 %v232
    %v2528 = vunpack.c.l.b16 %v233
    %v2529 = vunpack.c.h.b16 %v233
    %v2530 = vunpack.c.l.b16 %v234
    %v2531 = vunpack.c.h.b16 %v234
    %v2532 = vunpack.c.l.b16 %v235
    %v2533 = vunpack.c.h.b16 %v235
    %v2534 = vunpack.c.l.b16 %v236
    %v2535 = vunpack.c.h.b16 %v236
    %v2536 = vunpack.c.l.b16 %v237
    %v2537 = vunpack.c.h.b16 %v237
    %v2538 = vunpack.c.l.b16 %v238
    %v2539 = vunpack.c.h.b16 %v238
    %v2540 = vunpack.c.l.b16 %v239
    %v2541 = vunpack.c.h.b16 %v239
    %v2542 = vunpack.c.l.b16 %v240
    %v2543 = vunpack.c.h.b16 %v240
    %v2544 = vunpack.c.l.b16 %v241
    %v2545 = vunpack.c.h.b16 %v241
    %v2546 = vunpack.c.l.b16 %v242
    %v2547 = vunpack.c.h.b16 %v242
    %v2548 = vunpack.c.l.b16 %v243
    %v2549 = vunpack.c.h.b16 %v243
    %v2550 = vunpack.c.l.b16 %v244
    %v2551 = vunpack.c.h.b16 %v244
    %v2552 = vunpack.c.l.b16 %v245
    %v2553 = vunpack.c.h.b16 %v245
    %v2554 = vunpack.c.l.b16 %v246
    %v2555 = vunpack.c.h.b16 %v246
    %v2556 = vunpack.c.l.b16 %v247
    %v2557 = vunpack.c.h.b16 %v247
    %v2558 = vunpack.c.l.b16 %v248
    %v2559 = vunpack.c.h.b16 %v248
    %v2560 = vunpack.c.l.b16 %v249
    %v2561 = vunpack.c.h.b16 %v249
    %v2562 = vunpack.c.l.b16 %v250
    %v2563 = vunpack.c.h.b16 %v250
    %v2564 = vunpack.c.l.b16 %v251
    %v2565 = vunpack.c.h.b16 %v251
    %v2566 = vunpack.c.l.b16 %v252
    %v2567 = vunpack.c.h.b16 %v252
    %v2568 = vunpack.c.l.b16 %v253
    %v2569 = vunpack.c.h.b16 %v253
    %v2570 = vunpack.c.l.b16 %v254
    %v2571 = vunpack.c.h.b16 %v254
    %v2572 = vunpack.c.l.b16 %v255
    %v2573 = vunpack.c.h.b16 %v255
    %v2574 = vunpack.c.l.b16 %v256
    %v2575 = vunpack.c.h.b16 %v256
    %v2576 = vunpack.c.l.b16 %v257
    %v2577 = vunpack.c.h.b16 %v257
    %v2578 = vunpack.c.l.b16 %v258
    %v2579 = vunpack.c.h.b16 %v258
    %v2580 = vunpack.c.l.b16 %v259
    %v2581 = vunpack.c.h.b16 %v259
    %v2582 = vunpack.c.l.b16 %v260
    %v2583 = vunpack.c.h.b16 %v260
    %v2584 = vunpack.c.l.b16 %v261
    %v2585 = vunpack.c.h.b16 %v261
    %v2586 = vunpack.c.l.b16 %v262
    %v2587 = vunpack.c.h.b16 %v262
    %v2588 = vunpack.c.l.b16 %v263
    %v2589 = vunpack.c.h.b16 %v263
    %v2590 = vunpack.c.l.b16 %v264
    %v2591 = vunpack.c.h.b16 %v264
    %v2592 = vunpack.c.l.b16 %v265
    %v2593 = vunpack.c.h.b16 %v265
    %v2594 = vunpack.c.l.b16 %v266
    %v2595 = vunpack.c.h.b16 %v266
    %v2596 = vunpack.c.l.b16 %v267
    %v2597 = vunpack.c.h.b16 %v267
    %v2598 = vunpack.c.l.b16 %v268
    %v2599 = vunpack.c.h.b16 %v268
    %v2600 = vunpack.c.l.b16 %v269
    %v2601 = vunpack.c.h.b16 %v269
    %v2602 = vunpack.c.l.b16 %v270
    %v2603 = vunpack.c.h.b16 %v270
    %v2604 = vunpack.c.l.b16 %v271
    %v2605 = vunpack.c.h.b16 %v271
    %v2606 = vunpack.c.l.b16 %v272
    %v2607 = vunpack.c.h.b16 %v272
    %v2608 = vunpack.c.l.b16 %v273
    %v2609 = vunpack.c.h.b16 %v273
    %v2610 = vunpack.c.l.b16 %v274
    %v2611 = vunpack.c.h.b16 %v274
    %v2612 = vunpack.c.l.b16 %v275
    %v2613 = vunpack.c.h.b16 %v275
    %v2614 = vunpack.c.l.b16 %v276
    %v2615 = vunpack.c.h.b16 %v276
    %v2616 = vunpack.c.l.b16 %v277
    %v2617 = vunpack.c.h.b16 %v277
    %v2618 = vunpack.c.l.b16 %v278
    %v2619 = vunpack.c.h.b16 %v278
    %v2620 = vunpack.c.l.b16 %v279
    %v2621 = vunpack.c.h.b16 %v279
    %v2622 = vunpack.c.l.b16 %v280
    %v2623 = vunpack.c.h.b16 %v280
    %v2624 = vunpack.c.l.b16 %v281
    %v2625 = vunpack.c.h.b16 %v281
    %v2626 = vunpack.c.l.b16 %v282
    %v2627 = vunpack.c.h.b16 %v282
    %v2628 = vunpack.c.l.b16 %v283
    %v2629 = vunpack.c.h.b16 %v283
    %v2630 = vunpack.c.l.b16 %v284
    %v2631 = vunpack.c.h.b16 %v284
    %v2632 = vunpack.c.l.b16 %v285
    %v2633 = vunpack.c.h.b16 %v285
    %v2634 = vunpack.c.l.b16 %v286
    %v2635 = vunpack.c.h.b16 %v286
    %v2636 = vunpack.c.l.b16 %v287
    %v2637 = vunpack.c.h.b16 %v287
    %v2638 = vunpack.c.l.b16 %v288
    %v2639 = vunpack.c.h.b16 %v288
    %v2640 = vunpack.c.l.b16 %v289
    %v2641 = vunpack.c.h.b16 %v289
    %v2642 = vunpack.c.l.b16 %v290
    %v2643 = vunpack.c.h.b16 %v290
    %v2644 = vunpack.c.l.b16 %v291
    %v2645 = vunpack.c.h.b16 %v291
    %v2646 = vunpack.c.l.b16 %v292
    %v2647 = vunpack.c.h.b16 %v292
    %v2648 = vunpack.c.l.b16 %v293
    %v2649 = vunpack.c.h.b16 %v293
    %v2650 = vunpack.c.l.b16 %v294
    %v2651 = vunpack.c.h.b16 %v294
    %v2652 = vunpack.c.l.b16 %v295
    %v2653 = vunpack.c.h.b16 %v295
    %v2654 = vunpack.c.l.b16 %v296
    %v2655 = vunpack.c.h.b16 %v296
    %v2656 = vunpack.c.l.b16 %v297
    %v2657 = vunpack.c.h.b16 %v297
    %v2658 = vunpack.c.l.b16 %v298
    %v2659 = vunpack.c.h.b16 %v298
    %v2660 = vunpack.c.l.b16 %v299
    %v2661 = vunpack.c.h.b16 %v299
    %v2662 = vunpack.c.l.b16 %v300
    %v2663 = vunpack.c.h.b16 %v300
    %v2664 = vunpack.c.l.b16 %v301
    %v2665 = vunpack.c.h.b16 %v301
    %v2666 = vunpack.c.l.b16 %v302
    %v2667 = vunpack.c.h.b16 %v302
    %v2668 = vunpack.c.l.b16 %v303
    %v2669 = vunpack.c.h.b16 %v303
    %v2670 = vunpack.c.l.b16 %v304
    %v2671 = vunpack.c.h.b16 %v304
    %v2672 = vunpack.c.l.b16 %v305
    %v2673 = vunpack.c.h.b16 %v305
    %v2674 = vunpack.c.l.b16 %v306
    %v2675 = vunpack.c.h.b16 %v306
    %v2676 = vunpack.c.l.b16 %v307
    %v2677 = vunpack.c.h.b16 %v307
    %v2678 = vunpack.c.l.b16 %v308
    %v2679 = vunpack.c.h.b16 %v308
    %v2680 = vunpack.c.l.b16 %v309
    %v2681 = vunpack.c.h.b16 %v309
    %v2682 = vunpack.c.l.b16 %v310
    %v2683 = vunpack.c.h.b16 %v310
    %v2684 = vunpack.c.l.b16 %v311
    %v2685 = vunpack.c.h.b16 %v311
    %v2686 = vunpack.c.l.b16 %v312
    %v2687 = vunpack.c.h.b16 %v312
    %v2688 = vunpack.c.l.b16 %v313
    %v2689 = vunpack.c.h.b16 %v313
    %v2690 = vunpack.c.l.b16 %v314
    %v2691 = vunpack.c.h.b16 %v314
    %v2692 = vunpack.c.l.b16 %v315
    %v2693 = vunpack.c.h.b16 %v315
    %v2694 = vunpack.c.l.b16 %v316
    %v2695 = vunpack.c.h.b16 %v316
    %v2696 = vunpack.c.l.b16 %v317
    %v2697 = vunpack.c.h.b16 %v317
    %v2698 = vunpack.c.l.b16 %v318
    %v2699 = vunpack.c.h.b16 %v318
    %v2700 = vunpack.c.l.b16 %v319
    %v2701 = vunpack.c.h.b16 %v319
    %v2702 = vunpack.c.l.b16 %v320
    %v2703 = vunpack.c.h.b16 %v320
    %v2704 = vunpack.c.l.b16 %v321
    %v2705 = vunpack.c.h.b16 %v321
    %v2706 = vunpack.c.l.b16 %v322
    %v2707 = vunpack.c.h.b16 %v322
    %v2708 = vunpack.c.l.b16 %v323
    %v2709 = vunpack.c.h.b16 %v323
    %v2710 = vunpack.c.l.b16 %v324
    %v2711 = vunpack.c.h.b16 %v324
    %v2712 = vunpack.c.l.b16 %v325
    %v2713 = vunpack.c.h.b16 %v325
    %v2714 = vunpack.c.l.b16 %v326
    %v2715 = vunpack.c.h.b16 %v326
    %v2716 = vunpack.c.l.b16 %v327
    %v2717 = vunpack.c.h.b16 %v327
    %v2718 = vunpack.c.l.b16 %v328
    %v2719 = vunpack.c.h.b16 %v328
    %v2720 = vunpack.c.l.b16 %v329
    %v2721 = vunpack.c.h.b16 %v329
    %v2722 = vunpack.c.l.b16 %v330
    %v2723 = vunpack.c.h.b16 %v330
    %v2724 = vunpack.c.l.b16 %v331
    %v2725 = vunpack.c.h.b16 %v331
    %v2726 = vunpack.c.l.b16 %v332
    %v2727 = vunpack.c.h.b16 %v332
    %v2728 = vunpack.c.l.b16 %v333
    %v2729 = vunpack.c.h.b16 %v333
    %v2730 = vunpack.c.l.b16 %v334
    %v2731 = vunpack.c.h.b16 %v334
    %v2732 = vunpack.c.l.b16 %v335
    %v2733 = vunpack.c.h.b16 %v335
    %v2734 = vunpack.c.l.b16 %v336
    %v2735 = vunpack.c.h.b16 %v336
    %v2736 = vunpack.c.l.b16 %v337
    %v2737 = vunpack.c.h.b16 %v337
    %v2738 = vunpack.c.l.b16 %v338
    %v2739 = vunpack.c.h.b16 %v338
    %v2740 = vunpack.c.l.b16 %v339
    %v2741 = vunpack.c.h.b16 %v339
    %v2742 = vunpack.c.l.b16 %v340
    %v2743 = vunpack.c.h.b16 %v340
    %v2744 = vunpack.c.l.b16 %v341
    %v2745 = vunpack.c.h.b16 %v341
    %v2746 = vunpack.c.l.b16 %v342
    %v2747 = vunpack.c.h.b16 %v342
    %v2748 = vunpack.c.l.b16 %v343
    %v2749 = vunpack.c.h.b16 %v343
    %v2750 = vunpack.c.l.b16 %v344
    %v2751 = vunpack.c.h.b16 %v344
    %v2752 = vunpack.c.l.b16 %v345
    %v2753 = vunpack.c.h.b16 %v345
    %v2754 = vunpack.c.l.b16 %v346
    %v2755 = vunpack.c.h.b16 %v346
    %v2756 = vunpack.c.l.b16 %v347
    %v2757 = vunpack.c.h.b16 %v347
    %v2758 = vunpack.c.l.b16 %v348
    %v2759 = vunpack.c.h.b16 %v348
    %v2760 = vunpack.c.l.b16 %v349
    %v2761 = vunpack.c.h.b16 %v349
    %v2762 = vunpack.c.l.b16 %v350
    %v2763 = vunpack.c.h.b16 %v350
    %v2764 = vunpack.c.l.b16 %v351
    %v2765 = vunpack.c.h.b16 %v351
    %v2766 = vunpack.c.l.b16 %v352
    %v2767 = vunpack.c.h.b16 %v352
    %v2768 = vunpack.c.l.b16 %v353
    %v2769 = vunpack.c.h.b16 %v353
    %v2770 = vunpack.c.l.b16 %v354
    %v2771 = vunpack.c.h.b16 %v354
    %v2772 = vunpack.c.l.b16 %v355
    %v2773 = vunpack.c.h.b16 %v355
    %v2774 = vunpack.c.l.b16 %v356
    %v2775 = vunpack.c.h.b16 %v356
    %v2776 = vunpack.c.l.b16 %v357
    %v2777 = vunpack.c.h.b16 %v357
    %v2778 = vunpack.c.l.b16 %v358
    %v2779 = vunpack.c.h.b16 %v358
    %v2780 = vunpack.c.l.b16 %v359
    %v2781 = vunpack.c.h.b16 %v359
    %v2782 = vunpack.c.l.b16 %v360
    %v2783 = vunpack.c.h.b16 %v360
    %v2784 = vunpack.c.l.b16 %v361
    %v2785 = vunpack.c.h.b16 %v361
    %v2786 = vunpack.c.l.b16 %v362
    %v2787 = vunpack.c.h.b16 %v362
    %v2788 = vunpack.c.l.b16 %v363
    %v2789 = vunpack.c.h.b16 %v363
    %v2790 = vunpack.c.l.b16 %v364
    %v2791 = vunpack.c.h.b16 %v364
    %v2792 = vunpack.c.l.b16 %v365
    %v2793 = vunpack.c.h.b16 %v365
    %v2794 = vunpack.c.l.b16 %v366
    %v2795 = vunpack.c.h.b16 %v366
    %v2796 = vunpack.c.l.b16 %v367
    %v2797 = vunpack.c.h.b16 %v367
    %v2798 = vunpack.c.l.b16 %v368
    %v2799 = vunpack.c.h.b16 %v368
    %v2800 = vunpack.c.l.b16 %v369
    %v2801 = vunpack.c.h.b16 %v369
    %v2802 = vunpack.c.l.b16 %v370
    %v2803 = vunpack.c.h.b16 %v370
    %v2804 = vunpack.c.l.b16 %v371
    %v2805 = vunpack.c.h.b16 %v371
    %v2806 = vunpack.c.l.b16 %v372
    %v2807 = vunpack.c.h.b16 %v372
    %v2808 = vunpack.c.l.b16 %v373
    %v2809 = vunpack.c.h.b16 %v373
    %v2810 = vunpack.c.l.b16 %v374
    %v2811 = vunpack.c.h.b16 %v374
    %v2812 = vunpack.c.l.b16 %v375
    %v2813 = vunpack.c.h.b16 %v375
    %v2814 = vunpack.c.l.b16 %v376
    %v2815 = vunpack.c.h.b16 %v376
    %v2816 = vunpack.c.l.b16 %v377
    %v2817 = vunpack.c.h.b16 %v377
    %v2818 = vunpack.c.l.b16 %v378
    %v2819 = vunpack.c.h.b16 %v378
    %v2820 = vunpack.c.l.b16 %v379
    %v2821 = vunpack.c.h.b16 %v379
    %v2822 = vunpack.c.l.b16 %v380
    %v2823 = vunpack.c.h.b16 %v380
    %v2824 = vunpack.c.l.b16 %v381
    %v2825 = vunpack.c.h.b16 %v381
    %v2826 = vunpack.c.l.b16 %v382
    %v2827 = vunpack.c.h.b16 %v382
    %v2828 = vunpack.c.l.b16 %v383
    %v2829 = vunpack.c.h.b16 %v383
    %v2830 = vunpack.c.l.b16 %v384
    %v2831 = vunpack.c.h.b16 %v384
    %v2832 = vunpack.c.l.b16 %v385
    %v2833 = vunpack.c.h.b16 %v385
    %v2834 = vunpack.c.l.b16 %v386
    %v2835 = vunpack.c.h.b16 %v386
    %v2836 = vunpack.c.l.b16 %v387
    %v2837 = vunpack.c.h.b16 %v387
    %v2838 = vunpack.c.l.b16 %v388
    %v2839 = vunpack.c.h.b16 %v388
    %v2840 = vunpack.c.l.b16 %v389
    %v2841 = vunpack.c.h.b16 %v389
    %v2842 = vunpack.c.l.b16 %v390
    %v2843 = vunpack.c.h.b16 %v390
    %v2844 = vunpack.c.l.b16 %v391
    %v2845 = vunpack.c.h.b16 %v391
    %v2846 = vunpack.c.l.b16 %v392
    %v2847 = vunpack.c.h.b16 %v392
    %v2848 = vunpack.c.l.b16 %v393
    %v2849 = vunpack.c.h.b16 %v393
    %v2850 = vunpack.c.l.b16 %v394
    %v2851 = vunpack.c.h.b16 %v394
    %v2852 = vunpack.c.l.b16 %v395
    %v2853 = vunpack.c.h.b16 %v395
    %v2854 = vunpack.c.l.b16 %v396
    %v2855 = vunpack.c.h.b16 %v396
    %v2856 = vunpack.c.l.b16 %v397
    %v2857 = vunpack.c.h.b16 %v397
    %v2858 = vunpack.c.l.b16 %v398
    %v2859 = vunpack.c.h.b16 %v398
    %v2860 = vunpack.c.l.b16 %v399
    %v2861 = vunpack.c.h.b16 %v399
    %v2862 = vunpack.c.l.b16 %v400
    %v2863 = vunpack.c.h.b16 %v400
    %v2864 = vunpack.c.l.b16 %v401
    %v2865 = vunpack.c.h.b16 %v401
    %v2866 = vunpack.c.l.b16 %v402
    %v2867 = vunpack.c.h.b16 %v402
    %v2868 = vunpack.c.l.b16 %v403
    %v2869 = vunpack.c.h.b16 %v403
    %v2870 = vunpack.c.l.b16 %v404
    %v2871 = vunpack.c.h.b16 %v404
    %v2872 = vunpack.c.l.b16 %v405
    %v2873 = vunpack.c.h.b16 %v405
    %v2874 = vunpack.c.l.b16 %v406
    %v2875 = vunpack.c.h.b16 %v406
    %v2876 = vunpack.c.l.b16 %v407
    %v2877 = vunpack.c.h.b16 %v407
    %v2878 = vunpack.c.l.b16 %v408
    %v2879 = vunpack.c.h.b16 %v408
    %v2880 = vunpack.c.l.b16 %v409
    %v2881 = vunpack.c.h.b16 %v409
    %v2882 = vunpack.c.l.b16 %v410
    %v2883 = vunpack.c.h.b16 %v410
    %v2884 = vunpack.c.l.b16 %v411
    %v2885 = vunpack.c.h.b16 %v411
    %v2886 = vunpack.c.l.b16 %v412
    %v2887 = vunpack.c.h.b16 %v412
    %v2888 = vunpack.c.l.b16 %v413
    %v2889 = vunpack.c.h.b16 %v413
    %v2890 = vunpack.c.l.b16 %v414
    %v2891 = vunpack.c.h.b16 %v414
    %v2892 = vunpack.c.l.b16 %v415
    %v2893 = vunpack.c.h.b16 %v415
    %v2894 = vunpack.c.l.b16 %v416
    %v2895 = vunpack.c.h.b16 %v416
    %v2896 = vunpack.c.l.b16 %v417
    %v2897 = vunpack.c.h.b16 %v417
    %v2898 = vunpack.c.l.b16 %v418
    %v2899 = vunpack.c.h.b16 %v418
    %v2900 = vunpack.c.l.b16 %v419
    %v2901 = vunpack.c.h.b16 %v419
    %v2902 = vunpack.c.l.b16 %v420
    %v2903 = vunpack.c.h.b16 %v420
    %v2904 = vunpack.c.l.b16 %v421
    %v2905 = vunpack.c.h.b16 %v421
    %v2906 = vunpack.c.l.b16 %v422
    %v2907 = vunpack.c.h.b16 %v422
    %v2908 = vunpack.c.l.b16 %v423
    %v2909 = vunpack.c.h.b16 %v423
    %v2910 = vunpack.c.l.b16 %v424
    %v2911 = vunpack.c.h.b16 %v424
    %v2912 = vunpack.c.l.b16 %v425
    %v2913 = vunpack.c.h.b16 %v425
    %v2914 = vunpack.c.l.b16 %v426
    %v2915 = vunpack.c.h.b16 %v426
    %v2916 = vunpack.c.l.b16 %v427
    %v2917 = vunpack.c.h.b16 %v427
    %v2918 = vunpack.c.l.b16 %v428
    %v2919 = vunpack.c.h.b16 %v428
    %v2920 = vunpack.c.l.b16 %v429
    %v2921 = vunpack.c.h.b16 %v429
    %v2922 = vunpack.c.l.b16 %v430
    %v2923 = vunpack.c.h.b16 %v430
    %v2924 = vunpack.c.l.b16 %v431
    %v2925 = vunpack.c.h.b16 %v431
    %v2926 = vunpack.c.l.b16 %v432
    %v2927 = vunpack.c.h.b16 %v432
    %v2928 = vunpack.c.l.b16 %v433
    %v2929 = vunpack.c.h.b16 %v433
    %v2930 = vunpack.c.l.b16 %v434
    %v2931 = vunpack.c.h.b16 %v434
    %v2932 = vunpack.c.l.b16 %v435
    %v2933 = vunpack.c.h.b16 %v435
    %v2934 = vunpack.c.l.b16 %v436
    %v2935 = vunpack.c.h.b16 %v436
    %v2936 = vunpack.c.l.b16 %v437
    %v2937 = vunpack.c.h.b16 %v437
    %v2938 = vunpack.c.l.b16 %v438
    %v2939 = vunpack.c.h.b16 %v438
    %v2940 = vunpack.c.l.b16 %v439
    %v2941 = vunpack.c.h.b16 %v439
    %v2942 = vunpack.c.l.b16 %v440
    %v2943 = vunpack.c.h.b16 %v440
    %v2944 = vunpack.c.l.b16 %v441
    %v2945 = vunpack.c.h.b16 %v441
    %v2946 = vunpack.c.l.b16 %v442
    %v2947 = vunpack.c.h.b16 %v442
    %v2948 = vunpack.c.l.b16 %v443
    %v2949 = vunpack.c.h.b16 %v443
    %v2950 = vunpack.c.l.b16 %v444
    %v2951 = vunpack.c.h.b16 %v444
    %v2952 = vunpack.c.l.b16 %v445
    %v2953 = vunpack.c.h.b16 %v445
    %v2954 = vunpack.c.l.b16 %v446
    %v2955 = vunpack.c.h.b16 %v446
    %v2956 = vunpack.c.l.b16 %v447
    %v2957 = vunpack.c.h.b16 %v447
    %v2958 = vunpack.c.l.b16 %v448
    %v2959 = vunpack.c.h.b16 %v448
    %v2960 = vunpack.c.l.b16 %v449
    %v2961 = vunpack.c.h.b16 %v449
    %v2962 = vunpack.c.l.b16 %v450
    %v2963 = vunpack.c.h.b16 %v450
    %v2964 = vunpack.c.l.b16 %v451
    %v2965 = vunpack.c.h.b16 %v451
    %v2966 = vunpack.c.l.b16 %v452
    %v2967 = vunpack.c.h.b16 %v452
    %v2968 = vunpack.c.l.b16 %v453
    %v2969 = vunpack.c.h.b16 %v453
    %v2970 = vunpack.c.l.b16 %v454
    %v2971 = vunpack.c.h.b16 %v454
    %v2972 = vunpack.c.l.b16 %v455
    %v2973 = vunpack.c.h.b16 %v455
    %v2974 = vunpack.c.l.b16 %v456
    %v2975 = vunpack.c.h.b16 %v456
    %v2976 = vunpack.c.l.b16 %v457
    %v2977 = vunpack.c.h.b16 %v457
    %v2978 = vunpack.c.l.b16 %v458
    %v2979 = vunpack.c.h.b16 %v458
    %v2980 = vunpack.c.l.b16 %v459
    %v2981 = vunpack.c.h.b16 %v459
    %v2982 = vunpack.c.l.b16 %v460
    %v2983 = vunpack.c.h.b16 %v460
    %v2984 = vunpack.c.l.b16 %v461
    %v2985 = vunpack.c.h.b16 %v461
    %v2986 = vunpack.c.l.b16 %v462
    %v2987 = vunpack.c.h.b16 %v462
    %v2988 = vunpack.c.l.b16 %v463
    %v2989 = vunpack.c.h.b16 %v463
    %v2990 = vunpack.c.l.b16 %v464
    %v2991 = vunpack.c.h.b16 %v464
    %v2992 = vunpack.c.l.b16 %v465
    %v2993 = vunpack.c.h.b16 %v465
    %v2994 = vunpack.c.l.b16 %v466
    %v2995 = vunpack.c.h.b16 %v466
    %v2996 = vunpack.c.l.b16 %v467
    %v2997 = vunpack.c.h.b16 %v467
    %v2998 = vunpack.c.l.b16 %v468
    %v2999 = vunpack.c.h.b16 %v468
    %v3000 = vunpack.c.l.b16 %v469
    %v3001 = vunpack.c.h.b16 %v469
    %v3002 = vunpack.c.l.b16 %v470
    %v3003 = vunpack.c.h.b16 %v470
    %v3004 = vunpack.c.l.b16 %v471
    %v3005 = vunpack.c.h.b16 %v471
    %v3006 = vunpack.c.l.b16 %v472
    %v3007 = vunpack.c.h.b16 %v472
    %v3008 = vunpack.c.l.b16 %v473
    %v3009 = vunpack.c.h.b16 %v473
    %v3010 = vunpack.c.l.b16 %v474
    %v3011 = vunpack.c.h.b16 %v474
    %v3012 = vunpack.c.l.b16 %v475
    %v3013 = vunpack.c.h.b16 %v475
    %v3014 = vunpack.c.l.b16 %v476
    %v3015 = vunpack.c.h.b16 %v476
    %v3016 = vunpack.c.l.b16 %v477
    %v3017 = vunpack.c.h.b16 %v477
    %v3018 = vunpack.c.l.b16 %v478
    %v3019 = vunpack.c.h.b16 %v478
    %v3020 = vunpack.c.l.b16 %v479
    %v3021 = vunpack.c.h.b16 %v479
    %v3022 = vunpack.c.l.b16 %v480
    %v3023 = vunpack.c.h.b16 %v480
    %v3024 = vunpack.c.l.b16 %v481
    %v3025 = vunpack.c.h.b16 %v481
    %v3026 = vunpack.c.l.b16 %v482
    %v3027 = vunpack.c.h.b16 %v482
    %v3028 = vunpack.c.l.b16 %v483
    %v3029 = vunpack.c.h.b16 %v483
    %v3030 = vunpack.c.l.b16 %v484
    %v3031 = vunpack.c.h.b16 %v484
    %v3032 = vunpack.c.l.b16 %v485
    %v3033 = vunpack.c.h.b16 %v485
    %v3034 = vunpack.c.l.b16 %v486
    %v3035 = vunpack.c.h.b16 %v486
    %v3036 = vunpack.c.l.b16 %v487
    %v3037 = vunpack.c.h.b16 %v487
    %v3038 = vunpack.c.l.b16 %v488
    %v3039 = vunpack.c.h.b16 %v488
    %v3040 = vunpack.c.l.b16 %v489
    %v3041 = vunpack.c.h.b16 %v489
    %v3042 = vunpack.c.l.b16 %v490
    %v3043 = vunpack.c.h.b16 %v490
    %v3044 = vunpack.c.l.b16 %v491
    %v3045 = vunpack.c.h.b16 %v491
    %v3046 = vunpack.c.l.b16 %v492
    %v3047 = vunpack.c.h.b16 %v492
    %v3048 = vunpack.c.l.b16 %v493
    %v3049 = vunpack.c.h.b16 %v493
    %v3050 = vunpack.c.l.b16 %v494
    %v3051 = vunpack.c.h.b16 %v494
    %v3052 = vunpack.c.l.b16 %v495
    %v3053 = vunpack.c.h.b16 %v495
    %v3054 = vunpack.c.l.b16 %v496
    %v3055 = vunpack.c.h.b16 %v496
    %v3056 = vunpack.c.l.b16 %v497
    %v3057 = vunpack.c.h.b16 %v497
    %v3058 = vunpack.c.l.b16 %v498
    %v3059 = vunpack.c.h.b16 %v498
    %v3060 = vunpack.c.l.b16 %v499
    %v3061 = vunpack.c.h.b16 %v499
    %v3062 = vunpack.c.l.b16 %v500
    %v3063 = vunpack.c.h.b16 %v500
    %v3064 = vunpack.c.l.b16 %v501
    %v3065 = vunpack.c.h.b16 %v501
    %v3066 = vunpack.c.l.b16 %v502
    %v3067 = vunpack.c.h.b16 %v502
    %v3068 = vunpack.c.l.b16 %v503
    %v3069 = vunpack.c.h.b16 %v503
    %v3070 = vunpack.c.l.b16 %v504
    %v3071 = vunpack.c.h.b16 %v504
    %v3072 = vunpack.c.l.b16 %v505
    %v3073 = vunpack.c.h.b16 %v505
    %v3074 = vunpack.c.l.b16 %v506
    %v3075 = vunpack.c.h.b16 %v506
    %v3076 = vunpack.c.l.b16 %v507
    %v3077 = vunpack.c.h.b16 %v507
    %v3078 = vunpack.c.l.b16 %v508
    %v3079 = vunpack.c.h.b16 %v508
    %v3080 = vunpack.c.l.b16 %v509
    %v3081 = vunpack.c.h.b16 %v509
    %v3082 = vunpack.c.l.b16 %v510
    %v3083 = vunpack.c.h.b16 %v510
    %v3084 = vunpack.c.l.b16 %v511
    %v3085 = vunpack.c.h.b16 %v511
    %v3086 = vunpack.c.l.b16 %v512
    %v3087 = vunpack.c.h.b16 %v512
    %v3088 = vunpack.c.l.b16 %v513
    %v3089 = vunpack.c.h.b16 %v513
    %v3090 = vunpack.c.l.b16 %v514
    %v3091 = vunpack.c.h.b16 %v514
    %v3092 = vunpack.c.l.b16 %v515
    %v3093 = vunpack.c.h.b16 %v515
    %v3094 = vunpack.c.l.b16 %v516
    %v3095 = vunpack.c.h.b16 %v516
    %v3096 = vunpack.c.l.b16 %v517
    %v3097 = vunpack.c.h.b16 %v517
    %v3098 = vunpack.c.l.b16 %v518
    %v3099 = vunpack.c.h.b16 %v518
    %v3100 = vunpack.c.l.b16 %v519
    %v3101 = vunpack.c.h.b16 %v519
    %v3102 = vunpack.c.l.b16 %v520
    %v3103 = vunpack.c.h.b16 %v520
    %v3104 = vunpack.c.l.b16 %v521
    %v3105 = vunpack.c.h.b16 %v521
    %v3106 = vunpack.c.l.b16 %v522
    %v3107 = vunpack.c.h.b16 %v522
    %v3108 = vunpack.c.l.b16 %v523
    %v3109 = vunpack.c.h.b16 %v523
    %v3110 = vunpack.c.l.b16 %v524
    %v3111 = vunpack.c.h.b16 %v524
    %v3112 = vunpack.c.l.b16 %v525
    %v3113 = vunpack.c.h.b16 %v525
    %v3114 = vunpack.c.l.b16 %v526
    %v3115 = vunpack.c.h.b16 %v526
    %v3116 = vunpack.c.l.b16 %v527
    %v3117 = vunpack.c.h.b16 %v527
    %v3118 = vunpack.c.l.b16 %v528
    %v3119 = vunpack.c.h.b16 %v528
    %v3120 = vunpack.c.l.b16 %v529
    %v3121 = vunpack.c.h.b16 %v529
    %v3122 = vunpack.c.l.b16 %v530
    %v3123 = vunpack.c.h.b16 %v530
    %v3124 = vunpack.c.l.b16 %v531
    %v3125 = vunpack.c.h.b16 %v531
    %v3126 = vunpack.c.l.b16 %v532
    %v3127 = vunpack.c.h.b16 %v532
    %v3128 = vunpack.c.l.b16 %v533
    %v3129 = vunpack.c.h.b16 %v533
    %v3130 = vunpack.c.l.b16 %v534
    %v3131 = vunpack.c.h.b16 %v534
    %v3132 = vunpack.c.l.b16 %v535
    %v3133 = vunpack.c.h.b16 %v535
    %v3134 = vunpack.c.l.b16 %v536
    %v3135 = vunpack.c.h.b16 %v536
    %v3136 = vunpack.c.l.b16 %v537
    %v3137 = vunpack.c.h.b16 %v537
    %v3138 = vunpack.c.l.b16 %v538
    %v3139 = vunpack.c.h.b16 %v538
    %v3140 = vunpack.c.l.b16 %v539
    %v3141 = vunpack.c.h.b16 %v539
    %v3142 = vunpack.c.l.b16 %v540
    %v3143 = vunpack.c.h.b16 %v540
    %v3144 = vunpack.c.l.b16 %v541
    %v3145 = vunpack.c.h.b16 %v541
    %v3146 = vunpack.c.l.b16 %v542
    %v3147 = vunpack.c.h.b16 %v542
    %v3148 = vunpack.c.l.b16 %v543
    %v3149 = vunpack.c.h.b16 %v543
    %v3150 = vunpack.c.l.b16 %v544
    %v3151 = vunpack.c.h.b16 %v544
    %v3152 = vunpack.c.l.b16 %v545
    %v3153 = vunpack.c.h.b16 %v545
    %v3154 = vunpack.c.l.b16 %v546
    %v3155 = vunpack.c.h.b16 %v546
    %v3156 = vunpack.c.l.b16 %v547
    %v3157 = vunpack.c.h.b16 %v547
    %v3158 = vunpack.c.l.b16 %v548
    %v3159 = vunpack.c.h.b16 %v548
    %v3160 = vunpack.c.l.b16 %v549
    %v3161 = vunpack.c.h.b16 %v549
    %v3162 = vunpack.c.l.b16 %v550
    %v3163 = vunpack.c.h.b16 %v550
    %v3164 = vunpack.c.l.b16 %v551
    %v3165 = vunpack.c.h.b16 %v551
    %v3166 = vunpack.c.l.b16 %v552
    %v3167 = vunpack.c.h.b16 %v552
    %v3168 = vunpack.c.l.b16 %v553
    %v3169 = vunpack.c.h.b16 %v553
    %v3170 = vunpack.c.l.b16 %v554
    %v3171 = vunpack.c.h.b16 %v554
    %v3172 = vunpack.c.l.b16 %v555
    %v3173 = vunpack.c.h.b16 %v555
    %v3174 = vunpack.c.l.b16 %v556
    %v3175 = vunpack.c.h.b16 %v556
    %v3176 = vunpack.c.l.b16 %v557
    %v3177 = vunpack.c.h.b16 %v557
    %v3178 = vunpack.c.l.b16 %v558
    %v3179 = vunpack.c.h.b16 %v558
    %v3180 = vunpack.c.l.b16 %v559
    %v3181 = vunpack.c.h.b16 %v559
    %v3182 = vunpack.c.l.b16 %v560
    %v3183 = vunpack.c.h.b16 %v560
    %v3184 = vunpack.c.l.b16 %v561
    %v3185 = vunpack.c.h.b16 %v561
    %v3186 = vunpack.c.l.b16 %v562
    %v3187 = vunpack.c.h.b16 %v562
    %v3188 = vunpack.c.l.b16 %v563
    %v3189 = vunpack.c.h.b16 %v563
    %v3190 = vunpack.c.l.b16 %v564
    %v3191 = vunpack.c.h.b16 %v564
    %v3192 = vunpack.c.l.b16 %v565
    %v3193 = vunpack.c.h.b16 %v565
    %v3194 = vunpack.c.l.b16 %v566
    %v3195 = vunpack.c.h.b16 %v566
    %v3196 = vunpack.c.l.b16 %v567
    %v3197 = vunpack.c.h.b16 %v567
    %v3198 = vunpack.c.l.b16 %v568
    %v3199 = vunpack.c.h.b16 %v568
    %v3200 = vunpack.c.l.b16 %v569
    %v3201 = vunpack.c.h.b16 %v569
    %v3202 = vunpack.c.l.b16 %v570
    %v3203 = vunpack.c.h.b16 %v570
    %v3204 = vunpack.c.l.b16 %v571
    %v3205 = vunpack.c.h.b16 %v571
    %v3206 = vunpack.c.l.b16 %v572
    %v3207 = vunpack.c.h.b16 %v572
    %v3208 = vunpack.c.l.b16 %v573
    %v3209 = vunpack.c.h.b16 %v573
    %v3210 = vunpack.c.l.b16 %v574
    %v3211 = vunpack.c.h.b16 %v574
    %v3212 = vunpack.c.l.b16 %v575
    %v3213 = vunpack.c.h.b16 %v575
    %v3214 = vunpack.c.l.b16 %v576
    %v3215 = vunpack.c.h.b16 %v576
    %v3216 = vunpack.c.l.b16 %v577
    %v3217 = vunpack.c.h.b16 %v577
    %v3218 = vunpack.c.l.b16 %v578
    %v3219 = vunpack.c.h.b16 %v578
    %v3220 = vunpack.c.l.b16 %v579
    %v3221 = vunpack.c.h.b16 %v579
    %v3222 = vunpack.c.l.b16 %v580
    %v3223 = vunpack.c.h.b16 %v580
    %v3224 = vunpack.c.l.b16 %v581
    %v3225 = vunpack.c.h.b16 %v581
    %v3226 = vunpack.c.l.b16 %v582
    %v3227 = vunpack.c.h.b16 %v582
    %v3228 = vunpack.c.l.b16 %v583
    %v3229 = vunpack.c.h.b16 %v583
    %v3230 = vunpack.c.l.b16 %v584
    %v3231 = vunpack.c.h.b16 %v584
    %v3232 = vunpack.c.l.b16 %v585
    %v3233 = vunpack.c.h.b16 %v585
    %v3234 = vunpack.c.l.b16 %v586
    %v3235 = vunpack.c.h.b16 %v586
    %v3236 = vunpack.c.l.b16 %v587
    %v3237 = vunpack.c.h.b16 %v587
    %v3238 = vunpack.c.l.b16 %v588
    %v3239 = vunpack.c.h.b16 %v588
    %v3240 = vunpack.c.l.b16 %v589
    %v3241 = vunpack.c.h.b16 %v589
    %v3242 = vunpack.c.l.b16 %v590
    %v3243 = vunpack.c.h.b16 %v590
    %v3244 = vunpack.c.l.b16 %v591
    %v3245 = vunpack.c.h.b16 %v591
    %v3246 = vunpack.c.l.b16 %v592
    %v3247 = vunpack.c.h.b16 %v592
    %v3248 = vunpack.c.l.b16 %v593
    %v3249 = vunpack.c.h.b16 %v593
    %v3250 = vunpack.c.l.b16 %v594
    %v3251 = vunpack.c.h.b16 %v594
    %v3252 = vunpack.c.l.b16 %v595
    %v3253 = vunpack.c.h.b16 %v595
    %v3254 = vunpack.c.l.b16 %v596
    %v3255 = vunpack.c.h.b16 %v596
    %v3256 = vunpack.c.l.b16 %v597
    %v3257 = vunpack.c.h.b16 %v597
    %v3258 = vunpack.c.l.b16 %v598
    %v3259 = vunpack.c.h.b16 %v598
    %v3260 = vunpack.c.l.b16 %v599
    %v3261 = vunpack.c.h.b16 %v599
    %v3262 = vunpack.c.l.b16 %v600
    %v3263 = vunpack.c.h.b16 %v600
    %v3264 = vunpack.c.l.b16 %v601
    %v3265 = vunpack.c.h.b16 %v601
    %v3266 = vunpack.c.l.b16 %v602
    %v3267 = vunpack.c.h.b16 %v602
    %v3268 = vunpack.c.l.b16 %v603
    %v3269 = vunpack.c.h.b16 %v603
    %v3270 = vunpack.c.l.b16 %v604
    %v3271 = vunpack.c.h.b16 %v604
    %v3272 = vunpack.c.l.b16 %v605
    %v3273 = vunpack.c.h.b16 %v605
    %v3274 = vunpack.c.l.b16 %v606
    %v3275 = vunpack.c.h.b16 %v606
    %v3276 = vunpack.c.l.b16 %v607
    %v3277 = vunpack.c.h.b16 %v607
    %v3278 = vunpack.c.l.b16 %v608
    %v3279 = vunpack.c.h.b16 %v608
    %v3280 = vunpack.c.l.b16 %v609
    %v3281 = vunpack.c.h.b16 %v609
    %v3282 = vunpack.c.l.b16 %v610
    %v3283 = vunpack.c.h.b16 %v610
    %v3284 = vunpack.c.l.b16 %v611
    %v3285 = vunpack.c.h.b16 %v611
    %v3286 = vunpack.c.l.b16 %v612
    %v3287 = vunpack.c.h.b16 %v612
    %v3288 = vunpack.c.l.b16 %v613
    %v3289 = vunpack.c.h.b16 %v613
    %v3290 = vunpack.c.l.b16 %v614
    %v3291 = vunpack.c.h.b16 %v614
    %v3292 = vunpack.c.l.b16 %v615
    %v3293 = vunpack.c.h.b16 %v615
    %v3294 = vunpack.c.l.b16 %v616
    %v3295 = vunpack.c.h.b16 %v616
    %v3296 = vunpack.c.l.b16 %v617
    %v3297 = vunpack.c.h.b16 %v617
    %v3298 = vunpack.c.l.b16 %v618
    %v3299 = vunpack.c.h.b16 %v618
    %v3300 = vunpack.c.l.b16 %v619
    %v3301 = vunpack.c.h.b16 %v619
    %v3302 = vunpack.c.l.b16 %v620
    %v3303 = vunpack.c.h.b16 %v620
    %v3304 = vunpack.c.l.b16 %v621
    %v3305 = vunpack.c.h.b16 %v621
    %v3306 = vunpack.c.l.b16 %v622
    %v3307 = vunpack.c.h.b16 %v622
    %v3308 = vunpack.c.l.b16 %v623
    %v3309 = vunpack.c.h.b16 %v623
    %v3310 = vunpack.c.l.b16 %v624
    %v3311 = vunpack.c.h.b16 %v624
    %v3312 = vunpack.c.l.b16 %v625
    %v3313 = vunpack.c.h.b16 %v625
    %v3314 = vunpack.c.l.b16 %v626
    %v3315 = vunpack.c.h.b16 %v626
    %v3316 = vunpack.c.l.b16 %v627
    %v3317 = vunpack.c.h.b16 %v627
    %v3318 = vunpack.c.l.b16 %v628
    %v3319 = vunpack.c.h.b16 %v628
    %v3320 = vunpack.c.l.b16 %v629
    %v3321 = vunpack.c.h.b16 %v629
    %v3322 = vunpack.c.l.b16 %v630
    %v3323 = vunpack.c.h.b16 %v630
    %v3324 = vunpack.c.l.b16 %v631
    %v3325 = vunpack.c.h.b16 %v631
    %v3326 = vunpack.c.l.b16 %v632
    %v3327 = vunpack.c.h.b16 %v632
    %v3328 = vunpack.c.l.b16 %v633
    %v3329 = vunpack.c.h.b16 %v633
    %v3330 = vunpack.c.l.b16 %v634
    %v3331 = vunpack.c.h.b16 %v634
    %v3332 = vunpack.c.l.b16 %v635
    %v3333 = vunpack.c.h.b16 %v635
    %v3334 = vunpack.c.l.b16 %v636
    %v3335 = vunpack.c.h.b16 %v636
    %v3336 = vunpack.c.l.b16 %v637
    %v3337 = vunpack.c.h.b16 %v637
    %v3338 = vunpack.c.l.b16 %v638
    %v3339 = vunpack.c.h.b16 %v638
    %v3340 = vunpack.c.l.b16 %v639
    %v3341 = vunpack.c.h.b16 %v639
    %v3342 = vunpack.c.l.b16 %v640
    %v3343 = vunpack.c.h.b16 %v640
    %v3344 = vunpack.c.l.b16 %v641
    %v3345 = vunpack.c.h.b16 %v641
    %v3346 = vunpack.c.l.b16 %v642
    %v3347 = vunpack.c.h.b16 %v642
    %v3348 = vunpack.c.l.b16 %v643
    %v3349 = vunpack.c.h.b16 %v643
    %v3350 = vunpack.c.l.b16 %v644
    %v3351 = vunpack.c.h.b16 %v644
    %v3352 = vunpack.c.l.b16 %v645
    %v3353 = vunpack.c.h.b16 %v645
    %v3354 = vunpack.c.l.b16 %v646
    %v3355 = vunpack.c.h.b16 %v646
    %v3356 = vunpack.c.l.b16 %v647
    %v3357 = vunpack.c.h.b16 %v647
    %v3358 = vunpack.c.l.b16 %v648
    %v3359 = vunpack.c.h.b16 %v648
    %v3360 = vunpack.c.l.b16 %v649
    %v3361 = vunpack.c.h.b16 %v649
    %v3362 = vunpack.c.l.b16 %v650
    %v3363 = vunpack.c.h.b16 %v650
    %v3364 = vunpack.c.l.b16 %v651
    %v3365 = vunpack.c.h.b16 %v651
    %v3366 = vunpack.c.l.b16 %v652
    %v3367 = vunpack.c.h.b16 %v652
    %v3368 = vunpack.c.l.b16 %v653
    %v3369 = vunpack.c.h.b16 %v653
    %v3370 = vunpack.c.l.b16 %v654
    %v3371 = vunpack.c.h.b16 %v654
    %v3372 = vunpack.c.l.b16 %v655
    %v3373 = vunpack.c.h.b16 %v655
    %v3374 = vunpack.c.l.b16 %v656
    %v3375 = vunpack.c.h.b16 %v656
    %v3376 = vunpack.c.l.b16 %v657
    %v3377 = vunpack.c.h.b16 %v657
    %v3378 = vunpack.c.l.b16 %v658
    %v3379 = vunpack.c.h.b16 %v658
    %v3380 = vunpack.c.l.b16 %v659
    %v3381 = vunpack.c.h.b16 %v659
    %v3382 = vunpack.c.l.b16 %v660
    %v3383 = vunpack.c.h.b16 %v660
    %v3384 = vunpack.c.l.b16 %v661
    %v3385 = vunpack.c.h.b16 %v661
    %v3386 = vunpack.c.l.b16 %v662
    %v3387 = vunpack.c.h.b16 %v662
    %v3388 = vunpack.c.l.b16 %v663
    %v3389 = vunpack.c.h.b16 %v663
    %v3390 = vunpack.c.l.b16 %v664
    %v3391 = vunpack.c.h.b16 %v664
    %v3392 = vunpack.c.l.b16 %v665
    %v3393 = vunpack.c.h.b16 %v665
    %v3394 = vunpack.c.l.b16 %v666
    %v3395 = vunpack.c.h.b16 %v666
    %v3396 = vunpack.c.l.b16 %v667
    %v3397 = vunpack.c.h.b16 %v667
    %v3398 = vunpack.c.l.b16 %v668
    %v3399 = vunpack.c.h.b16 %v668
    %v3400 = vunpack.c.l.b16 %v669
    %v3401 = vunpack.c.h.b16 %v669
    %v3402 = vunpack.c.l.b16 %v670
    %v3403 = vunpack.c.h.b16 %v670
    %v3404 = vunpack.c.l.b16 %v671
    %v3405 = vunpack.c.h.b16 %v671
    %v3406 = vunpack.c.l.b16 %v672
    %v3407 = vunpack.c.h.b16 %v672
    %v3408 = vunpack.c.l.b16 %v673
    %v3409 = vunpack.c.h.b16 %v673
    %v3410 = vunpack.c.l.b16 %v674
    %v3411 = vunpack.c.h.b16 %v674
    %v3412 = vunpack.c.l.b16 %v675
    %v3413 = vunpack.c.h.b16 %v675
    %v3414 = vunpack.c.l.b16 %v676
    %v3415 = vunpack.c.h.b16 %v676
    %v3416 = vunpack.c.l.b16 %v677
    %v3417 = vunpack.c.h.b16 %v677
    %v3418 = vunpack.c.l.b16 %v678
    %v3419 = vunpack.c.h.b16 %v678
    %v3420 = vunpack.c.l.b16 %v679
    %v3421 = vunpack.c.h.b16 %v679
    %v3422 = vunpack.c.l.b16 %v680
    %v3423 = vunpack.c.h.b16 %v680
    %v3424 = vunpack.c.l.b16 %v681
    %v3425 = vunpack.c.h.b16 %v681
    %v3426 = vunpack.c.l.b16 %v682
    %v3427 = vunpack.c.h.b16 %v682
    %v3428 = vunpack.c.l.b16 %v683
    %v3429 = vunpack.c.h.b16 %v683
    %v3430 = vunpack.c.l.b16 %v684
    %v3431 = vunpack.c.h.b16 %v684
    %v3432 = vunpack.c.l.b16 %v685
    %v3433 = vunpack.c.h.b16 %v685
    %v3434 = vunpack.c.l.b16 %v686
    %v3435 = vunpack.c.h.b16 %v686
    %v3436 = vunpack.c.l.b16 %v687
    %v3437 = vunpack.c.h.b16 %v687
    %v3438 = vunpack.c.l.b16 %v688
    %v3439 = vunpack.c.h.b16 %v688
    %v3440 = vunpack.c.l.b16 %v689
    %v3441 = vunpack.c.h.b16 %v689
    %v3442 = vunpack.c.l.b16 %v690
    %v3443 = vunpack.c.h.b16 %v690
    %v3444 = vunpack.c.l.b16 %v691
    %v3445 = vunpack.c.h.b16 %v691
    %v3446 = vunpack.c.l.b16 %v692
    %v3447 = vunpack.c.h.b16 %v692
    %v3448 = vunpack.c.l.b16 %v693
    %v3449 = vunpack.c.h.b16 %v693
    %v3450 = vunpack.c.l.b16 %v694
    %v3451 = vunpack.c.h.b16 %v694
    %v3452 = vunpack.c.l.b16 %v695
    %v3453 = vunpack.c.h.b16 %v695
    %v3454 = vunpack.c.l.b16 %v696
    %v3455 = vunpack.c.h.b16 %v696
    %v3456 = vunpack.c.l.b16 %v697
    %v3457 = vunpack.c.h.b16 %v697
    %v3458 = vunpack.c.l.b16 %v698
    %v3459 = vunpack.c.h.b16 %v698
    %v3460 = vunpack.c.l.b16 %v699
    %v3461 = vunpack.c.h.b16 %v699
    %v3462 = vunpack.c.l.b16 %v700
    %v3463 = vunpack.c.h.b16 %v700
    %v3464 = vunpack.c.l.b16 %v701
    %v3465 = vunpack.c.h.b16 %v701
    %v3466 = vunpack.c.l.b16 %v702
    %v3467 = vunpack.c.h.b16 %v702
    %v3468 = vunpack.c.l.b16 %v703
    %v3469 = vunpack.c.h.b16 %v703
    %v3470 = vunpack.c.l.b16 %v704
    %v3471 = vunpack.c.h.b16 %v704
    %v3472 = vunpack.c.l.b16 %v705
    %v3473 = vunpack.c.h.b16 %v705
    %v3474 = vunpack.c.l.b16 %v706
    %v3475 = vunpack.c.h.b16 %v706
    %v3476 = vunpack.c.l.b16 %v707
    %v3477 = vunpack.c.h.b16 %v707
    %v3478 = vunpack.c.l.b16 %v708
    %v3479 = vunpack.c.h.b16 %v708
    %v3480 = vunpack.c.l.b16 %v709
    %v3481 = vunpack.c.h.b16 %v709
    %v3482 = vunpack.c.l.b16 %v710
    %v3483 = vunpack.c.h.b16 %v710
    %v3484 = vunpack.c.l.b16 %v711
    %v3485 = vunpack.c.h.b16 %v711
    %v3486 = vunpack.c.l.b16 %v712
    %v3487 = vunpack.c.h.b16 %v712
    %v3488 = vunpack.c.l.b16 %v713
    %v3489 = vunpack.c.h.b16 %v713
    %v3490 = vunpack.c.l.b16 %v714
    %v3491 = vunpack.c.h.b16 %v714
    %v3492 = vunpack.c.l.b16 %v715
    %v3493 = vunpack.c.h.b16 %v715
    %v3494 = vunpack.c.l.b16 %v716
    %v3495 = vunpack.c.h.b16 %v716
    %v3496 = vunpack.c.l.b16 %v717
    %v3497 = vunpack.c.h.b16 %v717
    %v3498 = vunpack.c.l.b16 %v718
    %v3499 = vunpack.c.h.b16 %v718
    %v3500 = vunpack.c.l.b16 %v719
    %v3501 = vunpack.c.h.b16 %v719
    %v3502 = vunpack.c.l.b16 %v720
    %v3503 = vunpack.c.h.b16 %v720
    %v3504 = vunpack.c.l.b16 %v721
    %v3505 = vunpack.c.h.b16 %v721
    %v3506 = vunpack.c.l.b16 %v722
    %v3507 = vunpack.c.h.b16 %v722
    %v3508 = vunpack.c.l.b16 %v723
    %v3509 = vunpack.c.h.b16 %v723
    %v3510 = vunpack.c.l.b16 %v724
    %v3511 = vunpack.c.h.b16 %v724
    %v3512 = vunpack.c.l.b16 %v725
    %v3513 = vunpack.c.h.b16 %v725
    %v3514 = vunpack.c.l.b16 %v726
    %v3515 = vunpack.c.h.b16 %v726
    %v3516 = vunpack.c.l.b16 %v727
    %v3517 = vunpack.c.h.b16 %v727
    %v3518 = vunpack.c.l.b16 %v728
    %v3519 = vunpack.c.h.b16 %v728
    %v3520 = vunpack.c.l.b16 %v729
    %v3521 = vunpack.c.h.b16 %v729
    %v3522 = vunpack.c.l.b16 %v730
    %v3523 = vunpack.c.h.b16 %v730
    %v3524 = vunpack.c.l.b16 %v731
    %v3525 = vunpack.c.h.b16 %v731
    %v3526 = vunpack.c.l.b16 %v732
    %v3527 = vunpack.c.h.b16 %v732
    %v3528 = vunpack.c.l.b16 %v733
    %v3529 = vunpack.c.h.b16 %v733
    %v3530 = vunpack.c.l.b16 %v734
    %v3531 = vunpack.c.h.b16 %v734
    %v3532 = vunpack.c.l.b16 %v735
    %v3533 = vunpack.c.h.b16 %v735
    %v3534 = vunpack.c.l.b16 %v736
    %v3535 = vunpack.c.h.b16 %v736
    %v3536 = vunpack.c.l.b16 %v737
    %v3537 = vunpack.c.h.b16 %v737
    %v3538 = vunpack.c.l.b16 %v738
    %v3539 = vunpack.c.h.b16 %v738
    %v3540 = vunpack.c.l.b16 %v739
    %v3541 = vunpack.c.h.b16 %v739
    %v3542 = vunpack.c.l.b16 %v740
    %v3543 = vunpack.c.h.b16 %v740
    %v3544 = vunpack.c.l.b16 %v741
    %v3545 = vunpack.c.h.b16 %v741
    %v3546 = vunpack.c.l.b16 %v742
    %v3547 = vunpack.c.h.b16 %v742
    %v3548 = vunpack.c.l.b16 %v743
    %v3549 = vunpack.c.h.b16 %v743
    %v3550 = vunpack.c.l.b16 %v744
    %v3551 = vunpack.c.h.b16 %v744
    %v3552 = vunpack.c.l.b16 %v745
    %v3553 = vunpack.c.h.b16 %v745
    %v3554 = vunpack.c.l.b16 %v746
    %v3555 = vunpack.c.h.b16 %v746
    %v3556 = vunpack.c.l.b16 %v747
    %v3557 = vunpack.c.h.b16 %v747
    %v3558 = vunpack.c.l.b16 %v748
    %v3559 = vunpack.c.h.b16 %v748
    %v3560 = vunpack.c.l.b16 %v749
    %v3561 = vunpack.c.h.b16 %v749
    %v3562 = vunpack.c.l.b16 %v750
    %v3563 = vunpack.c.h.b16 %v750
    %v3564 = vunpack.c.l.b16 %v751
    %v3565 = vunpack.c.h.b16 %v751
    %v3566 = vunpack.c.l.b16 %v752
    %v3567 = vunpack.c.h.b16 %v752
    %v3568 = vunpack.c.l.b16 %v753
    %v3569 = vunpack.c.h.b16 %v753
    %v3570 = vunpack.c.l.b16 %v754
    %v3571 = vunpack.c.h.b16 %v754
    %v3572 = vunpack.c.l.b16 %v755
    %v3573 = vunpack.c.h.b16 %v755
    %v3574 = vunpack.c.l.b16 %v756
    %v3575 = vunpack.c.h.b16 %v756
    %v3576 = vunpack.c.l.b16 %v757
    %v3577 = vunpack.c.h.b16 %v757
    %v3578 = vunpack.c.l.b16 %v758
    %v3579 = vunpack.c.h.b16 %v758
    %v3580 = vunpack.c.l.b16 %v759
    %v3581 = vunpack.c.h.b16 %v759
    %v3582 = vunpack.c.l.b16 %v760
    %v3583 = vunpack.c.h.b16 %v760
    %v3584 = vunpack.c.l.b16 %v761
    %v3585 = vunpack.c.h.b16 %v761
    %v3586 = vunpack.c.l.b16 %v762
    %v3587 = vunpack.c.h.b16 %v762
    %v3588 = vunpack.c.l.b16 %v763
    %v3589 = vunpack.c.h.b16 %v763
    %v3590 = vunpack.c.l.b16 %v764
    %v3591 = vunpack.c.h.b16 %v764
    %v3592 = vunpack.c.l.b16 %v765
    %v3593 = vunpack.c.h.b16 %v765
    %v3594 = vunpack.c.l.b16 %v766
    %v3595 = vunpack.c.h.b16 %v766
    %v3596 = vunpack.c.l.b16 %v767
    %v3597 = vunpack.c.h.b16 %v767
    %v3598 = vunpack.c.l.b16 %v768
    %v3599 = vunpack.c.h.b16 %v768
    %v3600 = vunpack.c.l.b16 %v769
    %v3601 = vunpack.c.h.b16 %v769
    %v3602 = vunpack.c.l.b16 %v770
    %v3603 = vunpack.c.h.b16 %v770
    %v3604 = vunpack.c.l.b16 %v771
    %v3605 = vunpack.c.h.b16 %v771
    %v3606 = vunpack.c.l.b16 %v772
    %v3607 = vunpack.c.h.b16 %v772
    %v3608 = vunpack.c.l.b16 %v773
    %v3609 = vunpack.c.h.b16 %v773
    %v3610 = vunpack.c.l.b16 %v774
    %v3611 = vunpack.c.h.b16 %v774
    %v3612 = vunpack.c.l.b16 %v775
    %v3613 = vunpack.c.h.b16 %v775
    %v3614 = vunpack.c.l.b16 %v776
    %v3615 = vunpack.c.h.b16 %v776
    %v3616 = vunpack.c.l.b16 %v777
    %v3617 = vunpack.c.h.b16 %v777
    %v3618 = vunpack.c.l.b16 %v778
    %v3619 = vunpack.c.h.b16 %v778
    %v3620 = vunpack.c.l.b16 %v779
    %v3621 = vunpack.c.h.b16 %v779
    %v3622 = vunpack.c.l.b16 %v780
    %v3623 = vunpack.c.h.b16 %v780
    %v3624 = vunpack.c.l.b16 %v781
    %v3625 = vunpack.c.h.b16 %v781
    %v3626 = vunpack.c.l.b16 %v782
    %v3627 = vunpack.c.h.b16 %v782
    %v3628 = vunpack.c.l.b16 %v783
    %v3629 = vunpack.c.h.b16 %v783
    %v3630 = vunpack.c.l.b16 %v784
    %v3631 = vunpack.c.h.b16 %v784
    %v3632 = vunpack.c.l.b16 %v785
    %v3633 = vunpack.c.h.b16 %v785
    %v3634 = vunpack.c.l.b16 %v786
    %v3635 = vunpack.c.h.b16 %v786
    %v3636 = vunpack.c.l.b16 %v787
    %v3637 = vunpack.c.h.b16 %v787
    %v3638 = vunpack.c.l.b16 %v788
    %v3639 = vunpack.c.h.b16 %v788
    %v3640 = vunpack.c.l.b16 %v789
    %v3641 = vunpack.c.h.b16 %v789
    %v3642 = vunpack.c.l.b16 %v790
    %v3643 = vunpack.c.h.b16 %v790
    %v3644 = vunpack.c.l.b16 %v791
    %v3645 = vunpack.c.h.b16 %v791
    %v3646 = vunpack.c.l.b16 %v792
    %v3647 = vunpack.c.h.b16 %v792
    %v3648 = vunpack.c.l.b16 %v793
    %v3649 = vunpack.c.h.b16 %v793
    %v3650 = vunpack.c.l.b16 %v794
    %v3651 = vunpack.c.h.b16 %v794
    %v3652 = vunpack.c.l.b16 %v795
    %v3653 = vunpack.c.h.b16 %v795
    %v3654 = vunpack.c.l.b16 %v796
    %v3655 = vunpack.c.h.b16 %v796
    %v3656 = vunpack.c.l.b16 %v797
    %v3657 = vunpack.c.h.b16 %v797
    %v3658 = vunpack.c.l.b16 %v798
    %v3659 = vunpack.c.h.b16 %v798
    %v3660 = vunpack.c.l.b16 %v799
    %v3661 = vunpack.c.h.b16 %v799
    %v3662 = vunpack.c.l.b16 %v800
    %v3663 = vunpack.c.h.b16 %v800
    %v3664 = vunpack.c.l.b16 %v801
    %v3665 = vunpack.c.h.b16 %v801
    %v3666 = vunpack.c.l.b16 %v802
    %v3667 = vunpack.c.h.b16 %v802
    %v3668 = vunpack.c.l.b16 %v803
    %v3669 = vunpack.c.h.b16 %v803
    %v3670 = vunpack.c.l.b16 %v804
    %v3671 = vunpack.c.h.b16 %v804
    %v3672 = vunpack.c.l.b16 %v805
    %v3673 = vunpack.c.h.b16 %v805
    %v3674 = vunpack.c.l.b16 %v806
    %v3675 = vunpack.c.h.b16 %v806
    %v3676 = vunpack.c.l.b16 %v807
    %v3677 = vunpack.c.h.b16 %v807
    %v3678 = vunpack.c.l.b16 %v808
    %v3679 = vunpack.c.h.b16 %v808
    %v3680 = vunpack.c.l.b16 %v809
    %v3681 = vunpack.c.h.b16 %v809
    %v3682 = vunpack.c.l.b16 %v810
    %v3683 = vunpack.c.h.b16 %v810
    %v3684 = vunpack.c.l.b16 %v811
    %v3685 = vunpack.c.h.b16 %v811
    %v3686 = vunpack.c.l.b16 %v812
    %v3687 = vunpack.c.h.b16 %v812
    %v3688 = vunpack.c.l.b16 %v813
    %v3689 = vunpack.c.h.b16 %v813
    %v3690 = vunpack.c.l.b16 %v814
    %v3691 = vunpack.c.h.b16 %v814
    %v3692 = vunpack.c.l.b16 %v815
    %v3693 = vunpack.c.h.b16 %v815
    %v3694 = vunpack.c.l.b16 %v816
    %v3695 = vunpack.c.h.b16 %v816
    %v3696 = vunpack.c.l.b16 %v817
    %v3697 = vunpack.c.h.b16 %v817
    %v3698 = vunpack.c.l.b16 %v818
    %v3699 = vunpack.c.h.b16 %v818
    %v3700 = vunpack.c.l.b16 %v819
    %v3701 = vunpack.c.h.b16 %v819
    %v3702 = vunpack.c.l.b16 %v820
    %v3703 = vunpack.c.h.b16 %v820
    %v3704 = vunpack.c.l.b16 %v821
    %v3705 = vunpack.c.h.b16 %v821
    %v3706 = vunpack.c.l.b16 %v822
    %v3707 = vunpack.c.h.b16 %v822
    %v3708 = vunpack.c.l.b16 %v823
    %v3709 = vunpack.c.h.b16 %v823
    %v3710 = vunpack.c.l.b16 %v824
    %v3711 = vunpack.c.h.b16 %v824
    %v3712 = vunpack.c.l.b16 %v825
    %v3713 = vunpack.c.h.b16 %v825
    %v3714 = vunpack.c.l.b16 %v826
    %v3715 = vunpack.c.h.b16 %v826
    %v3716 = vunpack.c.l.b16 %v827
    %v3717 = vunpack.c.h.b16 %v827
    %v3718 = vunpack.c.l.b16 %v828
    %v3719 = vunpack.c.h.b16 %v828
    %v3720 = vunpack.c.l.b16 %v829
    %v3721 = vunpack.c.h.b16 %v829
    %v3722 = vunpack.c.l.b16 %v830
    %v3723 = vunpack.c.h.b16 %v830
    %v3724 = vunpack.c.l.b16 %v831
    %v3725 = vunpack.c.h.b16 %v831
    %v3726 = vunpack.c.l.b16 %v832
    %v3727 = vunpack.c.h.b16 %v832
    %v3728 = vunpack.c.l.b16 %v833
    %v3729 = vunpack.c.h.b16 %v833
    %v3730 = vunpack.c.l.b16 %v834
    %v3731 = vunpack.c.h.b16 %v834
    %v3732 = vunpack.c.l.b16 %v835
    %v3733 = vunpack.c.h.b16 %v835
    %v3734 = vunpack.c.l.b16 %v836
    %v3735 = vunpack.c.h.b16 %v836
    %v3736 = vunpack.c.l.b16 %v837
    %v3737 = vunpack.c.h.b16 %v837
    %v3738 = vunpack.c.l.b16 %v838
    %v3739 = vunpack.c.h.b16 %v838
    %v3740 = vunpack.c.l.b16 %v839
    %v3741 = vunpack.c.h.b16 %v839
    %v3742 = vunpack.c.l.b16 %v840
    %v3743 = vunpack.c.h.b16 %v840
    %v3744 = vunpack.c.l.b16 %v841
    %v3745 = vunpack.c.h.b16 %v841
    %v3746 = vunpack.c.l.b16 %v842
    %v3747 = vunpack.c.h.b16 %v842
    %v3748 = vunpack.c.l.b16 %v843
    %v3749 = vunpack.c.h.b16 %v843
    %v3750 = vunpack.c.l.b16 %v844
    %v3751 = vunpack.c.h.b16 %v844
    %v3752 = vunpack.c.l.b16 %v845
    %v3753 = vunpack.c.h.b16 %v845
    %v3754 = vunpack.c.l.b16 %v846
    %v3755 = vunpack.c.h.b16 %v846
    %v3756 = vunpack.c.l.b16 %v847
    %v3757 = vunpack.c.h.b16 %v847
    %v3758 = vunpack.c.l.b16 %v848
    %v3759 = vunpack.c.h.b16 %v848
    %v3760 = vunpack.c.l.b16 %v849
    %v3761 = vunpack.c.h.b16 %v849
    %v3762 = vunpack.c.l.b16 %v850
    %v3763 = vunpack.c.h.b16 %v850
    %v3764 = vunpack.c.l.b16 %v851
    %v3765 = vunpack.c.h.b16 %v851
    %v3766 = vunpack.c.l.b16 %v852
    %v3767 = vunpack.c.h.b16 %v852
    %v3768 = vunpack.c.l.b16 %v853
    %v3769 = vunpack.c.h.b16 %v853
    %v3770 = vunpack.c.l.b16 %v854
    %v3771 = vunpack.c.h.b16 %v854
    %v3772 = vunpack.c.l.b16 %v855
    %v3773 = vunpack.c.h.b16 %v855
    %v3774 = vunpack.c.l.b16 %v856
    %v3775 = vunpack.c.h.b16 %v856
    %v3776 = vunpack.c.l.b16 %v857
    %v3777 = vunpack.c.h.b16 %v857
    %v3778 = vunpack.c.l.b16 %v858
    %v3779 = vunpack.c.h.b16 %v858
    %v3780 = vunpack.c.l.b16 %v859
    %v3781 = vunpack.c.h.b16 %v859
    %v3782 = vunpack.c.l.b16 %v860
    %v3783 = vunpack.c.h.b16 %v860
    %v3784 = vunpack.c.l.b16 %v861
    %v3785 = vunpack.c.h.b16 %v861
    %v3786 = vunpack.c.l.b16 %v862
    %v3787 = vunpack.c.h.b16 %v862
    %v3788 = vunpack.c.l.b16 %v863
    %v3789 = vunpack.c.h.b16 %v863
    %v3790 = vunpack.c.l.b16 %v864
    %v3791 = vunpack.c.h.b16 %v864
    %v3792 = vunpack.c.l.b16 %v865
    %v3793 = vunpack.c.h.b16 %v865
    %v3794 = vunpack.c.l.b16 %v866
    %v3795 = vunpack.c.h.b16 %v866
    %v3796 = vunpack.c.l.b16 %v867
    %v3797 = vunpack.c.h.b16 %v867
    %v3798 = vunpack.c.l.b16 %v868
    %v3799 = vunpack.c.h.b16 %v868
    %v3800 = vunpack.c.l.b16 %v869
    %v3801 = vunpack.c.h.b16 %v869
    %v3802 = vunpack.c.l.b16 %v870
    %v3803 = vunpack.c.h.b16 %v870
    %v3804 = vunpack.c.l.b16 %v871
    %v3805 = vunpack.c.h.b16 %v871
    %v3806 = vunpack.c.l.b16 %v872
    %v3807 = vunpack.c.h.b16 %v872
    %v3808 = vunpack.c.l.b16 %v873
    %v3809 = vunpack.c.h.b16 %v873
    %v3810 = vunpack.c.l.b16 %v874
    %v3811 = vunpack.c.h.b16 %v874
    %v3812 = vunpack.c.l.b16 %v875
    %v3813 = vunpack.c.h.b16 %v875
    %v3814 = vunpack.c.l.b16 %v876
    %v3815 = vunpack.c.h.b16 %v876
    %v3816 = vunpack.c.l.b16 %v877
    %v3817 = vunpack.c.h.b16 %v877
    %v3818 = vunpack.c.l.b16 %v878
    %v3819 = vunpack.c.h.b16 %v878
    %v3820 = vunpack.c.l.b16 %v879
    %v3821 = vunpack.c.h.b16 %v879
    %v3822 = vunpack.c.l.b16 %v880
    %v3823 = vunpack.c.h.b16 %v880
    %v3824 = vunpack.c.l.b16 %v881
    %v3825 = vunpack.c.h.b16 %v881
    %v3826 = vunpack.c.l.b16 %v882
    %v3827 = vunpack.c.h.b16 %v882
    %v3828 = vunpack.c.l.b16 %v883
    %v3829 = vunpack.c.h.b16 %v883
    %v3830 = vunpack.c.l.b16 %v884
    %v3831 = vunpack.c.h.b16 %v884
    %v3832 = vunpack.c.l.b16 %v885
    %v3833 = vunpack.c.h.b16 %v885
    %v3834 = vunpack.c.l.b16 %v886
    %v3835 = vunpack.c.h.b16 %v886
    %v3836 = vunpack.c.l.b16 %v887
    %v3837 = vunpack.c.h.b16 %v887
    %v3838 = vunpack.c.l.b16 %v888
    %v3839 = vunpack.c.h.b16 %v888
    %v3840 = vunpack.c.l.b16 %v889
    %v3841 = vunpack.c.h.b16 %v889
    %v3842 = vunpack.c.l.b16 %v890
    %v3843 = vunpack.c.h.b16 %v890
    %v3844 = vunpack.c.l.b16 %v891
    %v3845 = vunpack.c.h.b16 %v891
    %v3846 = vunpack.c.l.b16 %v892
    %v3847 = vunpack.c.h.b16 %v892
    %v3848 = vunpack.c.l.b16 %v893
    %v3849 = vunpack.c.h.b16 %v893
    %v3850 = vunpack.c.l.b16 %v894
    %v3851 = vunpack.c.h.b16 %v894
    %v3852 = vunpack.c.l.b16 %v895
    %v3853 = vunpack.c.h.b16 %v895
    %v3854 = vunpack.c.l.b16 %v896
    %v3855 = vunpack.c.h.b16 %v896
    %v3856 = vunpack.c.l.b16 %v897
    %v3857 = vunpack.c.h.b16 %v897
    %v3858 = vunpack.c.l.b16 %v898
    %v3859 = vunpack.c.h.b16 %v898
    %v3860 = vunpack.c.l.b16 %v899
    %v3861 = vunpack.c.h.b16 %v899
    %v3862 = vunpack.c.l.b16 %v900
    %v3863 = vunpack.c.h.b16 %v900
    %v3864 = vunpack.c.l.b16 %v901
    %v3865 = vunpack.c.h.b16 %v901
    %v3866 = vunpack.c.l.b16 %v902
    %v3867 = vunpack.c.h.b16 %v902
    %v3868 = vunpack.c.l.b16 %v903
    %v3869 = vunpack.c.h.b16 %v903
    %v3870 = vunpack.c.l.b16 %v904
    %v3871 = vunpack.c.h.b16 %v904
    %v3872 = vunpack.c.l.b16 %v905
    %v3873 = vunpack.c.h.b16 %v905
    %v3874 = vunpack.c.l.b16 %v906
    %v3875 = vunpack.c.h.b16 %v906
    %v3876 = vunpack.c.l.b16 %v907
    %v3877 = vunpack.c.h.b16 %v907
    %v3878 = vunpack.c.l.b16 %v908
    %v3879 = vunpack.c.h.b16 %v908
    %v3880 = vunpack.c.l.b16 %v909
    %v3881 = vunpack.c.h.b16 %v909
    %v3882 = vunpack.c.l.b16 %v910
    %v3883 = vunpack.c.h.b16 %v910
    %v3884 = vunpack.c.l.b16 %v911
    %v3885 = vunpack.c.h.b16 %v911
    %v3886 = vunpack.c.l.b16 %v912
    %v3887 = vunpack.c.h.b16 %v912
    %v3888 = vunpack.c.l.b16 %v913
    %v3889 = vunpack.c.h.b16 %v913
    %v3890 = vunpack.c.l.b16 %v914
    %v3891 = vunpack.c.h.b16 %v914
    %v3892 = vunpack.c.l.b16 %v915
    %v3893 = vunpack.c.h.b16 %v915
    %v3894 = vunpack.c.l.b16 %v916
    %v3895 = vunpack.c.h.b16 %v916
    %v3896 = vunpack.c.l.b16 %v917
    %v3897 = vunpack.c.h.b16 %v917
    %v3898 = vunpack.c.l.b16 %v918
    %v3899 = vunpack.c.h.b16 %v918
    %v3900 = vunpack.c.l.b16 %v919
    %v3901 = vunpack.c.h.b16 %v919
    %v3902 = vunpack.c.l.b16 %v920
    %v3903 = vunpack.c.h.b16 %v920
    %v3904 = vunpack.c.l.b16 %v921
    %v3905 = vunpack.c.h.b16 %v921
    %v3906 = vunpack.c.l.b16 %v922
    %v3907 = vunpack.c.h.b16 %v922
    %v3908 = vunpack.c.l.b16 %v923
    %v3909 = vunpack.c.h.b16 %v923
    %v3910 = vunpack.c.l.b16 %v924
    %v3911 = vunpack.c.h.b16 %v924
    %v3912 = vunpack.c.l.b16 %v925
    %v3913 = vunpack.c.h.b16 %v925
    %v3914 = vunpack.c.l.b16 %v926
    %v3915 = vunpack.c.h.b16 %v926
    %v3916 = vunpack.c.l.b16 %v927
    %v3917 = vunpack.c.h.b16 %v927
    %v3918 = vunpack.c.l.b16 %v928
    %v3919 = vunpack.c.h.b16 %v928
    %v3920 = vunpack.c.l.b16 %v929
    %v3921 = vunpack.c.h.b16 %v929
    %v3922 = vunpack.c.l.b16 %v930
    %v3923 = vunpack.c.h.b16 %v930
    %v3924 = vunpack.c.l.b16 %v931
    %v3925 = vunpack.c.h.b16 %v931
    %v3926 = vunpack.c.l.b16 %v932
    %v3927 = vunpack.c.h.b16 %v932
    %v3928 = vunpack.c.l.b16 %v933
    %v3929 = vunpack.c.h.b16 %v933
    %v3930 = vunpack.c.l.b16 %v934
    %v3931 = vunpack.c.h.b16 %v934
    %v3932 = vunpack.c.l.b16 %v935
    %v3933 = vunpack.c.h.b16 %v935
    %v3934 = vunpack.c.l.b16 %v936
    %v3935 = vunpack.c.h.b16 %v936
    %v3936 = vunpack.c.l.b16 %v937
    %v3937 = vunpack.c.h.b16 %v937
    %v3938 = vunpack.c.l.b16 %v938
    %v3939 = vunpack.c.h.b16 %v938
    %v3940 = vunpack.c.l.b16 %v939
    %v3941 = vunpack.c.h.b16 %v939
    %v3942 = vunpack.c.l.b16 %v940
    %v3943 = vunpack.c.h.b16 %v940
    %v3944 = vunpack.c.l.b16 %v941
    %v3945 = vunpack.c.h.b16 %v941
    %v3946 = vunpack.c.l.b16 %v942
    %v3947 = vunpack.c.h.b16 %v942
    %v3948 = vunpack.c.l.b16 %v943
    %v3949 = vunpack.c.h.b16 %v943
    %v3950 = vunpack.c.l.b16 %v944
    %v3951 = vunpack.c.h.b16 %v944
    %v3952 = vunpack.c.l.b16 %v945
    %v3953 = vunpack.c.h.b16 %v945
    %v3954 = vunpack.c.l.b16 %v946
    %v3955 = vunpack.c.h.b16 %v946
    %v3956 = vunpack.c.l.b16 %v947
    %v3957 = vunpack.c.h.b16 %v947
    %v3958 = vunpack.c.l.b16 %v948
    %v3959 = vunpack.c.h.b16 %v948
    %v3960 = vunpack.c.l.b16 %v949
    %v3961 = vunpack.c.h.b16 %v949
    %v3962 = vunpack.c.l.b16 %v950
    %v3963 = vunpack.c.h.b16 %v950
    %v3964 = vunpack.c.l.b16 %v951
    %v3965 = vunpack.c.h.b16 %v951
    %v3966 = vunpack.c.l.b16 %v952
    %v3967 = vunpack.c.h.b16 %v952
    %v3968 = vunpack.c.l.b16 %v953
    %v3969 = vunpack.c.h.b16 %v953
    %v3970 = vunpack.c.l.b16 %v954
    %v3971 = vunpack.c.h.b16 %v954
    %v3972 = vunpack.c.l.b16 %v955
    %v3973 = vunpack.c.h.b16 %v955
    %v3974 = vunpack.c.l.b16 %v956
    %v3975 = vunpack.c.h.b16 %v956
    %v3976 = vunpack.c.l.b16 %v957
    %v3977 = vunpack.c.h.b16 %v957
    %v3978 = vunpack.c.l.b16 %v958
    %v3979 = vunpack.c.h.b16 %v958
    %v3980 = vunpack.c.l.b16 %v959
    %v3981 = vunpack.c.h.b16 %v959
    %v3982 = vunpack.c.l.b16 %v960
    %v3983 = vunpack.c.h.b16 %v960
    %v3984 = vunpack.c.l.b16 %v961
    %v3985 = vunpack.c.h.b16 %v961
    %v3986 = vunpack.c.l.b16 %v962
    %v3987 = vunpack.c.h.b16 %v962
    %v3988 = vunpack.c.l.b16 %v963
    %v3989 = vunpack.c.h.b16 %v963
    %v3990 = vunpack.c.l.b16 %v964
    %v3991 = vunpack.c.h.b16 %v964
    %v3992 = vunpack.c.l.b16 %v965
    %v3993 = vunpack.c.h.b16 %v965
    %v3994 = vunpack.c.l.b16 %v966
    %v3995 = vunpack.c.h.b16 %v966
    %v3996 = vunpack.c.l.b16 %v967
    %v3997 = vunpack.c.h.b16 %v967
    %v3998 = vunpack.c.l.b16 %v968
    %v3999 = vunpack.c.h.b16 %v968
    %v4000 = vunpack.c.l.b16 %v969
    %v4001 = vunpack.c.h.b16 %v969
    %v4002 = vunpack.c.l.b16 %v970
    %v4003 = vunpack.c.h.b16 %v970
    %v4004 = vunpack.c.l.b16 %v971
    %v4005 = vunpack.c.h.b16 %v971
    %v4006 = vunpack.c.l.b16 %v972
    %v4007 = vunpack.c.h.b16 %v972
    %v4008 = vunpack.c.l.b16 %v973
    %v4009 = vunpack.c.h.b16 %v973
    %v4010 = vunpack.c.l.b16 %v974
    %v4011 = vunpack.c.h.b16 %v974
    %v4012 = vunpack.c.l.b16 %v975
    %v4013 = vunpack.c.h.b16 %v975
    %v4014 = vunpack.c.l.b16 %v976
    %v4015 = vunpack.c.h.b16 %v976
    %v4016 = vunpack.c.l.b16 %v977
    %v4017 = vunpack.c.h.b16 %v977
    %v4018 = vunpack.c.l.b16 %v978
    %v4019 = vunpack.c.h.b16 %v978
    %v4020 = vunpack.c.l.b16 %v979
    %v4021 = vunpack.c.h.b16 %v979
    %v4022 = vunpack.c.l.b16 %v980
    %v4023 = vunpack.c.h.b16 %v980
    %v4024 = vunpack.c.l.b16 %v981
    %v4025 = vunpack.c.h.b16 %v981
    %v4026 = vunpack.c.l.b16 %v982
    %v4027 = vunpack.c.h.b16 %v982
    %v4028 = vunpack.c.l.b16 %v983
    %v4029 = vunpack.c.h.b16 %v983
    %v4030 = vunpack.c.l.b16 %v984
    %v4031 = vunpack.c.h.b16 %v984
    %v4032 = vunpack.c.l.b16 %v985
    %v4033 = vunpack.c.h.b16 %v985
    %v4034 = vunpack.c.l.b16 %v986
    %v4035 = vunpack.c.h.b16 %v986
    %v4036 = vunpack.c.l.b16 %v987
    %v4037 = vunpack.c.h.b16 %v987
    %v4038 = vunpack.c.l.b16 %v988
    %v4039 = vunpack.c.h.b16 %v988
    %v4040 = vunpack.c.l.b16 %v989
    %v4041 = vunpack.c.h.b16 %v989
    %v4042 = vunpack.c.l.b16 %v990
    %v4043 = vunpack.c.h.b16 %v990
    %v4044 = vunpack.c.l.b16 %v991
    %v4045 = vunpack.c.h.b16 %v991
    %v4046 = vunpack.c.l.b16 %v992
    %v4047 = vunpack.c.h.b16 %v992
    %v4048 = vunpack.c.l.b16 %v993
    %v4049 = vunpack.c.h.b16 %v993
    %v4050 = vunpack.c.l.b16 %v994
    %v4051 = vunpack.c.h.b16 %v994
    %v4052 = vunpack.c.l.b16 %v995
    %v4053 = vunpack.c.h.b16 %v995
    %v4054 = vunpack.c.l.b16 %v996
    %v4055 = vunpack.c.h.b16 %v996
    %v4056 = vunpack.c.l.b16 %v997
    %v4057 = vunpack.c.h.b16 %v997
    %v4058 = vunpack.c.l.b16 %v998
    %v4059 = vunpack.c.h.b16 %v998
    %v4060 = vunpack.c.l.b16 %v999
    %v4061 = vunpack.c.h.b16 %v999
    %v4062 = vunpack.c.l.b16 %v1000
    %v4063 = vunpack.c.h.b16 %v1000
    %v4064 = vunpack.c.l.b16 %v1001
    %v4065 = vunpack.c.h.b16 %v1001
    %v4066 = vunpack.c.l.b16 %v1002
    %v4067 = vunpack.c.h.b16 %v1002
    %v4068 = vunpack.c.l.b16 %v1003
    %v4069 = vunpack.c.h.b16 %v1003
    %v4070 = vunpack.c.l.b16 %v1004
    %v4071 = vunpack.c.h.b16 %v1004
    %v4072 = vunpack.c.l.b16 %v1005
    %v4073 = vunpack.c.h.b16 %v1005
    %v4074 = vunpack.c.l.b16 %v1006
    %v4075 = vunpack.c.h.b16 %v1006
    %v4076 = vunpack.c.l.b16 %v1007
    %v4077 = vunpack.c.h.b16 %v1007
    %v4078 = vunpack.c.l.b16 %v1008
    %v4079 = vunpack.c.h.b16 %v1008
    %v4080 = vunpack.c.l.b16 %v1009
    %v4081 = vunpack.c.h.b16 %v1009
    %v4082 = vunpack.c.l.b16 %v1010
    %v4083 = vunpack.c.h.b16 %v1010
    %v4084 = vunpack.c.l.b16 %v1011
    %v4085 = vunpack.c.h.b16 %v1011
    %v4086 = vunpack.c.l.b16 %v1012
    %v4087 = vunpack.c.h.b16 %v1012
    %v4088 = vunpack.c.l.b16 %v1013
    %v4089 = vunpack.c.h.b16 %v1013
    %v4090 = vunpack.c.l.b16 %v1014
    %v4091 = vunpack.c.h.b16 %v1014
    %v4092 = vunpack.c.l.b16 %v1015
    %v4093 = vunpack.c.h.b16 %v1015
    %v4094 = vunpack.c.l.b16 %v1016
    %v4095 = vunpack.c.h.b16 %v1016
    %v4096 = vunpack.c.l.b16 %v1017
    %v4097 = vunpack.c.h.b16 %v1017
    %v4098 = vunpack.c.l.b16 %v1018
    %v4099 = vunpack.c.h.b16 %v1018
    %v4100 = vunpack.c.l.b16 %v1019
    %v4101 = vunpack.c.h.b16 %v1019
    %v4102 = vunpack.c.l.b16 %v1020
    %v4103 = vunpack.c.h.b16 %v1020
    %v4104 = vunpack.c.l.b16 %v1021
    %v4105 = vunpack.c.h.b16 %v1021
    %v4106 = vunpack.c.l.b16 %v1022
    %v4107 = vunpack.c.h.b16 %v1022
    %v4108 = vunpack.c.l.b16 %v1023
    %v4109 = vunpack.c.h.b16 %v1023
    %v4110 = vunpack.c.l.b16 %v1024
    %v4111 = vunpack.c.h.b16 %v1024
    %v4112 = vunpack.c.l.b16 %v1025
    %v4113 = vunpack.c.h.b16 %v1025
    %v4114 = vunpack.c.l.b16 %v1026
    %v4115 = vunpack.c.h.b16 %v1026
    %v4116 = vunpack.c.l.b16 %v1027
    %v4117 = vunpack.c.h.b16 %v1027
    %v4118 = vunpack.c.l.b16 %v1028
    %v4119 = vunpack.c.h.b16 %v1028
    %v4120 = vunpack.c.l.b16 %v1029
    %v4121 = vunpack.c.h.b16 %v1029
    %v4122 = vunpack.c.l.b16 %v1030
    %v4123 = vunpack.c.h.b16 %v1030
    %v4124 = vunpack.c.l.b16 %v1031
    %v4125 = vunpack.c.h.b16 %v1031
    %v4126 = vunpack.c.l.b16 %v1032
    %v4127 = vunpack.c.h.b16 %v1032
    %v4128 = vunpack.c.l.b16 %v1033
    %v4129 = vunpack.c.h.b16 %v1033
    %v4130 = vunpack.c.l.b16 %v1034
    %v4131 = vunpack.c.h.b16 %v1034
    %v4132 = vunpack.c.l.b16 %v1035
    %v4133 = vunpack.c.h.b16 %v1035
    %v4134 = vunpack.c.l.b16 %v1036
    %v4135 = vunpack.c.h.b16 %v1036
    %v4136 = vunpack.c.l.b16 %v1037
    %v4137 = vunpack.c.h.b16 %v1037
    %v4138 = vunpack.c.l.b16 %v1038
    %v4139 = vunpack.c.h.b16 %v1038
    %v4140 = vunpack.c.l.b16 %v1039
    %v4141 = vunpack.c.h.b16 %v1039
    %v4142 = vunpack.c.l.b16 %v1040
    %v4143 = vunpack.c.h.b16 %v1040
    %v4144 = vunpack.c.l.b16 %v1041
    %v4145 = vunpack.c.h.b16 %v1041
    %v4146 = vunpack.c.l.b16 %v1042
    %v4147 = vunpack.c.h.b16 %v1042
    %v4148 = vunpack.c.l.b16 %v1043
    %v4149 = vunpack.c.h.b16 %v1043
    %v4150 = vunpack.c.l.b16 %v1044
    %v4151 = vunpack.c.h.b16 %v1044
    %v4152 = vunpack.c.l.b16 %v1045
    %v4153 = vunpack.c.h.b16 %v1045
    %v4154 = vunpack.c.l.b16 %v1046
    %v4155 = vunpack.c.h.b16 %v1046
    %v4156 = vunpack.c.l.b16 %v1047
    %v4157 = vunpack.c.h.b16 %v1047
    %v4158 = vunpack.c.l.b16 %v1048
    %v4159 = vunpack.c.h.b16 %v1048
    %v4160 = vunpack.c.l.b16 %v1049
    %v4161 = vunpack.c.h.b16 %v1049
    %v4162 = vunpack.c.l.b16 %v1050
    %v4163 = vunpack.c.h.b16 %v1050
    %v4164 = vunpack.c.l.b16 %v1051
    %v4165 = vunpack.c.h.b16 %v1051
    %v4166 = vunpack.c.l.b16 %v1052
    %v4167 = vunpack.c.h.b16 %v1052
    %v4168 = vunpack.c.l.b16 %v1053
    %v4169 = vunpack.c.h.b16 %v1053
    %v4170 = vunpack.c.l.b16 %v1054
    %v4171 = vunpack.c.h.b16 %v1054
    %v4172 = vunpack.c.l.b16 %v1055
    %v4173 = vunpack.c.h.b16 %v1055
    %v4174 = vunpack.c.l.b16 %v1056
    %v4175 = vunpack.c.h.b16 %v1056
    %v4176 = vunpack.c.l.b16 %v1057
    %v4177 = vunpack.c.h.b16 %v1057
    %v4178 = vunpack.c.l.b16 %v1058
    %v4179 = vunpack.c.h.b16 %v1058
    %v4180 = vunpack.c.l.b16 %v1059
    %v4181 = vunpack.c.h.b16 %v1059
    %v4182 = vunpack.c.l.b16 %v1060
    %v4183 = vunpack.c.h.b16 %v1060
    %v4184 = vunpack.c.l.b16 %v1061
    %v4185 = vunpack.c.h.b16 %v1061
    %v4186 = vunpack.c.l.b16 %v1062
    %v4187 = vunpack.c.h.b16 %v1062
    %v4188 = vunpack.c.l.b16 %v1063
    %v4189 = vunpack.c.h.b16 %v1063
    %v4190 = vunpack.c.l.b16 %v1064
    %v4191 = vunpack.c.h.b16 %v1064
    %v4192 = vunpack.c.l.b16 %v1065
    %v4193 = vunpack.c.h.b16 %v1065
    %v4194 = vunpack.c.l.b16 %v1066
    %v4195 = vunpack.c.h.b16 %v1066
    %v4196 = vunpack.c.l.b16 %v1067
    %v4197 = vunpack.c.h.b16 %v1067
    %v4198 = vunpack.c.l.b16 %v1068
    %v4199 = vunpack.c.h.b16 %v1068
    %v4200 = vunpack.c.l.b16 %v1069
    %v4201 = vunpack.c.h.b16 %v1069
    %v4202 = vunpack.c.l.b16 %v1070
    %v4203 = vunpack.c.h.b16 %v1070
    %v4204 = vunpack.c.l.b16 %v1071
    %v4205 = vunpack.c.h.b16 %v1071
    %v4206 = vunpack.c.l.b16 %v1072
    %v4207 = vunpack.c.h.b16 %v1072
    %v4208 = vunpack.c.l.b16 %v1073
    %v4209 = vunpack.c.h.b16 %v1073
    %v4210 = vunpack.c.l.b16 %v1074
    %v4211 = vunpack.c.h.b16 %v1074
    %v4212 = vunpack.c.l.b16 %v1075
    %v4213 = vunpack.c.h.b16 %v1075
    %v4214 = vunpack.c.l.b16 %v1076
    %v4215 = vunpack.c.h.b16 %v1076
    %v4216 = vunpack.c.l.b16 %v1077
    %v4217 = vunpack.c.h.b16 %v1077
    %v4218 = vunpack.c.l.b16 %v1078
    %v4219 = vunpack.c.h.b16 %v1078
    %v4220 = vunpack.c.l.b16 %v1079
    %v4221 = vunpack.c.h.b16 %v1079
    %v4222 = vunpack.c.l.b16 %v1080
    %v4223 = vunpack.c.h.b16 %v1080
    %v4224 = vunpack.c.l.b16 %v1081
    %v4225 = vunpack.c.h.b16 %v1081
    %v4226 = vunpack.c.l.b16 %v1082
    %v4227 = vunpack.c.h.b16 %v1082
    %v4228 = vunpack.c.l.b16 %v1083
    %v4229 = vunpack.c.h.b16 %v1083
    %v4230 = vunpack.c.l.b16 %v1084
    %v4231 = vunpack.c.h.b16 %v1084
    %v4232 = vunpack.c.l.b16 %v1085
    %v4233 = vunpack.c.h.b16 %v1085
    %v4234 = vunpack.c.l.b16 %v1086
    %v4235 = vunpack.c.h.b16 %v1086
    %v4236 = vunpack.c.l.b16 %v1087
    %v4237 = vunpack.c.h.b16 %v1087
    %v4238 = vunpack.c.l.b16 %v1088
    %v4239 = vunpack.c.h.b16 %v1088
    %v4240 = vunpack.c.l.b16 %v1089
    %v4241 = vunpack.c.h.b16 %v1089
    %v4242 = vunpack.c.l.b16 %v1090
    %v4243 = vunpack.c.h.b16 %v1090
    %v4244 = vunpack.c.l.b16 %v1091
    %v4245 = vunpack.c.h.b16 %v1091
    %v4246 = vunpack.c.l.b16 %v1092
    %v4247 = vunpack.c.h.b16 %v1092
    %v4248 = vunpack.c.l.b16 %v1093
    %v4249 = vunpack.c.h.b16 %v1093
    %v4250 = vunpack.c.l.b16 %v1094
    %v4251 = vunpack.c.h.b16 %v1094
    %v4252 = vunpack.c.l.b16 %v1095
    %v4253 = vunpack.c.h.b16 %v1095
    %v4254 = vunpack.c.l.b16 %v1096
    %v4255 = vunpack.c.h.b16 %v1096
    %v4256 = vunpack.c.l.b16 %v1097
    %v4257 = vunpack.c.h.b16 %v1097
    %v4258 = vunpack.c.l.b16 %v1098
    %v4259 = vunpack.c.h.b16 %v1098
    %v4260 = vunpack.c.l.b16 %v1099
    %v4261 = vunpack.c.h.b16 %v1099
    %v4262 = vunpack.c.l.b16 %v1100
    %v4263 = vunpack.c.h.b16 %v1100
    %v4264 = vunpack.c.l.b16 %v1101
    %v4265 = vunpack.c.h.b16 %v1101
    %v4266 = vunpack.c.l.b16 %v1102
    %v4267 = vunpack.c.h.b16 %v1102
    %v4268 = vunpack.c.l.b16 %v1103
    %v4269 = vunpack.c.h.b16 %v1103
    %v4270 = vunpack.c.l.b16 %v1104
    %v4271 = vunpack.c.h.b16 %v1104
    %v4272 = vunpack.c.l.b16 %v1105
    %v4273 = vunpack.c.h.b16 %v1105
    %v4274 = vunpack.c.l.b16 %v1106
    %v4275 = vunpack.c.h.b16 %v1106
    %v4276 = vunpack.c.l.b16 %v1107
    %v4277 = vunpack.c.h.b16 %v1107
    %v4278 = vunpack.c.l.b16 %v1108
    %v4279 = vunpack.c.h.b16 %v1108
    %v4280 = vunpack.c.l.b16 %v1109
    %v4281 = vunpack.c.h.b16 %v1109
    %v4282 = vunpack.c.l.b16 %v1110
    %v4283 = vunpack.c.h.b16 %v1110
    %v4284 = vunpack.c.l.b16 %v1111
    %v4285 = vunpack.c.h.b16 %v1111
    %v4286 = vunpack.c.l.b16 %v1112
    %v4287 = vunpack.c.h.b16 %v1112
    %v4288 = vunpack.c.l.b16 %v1113
    %v4289 = vunpack.c.h.b16 %v1113
    %v4290 = vunpack.c.l.b16 %v1114
    %v4291 = vunpack.c.h.b16 %v1114
    %v4292 = vunpack.c.l.b16 %v1115
    %v4293 = vunpack.c.h.b16 %v1115
    %v4294 = vunpack.c.l.b16 %v1116
    %v4295 = vunpack.c.h.b16 %v1116
    %v4296 = vunpack.c.l.b16 %v1117
    %v4297 = vunpack.c.h.b16 %v1117
    %v4298 = vunpack.c.l.b16 %v1118
    %v4299 = vunpack.c.h.b16 %v1118
    %v4300 = vunpack.c.l.b16 %v1119
    %v4301 = vunpack.c.h.b16 %v1119
    %v4302 = vunpack.c.l.b16 %v1120
    %v4303 = vunpack.c.h.b16 %v1120
    %v4304 = vunpack.c.l.b16 %v1121
    %v4305 = vunpack.c.h.b16 %v1121
    %v4306 = vpack.c.b16 %v2274, %v2258
    %v4307 = vpack.c.b16 %v2275, %v2259
    %v4308 = vpack.c.b16 %v2276, %v2260
    %v4309 = vpack.c.b16 %v2277, %v2261
    %v4310 = vpack.c.b16 %v2278, %v2262
    %v4311 = vpack.c.b16 %v2279, %v2263
    %v4312 = vpack.c.b16 %v2280, %v2264
    %v4313 = vpack.c.b16 %v2281, %v2265
    %v4314 = vpack.c.b16 %v2282, %v2266
    %v4315 = vpack.c.b16 %v2283, %v2267
    %v4316 = vpack.c.b16 %v2284, %v2268
    %v4317 = vpack.c.b16 %v2285, %v2269
    %v4318 = vpack.c.b16 %v2286, %v2270
    %v4319 = vpack.c.b16 %v2287, %v2271
    %v4320 = vpack.c.b16 %v2288, %v2272
    %v4321 = vpack.c.b16 %v2289, %v2273
    %v4322 = vpack.c.b16 %v2306, %v2290
    %v4323 = vpack.c.b16 %v2307, %v2291
    %v4324 = vpack.c.b16 %v2308, %v2292
    %v4325 = vpack.c.b16 %v2309, %v2293
    %v4326 = vpack.c.b16 %v2310, %v2294
    %v4327 = vpack.c.b16 %v2311, %v2295
    %v4328 = vpack.c.b16 %v2312, %v2296
    %v4329 = vpack.c.b16 %v2313, %v2297
    %v4330 = vpack.c.b16 %v2314, %v2298
    %v4331 = vpack.c.b16 %v2315, %v2299
    %v4332 = vpack.c.b16 %v2316, %v2300
    %v4333 = vpack.c.b16 %v2317, %v2301
    %v4334 = vpack.c.b16 %v2318, %v2302
    %v4335 = vpack.c.b16 %v2319, %v2303
    %v4336 = vpack.c.b16 %v2320, %v2304
    %v4337 = vpack.c.b16 %v2321, %v2305
    %v4338 = vpack.c.b16 %v2338, %v2322
    %v4339 = vpack.c.b16 %v2339, %v2323
    %v4340 = vpack.c.b16 %v2340, %v2324
    %v4341 = vpack.c.b16 %v2341, %v2325
    %v4342 = vpack.c.b16 %v2342, %v2326
    %v4343 = vpack.c.b16 %v2343, %v2327
    %v4344 = vpack.c.b16 %v2344, %v2328
    %v4345 = vpack.c.b16 %v2345, %v2329
    %v4346 = vpack.c.b16 %v2346, %v2330
    %v4347 = vpack.c.b16 %v2347, %v2331
    %v4348 = vpack.c.b16 %v2348, %v2332
    %v4349 = vpack.c.b16 %v2349, %v2333
    %v4350 = vpack.c.b16 %v2350, %v2334
    %v4351 = vpack.c.b16 %v2351, %v2335
    %v4352 = vpack.c.b16 %v2352, %v2336
    %v4353 = vpack.c.b16 %v2353, %v2337
    %v4354 = vpack.c.b16 %v2370, %v2354
    %v4355 = vpack.c.b16 %v2371, %v2355
    %v4356 = vpack.c.b16 %v2372, %v2356
    %v4357 = vpack.c.b16 %v2373, %v2357
    %v4358 = vpack.c.b16 %v2374, %v2358
    %v4359 = vpack.c.b16 %v2375, %v2359
    %v4360 = vpack.c.b16 %v2376, %v2360
    %v4361 = vpack.c.b16 %v2377, %v2361
    %v4362 = vpack.c.b16 %v2378, %v2362
    %v4363 = vpack.c.b16 %v2379, %v2363
    %v4364 = vpack.c.b16 %v2380, %v2364
    %v4365 = vpack.c.b16 %v2381, %v2365
    %v4366 = vpack.c.b16 %v2382, %v2366
    %v4367 = vpack.c.b16 %v2383, %v2367
    %v4368 = vpack.c.b16 %v2384, %v2368
    %v4369 = vpack.c.b16 %v2385, %v2369
    %v4370 = vpack.c.b16 %v2402, %v2386
    %v4371 = vpack.c.b16 %v2403, %v2387
    %v4372 = vpack.c.b16 %v2404, %v2388
    %v4373 = vpack.c.b16 %v2405, %v2389
    %v4374 = vpack.c.b16 %v2406, %v2390
    %v4375 = vpack.c.b16 %v2407, %v2391
    %v4376 = vpack.c.b16 %v2408, %v2392
    %v4377 = vpack.c.b16 %v2409, %v2393
    %v4378 = vpack.c.b16 %v2410, %v2394
    %v4379 = vpack.c.b16 %v2411, %v2395
    %v4380 = vpack.c.b16 %v2412, %v2396
    %v4381 = vpack.c.b16 %v2413, %v2397
    %v4382 = vpack.c.b16 %v2414, %v2398
    %v4383 = vpack.c.b16 %v2415, %v2399
    %v4384 = vpack.c.b16 %v2416, %v2400
    %v4385 = vpack.c.b16 %v2417, %v2401
    %v4386 = vpack.c.b16 %v2434, %v2418
    %v4387 = vpack.c.b16 %v2435, %v2419
    %v4388 = vpack.c.b16 %v2436, %v2420
    %v4389 = vpack.c.b16 %v2437, %v2421
    %v4390 = vpack.c.b16 %v2438, %v2422
    %v4391 = vpack.c.b16 %v2439, %v2423
    %v4392 = vpack.c.b16 %v2440, %v2424
    %v4393 = vpack.c.b16 %v2441, %v2425
    %v4394 = vpack.c.b16 %v2442, %v2426
    %v4395 = vpack.c.b16 %v2443, %v2427
    %v4396 = vpack.c.b16 %v2444, %v2428
    %v4397 = vpack.c.b16 %v2445, %v2429
    %v4398 = vpack.c.b16 %v2446, %v2430
    %v4399 = vpack.c.b16 %v2447, %v2431
    %v4400 = vpack.c.b16 %v2448, %v2432
    %v4401 = vpack.c.b16 %v2449, %v2433
    %v4402 = vpack.c.b16 %v2466, %v2450
    %v4403 = vpack.c.b16 %v2467, %v2451
    %v4404 = vpack.c.b16 %v2468, %v2452
    %v4405 = vpack.c.b16 %v2469, %v2453
    %v4406 = vpack.c.b16 %v2470, %v2454
    %v4407 = vpack.c.b16 %v2471, %v2455
    %v4408 = vpack.c.b16 %v2472, %v2456
    %v4409 = vpack.c.b16 %v2473, %v2457
    %v4410 = vpack.c.b16 %v2474, %v2458
    %v4411 = vpack.c.b16 %v2475, %v2459
    %v4412 = vpack.c.b16 %v2476, %v2460
    %v4413 = vpack.c.b16 %v2477, %v2461
    %v4414 = vpack.c.b16 %v2478, %v2462
    %v4415 = vpack.c.b16 %v2479, %v2463
    %v4416 = vpack.c.b16 %v2480, %v2464
    %v4417 = vpack.c.b16 %v2481, %v2465
    %v4418 = vpack.c.b16 %v2498, %v2482
    %v4419 = vpack.c.b16 %v2499, %v2483
    %v4420 = vpack.c.b16 %v2500, %v2484
    %v4421 = vpack.c.b16 %v2501, %v2485
    %v4422 = vpack.c.b16 %v2502, %v2486
    %v4423 = vpack.c.b16 %v2503, %v2487
    %v4424 = vpack.c.b16 %v2504, %v2488
    %v4425 = vpack.c.b16 %v2505, %v2489
    %v4426 = vpack.c.b16 %v2506, %v2490
    %v4427 = vpack.c.b16 %v2507, %v2491
    %v4428 = vpack.c.b16 %v2508, %v2492
    %v4429 = vpack.c.b16 %v2509, %v2493
    %v4430 = vpack.c.b16 %v2510, %v2494
    %v4431 = vpack.c.b16 %v2511, %v2495
    %v4432 = vpack.c.b16 %v2512, %v2496
    %v4433 = vpack.c.b16 %v2513, %v2497
    %v4434 = vpack.c.b16 %v2530, %v2514
    %v4435 = vpack.c.b16 %v2531, %v2515
    %v4436 = vpack.c.b16 %v2532, %v2516
    %v4437 = vpack.c.b16 %v2533, %v2517
    %v4438 = vpack.c.b16 %v2534, %v2518
    %v4439 = vpack.c.b16 %v2535, %v2519
    %v4440 = vpack.c.b16 %v2536, %v2520
    %v4441 = vpack.c.b16 %v2537, %v2521
    %v4442 = vpack.c.b16 %v2538, %v2522
    %v4443 = vpack.c.b16 %v2539, %v2523
    %v4444 = vpack.c.b16 %v2540, %v2524
    %v4445 = vpack.c.b16 %v2541, %v2525
    %v4446 = vpack.c.b16 %v2542, %v2526
    %v4447 = vpack.c.b16 %v2543, %v2527
    %v4448 = vpack.c.b16 %v2544, %v2528
    %v4449 = vpack.c.b16 %v2545, %v2529
    %v4450 = vpack.c.b16 %v2562, %v2546
    %v4451 = vpack.c.b16 %v2563, %v2547
    %v4452 = vpack.c.b16 %v2564, %v2548
    %v4453 = vpack.c.b16 %v2565, %v2549
    %v4454 = vpack.c.b16 %v2566, %v2550
    %v4455 = vpack.c.b16 %v2567, %v2551
    %v4456 = vpack.c.b16 %v2568, %v2552
    %v4457 = vpack.c.b16 %v2569, %v2553
    %v4458 = vpack.c.b16 %v2570, %v2554
    %v4459 = vpack.c.b16 %v2571, %v2555
    %v4460 = vpack.c.b16 %v2572, %v2556
    %v4461 = vpack.c.b16 %v2573, %v2557
    %v4462 = vpack.c.b16 %v2574, %v2558
    %v4463 = vpack.c.b16 %v2575, %v2559
    %v4464 = vpack.c.b16 %v2576, %v2560
    %v4465 = vpack.c.b16 %v2577, %v2561
    %v4466 = vpack.c.b16 %v2594, %v2578
    %v4467 = vpack.c.b16 %v2595, %v2579
    %v4468 = vpack.c.b16 %v2596, %v2580
    %v4469 = vpack.c.b16 %v2597, %v2581
    %v4470 = vpack.c.b16 %v2598, %v2582
    %v4471 = vpack.c.b16 %v2599, %v2583
    %v4472 = vpack.c.b16 %v2600, %v2584
    %v4473 = vpack.c.b16 %v2601, %v2585
    %v4474 = vpack.c.b16 %v2602, %v2586
    %v4475 = vpack.c.b16 %v2603, %v2587
    %v4476 = vpack.c.b16 %v2604, %v2588
    %v4477 = vpack.c.b16 %v2605, %v2589
    %v4478 = vpack.c.b16 %v2606, %v2590
    %v4479 = vpack.c.b16 %v2607, %v2591
    %v4480 = vpack.c.b16 %v2608, %v2592
    %v4481 = vpack.c.b16 %v2609, %v2593
    %v4482 = vpack.c.b16 %v2626, %v2610
    %v4483 = vpack.c.b16 %v2627, %v2611
    %v4484 = vpack.c.b16 %v2628, %v2612
    %v4485 = vpack.c.b16 %v2629, %v2613
    %v4486 = vpack.c.b16 %v2630, %v2614
    %v4487 = vpack.c.b16 %v2631, %v2615
    %v4488 = vpack.c.b16 %v2632, %v2616
    %v4489 = vpack.c.b16 %v2633, %v2617
    %v4490 = vpack.c.b16 %v2634, %v2618
    %v4491 = vpack.c.b16 %v2635, %v2619
    %v4492 = vpack.c.b16 %v2636, %v2620
    %v4493 = vpack.c.b16 %v2637, %v2621
    %v4494 = vpack.c.b16 %v2638, %v2622
    %v4495 = vpack.c.b16 %v2639, %v2623
    %v4496 = vpack.c.b16 %v2640, %v2624
    %v4497 = vpack.c.b16 %v2641, %v2625
    %v4498 = vpack.c.b16 %v2658, %v2642
    %v4499 = vpack.c.b16 %v2659, %v2643
    %v4500 = vpack.c.b16 %v2660, %v2644
    %v4501 = vpack.c.b16 %v2661, %v2645
    %v4502 = vpack.c.b16 %v2662, %v2646
    %v4503 = vpack.c.b16 %v2663, %v2647
    %v4504 = vpack.c.b16 %v2664, %v2648
    %v4505 = vpack.c.b16 %v2665, %v2649
    %v4506 = vpack.c.b16 %v2666, %v2650
    %v4507 = vpack.c.b16 %v2667, %v2651
    %v4508 = vpack.c.b16 %v2668, %v2652
    %v4509 = vpack.c.b16 %v2669, %v2653
    %v4510 = vpack.c.b16 %v2670, %v2654
    %v4511 = vpack.c.b16 %v2671, %v2655
    %v4512 = vpack.c.b16 %v2672, %v2656
    %v4513 = vpack.c.b16 %v2673, %v2657
    %v4514 = vpack.c.b16 %v2690, %v2674
    %v4515 = vpack.c.b16 %v2691, %v2675
    %v4516 = vpack.c.b16 %v2692, %v2676
    %v4517 = vpack.c.b16 %v2693, %v2677
    %v4518 = vpack.c.b16 %v2694, %v2678
    %v4519 = vpack.c.b16 %v2695, %v2679
    %v4520 = vpack.c.b16 %v2696, %v2680
    %v4521 = vpack.c.b16 %v2697, %v2681
    %v4522 = vpack.c.b16 %v2698, %v2682
    %v4523 = vpack.c.b16 %v2699, %v2683
    %v4524 = vpack.c.b16 %v2700, %v2684
    %v4525 = vpack.c.b16 %v2701, %v2685
    %v4526 = vpack.c.b16 %v2702, %v2686
    %v4527 = vpack.c.b16 %v2703, %v2687
    %v4528 = vpack.c.b16 %v2704, %v2688
    %v4529 = vpack.c.b16 %v2705, %v2689
    %v4530 = vpack.c.b16 %v2722, %v2706
    %v4531 = vpack.c.b16 %v2723, %v2707
    %v4532 = vpack.c.b16 %v2724, %v2708
    %v4533 = vpack.c.b16 %v2725, %v2709
    %v4534 = vpack.c.b16 %v2726, %v2710
    %v4535 = vpack.c.b16 %v2727, %v2711
    %v4536 = vpack.c.b16 %v2728, %v2712
    %v4537 = vpack.c.b16 %v2729, %v2713
    %v4538 = vpack.c.b16 %v2730, %v2714
    %v4539 = vpack.c.b16 %v2731, %v2715
    %v4540 = vpack.c.b16 %v2732, %v2716
    %v4541 = vpack.c.b16 %v2733, %v2717
    %v4542 = vpack.c.b16 %v2734, %v2718
    %v4543 = vpack.c.b16 %v2735, %v2719
    %v4544 = vpack.c.b16 %v2736, %v2720
    %v4545 = vpack.c.b16 %v2737, %v2721
    %v4546 = vpack.c.b16 %v2754, %v2738
    %v4547 = vpack.c.b16 %v2755, %v2739
    %v4548 = vpack.c.b16 %v2756, %v2740
    %v4549 = vpack.c.b16 %v2757, %v2741
    %v4550 = vpack.c.b16 %v2758, %v2742
    %v4551 = vpack.c.b16 %v2759, %v2743
    %v4552 = vpack.c.b16 %v2760, %v2744
    %v4553 = vpack.c.b16 %v2761, %v2745
    %v4554 = vpack.c.b16 %v2762, %v2746
    %v4555 = vpack.c.b16 %v2763, %v2747
    %v4556 = vpack.c.b16 %v2764, %v2748
    %v4557 = vpack.c.b16 %v2765, %v2749
    %v4558 = vpack.c.b16 %v2766, %v2750
    %v4559 = vpack.c.b16 %v2767, %v2751
    %v4560 = vpack.c.b16 %v2768, %v2752
    %v4561 = vpack.c.b16 %v2769, %v2753
    %v4562 = vpack.c.b16 %v2786, %v2770
    %v4563 = vpack.c.b16 %v2787, %v2771
    %v4564 = vpack.c.b16 %v2788, %v2772
    %v4565 = vpack.c.b16 %v2789, %v2773
    %v4566 = vpack.c.b16 %v2790, %v2774
    %v4567 = vpack.c.b16 %v2791, %v2775
    %v4568 = vpack.c.b16 %v2792, %v2776
    %v4569 = vpack.c.b16 %v2793, %v2777
    %v4570 = vpack.c.b16 %v2794, %v2778
    %v4571 = vpack.c.b16 %v2795, %v2779
    %v4572 = vpack.c.b16 %v2796, %v2780
    %v4573 = vpack.c.b16 %v2797, %v2781
    %v4574 = vpack.c.b16 %v2798, %v2782
    %v4575 = vpack.c.b16 %v2799, %v2783
    %v4576 = vpack.c.b16 %v2800, %v2784
    %v4577 = vpack.c.b16 %v2801, %v2785
    %v4578 = vpack.c.b16 %v2818, %v2802
    %v4579 = vpack.c.b16 %v2819, %v2803
    %v4580 = vpack.c.b16 %v2820, %v2804
    %v4581 = vpack.c.b16 %v2821, %v2805
    %v4582 = vpack.c.b16 %v2822, %v2806
    %v4583 = vpack.c.b16 %v2823, %v2807
    %v4584 = vpack.c.b16 %v2824, %v2808
    %v4585 = vpack.c.b16 %v2825, %v2809
    %v4586 = vpack.c.b16 %v2826, %v2810
    %v4587 = vpack.c.b16 %v2827, %v2811
    %v4588 = vpack.c.b16 %v2828, %v2812
    %v4589 = vpack.c.b16 %v2829, %v2813
    %v4590 = vpack.c.b16 %v2830, %v2814
    %v4591 = vpack.c.b16 %v2831, %v2815
    %v4592 = vpack.c.b16 %v2832, %v2816
    %v4593 = vpack.c.b16 %v2833, %v2817
    %v4594 = vpack.c.b16 %v2850, %v2834
    %v4595 = vpack.c.b16 %v2851, %v2835
    %v4596 = vpack.c.b16 %v2852, %v2836
    %v4597 = vpack.c.b16 %v2853, %v2837
    %v4598 = vpack.c.b16 %v2854, %v2838
    %v4599 = vpack.c.b16 %v2855, %v2839
    %v4600 = vpack.c.b16 %v2856, %v2840
    %v4601 = vpack.c.b16 %v2857, %v2841
    %v4602 = vpack.c.b16 %v2858, %v2842
    %v4603 = vpack.c.b16 %v2859, %v2843
    %v4604 = vpack.c.b16 %v2860, %v2844
    %v4605 = vpack.c.b16 %v2861, %v2845
    %v4606 = vpack.c.b16 %v2862, %v2846
    %v4607 = vpack.c.b16 %v2863, %v2847
    %v4608 = vpack.c.b16 %v2864, %v2848
    %v4609 = vpack.c.b16 %v2865, %v2849
    %v4610 = vpack.c.b16 %v2882, %v2866
    %v4611 = vpack.c.b16 %v2883, %v2867
    %v4612 = vpack.c.b16 %v2884, %v2868
    %v4613 = vpack.c.b16 %v2885, %v2869
    %v4614 = vpack.c.b16 %v2886, %v2870
    %v4615 = vpack.c.b16 %v2887, %v2871
    %v4616 = vpack.c.b16 %v2888, %v2872
    %v4617 = vpack.c.b16 %v2889, %v2873
    %v4618 = vpack.c.b16 %v2890, %v2874
    %v4619 = vpack.c.b16 %v2891, %v2875
    %v4620 = vpack.c.b16 %v2892, %v2876
    %v4621 = vpack.c.b16 %v2893, %v2877
    %v4622 = vpack.c.b16 %v2894, %v2878
    %v4623 = vpack.c.b16 %v2895, %v2879
    %v4624 = vpack.c.b16 %v2896, %v2880
    %v4625 = vpack.c.b16 %v2897, %v2881
    %v4626 = vpack.c.b16 %v2914, %v2898
    %v4627 = vpack.c.b16 %v2915, %v2899
    %v4628 = vpack.c.b16 %v2916, %v2900
    %v4629 = vpack.c.b16 %v2917, %v2901
    %v4630 = vpack.c.b16 %v2918, %v2902
    %v4631 = vpack.c.b16 %v2919, %v2903
    %v4632 = vpack.c.b16 %v2920, %v2904
    %v4633 = vpack.c.b16 %v2921, %v2905
    %v4634 = vpack.c.b16 %v2922, %v2906
    %v4635 = vpack.c.b16 %v2923, %v2907
    %v4636 = vpack.c.b16 %v2924, %v2908
    %v4637 = vpack.c.b16 %v2925, %v2909
    %v4638 = vpack.c.b16 %v2926, %v2910
    %v4639 = vpack.c.b16 %v2927, %v2911
    %v4640 = vpack.c.b16 %v2928, %v2912
    %v4641 = vpack.c.b16 %v2929, %v2913
    %v4642 = vpack.c.b16 %v2946, %v2930
    %v4643 = vpack.c.b16 %v2947, %v2931
    %v4644 = vpack.c.b16 %v2948, %v2932
    %v4645 = vpack.c.b16 %v2949, %v2933
    %v4646 = vpack.c.b16 %v2950, %v2934
    %v4647 = vpack.c.b16 %v2951, %v2935
    %v4648 = vpack.c.b16 %v2952, %v2936
    %v4649 = vpack.c.b16 %v2953, %v2937
    %v4650 = vpack.c.b16 %v2954, %v2938
    %v4651 = vpack.c.b16 %v2955, %v2939
    %v4652 = vpack.c.b16 %v2956, %v2940
    %v4653 = vpack.c.b16 %v2957, %v2941
    %v4654 = vpack.c.b16 %v2958, %v2942
    %v4655 = vpack.c.b16 %v2959, %v2943
    %v4656 = vpack.c.b16 %v2960, %v2944
    %v4657 = vpack.c.b16 %v2961, %v2945
    %v4658 = vpack.c.b16 %v2978, %v2962
    %v4659 = vpack.c.b16 %v2979, %v2963
    %v4660 = vpack.c.b16 %v2980, %v2964
    %v4661 = vpack.c.b16 %v2981, %v2965
    %v4662 = vpack.c.b16 %v2982, %v2966
    %v4663 = vpack.c.b16 %v2983, %v2967
    %v4664 = vpack.c.b16 %v2984, %v2968
    %v4665 = vpack.c.b16 %v2985, %v2969
    %v4666 = vpack.c.b16 %v2986, %v2970
    %v4667 = vpack.c.b16 %v2987, %v2971
    %v4668 = vpack.c.b16 %v2988, %v2972
    %v4669 = vpack.c.b16 %v2989, %v2973
    %v4670 = vpack.c.b16 %v2990, %v2974
    %v4671 = vpack.c.b16 %v2991, %v2975
    %v4672 = vpack.c.b16 %v2992, %v2976
    %v4673 = vpack.c.b16 %v2993, %v2977
    %v4674 = vpack.c.b16 %v3010, %v2994
    %v4675 = vpack.c.b16 %v3011, %v2995
    %v4676 = vpack.c.b16 %v3012, %v2996
    %v4677 = vpack.c.b16 %v3013, %v2997
    %v4678 = vpack.c.b16 %v3014, %v2998
    %v4679 = vpack.c.b16 %v3015, %v2999
    %v4680 = vpack.c.b16 %v3016, %v3000
    %v4681 = vpack.c.b16 %v3017, %v3001
    %v4682 = vpack.c.b16 %v3018, %v3002
    %v4683 = vpack.c.b16 %v3019, %v3003
    %v4684 = vpack.c.b16 %v3020, %v3004
    %v4685 = vpack.c.b16 %v3021, %v3005
    %v4686 = vpack.c.b16 %v3022, %v3006
    %v4687 = vpack.c.b16 %v3023, %v3007
    %v4688 = vpack.c.b16 %v3024, %v3008
    %v4689 = vpack.c.b16 %v3025, %v3009
    %v4690 = vpack.c.b16 %v3042, %v3026
    %v4691 = vpack.c.b16 %v3043, %v3027
    %v4692 = vpack.c.b16 %v3044, %v3028
    %v4693 = vpack.c.b16 %v3045, %v3029
    %v4694 = vpack.c.b16 %v3046, %v3030
    %v4695 = vpack.c.b16 %v3047, %v3031
    %v4696 = vpack.c.b16 %v3048, %v3032
    %v4697 = vpack.c.b16 %v3049, %v3033
    %v4698 = vpack.c.b16 %v3050, %v3034
    %v4699 = vpack.c.b16 %v3051, %v3035
    %v4700 = vpack.c.b16 %v3052, %v3036
    %v4701 = vpack.c.b16 %v3053, %v3037
    %v4702 = vpack.c.b16 %v3054, %v3038
    %v4703 = vpack.c.b16 %v3055, %v3039
    %v4704 = vpack.c.b16 %v3056, %v3040
    %v4705 = vpack.c.b16 %v3057, %v3041
    %v4706 = vpack.c.b16 %v3074, %v3058
    %v4707 = vpack.c.b16 %v3075, %v3059
    %v4708 = vpack.c.b16 %v3076, %v3060
    %v4709 = vpack.c.b16 %v3077, %v3061
    %v4710 = vpack.c.b16 %v3078, %v3062
    %v4711 = vpack.c.b16 %v3079, %v3063
    %v4712 = vpack.c.b16 %v3080, %v3064
    %v4713 = vpack.c.b16 %v3081, %v3065
    %v4714 = vpack.c.b16 %v3082, %v3066
    %v4715 = vpack.c.b16 %v3083, %v3067
    %v4716 = vpack.c.b16 %v3084, %v3068
    %v4717 = vpack.c.b16 %v3085, %v3069
    %v4718 = vpack.c.b16 %v3086, %v3070
    %v4719 = vpack.c.b16 %v3087, %v3071
    %v4720 = vpack.c.b16 %v3088, %v3072
    %v4721 = vpack.c.b16 %v3089, %v3073
    %v4722 = vpack.c.b16 %v3106, %v3090
    %v4723 = vpack.c.b16 %v3107, %v3091
    %v4724 = vpack.c.b16 %v3108, %v3092
    %v4725 = vpack.c.b16 %v3109, %v3093
    %v4726 = vpack.c.b16 %v3110, %v3094
    %v4727 = vpack.c.b16 %v3111, %v3095
    %v4728 = vpack.c.b16 %v3112, %v3096
    %v4729 = vpack.c.b16 %v3113, %v3097
    %v4730 = vpack.c.b16 %v3114, %v3098
    %v4731 = vpack.c.b16 %v3115, %v3099
    %v4732 = vpack.c.b16 %v3116, %v3100
    %v4733 = vpack.c.b16 %v3117, %v3101
    %v4734 = vpack.c.b16 %v3118, %v3102
    %v4735 = vpack.c.b16 %v3119, %v3103
    %v4736 = vpack.c.b16 %v3120, %v3104
    %v4737 = vpack.c.b16 %v3121, %v3105
    %v4738 = vpack.c.b16 %v3138, %v3122
    %v4739 = vpack.c.b16 %v3139, %v3123
    %v4740 = vpack.c.b16 %v3140, %v3124
    %v4741 = vpack.c.b16 %v3141, %v3125
    %v4742 = vpack.c.b16 %v3142, %v3126
    %v4743 = vpack.c.b16 %v3143, %v3127
    %v4744 = vpack.c.b16 %v3144, %v3128
    %v4745 = vpack.c.b16 %v3145, %v3129
    %v4746 = vpack.c.b16 %v3146, %v3130
    %v4747 = vpack.c.b16 %v3147, %v3131
    %v4748 = vpack.c.b16 %v3148, %v3132
    %v4749 = vpack.c.b16 %v3149, %v3133
    %v4750 = vpack.c.b16 %v3150, %v3134
    %v4751 = vpack.c.b16 %v3151, %v3135
    %v4752 = vpack.c.b16 %v3152, %v3136
    %v4753 = vpack.c.b16 %v3153, %v3137
    %v4754 = vpack.c.b16 %v3170, %v3154
    %v4755 = vpack.c.b16 %v3171, %v3155
    %v4756 = vpack.c.b16 %v3172, %v3156
    %v4757 = vpack.c.b16 %v3173, %v3157
    %v4758 = vpack.c.b16 %v3174, %v3158
    %v4759 = vpack.c.b16 %v3175, %v3159
    %v4760 = vpack.c.b16 %v3176, %v3160
    %v4761 = vpack.c.b16 %v3177, %v3161
    %v4762 = vpack.c.b16 %v3178, %v3162
    %v4763 = vpack.c.b16 %v3179, %v3163
    %v4764 = vpack.c.b16 %v3180, %v3164
    %v4765 = vpack.c.b16 %v3181, %v3165
    %v4766 = vpack.c.b16 %v3182, %v3166
    %v4767 = vpack.c.b16 %v3183, %v3167
    %v4768 = vpack.c.b16 %v3184, %v3168
    %v4769 = vpack.c.b16 %v3185, %v3169
    %v4770 = vpack.c.b16 %v3202, %v3186
    %v4771 = vpack.c.b16 %v3203, %v3187
    %v4772 = vpack.c.b16 %v3204, %v3188
    %v4773 = vpack.c.b16 %v3205, %v3189
    %v4774 = vpack.c.b16 %v3206, %v3190
    %v4775 = vpack.c.b16 %v3207, %v3191
    %v4776 = vpack.c.b16 %v3208, %v3192
    %v4777 = vpack.c.b16 %v3209, %v3193
    %v4778 = vpack.c.b16 %v3210, %v3194
    %v4779 = vpack.c.b16 %v3211, %v3195
    %v4780 = vpack.c.b16 %v3212, %v3196
    %v4781 = vpack.c.b16 %v3213, %v3197
    %v4782 = vpack.c.b16 %v3214, %v3198
    %v4783 = vpack.c.b16 %v3215, %v3199
    %v4784 = vpack.c.b16 %v3216, %v3200
    %v4785 = vpack.c.b16 %v3217, %v3201
    %v4786 = vpack.c.b16 %v3234, %v3218
    %v4787 = vpack.c.b16 %v3235, %v3219
    %v4788 = vpack.c.b16 %v3236, %v3220
    %v4789 = vpack.c.b16 %v3237, %v3221
    %v4790 = vpack.c.b16 %v3238, %v3222
    %v4791 = vpack.c.b16 %v3239, %v3223
    %v4792 = vpack.c.b16 %v3240, %v3224
    %v4793 = vpack.c.b16 %v3241, %v3225
    %v4794 = vpack.c.b16 %v3242, %v3226
    %v4795 = vpack.c.b16 %v3243, %v3227
    %v4796 = vpack.c.b16 %v3244, %v3228
    %v4797 = vpack.c.b16 %v3245, %v3229
    %v4798 = vpack.c.b16 %v3246, %v3230
    %v4799 = vpack.c.b16 %v3247, %v3231
    %v4800 = vpack.c.b16 %v3248, %v3232
    %v4801 = vpack.c.b16 %v3249, %v3233
    %v4802 = vpack.c.b16 %v3266, %v3250
    %v4803 = vpack.c.b16 %v3267, %v3251
    %v4804 = vpack.c.b16 %v3268, %v3252
    %v4805 = vpack.c.b16 %v3269, %v3253
    %v4806 = vpack.c.b16 %v3270, %v3254
    %v4807 = vpack.c.b16 %v3271, %v3255
    %v4808 = vpack.c.b16 %v3272, %v3256
    %v4809 = vpack.c.b16 %v3273, %v3257
    %v4810 = vpack.c.b16 %v3274, %v3258
    %v4811 = vpack.c.b16 %v3275, %v3259
    %v4812 = vpack.c.b16 %v3276, %v3260
    %v4813 = vpack.c.b16 %v3277, %v3261
    %v4814 = vpack.c.b16 %v3278, %v3262
    %v4815 = vpack.c.b16 %v3279, %v3263
    %v4816 = vpack.c.b16 %v3280, %v3264
    %v4817 = vpack.c.b16 %v3281, %v3265
    %v4818 = vpack.c.b16 %v3298, %v3282
    %v4819 = vpack.c.b16 %v3299, %v3283
    %v4820 = vpack.c.b16 %v3300, %v3284
    %v4821 = vpack.c.b16 %v3301, %v3285
    %v4822 = vpack.c.b16 %v3302, %v3286
    %v4823 = vpack.c.b16 %v3303, %v3287
    %v4824 = vpack.c.b16 %v3304, %v3288
    %v4825 = vpack.c.b16 %v3305, %v3289
    %v4826 = vpack.c.b16 %v3306, %v3290
    %v4827 = vpack.c.b16 %v3307, %v3291
    %v4828 = vpack.c.b16 %v3308, %v3292
    %v4829 = vpack.c.b16 %v3309, %v3293
    %v4830 = vpack.c.b16 %v3310, %v3294
    %v4831 = vpack.c.b16 %v3311, %v3295
    %v4832 = vpack.c.b16 %v3312, %v3296
    %v4833 = vpack.c.b16 %v3313, %v3297
    %v4834 = vpack.c.b16 %v3330, %v3314
    %v4835 = vpack.c.b16 %v3331, %v3315
    %v4836 = vpack.c.b16 %v3332, %v3316
    %v4837 = vpack.c.b16 %v3333, %v3317
    %v4838 = vpack.c.b16 %v3334, %v3318
    %v4839 = vpack.c.b16 %v3335, %v3319
    %v4840 = vpack.c.b16 %v3336, %v3320
    %v4841 = vpack.c.b16 %v3337, %v3321
    %v4842 = vpack.c.b16 %v3338, %v3322
    %v4843 = vpack.c.b16 %v3339, %v3323
    %v4844 = vpack.c.b16 %v3340, %v3324
    %v4845 = vpack.c.b16 %v3341, %v3325
    %v4846 = vpack.c.b16 %v3342, %v3326
    %v4847 = vpack.c.b16 %v3343, %v3327
    %v4848 = vpack.c.b16 %v3344, %v3328
    %v4849 = vpack.c.b16 %v3345, %v3329
    %v4850 = vpack.c.b16 %v3362, %v3346
    %v4851 = vpack.c.b16 %v3363, %v3347
    %v4852 = vpack.c.b16 %v3364, %v3348
    %v4853 = vpack.c.b16 %v3365, %v3349
    %v4854 = vpack.c.b16 %v3366, %v3350
    %v4855 = vpack.c.b16 %v3367, %v3351
    %v4856 = vpack.c.b16 %v3368, %v3352
    %v4857 = vpack.c.b16 %v3369, %v3353
    %v4858 = vpack.c.b16 %v3370, %v3354
    %v4859 = vpack.c.b16 %v3371, %v3355
    %v4860 = vpack.c.b16 %v3372, %v3356
    %v4861 = vpack.c.b16 %v3373, %v3357
    %v4862 = vpack.c.b16 %v3374, %v3358
    %v4863 = vpack.c.b16 %v3375, %v3359
    %v4864 = vpack.c.b16 %v3376, %v3360
    %v4865 = vpack.c.b16 %v3377, %v3361
    %v4866 = vpack.c.b16 %v3394, %v3378
    %v4867 = vpack.c.b16 %v3395, %v3379
    %v4868 = vpack.c.b16 %v3396, %v3380
    %v4869 = vpack.c.b16 %v3397, %v3381
    %v4870 = vpack.c.b16 %v3398, %v3382
    %v4871 = vpack.c.b16 %v3399, %v3383
    %v4872 = vpack.c.b16 %v3400, %v3384
    %v4873 = vpack.c.b16 %v3401, %v3385
    %v4874 = vpack.c.b16 %v3402, %v3386
    %v4875 = vpack.c.b16 %v3403, %v3387
    %v4876 = vpack.c.b16 %v3404, %v3388
    %v4877 = vpack.c.b16 %v3405, %v3389
    %v4878 = vpack.c.b16 %v3406, %v3390
    %v4879 = vpack.c.b16 %v3407, %v3391
    %v4880 = vpack.c.b16 %v3408, %v3392
    %v4881 = vpack.c.b16 %v3409, %v3393
    %v4882 = vpack.c.b16 %v3426, %v3410
    %v4883 = vpack.c.b16 %v3427, %v3411
    %v4884 = vpack.c.b16 %v3428, %v3412
    %v4885 = vpack.c.b16 %v3429, %v3413
    %v4886 = vpack.c.b16 %v3430, %v3414
    %v4887 = vpack.c.b16 %v3431, %v3415
    %v4888 = vpack.c.b16 %v3432, %v3416
    %v4889 = vpack.c.b16 %v3433, %v3417
    %v4890 = vpack.c.b16 %v3434, %v3418
    %v4891 = vpack.c.b16 %v3435, %v3419
    %v4892 = vpack.c.b16 %v3436, %v3420
    %v4893 = vpack.c.b16 %v3437, %v3421
    %v4894 = vpack.c.b16 %v3438, %v3422
    %v4895 = vpack.c.b16 %v3439, %v3423
    %v4896 = vpack.c.b16 %v3440, %v3424
    %v4897 = vpack.c.b16 %v3441, %v3425
    %v4898 = vpack.c.b16 %v3458, %v3442
    %v4899 = vpack.c.b16 %v3459, %v3443
    %v4900 = vpack.c.b16 %v3460, %v3444
    %v4901 = vpack.c.b16 %v3461, %v3445
    %v4902 = vpack.c.b16 %v3462, %v3446
    %v4903 = vpack.c.b16 %v3463, %v3447
    %v4904 = vpack.c.b16 %v3464, %v3448
    %v4905 = vpack.c.b16 %v3465, %v3449
    %v4906 = vpack.c.b16 %v3466, %v3450
    %v4907 = vpack.c.b16 %v3467, %v3451
    %v4908 = vpack.c.b16 %v3468, %v3452
    %v4909 = vpack.c.b16 %v3469, %v3453
    %v4910 = vpack.c.b16 %v3470, %v3454
    %v4911 = vpack.c.b16 %v3471, %v3455
    %v4912 = vpack.c.b16 %v3472, %v3456
    %v4913 = vpack.c.b16 %v3473, %v3457
    %v4914 = vpack.c.b16 %v3490, %v3474
    %v4915 = vpack.c.b16 %v3491, %v3475
    %v4916 = vpack.c.b16 %v3492, %v3476
    %v4917 = vpack.c.b16 %v3493, %v3477
    %v4918 = vpack.c.b16 %v3494, %v3478
    %v4919 = vpack.c.b16 %v3495, %v3479
    %v4920 = vpack.c.b16 %v3496, %v3480
    %v4921 = vpack.c.b16 %v3497, %v3481
    %v4922 = vpack.c.b16 %v3498, %v3482
    %v4923 = vpack.c.b16 %v3499, %v3483
    %v4924 = vpack.c.b16 %v3500, %v3484
    %v4925 = vpack.c.b16 %v3501, %v3485
    %v4926 = vpack.c.b16 %v3502, %v3486
    %v4927 = vpack.c.b16 %v3503, %v3487
    %v4928 = vpack.c.b16 %v3504, %v3488
    %v4929 = vpack.c.b16 %v3505, %v3489
    %v4930 = vpack.c.b16 %v3522, %v3506
    %v4931 = vpack.c.b16 %v3523, %v3507
    %v4932 = vpack.c.b16 %v3524, %v3508
    %v4933 = vpack.c.b16 %v3525, %v3509
    %v4934 = vpack.c.b16 %v3526, %v3510
    %v4935 = vpack.c.b16 %v3527, %v3511
    %v4936 = vpack.c.b16 %v3528, %v3512
    %v4937 = vpack.c.b16 %v3529, %v3513
    %v4938 = vpack.c.b16 %v3530, %v3514
    %v4939 = vpack.c.b16 %v3531, %v3515
    %v4940 = vpack.c.b16 %v3532, %v3516
    %v4941 = vpack.c.b16 %v3533, %v3517
    %v4942 = vpack.c.b16 %v3534, %v3518
    %v4943 = vpack.c.b16 %v3535, %v3519
    %v4944 = vpack.c.b16 %v3536, %v3520
    %v4945 = vpack.c.b16 %v3537, %v3521
    %v4946 = vpack.c.b16 %v3554, %v3538
    %v4947 = vpack.c.b16 %v3555, %v3539
    %v4948 = vpack.c.b16 %v3556, %v3540
    %v4949 = vpack.c.b16 %v3557, %v3541
    %v4950 = vpack.c.b16 %v3558, %v3542
    %v4951 = vpack.c.b16 %v3559, %v3543
    %v4952 = vpack.c.b16 %v3560, %v3544
    %v4953 = vpack.c.b16 %v3561, %v3545
    %v4954 = vpack.c.b16 %v3562, %v3546
    %v4955 = vpack.c.b16 %v3563, %v3547
    %v4956 = vpack.c.b16 %v3564, %v3548
    %v4957 = vpack.c.b16 %v3565, %v3549
    %v4958 = vpack.c.b16 %v3566, %v3550
    %v4959 = vpack.c.b16 %v3567, %v3551
    %v4960 = vpack.c.b16 %v3568, %v3552
    %v4961 = vpack.c.b16 %v3569, %v3553
    %v4962 = vpack.c.b16 %v3586, %v3570
    %v4963 = vpack.c.b16 %v3587, %v3571
    %v4964 = vpack.c.b16 %v3588, %v3572
    %v4965 = vpack.c.b16 %v3589, %v3573
    %v4966 = vpack.c.b16 %v3590, %v3574
    %v4967 = vpack.c.b16 %v3591, %v3575
    %v4968 = vpack.c.b16 %v3592, %v3576
    %v4969 = vpack.c.b16 %v3593, %v3577
    %v4970 = vpack.c.b16 %v3594, %v3578
    %v4971 = vpack.c.b16 %v3595, %v3579
    %v4972 = vpack.c.b16 %v3596, %v3580
    %v4973 = vpack.c.b16 %v3597, %v3581
    %v4974 = vpack.c.b16 %v3598, %v3582
    %v4975 = vpack.c.b16 %v3599, %v3583
    %v4976 = vpack.c.b16 %v3600, %v3584
    %v4977 = vpack.c.b16 %v3601, %v3585
    %v4978 = vpack.c.b16 %v3618, %v3602
    %v4979 = vpack.c.b16 %v3619, %v3603
    %v4980 = vpack.c.b16 %v3620, %v3604
    %v4981 = vpack.c.b16 %v3621, %v3605
    %v4982 = vpack.c.b16 %v3622, %v3606
    %v4983 = vpack.c.b16 %v3623, %v3607
    %v4984 = vpack.c.b16 %v3624, %v3608
    %v4985 = vpack.c.b16 %v3625, %v3609
    %v4986 = vpack.c.b16 %v3626, %v3610
    %v4987 = vpack.c.b16 %v3627, %v3611
    %v4988 = vpack.c.b16 %v3628, %v3612
    %v4989 = vpack.c.b16 %v3629, %v3613
    %v4990 = vpack.c.b16 %v3630, %v3614
    %v4991 = vpack.c.b16 %v3631, %v3615
    %v4992 = vpack.c.b16 %v3632, %v3616
    %v4993 = vpack.c.b16 %v3633, %v3617
    %v4994 = vpack.c.b16 %v3650, %v3634
    %v4995 = vpack.c.b16 %v3651, %v3635
    %v4996 = vpack.c.b16 %v3652, %v3636
    %v4997 = vpack.c.b16 %v3653, %v3637
    %v4998 = vpack.c.b16 %v3654, %v3638
    %v4999 = vpack.c.b16 %v3655, %v3639
    %v5000 = vpack.c.b16 %v3656, %v3640
    %v5001 = vpack.c.b16 %v3657, %v3641
    %v5002 = vpack.c.b16 %v3658, %v3642
    %v5003 = vpack.c.b16 %v3659, %v3643
    %v5004 = vpack.c.b16 %v3660, %v3644
    %v5005 = vpack.c.b16 %v3661, %v3645
    %v5006 = vpack.c.b16 %v3662, %v3646
    %v5007 = vpack.c.b16 %v3663, %v3647
    %v5008 = vpack.c.b16 %v3664, %v3648
    %v5009 = vpack.c.b16 %v3665, %v3649
    %v5010 = vpack.c.b16 %v3682, %v3666
    %v5011 = vpack.c.b16 %v3683, %v3667
    %v5012 = vpack.c.b16 %v3684, %v3668
    %v5013 = vpack.c.b16 %v3685, %v3669
    %v5014 = vpack.c.b16 %v3686, %v3670
    %v5015 = vpack.c.b16 %v3687, %v3671
    %v5016 = vpack.c.b16 %v3688, %v3672
    %v5017 = vpack.c.b16 %v3689, %v3673
    %v5018 = vpack.c.b16 %v3690, %v3674
    %v5019 = vpack.c.b16 %v3691, %v3675
    %v5020 = vpack.c.b16 %v3692, %v3676
    %v5021 = vpack.c.b16 %v3693, %v3677
    %v5022 = vpack.c.b16 %v3694, %v3678
    %v5023 = vpack.c.b16 %v3695, %v3679
    %v5024 = vpack.c.b16 %v3696, %v3680
    %v5025 = vpack.c.b16 %v3697, %v3681
    %v5026 = vpack.c.b16 %v3714, %v3698
    %v5027 = vpack.c.b16 %v3715, %v3699
    %v5028 = vpack.c.b16 %v3716, %v3700
    %v5029 = vpack.c.b16 %v3717, %v3701
    %v5030 = vpack.c.b16 %v3718, %v3702
    %v5031 = vpack.c.b16 %v3719, %v3703
    %v5032 = vpack.c.b16 %v3720, %v3704
    %v5033 = vpack.c.b16 %v3721, %v3705
    %v5034 = vpack.c.b16 %v3722, %v3706
    %v5035 = vpack.c.b16 %v3723, %v3707
    %v5036 = vpack.c.b16 %v3724, %v3708
    %v5037 = vpack.c.b16 %v3725, %v3709
    %v5038 = vpack.c.b16 %v3726, %v3710
    %v5039 = vpack.c.b16 %v3727, %v3711
    %v5040 = vpack.c.b16 %v3728, %v3712
    %v5041 = vpack.c.b16 %v3729, %v3713
    %v5042 = vpack.c.b16 %v3746, %v3730
    %v5043 = vpack.c.b16 %v3747, %v3731
    %v5044 = vpack.c.b16 %v3748, %v3732
    %v5045 = vpack.c.b16 %v3749, %v3733
    %v5046 = vpack.c.b16 %v3750, %v3734
    %v5047 = vpack.c.b16 %v3751, %v3735
    %v5048 = vpack.c.b16 %v3752, %v3736
    %v5049 = vpack.c.b16 %v3753, %v3737
    %v5050 = vpack.c.b16 %v3754, %v3738
    %v5051 = vpack.c.b16 %v3755, %v3739
    %v5052 = vpack.c.b16 %v3756, %v3740
    %v5053 = vpack.c.b16 %v3757, %v3741
    %v5054 = vpack.c.b16 %v3758, %v3742
    %v5055 = vpack.c.b16 %v3759, %v3743
    %v5056 = vpack.c.b16 %v3760, %v3744
    %v5057 = vpack.c.b16 %v3761, %v3745
    %v5058 = vpack.c.b16 %v3778, %v3762
    %v5059 = vpack.c.b16 %v3779, %v3763
    %v5060 = vpack.c.b16 %v3780, %v3764
    %v5061 = vpack.c.b16 %v3781, %v3765
    %v5062 = vpack.c.b16 %v3782, %v3766
    %v5063 = vpack.c.b16 %v3783, %v3767
    %v5064 = vpack.c.b16 %v3784, %v3768
    %v5065 = vpack.c.b16 %v3785, %v3769
    %v5066 = vpack.c.b16 %v3786, %v3770
    %v5067 = vpack.c.b16 %v3787, %v3771
    %v5068 = vpack.c.b16 %v3788, %v3772
    %v5069 = vpack.c.b16 %v3789, %v3773
    %v5070 = vpack.c.b16 %v3790, %v3774
    %v5071 = vpack.c.b16 %v3791, %v3775
    %v5072 = vpack.c.b16 %v3792, %v3776
    %v5073 = vpack.c.b16 %v3793, %v3777
    %v5074 = vpack.c.b16 %v3810, %v3794
    %v5075 = vpack.c.b16 %v3811, %v3795
    %v5076 = vpack.c.b16 %v3812, %v3796
    %v5077 = vpack.c.b16 %v3813, %v3797
    %v5078 = vpack.c.b16 %v3814, %v3798
    %v5079 = vpack.c.b16 %v3815, %v3799
    %v5080 = vpack.c.b16 %v3816, %v3800
    %v5081 = vpack.c.b16 %v3817, %v3801
    %v5082 = vpack.c.b16 %v3818, %v3802
    %v5083 = vpack.c.b16 %v3819, %v3803
    %v5084 = vpack.c.b16 %v3820, %v3804
    %v5085 = vpack.c.b16 %v3821, %v3805
    %v5086 = vpack.c.b16 %v3822, %v3806
    %v5087 = vpack.c.b16 %v3823, %v3807
    %v5088 = vpack.c.b16 %v3824, %v3808
    %v5089 = vpack.c.b16 %v3825, %v3809
    %v5090 = vpack.c.b16 %v3842, %v3826
    %v5091 = vpack.c.b16 %v3843, %v3827
    %v5092 = vpack.c.b16 %v3844, %v3828
    %v5093 = vpack.c.b16 %v3845, %v3829
    %v5094 = vpack.c.b16 %v3846, %v3830
    %v5095 = vpack.c.b16 %v3847, %v3831
    %v5096 = vpack.c.b16 %v3848, %v3832
    %v5097 = vpack.c.b16 %v3849, %v3833
    %v5098 = vpack.c.b16 %v3850, %v3834
    %v5099 = vpack.c.b16 %v3851, %v3835
    %v5100 = vpack.c.b16 %v3852, %v3836
    %v5101 = vpack.c.b16 %v3853, %v3837
    %v5102 = vpack.c.b16 %v3854, %v3838
    %v5103 = vpack.c.b16 %v3855, %v3839
    %v5104 = vpack.c.b16 %v3856, %v3840
    %v5105 = vpack.c.b16 %v3857, %v3841
    %v5106 = vpack.c.b16 %v3874, %v3858
    %v5107 = vpack.c.b16 %v3875, %v3859
    %v5108 = vpack.c.b16 %v3876, %v3860
    %v5109 = vpack.c.b16 %v3877, %v3861
    %v5110 = vpack.c.b16 %v3878, %v3862
    %v5111 = vpack.c.b16 %v3879, %v3863
    %v5112 = vpack.c.b16 %v3880, %v3864
    %v5113 = vpack.c.b16 %v3881, %v3865
    %v5114 = vpack.c.b16 %v3882, %v3866
    %v5115 = vpack.c.b16 %v3883, %v3867
    %v5116 = vpack.c.b16 %v3884, %v3868
    %v5117 = vpack.c.b16 %v3885, %v3869
    %v5118 = vpack.c.b16 %v3886, %v3870
    %v5119 = vpack.c.b16 %v3887, %v3871
    %v5120 = vpack.c.b16 %v3888, %v3872
    %v5121 = vpack.c.b16 %v3889, %v3873
    %v5122 = vpack.c.b16 %v3906, %v3890
    %v5123 = vpack.c.b16 %v3907, %v3891
    %v5124 = vpack.c.b16 %v3908, %v3892
    %v5125 = vpack.c.b16 %v3909, %v3893
    %v5126 = vpack.c.b16 %v3910, %v3894
    %v5127 = vpack.c.b16 %v3911, %v3895
    %v5128 = vpack.c.b16 %v3912, %v3896
    %v5129 = vpack.c.b16 %v3913, %v3897
    %v5130 = vpack.c.b16 %v3914, %v3898
    %v5131 = vpack.c.b16 %v3915, %v3899
    %v5132 = vpack.c.b16 %v3916, %v3900
    %v5133 = vpack.c.b16 %v3917, %v3901
    %v5134 = vpack.c.b16 %v3918, %v3902
    %v5135 = vpack.c.b16 %v3919, %v3903
    %v5136 = vpack.c.b16 %v3920, %v3904
    %v5137 = vpack.c.b16 %v3921, %v3905
    %v5138 = vpack.c.b16 %v3938, %v3922
    %v5139 = vpack.c.b16 %v3939, %v3923
    %v5140 = vpack.c.b16 %v3940, %v3924
    %v5141 = vpack.c.b16 %v3941, %v3925
    %v5142 = vpack.c.b16 %v3942, %v3926
    %v5143 = vpack.c.b16 %v3943, %v3927
    %v5144 = vpack.c.b16 %v3944, %v3928
    %v5145 = vpack.c.b16 %v3945, %v3929
    %v5146 = vpack.c.b16 %v3946, %v3930
    %v5147 = vpack.c.b16 %v3947, %v3931
    %v5148 = vpack.c.b16 %v3948, %v3932
    %v5149 = vpack.c.b16 %v3949, %v3933
    %v5150 = vpack.c.b16 %v3950, %v3934
    %v5151 = vpack.c.b16 %v3951, %v3935
    %v5152 = vpack.c.b16 %v3952, %v3936
    %v5153 = vpack.c.b16 %v3953, %v3937
    %v5154 = vpack.c.b16 %v3970, %v3954
    %v5155 = vpack.c.b16 %v3971, %v3955
    %v5156 = vpack.c.b16 %v3972, %v3956
    %v5157 = vpack.c.b16 %v3973, %v3957
    %v5158 = vpack.c.b16 %v3974, %v3958
    %v5159 = vpack.c.b16 %v3975, %v3959
    %v5160 = vpack.c.b16 %v3976, %v3960
    %v5161 = vpack.c.b16 %v3977, %v3961
    %v5162 = vpack.c.b16 %v3978, %v3962
    %v5163 = vpack.c.b16 %v3979, %v3963
    %v5164 = vpack.c.b16 %v3980, %v3964
    %v5165 = vpack.c.b16 %v3981, %v3965
    %v5166 = vpack.c.b16 %v3982, %v3966
    %v5167 = vpack.c.b16 %v3983, %v3967
    %v5168 = vpack.c.b16 %v3984, %v3968
    %v5169 = vpack.c.b16 %v3985, %v3969
    %v5170 = vpack.c.b16 %v4002, %v3986
    %v5171 = vpack.c.b16 %v4003, %v3987
    %v5172 = vpack.c.b16 %v4004, %v3988
    %v5173 = vpack.c.b16 %v4005, %v3989
    %v5174 = vpack.c.b16 %v4006, %v3990
    %v5175 = vpack.c.b16 %v4007, %v3991
    %v5176 = vpack.c.b16 %v4008, %v3992
    %v5177 = vpack.c.b16 %v4009, %v3993
    %v5178 = vpack.c.b16 %v4010, %v3994
    %v5179 = vpack.c.b16 %v4011, %v3995
    %v5180 = vpack.c.b16 %v4012, %v3996
    %v5181 = vpack.c.b16 %v4013, %v3997
    %v5182 = vpack.c.b16 %v4014, %v3998
    %v5183 = vpack.c.b16 %v4015, %v3999
    %v5184 = vpack.c.b16 %v4016, %v4000
    %v5185 = vpack.c.b16 %v4017, %v4001
    %v5186 = vpack.c.b16 %v4034, %v4018
    %v5187 = vpack.c.b16 %v4035, %v4019
    %v5188 = vpack.c.b16 %v4036, %v4020
    %v5189 = vpack.c.b16 %v4037, %v4021
    %v5190 = vpack.c.b16 %v4038, %v4022
    %v5191 = vpack.c.b16 %v4039, %v4023
    %v5192 = vpack.c.b16 %v4040, %v4024
    %v5193 = vpack.c.b16 %v4041, %v4025
    %v5194 = vpack.c.b16 %v4042, %v4026
    %v5195 = vpack.c.b16 %v4043, %v4027
    %v5196 = vpack.c.b16 %v4044, %v4028
    %v5197 = vpack.c.b16 %v4045, %v4029
    %v5198 = vpack.c.b16 %v4046, %v4030
    %v5199 = vpack.c.b16 %v4047, %v4031
    %v5200 = vpack.c.b16 %v4048, %v4032
    %v5201 = vpack.c.b16 %v4049, %v4033
    %v5202 = vpack.c.b16 %v4066, %v4050
    %v5203 = vpack.c.b16 %v4067, %v4051
    %v5204 = vpack.c.b16 %v4068, %v4052
    %v5205 = vpack.c.b16 %v4069, %v4053
    %v5206 = vpack.c.b16 %v4070, %v4054
    %v5207 = vpack.c.b16 %v4071, %v4055
    %v5208 = vpack.c.b16 %v4072, %v4056
    %v5209 = vpack.c.b16 %v4073, %v4057
    %v5210 = vpack.c.b16 %v4074, %v4058
    %v5211 = vpack.c.b16 %v4075, %v4059
    %v5212 = vpack.c.b16 %v4076, %v4060
    %v5213 = vpack.c.b16 %v4077, %v4061
    %v5214 = vpack.c.b16 %v4078, %v4062
    %v5215 = vpack.c.b16 %v4079, %v4063
    %v5216 = vpack.c.b16 %v4080, %v4064
    %v5217 = vpack.c.b16 %v4081, %v4065
    %v5218 = vpack.c.b16 %v4098, %v4082
    %v5219 = vpack.c.b16 %v4099, %v4083
    %v5220 = vpack.c.b16 %v4100, %v4084
    %v5221 = vpack.c.b16 %v4101, %v4085
    %v5222 = vpack.c.b16 %v4102, %v4086
    %v5223 = vpack.c.b16 %v4103, %v4087
    %v5224 = vpack.c.b16 %v4104, %v4088
    %v5225 = vpack.c.b16 %v4105, %v4089
    %v5226 = vpack.c.b16 %v4106, %v4090
    %v5227 = vpack.c.b16 %v4107, %v4091
    %v5228 = vpack.c.b16 %v4108, %v4092
    %v5229 = vpack.c.b16 %v4109, %v4093
    %v5230 = vpack.c.b16 %v4110, %v4094
    %v5231 = vpack.c.b16 %v4111, %v4095
    %v5232 = vpack.c.b16 %v4112, %v4096
    %v5233 = vpack.c.b16 %v4113, %v4097
    %v5234 = vpack.c.b16 %v4130, %v4114
    %v5235 = vpack.c.b16 %v4131, %v4115
    %v5236 = vpack.c.b16 %v4132, %v4116
    %v5237 = vpack.c.b16 %v4133, %v4117
    %v5238 = vpack.c.b16 %v4134, %v4118
    %v5239 = vpack.c.b16 %v4135, %v4119
    %v5240 = vpack.c.b16 %v4136, %v4120
    %v5241 = vpack.c.b16 %v4137, %v4121
    %v5242 = vpack.c.b16 %v4138, %v4122
    %v5243 = vpack.c.b16 %v4139, %v4123
    %v5244 = vpack.c.b16 %v4140, %v4124
    %v5245 = vpack.c.b16 %v4141, %v4125
    %v5246 = vpack.c.b16 %v4142, %v4126
    %v5247 = vpack.c.b16 %v4143, %v4127
    %v5248 = vpack.c.b16 %v4144, %v4128
    %v5249 = vpack.c.b16 %v4145, %v4129
    %v5250 = vpack.c.b16 %v4162, %v4146
    %v5251 = vpack.c.b16 %v4163, %v4147
    %v5252 = vpack.c.b16 %v4164, %v4148
    %v5253 = vpack.c.b16 %v4165, %v4149
    %v5254 = vpack.c.b16 %v4166, %v4150
    %v5255 = vpack.c.b16 %v4167, %v4151
    %v5256 = vpack.c.b16 %v4168, %v4152
    %v5257 = vpack.c.b16 %v4169, %v4153
    %v5258 = vpack.c.b16 %v4170, %v4154
    %v5259 = vpack.c.b16 %v4171, %v4155
    %v5260 = vpack.c.b16 %v4172, %v4156
    %v5261 = vpack.c.b16 %v4173, %v4157
    %v5262 = vpack.c.b16 %v4174, %v4158
    %v5263 = vpack.c.b16 %v4175, %v4159
    %v5264 = vpack.c.b16 %v4176, %v4160
    %v5265 = vpack.c.b16 %v4177, %v4161
    %v5266 = vpack.c.b16 %v4194, %v4178
    %v5267 = vpack.c.b16 %v4195, %v4179
    %v5268 = vpack.c.b16 %v4196, %v4180
    %v5269 = vpack.c.b16 %v4197, %v4181
    %v5270 = vpack.c.b16 %v4198, %v4182
    %v5271 = vpack.c.b16 %v4199, %v4183
    %v5272 = vpack.c.b16 %v4200, %v4184
    %v5273 = vpack.c.b16 %v4201, %v4185
    %v5274 = vpack.c.b16 %v4202, %v4186
    %v5275 = vpack.c.b16 %v4203, %v4187
    %v5276 = vpack.c.b16 %v4204, %v4188
    %v5277 = vpack.c.b16 %v4205, %v4189
    %v5278 = vpack.c.b16 %v4206, %v4190
    %v5279 = vpack.c.b16 %v4207, %v4191
    %v5280 = vpack.c.b16 %v4208, %v4192
    %v5281 = vpack.c.b16 %v4209, %v4193
    %v5282 = vpack.c.b16 %v4226, %v4210
    %v5283 = vpack.c.b16 %v4227, %v4211
    %v5284 = vpack.c.b16 %v4228, %v4212
    %v5285 = vpack.c.b16 %v4229, %v4213
    %v5286 = vpack.c.b16 %v4230, %v4214
    %v5287 = vpack.c.b16 %v4231, %v4215
    %v5288 = vpack.c.b16 %v4232, %v4216
    %v5289 = vpack.c.b16 %v4233, %v4217
    %v5290 = vpack.c.b16 %v4234, %v4218
    %v5291 = vpack.c.b16 %v4235, %v4219
    %v5292 = vpack.c.b16 %v4236, %v4220
    %v5293 = vpack.c.b16 %v4237, %v4221
    %v5294 = vpack.c.b16 %v4238, %v4222
    %v5295 = vpack.c.b16 %v4239, %v4223
    %v5296 = vpack.c.b16 %v4240, %v4224
    %v5297 = vpack.c.b16 %v4241, %v4225
    %v5298 = vpack.c.b16 %v4258, %v4242
    %v5299 = vpack.c.b16 %v4259, %v4243
    %v5300 = vpack.c.b16 %v4260, %v4244
    %v5301 = vpack.c.b16 %v4261, %v4245
    %v5302 = vpack.c.b16 %v4262, %v4246
    %v5303 = vpack.c.b16 %v4263, %v4247
    %v5304 = vpack.c.b16 %v4264, %v4248
    %v5305 = vpack.c.b16 %v4265, %v4249
    %v5306 = vpack.c.b16 %v4266, %v4250
    %v5307 = vpack.c.b16 %v4267, %v4251
    %v5308 = vpack.c.b16 %v4268, %v4252
    %v5309 = vpack.c.b16 %v4269, %v4253
    %v5310 = vpack.c.b16 %v4270, %v4254
    %v5311 = vpack.c.b16 %v4271, %v4255
    %v5312 = vpack.c.b16 %v4272, %v4256
    %v5313 = vpack.c.b16 %v4273, %v4257
    %v5314 = vpack.c.b16 %v4290, %v4274
    %v5315 = vpack.c.b16 %v4291, %v4275
    %v5316 = vpack.c.b16 %v4292, %v4276
    %v5317 = vpack.c.b16 %v4293, %v4277
    %v5318 = vpack.c.b16 %v4294, %v4278
    %v5319 = vpack.c.b16 %v4295, %v4279
    %v5320 = vpack.c.b16 %v4296, %v4280
    %v5321 = vpack.c.b16 %v4297, %v4281
    %v5322 = vpack.c.b16 %v4298, %v4282
    %v5323 = vpack.c.b16 %v4299, %v4283
    %v5324 = vpack.c.b16 %v4300, %v4284
    %v5325 = vpack.c.b16 %v4301, %v4285
    %v5326 = vpack.c.b16 %v4302, %v4286
    %v5327 = vpack.c.b16 %v4303, %v4287
    %v5328 = vpack.c.b16 %v4304, %v4288
    %v5329 = vpack.c.b16 %v4305, %v4289
    %6354 = vmatprep.subr.bf16.mxu0 %v4419
    %6355 = vmatpush1.bf16.msra.mxu0 %v4418
    %6356 = vmatprep.subr.bf16.mxu0 %v4403
    %6357 = vmatpush1.bf16.msra.mxu0 %v4402
    %6358 = vmatprep.subr.bf16.mxu0 %v4387
    %6359 = vmatpush1.bf16.msra.mxu0 %v4386
    %6360 = vmatprep.subr.bf16.mxu0 %v4371
    %6361 = vmatpush1.bf16.msra.mxu0 %v4370
    %6362 = vmatprep.subr.bf16.mxu0 %v4355
    %6363 = vmatpush1.bf16.msra.mxu0 %v4354
    %6364 = vmatprep.subr.bf16.mxu0 %v4339
    %6365 = vmatpush1.bf16.msra.mxu0 %v4338
    %6366 = vmatprep.subr.bf16.mxu0 %v4323
    %6367 = vmatpush1.bf16.msra.mxu0 %v4322
    %6368 = vmatprep.subr.bf16.mxu0 %v4307
    %6369 = vmatpush1.bf16.msra.mxu0 %v4306
    %6370 = vmatprep.subr.bf16.mxu0 %v4547
    %6371 = vmatpush2.bf16.msra.mxu0 %v4546
    %6372 = vmatprep.subr.bf16.mxu0 %v4531
    %6373 = vmatpush2.bf16.msra.mxu0 %v4530
    %6374 = vmatprep.subr.bf16.mxu0 %v4515
    %6375 = vmatpush2.bf16.msra.mxu0 %v4514
    %6376 = vmatprep.subr.bf16.mxu0 %v4499
    %6377 = vmatpush2.bf16.msra.mxu0 %v4498
    %6378 = vmatprep.subr.bf16.mxu0 %v4483
    %6379 = vmatpush2.bf16.msra.mxu0 %v4482
    %6380 = vmatprep.subr.bf16.mxu0 %v4467
    %6381 = vmatpush2.bf16.msra.mxu0 %v4466
    %6382 = vmatprep.subr.bf16.mxu0 %v4451
    %6383 = vmatpush2.bf16.msra.mxu0 %v4450
    %6384 = vmatprep.subr.bf16.mxu0 %v4435
    %6385 = vmatpush2.bf16.msra.mxu0 %v4434
    %6386 = vmatprep.mubr.bf16.mxu0 %v1219
    %6387 = vmatmul.mubr.bf16.gmra.mxu0 %v1218
    %v6388 = vpop.f32.mrf.mxu0
    %v6389 = vadd.f32 %v1129, %v6388
    %v6390 = vpop.f32.mrf.mxu0
    %v6391 = vadd.f32 %v1133, %v6390
    %v6392 = vpop.f32.mrf.mxu0
    %v6393 = vpop.f32.mrf.mxu0
    %6394 = vdwg.mxu0
    %6395 = vmatprep.subr.bf16.mxu0 %v4675
    %6396 = vmatpush1.bf16.msra.mxu0 %v4674
    %6397 = vmatprep.subr.bf16.mxu0 %v4659
    %6398 = vmatpush1.bf16.msra.mxu0 %v4658
    %6399 = vmatprep.subr.bf16.mxu0 %v4643
    %6400 = vmatpush1.bf16.msra.mxu0 %v4642
    %6401 = vmatprep.subr.bf16.mxu0 %v4627
    %6402 = vmatpush1.bf16.msra.mxu0 %v4626
    %6403 = vmatprep.subr.bf16.mxu0 %v4611
    %6404 = vmatpush1.bf16.msra.mxu0 %v4610
    %6405 = vmatprep.subr.bf16.mxu0 %v4595
    %6406 = vmatpush1.bf16.msra.mxu0 %v4594
    %6407 = vmatprep.subr.bf16.mxu0 %v4579
    %6408 = vmatpush1.bf16.msra.mxu0 %v4578
    %6409 = vmatprep.subr.bf16.mxu0 %v4563
    %6410 = vmatpush1.bf16.msra.mxu0 %v4562
    %6411 = vmatprep.subr.bf16.mxu0 %v4803
    %6412 = vmatpush2.bf16.msra.mxu0 %v4802
    %6413 = vmatprep.subr.bf16.mxu0 %v4787
    %6414 = vmatpush2.bf16.msra.mxu0 %v4786
    %6415 = vmatprep.subr.bf16.mxu0 %v4771
    %6416 = vmatpush2.bf16.msra.mxu0 %v4770
    %6417 = vmatprep.subr.bf16.mxu0 %v4755
    %6418 = vmatpush2.bf16.msra.mxu0 %v4754
    %6419 = vmatprep.subr.bf16.mxu0 %v4739
    %6420 = vmatpush2.bf16.msra.mxu0 %v4738
    %6421 = vmatprep.subr.bf16.mxu0 %v4723
    %6422 = vmatpush2.bf16.msra.mxu0 %v4722
    %6423 = vmatprep.subr.bf16.mxu0 %v4707
    %6424 = vmatpush2.bf16.msra.mxu0 %v4706
    %6425 = vmatprep.subr.bf16.mxu0 %v4691
    %6426 = vmatpush2.bf16.msra.mxu0 %v4690
    %6427 = vmatprep.mubr.bf16.mxu0 %v1221
    %6428 = vmatmul.mubr.bf16.gmra.mxu0 %v1220
    %v6429 = vpop.f32.mrf.mxu0
    %v6430 = vadd.f32 %v6389, %v6429
    %v6431 = vpop.f32.mrf.mxu0
    %v6432 = vadd.f32 %v6391, %v6431
    %v6433 = vpop.f32.mrf.mxu0
    %v6434 = vpop.f32.mrf.mxu0
    %6435 = vdwg.mxu0
    %6436 = vmatprep.subr.bf16.mxu0 %v4931
    %6437 = vmatpush1.bf16.msra.mxu0 %v4930
    %6438 = vmatprep.subr.bf16.mxu0 %v4915
    %6439 = vmatpush1.bf16.msra.mxu0 %v4914
    %6440 = vmatprep.subr.bf16.mxu0 %v4899
    %6441 = vmatpush1.bf16.msra.mxu0 %v4898
    %6442 = vmatprep.subr.bf16.mxu0 %v4883
    %6443 = vmatpush1.bf16.msra.mxu0 %v4882
    %6444 = vmatprep.subr.bf16.mxu0 %v4867
    %6445 = vmatpush1.bf16.msra.mxu0 %v4866
    %6446 = vmatprep.subr.bf16.mxu0 %v4851
    %6447 = vmatpush1.bf16.msra.mxu0 %v4850
    %6448 = vmatprep.subr.bf16.mxu0 %v4835
    %6449 = vmatpush1.bf16.msra.mxu0 %v4834
    %6450 = vmatprep.subr.bf16.mxu0 %v4819
    %6451 = vmatpush1.bf16.msra.mxu0 %v4818
    %6452 = vmatprep.subr.bf16.mxu0 %v5059
    %6453 = vmatpush2.bf16.msra.mxu0 %v5058
    %6454 = vmatprep.subr.bf16.mxu0 %v5043
    %6455 = vmatpush2.bf16.msra.mxu0 %v5042
    %6456 = vmatprep.subr.bf16.mxu0 %v5027
    %6457 = vmatpush2.bf16.msra.mxu0 %v5026
    %6458 = vmatprep.subr.bf16.mxu0 %v5011
    %6459 = vmatpush2.bf16.msra.mxu0 %v5010
    %6460 = vmatprep.subr.bf16.mxu0 %v4995
    %6461 = vmatpush2.bf16.msra.mxu0 %v4994
    %6462 = vmatprep.subr.bf16.mxu0 %v4979
    %6463 = vmatpush2.bf16.msra.mxu0 %v4978
    %6464 = vmatprep.subr.bf16.mxu0 %v4963
    %6465 = vmatpush2.bf16.msra.mxu0 %v4962
    %6466 = vmatprep.subr.bf16.mxu0 %v4947
    %6467 = vmatpush2.bf16.msra.mxu0 %v4946
    %6468 = vmatprep.mubr.bf16.mxu0 %v1223
    %6469 = vmatmul.mubr.bf16.gmra.mxu0 %v1222
    %v6470 = vpop.f32.mrf.mxu0
    %v6471 = vadd.f32 %v6430, %v6470
    %v6472 = vpop.f32.mrf.mxu0
    %v6473 = vadd.f32 %v6432, %v6472
    %v6474 = vpop.f32.mrf.mxu0
    %v6475 = vpop.f32.mrf.mxu0
    %6476 = vdwg.mxu0
    %6477 = vmatprep.subr.bf16.mxu0 %v5187
    %6478 = vmatpush1.bf16.msra.mxu0 %v5186
    %6479 = vmatprep.subr.bf16.mxu0 %v5171
    %6480 = vmatpush1.bf16.msra.mxu0 %v5170
    %6481 = vmatprep.subr.bf16.mxu0 %v5155
    %6482 = vmatpush1.bf16.msra.mxu0 %v5154
    %6483 = vmatprep.subr.bf16.mxu0 %v5139
    %6484 = vmatpush1.bf16.msra.mxu0 %v5138
    %6485 = vmatprep.subr.bf16.mxu0 %v5123
    %6486 = vmatpush1.bf16.msra.mxu0 %v5122
    %6487 = vmatprep.subr.bf16.mxu0 %v5107
    %6488 = vmatpush1.bf16.msra.mxu0 %v5106
    %6489 = vmatprep.subr.bf16.mxu0 %v5091
    %6490 = vmatpush1.bf16.msra.mxu0 %v5090
    %6491 = vmatprep.subr.bf16.mxu0 %v5075
    %6492 = vmatpush1.bf16.msra.mxu0 %v5074
    %6493 = vmatprep.subr.bf16.mxu0 %v5315
    %6494 = vmatpush2.bf16.msra.mxu0 %v5314
    %6495 = vmatprep.subr.bf16.mxu0 %v5299
    %6496 = vmatpush2.bf16.msra.mxu0 %v5298
    %6497 = vmatprep.subr.bf16.mxu0 %v5283
    %6498 = vmatpush2.bf16.msra.mxu0 %v5282
    %6499 = vmatprep.subr.bf16.mxu0 %v5267
    %6500 = vmatpush2.bf16.msra.mxu0 %v5266
    %6501 = vmatprep.subr.bf16.mxu0 %v5251
    %6502 = vmatpush2.bf16.msra.mxu0 %v5250
    %6503 = vmatprep.subr.bf16.mxu0 %v5235
    %6504 = vmatpush2.bf16.msra.mxu0 %v5234
    %6505 = vmatprep.subr.bf16.mxu0 %v5219
    %6506 = vmatpush2.bf16.msra.mxu0 %v5218
    %6507 = vmatprep.subr.bf16.mxu0 %v5203
    %6508 = vmatpush2.bf16.msra.mxu0 %v5202
    %6509 = vmatprep.mubr.bf16.mxu0 %v1225
    %6510 = vmatmul.mubr.bf16.gmra.mxu0 %v1224
    %v6511 = vpop.f32.mrf.mxu0
    %v6512 = vadd.f32 %v6471, %v6511
    %v6513 = vpop.f32.mrf.mxu0
    %v6514 = vadd.f32 %v6473, %v6513
    %v6515 = vpop.f32.mrf.mxu0
    %v6516 = vpop.f32.mrf.mxu0
    %6517 = vdwg.mxu0
    %6518 = vmatprep.subr.bf16.mxu0 %v4421
    %6519 = vmatpush1.bf16.msra.mxu0 %v4420
    %6520 = vmatprep.subr.bf16.mxu0 %v4405
    %6521 = vmatpush1.bf16.msra.mxu0 %v4404
    %6522 = vmatprep.subr.bf16.mxu0 %v4389
    %6523 = vmatpush1.bf16.msra.mxu0 %v4388
    %6524 = vmatprep.subr.bf16.mxu0 %v4373
    %6525 = vmatpush1.bf16.msra.mxu0 %v4372
    %6526 = vmatprep.subr.bf16.mxu0 %v4357
    %6527 = vmatpush1.bf16.msra.mxu0 %v4356
    %6528 = vmatprep.subr.bf16.mxu0 %v4341
    %6529 = vmatpush1.bf16.msra.mxu0 %v4340
    %6530 = vmatprep.subr.bf16.mxu0 %v4325
    %6531 = vmatpush1.bf16.msra.mxu0 %v4324
    %6532 = vmatprep.subr.bf16.mxu0 %v4309
    %6533 = vmatpush1.bf16.msra.mxu0 %v4308
    %6534 = vmatprep.subr.bf16.mxu0 %v4549
    %6535 = vmatpush2.bf16.msra.mxu0 %v4548
    %6536 = vmatprep.subr.bf16.mxu0 %v4533
    %6537 = vmatpush2.bf16.msra.mxu0 %v4532
    %6538 = vmatprep.subr.bf16.mxu0 %v4517
    %6539 = vmatpush2.bf16.msra.mxu0 %v4516
    %6540 = vmatprep.subr.bf16.mxu0 %v4501
    %6541 = vmatpush2.bf16.msra.mxu0 %v4500
    %6542 = vmatprep.subr.bf16.mxu0 %v4485
    %6543 = vmatpush2.bf16.msra.mxu0 %v4484
    %6544 = vmatprep.subr.bf16.mxu0 %v4469
    %6545 = vmatpush2.bf16.msra.mxu0 %v4468
    %6546 = vmatprep.subr.bf16.mxu0 %v4453
    %6547 = vmatpush2.bf16.msra.mxu0 %v4452
    %6548 = vmatprep.subr.bf16.mxu0 %v4437
    %6549 = vmatpush2.bf16.msra.mxu0 %v4436
    %6550 = vmatprep.mubr.bf16.mxu0 %v1219
    %6551 = vmatmul.mubr.bf16.gmra.mxu0 %v1218
    %v6552 = vpop.f32.mrf.mxu0
    %v6553 = vadd.f32 %v1137, %v6552
    %v6554 = vpop.f32.mrf.mxu0
    %v6555 = vadd.f32 %v1141, %v6554
    %v6556 = vpop.f32.mrf.mxu0
    %v6557 = vpop.f32.mrf.mxu0
    %6558 = vdwg.mxu0
    %6559 = vmatprep.subr.bf16.mxu0 %v4677
    %6560 = vmatpush1.bf16.msra.mxu0 %v4676
    %6561 = vmatprep.subr.bf16.mxu0 %v4661
    %6562 = vmatpush1.bf16.msra.mxu0 %v4660
    %6563 = vmatprep.subr.bf16.mxu0 %v4645
    %6564 = vmatpush1.bf16.msra.mxu0 %v4644
    %6565 = vmatprep.subr.bf16.mxu0 %v4629
    %6566 = vmatpush1.bf16.msra.mxu0 %v4628
    %6567 = vmatprep.subr.bf16.mxu0 %v4613
    %6568 = vmatpush1.bf16.msra.mxu0 %v4612
    %6569 = vmatprep.subr.bf16.mxu0 %v4597
    %6570 = vmatpush1.bf16.msra.mxu0 %v4596
    %6571 = vmatprep.subr.bf16.mxu0 %v4581
    %6572 = vmatpush1.bf16.msra.mxu0 %v4580
    %6573 = vmatprep.subr.bf16.mxu0 %v4565
    %6574 = vmatpush1.bf16.msra.mxu0 %v4564
    %6575 = vmatprep.subr.bf16.mxu0 %v4805
    %6576 = vmatpush2.bf16.msra.mxu0 %v4804
    %6577 = vmatprep.subr.bf16.mxu0 %v4789
    %6578 = vmatpush2.bf16.msra.mxu0 %v4788
    %6579 = vmatprep.subr.bf16.mxu0 %v4773
    %6580 = vmatpush2.bf16.msra.mxu0 %v4772
    %6581 = vmatprep.subr.bf16.mxu0 %v4757
    %6582 = vmatpush2.bf16.msra.mxu0 %v4756
    %6583 = vmatprep.subr.bf16.mxu0 %v4741
    %6584 = vmatpush2.bf16.msra.mxu0 %v4740
    %6585 = vmatprep.subr.bf16.mxu0 %v4725
    %6586 = vmatpush2.bf16.msra.mxu0 %v4724
    %6587 = vmatprep.subr.bf16.mxu0 %v4709
    %6588 = vmatpush2.bf16.msra.mxu0 %v4708
    %6589 = vmatprep.subr.bf16.mxu0 %v4693
    %6590 = vmatpush2.bf16.msra.mxu0 %v4692
    %6591 = vmatprep.mubr.bf16.mxu0 %v1221
    %6592 = vmatmul.mubr.bf16.gmra.mxu0 %v1220
    %v6593 = vpop.f32.mrf.mxu0
    %v6594 = vadd.f32 %v6553, %v6593
    %v6595 = vpop.f32.mrf.mxu0
    %v6596 = vadd.f32 %v6555, %v6595
    %v6597 = vpop.f32.mrf.mxu0
    %v6598 = vpop.f32.mrf.mxu0
    %6599 = vdwg.mxu0
    %6600 = vmatprep.subr.bf16.mxu0 %v4933
    %6601 = vmatpush1.bf16.msra.mxu0 %v4932
    %6602 = vmatprep.subr.bf16.mxu0 %v4917
    %6603 = vmatpush1.bf16.msra.mxu0 %v4916
    %6604 = vmatprep.subr.bf16.mxu0 %v4901
    %6605 = vmatpush1.bf16.msra.mxu0 %v4900
    %6606 = vmatprep.subr.bf16.mxu0 %v4885
    %6607 = vmatpush1.bf16.msra.mxu0 %v4884
    %6608 = vmatprep.subr.bf16.mxu0 %v4869
    %6609 = vmatpush1.bf16.msra.mxu0 %v4868
    %6610 = vmatprep.subr.bf16.mxu0 %v4853
    %6611 = vmatpush1.bf16.msra.mxu0 %v4852
    %6612 = vmatprep.subr.bf16.mxu0 %v4837
    %6613 = vmatpush1.bf16.msra.mxu0 %v4836
    %6614 = vmatprep.subr.bf16.mxu0 %v4821
    %6615 = vmatpush1.bf16.msra.mxu0 %v4820
    %6616 = vmatprep.subr.bf16.mxu0 %v5061
    %6617 = vmatpush2.bf16.msra.mxu0 %v5060
    %6618 = vmatprep.subr.bf16.mxu0 %v5045
    %6619 = vmatpush2.bf16.msra.mxu0 %v5044
    %6620 = vmatprep.subr.bf16.mxu0 %v5029
    %6621 = vmatpush2.bf16.msra.mxu0 %v5028
    %6622 = vmatprep.subr.bf16.mxu0 %v5013
    %6623 = vmatpush2.bf16.msra.mxu0 %v5012
    %6624 = vmatprep.subr.bf16.mxu0 %v4997
    %6625 = vmatpush2.bf16.msra.mxu0 %v4996
    %6626 = vmatprep.subr.bf16.mxu0 %v4981
    %6627 = vmatpush2.bf16.msra.mxu0 %v4980
    %6628 = vmatprep.subr.bf16.mxu0 %v4965
    %6629 = vmatpush2.bf16.msra.mxu0 %v4964
    %6630 = vmatprep.subr.bf16.mxu0 %v4949
    %6631 = vmatpush2.bf16.msra.mxu0 %v4948
    %6632 = vmatprep.mubr.bf16.mxu0 %v1223
    %6633 = vmatmul.mubr.bf16.gmra.mxu0 %v1222
    %v6634 = vpop.f32.mrf.mxu0
    %v6635 = vadd.f32 %v6594, %v6634
    %v6636 = vpop.f32.mrf.mxu0
    %v6637 = vadd.f32 %v6596, %v6636
    %v6638 = vpop.f32.mrf.mxu0
    %v6639 = vpop.f32.mrf.mxu0
    %6640 = vdwg.mxu0
    %6641 = vmatprep.subr.bf16.mxu0 %v5189
    %6642 = vmatpush1.bf16.msra.mxu0 %v5188
    %6643 = vmatprep.subr.bf16.mxu0 %v5173
    %6644 = vmatpush1.bf16.msra.mxu0 %v5172
    %6645 = vmatprep.subr.bf16.mxu0 %v5157
    %6646 = vmatpush1.bf16.msra.mxu0 %v5156
    %6647 = vmatprep.subr.bf16.mxu0 %v5141
    %6648 = vmatpush1.bf16.msra.mxu0 %v5140
    %6649 = vmatprep.subr.bf16.mxu0 %v5125
    %6650 = vmatpush1.bf16.msra.mxu0 %v5124
    %6651 = vmatprep.subr.bf16.mxu0 %v5109
    %6652 = vmatpush1.bf16.msra.mxu0 %v5108
    %6653 = vmatprep.subr.bf16.mxu0 %v5093
    %6654 = vmatpush1.bf16.msra.mxu0 %v5092
    %6655 = vmatprep.subr.bf16.mxu0 %v5077
    %6656 = vmatpush1.bf16.msra.mxu0 %v5076
    %6657 = vmatprep.subr.bf16.mxu0 %v5317
    %6658 = vmatpush2.bf16.msra.mxu0 %v5316
    %6659 = vmatprep.subr.bf16.mxu0 %v5301
    %6660 = vmatpush2.bf16.msra.mxu0 %v5300
    %6661 = vmatprep.subr.bf16.mxu0 %v5285
    %6662 = vmatpush2.bf16.msra.mxu0 %v5284
    %6663 = vmatprep.subr.bf16.mxu0 %v5269
    %6664 = vmatpush2.bf16.msra.mxu0 %v5268
    %6665 = vmatprep.subr.bf16.mxu0 %v5253
    %6666 = vmatpush2.bf16.msra.mxu0 %v5252
    %6667 = vmatprep.subr.bf16.mxu0 %v5237
    %6668 = vmatpush2.bf16.msra.mxu0 %v5236
    %6669 = vmatprep.subr.bf16.mxu0 %v5221
    %6670 = vmatpush2.bf16.msra.mxu0 %v5220
    %6671 = vmatprep.subr.bf16.mxu0 %v5205
    %6672 = vmatpush2.bf16.msra.mxu0 %v5204
    %6673 = vmatprep.mubr.bf16.mxu0 %v1225
    %6674 = vmatmul.mubr.bf16.gmra.mxu0 %v1224
    %v6675 = vpop.f32.mrf.mxu0
    %v6676 = vadd.f32 %v6635, %v6675
    %v6677 = vpop.f32.mrf.mxu0
    %v6678 = vadd.f32 %v6637, %v6677
    %v6679 = vpop.f32.mrf.mxu0
    %v6680 = vpop.f32.mrf.mxu0
    %6681 = vdwg.mxu0
    %6682 = vmatprep.subr.bf16.mxu0 %v4423
    %6683 = vmatpush1.bf16.msra.mxu0 %v4422
    %6684 = vmatprep.subr.bf16.mxu0 %v4407
    %6685 = vmatpush1.bf16.msra.mxu0 %v4406
    %6686 = vmatprep.subr.bf16.mxu0 %v4391
    %6687 = vmatpush1.bf16.msra.mxu0 %v4390
    %6688 = vmatprep.subr.bf16.mxu0 %v4375
    %6689 = vmatpush1.bf16.msra.mxu0 %v4374
    %6690 = vmatprep.subr.bf16.mxu0 %v4359
    %6691 = vmatpush1.bf16.msra.mxu0 %v4358
    %6692 = vmatprep.subr.bf16.mxu0 %v4343
    %6693 = vmatpush1.bf16.msra.mxu0 %v4342
    %6694 = vmatprep.subr.bf16.mxu0 %v4327
    %6695 = vmatpush1.bf16.msra.mxu0 %v4326
    %6696 = vmatprep.subr.bf16.mxu0 %v4311
    %6697 = vmatpush1.bf16.msra.mxu0 %v4310
    %6698 = vmatprep.subr.bf16.mxu0 %v4551
    %6699 = vmatpush2.bf16.msra.mxu0 %v4550
    %6700 = vmatprep.subr.bf16.mxu0 %v4535
    %6701 = vmatpush2.bf16.msra.mxu0 %v4534
    %6702 = vmatprep.subr.bf16.mxu0 %v4519
    %6703 = vmatpush2.bf16.msra.mxu0 %v4518
    %6704 = vmatprep.subr.bf16.mxu0 %v4503
    %6705 = vmatpush2.bf16.msra.mxu0 %v4502
    %6706 = vmatprep.subr.bf16.mxu0 %v4487
    %6707 = vmatpush2.bf16.msra.mxu0 %v4486
    %6708 = vmatprep.subr.bf16.mxu0 %v4471
    %6709 = vmatpush2.bf16.msra.mxu0 %v4470
    %6710 = vmatprep.subr.bf16.mxu0 %v4455
    %6711 = vmatpush2.bf16.msra.mxu0 %v4454
    %6712 = vmatprep.subr.bf16.mxu0 %v4439
    %6713 = vmatpush2.bf16.msra.mxu0 %v4438
    %6714 = vmatprep.mubr.bf16.mxu0 %v1219
    %6715 = vmatmul.mubr.bf16.gmra.mxu0 %v1218
    %v6716 = vpop.f32.mrf.mxu0
    %v6717 = vadd.f32 %v1145, %v6716
    %v6718 = vpop.f32.mrf.mxu0
    %v6719 = vadd.f32 %v1149, %v6718
    %v6720 = vpop.f32.mrf.mxu0
    %v6721 = vpop.f32.mrf.mxu0
    %6722 = vdwg.mxu0
    %6723 = vmatprep.subr.bf16.mxu0 %v4679
    %6724 = vmatpush1.bf16.msra.mxu0 %v4678
    %6725 = vmatprep.subr.bf16.mxu0 %v4663
    %6726 = vmatpush1.bf16.msra.mxu0 %v4662
    %6727 = vmatprep.subr.bf16.mxu0 %v4647
    %6728 = vmatpush1.bf16.msra.mxu0 %v4646
    %6729 = vmatprep.subr.bf16.mxu0 %v4631
    %6730 = vmatpush1.bf16.msra.mxu0 %v4630
    %6731 = vmatprep.subr.bf16.mxu0 %v4615
    %6732 = vmatpush1.bf16.msra.mxu0 %v4614
    %6733 = vmatprep.subr.bf16.mxu0 %v4599
    %6734 = vmatpush1.bf16.msra.mxu0 %v4598
    %6735 = vmatprep.subr.bf16.mxu0 %v4583
    %6736 = vmatpush1.bf16.msra.mxu0 %v4582
    %6737 = vmatprep.subr.bf16.mxu0 %v4567
    %6738 = vmatpush1.bf16.msra.mxu0 %v4566
    %6739 = vmatprep.subr.bf16.mxu0 %v4807
    %6740 = vmatpush2.bf16.msra.mxu0 %v4806
    %6741 = vmatprep.subr.bf16.mxu0 %v4791
    %6742 = vmatpush2.bf16.msra.mxu0 %v4790
    %6743 = vmatprep.subr.bf16.mxu0 %v4775
    %6744 = vmatpush2.bf16.msra.mxu0 %v4774
    %6745 = vmatprep.subr.bf16.mxu0 %v4759
    %6746 = vmatpush2.bf16.msra.mxu0 %v4758
    %6747 = vmatprep.subr.bf16.mxu0 %v4743
    %6748 = vmatpush2.bf16.msra.mxu0 %v4742
    %6749 = vmatprep.subr.bf16.mxu0 %v4727
    %6750 = vmatpush2.bf16.msra.mxu0 %v4726
    %6751 = vmatprep.subr.bf16.mxu0 %v4711
    %6752 = vmatpush2.bf16.msra.mxu0 %v4710
    %6753 = vmatprep.subr.bf16.mxu0 %v4695
    %6754 = vmatpush2.bf16.msra.mxu0 %v4694
    %6755 = vmatprep.mubr.bf16.mxu0 %v1221
    %6756 = vmatmul.mubr.bf16.gmra.mxu0 %v1220
    %v6757 = vpop.f32.mrf.mxu0
    %v6758 = vadd.f32 %v6717, %v6757
    %v6759 = vpop.f32.mrf.mxu0
    %v6760 = vadd.f32 %v6719, %v6759
    %v6761 = vpop.f32.mrf.mxu0
    %v6762 = vpop.f32.mrf.mxu0
    %6763 = vdwg.mxu0
    %6764 = vmatprep.subr.bf16.mxu0 %v4935
    %6765 = vmatpush1.bf16.msra.mxu0 %v4934
    %6766 = vmatprep.subr.bf16.mxu0 %v4919
    %6767 = vmatpush1.bf16.msra.mxu0 %v4918
    %6768 = vmatprep.subr.bf16.mxu0 %v4903
    %6769 = vmatpush1.bf16.msra.mxu0 %v4902
    %6770 = vmatprep.subr.bf16.mxu0 %v4887
    %6771 = vmatpush1.bf16.msra.mxu0 %v4886
    %6772 = vmatprep.subr.bf16.mxu0 %v4871
    %6773 = vmatpush1.bf16.msra.mxu0 %v4870
    %6774 = vmatprep.subr.bf16.mxu0 %v4855
    %6775 = vmatpush1.bf16.msra.mxu0 %v4854
    %6776 = vmatprep.subr.bf16.mxu0 %v4839
    %6777 = vmatpush1.bf16.msra.mxu0 %v4838
    %6778 = vmatprep.subr.bf16.mxu0 %v4823
    %6779 = vmatpush1.bf16.msra.mxu0 %v4822
    %6780 = vmatprep.subr.bf16.mxu0 %v5063
    %6781 = vmatpush2.bf16.msra.mxu0 %v5062
    %6782 = vmatprep.subr.bf16.mxu0 %v5047
    %6783 = vmatpush2.bf16.msra.mxu0 %v5046
    %6784 = vmatprep.subr.bf16.mxu0 %v5031
    %6785 = vmatpush2.bf16.msra.mxu0 %v5030
    %6786 = vmatprep.subr.bf16.mxu0 %v5015
    %6787 = vmatpush2.bf16.msra.mxu0 %v5014
    %6788 = vmatprep.subr.bf16.mxu0 %v4999
    %6789 = vmatpush2.bf16.msra.mxu0 %v4998
    %6790 = vmatprep.subr.bf16.mxu0 %v4983
    %6791 = vmatpush2.bf16.msra.mxu0 %v4982
    %6792 = vmatprep.subr.bf16.mxu0 %v4967
    %6793 = vmatpush2.bf16.msra.mxu0 %v4966
    %6794 = vmatprep.subr.bf16.mxu0 %v4951
    %6795 = vmatpush2.bf16.msra.mxu0 %v4950
    %6796 = vmatprep.mubr.bf16.mxu0 %v1223
    %6797 = vmatmul.mubr.bf16.gmra.mxu0 %v1222
    %v6798 = vpop.f32.mrf.mxu0
    %v6799 = vadd.f32 %v6758, %v6798
    %v6800 = vpop.f32.mrf.mxu0
    %v6801 = vadd.f32 %v6760, %v6800
    %v6802 = vpop.f32.mrf.mxu0
    %v6803 = vpop.f32.mrf.mxu0
    %6804 = vdwg.mxu0
    %6805 = vmatprep.subr.bf16.mxu0 %v5191
    %6806 = vmatpush1.bf16.msra.mxu0 %v5190
    %6807 = vmatprep.subr.bf16.mxu0 %v5175
    %6808 = vmatpush1.bf16.msra.mxu0 %v5174
    %6809 = vmatprep.subr.bf16.mxu0 %v5159
    %6810 = vmatpush1.bf16.msra.mxu0 %v5158
    %6811 = vmatprep.subr.bf16.mxu0 %v5143
    %6812 = vmatpush1.bf16.msra.mxu0 %v5142
    %6813 = vmatprep.subr.bf16.mxu0 %v5127
    %6814 = vmatpush1.bf16.msra.mxu0 %v5126
    %6815 = vmatprep.subr.bf16.mxu0 %v5111
    %6816 = vmatpush1.bf16.msra.mxu0 %v5110
    %6817 = vmatprep.subr.bf16.mxu0 %v5095
    %6818 = vmatpush1.bf16.msra.mxu0 %v5094
    %6819 = vmatprep.subr.bf16.mxu0 %v5079
    %6820 = vmatpush1.bf16.msra.mxu0 %v5078
    %6821 = vmatprep.subr.bf16.mxu0 %v5319
    %6822 = vmatpush2.bf16.msra.mxu0 %v5318
    %6823 = vmatprep.subr.bf16.mxu0 %v5303
    %6824 = vmatpush2.bf16.msra.mxu0 %v5302
    %6825 = vmatprep.subr.bf16.mxu0 %v5287
    %6826 = vmatpush2.bf16.msra.mxu0 %v5286
    %6827 = vmatprep.subr.bf16.mxu0 %v5271
    %6828 = vmatpush2.bf16.msra.mxu0 %v5270
    %6829 = vmatprep.subr.bf16.mxu0 %v5255
    %6830 = vmatpush2.bf16.msra.mxu0 %v5254
    %6831 = vmatprep.subr.bf16.mxu0 %v5239
    %6832 = vmatpush2.bf16.msra.mxu0 %v5238
    %6833 = vmatprep.subr.bf16.mxu0 %v5223
    %6834 = vmatpush2.bf16.msra.mxu0 %v5222
    %6835 = vmatprep.subr.bf16.mxu0 %v5207
    %6836 = vmatpush2.bf16.msra.mxu0 %v5206
    %6837 = vmatprep.mubr.bf16.mxu0 %v1225
    %6838 = vmatmul.mubr.bf16.gmra.mxu0 %v1224
    %v6839 = vpop.f32.mrf.mxu0
    %v6840 = vadd.f32 %v6799, %v6839
    %v6841 = vpop.f32.mrf.mxu0
    %v6842 = vadd.f32 %v6801, %v6841
    %v6843 = vpop.f32.mrf.mxu0
    %v6844 = vpop.f32.mrf.mxu0
    %6845 = vdwg.mxu0
    %6846 = vmatprep.subr.bf16.mxu0 %v4425
    %6847 = vmatpush1.bf16.msra.mxu0 %v4424
    %6848 = vmatprep.subr.bf16.mxu0 %v4409
    %6849 = vmatpush1.bf16.msra.mxu0 %v4408
    %6850 = vmatprep.subr.bf16.mxu0 %v4393
    %6851 = vmatpush1.bf16.msra.mxu0 %v4392
    %6852 = vmatprep.subr.bf16.mxu0 %v4377
    %6853 = vmatpush1.bf16.msra.mxu0 %v4376
    %6854 = vmatprep.subr.bf16.mxu0 %v4361
    %6855 = vmatpush1.bf16.msra.mxu0 %v4360
    %6856 = vmatprep.subr.bf16.mxu0 %v4345
    %6857 = vmatpush1.bf16.msra.mxu0 %v4344
    %6858 = vmatprep.subr.bf16.mxu0 %v4329
    %6859 = vmatpush1.bf16.msra.mxu0 %v4328
    %6860 = vmatprep.subr.bf16.mxu0 %v4313
    %6861 = vmatpush1.bf16.msra.mxu0 %v4312
    %6862 = vmatprep.subr.bf16.mxu0 %v4553
    %6863 = vmatpush2.bf16.msra.mxu0 %v4552
    %6864 = vmatprep.subr.bf16.mxu0 %v4537
    %6865 = vmatpush2.bf16.msra.mxu0 %v4536
    %6866 = vmatprep.subr.bf16.mxu0 %v4521
    %6867 = vmatpush2.bf16.msra.mxu0 %v4520
    %6868 = vmatprep.subr.bf16.mxu0 %v4505
    %6869 = vmatpush2.bf16.msra.mxu0 %v4504
    %6870 = vmatprep.subr.bf16.mxu0 %v4489
    %6871 = vmatpush2.bf16.msra.mxu0 %v4488
    %6872 = vmatprep.subr.bf16.mxu0 %v4473
    %6873 = vmatpush2.bf16.msra.mxu0 %v4472
    %6874 = vmatprep.subr.bf16.mxu0 %v4457
    %6875 = vmatpush2.bf16.msra.mxu0 %v4456
    %6876 = vmatprep.subr.bf16.mxu0 %v4441
    %6877 = vmatpush2.bf16.msra.mxu0 %v4440
    %6878 = vmatprep.mubr.bf16.mxu0 %v1219
    %6879 = vmatmul.mubr.bf16.gmra.mxu0 %v1218
    %v6880 = vpop.f32.mrf.mxu0
    %v6881 = vadd.f32 %v1153, %v6880
    %v6882 = vpop.f32.mrf.mxu0
    %v6883 = vadd.f32 %v1157, %v6882
    %v6884 = vpop.f32.mrf.mxu0
    %v6885 = vpop.f32.mrf.mxu0
    %6886 = vdwg.mxu0
    %6887 = vmatprep.subr.bf16.mxu0 %v4681
    %6888 = vmatpush1.bf16.msra.mxu0 %v4680
    %6889 = vmatprep.subr.bf16.mxu0 %v4665
    %6890 = vmatpush1.bf16.msra.mxu0 %v4664
    %6891 = vmatprep.subr.bf16.mxu0 %v4649
    %6892 = vmatpush1.bf16.msra.mxu0 %v4648
    %6893 = vmatprep.subr.bf16.mxu0 %v4633
    %6894 = vmatpush1.bf16.msra.mxu0 %v4632
    %6895 = vmatprep.subr.bf16.mxu0 %v4617
    %6896 = vmatpush1.bf16.msra.mxu0 %v4616
    %6897 = vmatprep.subr.bf16.mxu0 %v4601
    %6898 = vmatpush1.bf16.msra.mxu0 %v4600
    %6899 = vmatprep.subr.bf16.mxu0 %v4585
    %6900 = vmatpush1.bf16.msra.mxu0 %v4584
    %6901 = vmatprep.subr.bf16.mxu0 %v4569
    %6902 = vmatpush1.bf16.msra.mxu0 %v4568
    %6903 = vmatprep.subr.bf16.mxu0 %v4809
    %6904 = vmatpush2.bf16.msra.mxu0 %v4808
    %6905 = vmatprep.subr.bf16.mxu0 %v4793
    %6906 = vmatpush2.bf16.msra.mxu0 %v4792
    %6907 = vmatprep.subr.bf16.mxu0 %v4777
    %6908 = vmatpush2.bf16.msra.mxu0 %v4776
    %6909 = vmatprep.subr.bf16.mxu0 %v4761
    %6910 = vmatpush2.bf16.msra.mxu0 %v4760
    %6911 = vmatprep.subr.bf16.mxu0 %v4745
    %6912 = vmatpush2.bf16.msra.mxu0 %v4744
    %6913 = vmatprep.subr.bf16.mxu0 %v4729
    %6914 = vmatpush2.bf16.msra.mxu0 %v4728
    %6915 = vmatprep.subr.bf16.mxu0 %v4713
    %6916 = vmatpush2.bf16.msra.mxu0 %v4712
    %6917 = vmatprep.subr.bf16.mxu0 %v4697
    %6918 = vmatpush2.bf16.msra.mxu0 %v4696
    %6919 = vmatprep.mubr.bf16.mxu0 %v1221
    %6920 = vmatmul.mubr.bf16.gmra.mxu0 %v1220
    %v6921 = vpop.f32.mrf.mxu0
    %v6922 = vadd.f32 %v6881, %v6921
    %v6923 = vpop.f32.mrf.mxu0
    %v6924 = vadd.f32 %v6883, %v6923
    %v6925 = vpop.f32.mrf.mxu0
    %v6926 = vpop.f32.mrf.mxu0
    %6927 = vdwg.mxu0
    %6928 = vmatprep.subr.bf16.mxu0 %v4937
    %6929 = vmatpush1.bf16.msra.mxu0 %v4936
    %6930 = vmatprep.subr.bf16.mxu0 %v4921
    %6931 = vmatpush1.bf16.msra.mxu0 %v4920
    %6932 = vmatprep.subr.bf16.mxu0 %v4905
    %6933 = vmatpush1.bf16.msra.mxu0 %v4904
    %6934 = vmatprep.subr.bf16.mxu0 %v4889
    %6935 = vmatpush1.bf16.msra.mxu0 %v4888
    %6936 = vmatprep.subr.bf16.mxu0 %v4873
    %6937 = vmatpush1.bf16.msra.mxu0 %v4872
    %6938 = vmatprep.subr.bf16.mxu0 %v4857
    %6939 = vmatpush1.bf16.msra.mxu0 %v4856
    %6940 = vmatprep.subr.bf16.mxu0 %v4841
    %6941 = vmatpush1.bf16.msra.mxu0 %v4840
    %6942 = vmatprep.subr.bf16.mxu0 %v4825
    %6943 = vmatpush1.bf16.msra.mxu0 %v4824
    %6944 = vmatprep.subr.bf16.mxu0 %v5065
    %6945 = vmatpush2.bf16.msra.mxu0 %v5064
    %6946 = vmatprep.subr.bf16.mxu0 %v5049
    %6947 = vmatpush2.bf16.msra.mxu0 %v5048
    %6948 = vmatprep.subr.bf16.mxu0 %v5033
    %6949 = vmatpush2.bf16.msra.mxu0 %v5032
    %6950 = vmatprep.subr.bf16.mxu0 %v5017
    %6951 = vmatpush2.bf16.msra.mxu0 %v5016
    %6952 = vmatprep.subr.bf16.mxu0 %v5001
    %6953 = vmatpush2.bf16.msra.mxu0 %v5000
    %6954 = vmatprep.subr.bf16.mxu0 %v4985
    %6955 = vmatpush2.bf16.msra.mxu0 %v4984
    %6956 = vmatprep.subr.bf16.mxu0 %v4969
    %6957 = vmatpush2.bf16.msra.mxu0 %v4968
    %6958 = vmatprep.subr.bf16.mxu0 %v4953
    %6959 = vmatpush2.bf16.msra.mxu0 %v4952
    %6960 = vmatprep.mubr.bf16.mxu0 %v1223
    %6961 = vmatmul.mubr.bf16.gmra.mxu0 %v1222
    %v6962 = vpop.f32.mrf.mxu0
    %v6963 = vadd.f32 %v6922, %v6962
    %v6964 = vpop.f32.mrf.mxu0
    %v6965 = vadd.f32 %v6924, %v6964
    %v6966 = vpop.f32.mrf.mxu0
    %v6967 = vpop.f32.mrf.mxu0
    %6968 = vdwg.mxu0
    %6969 = vmatprep.subr.bf16.mxu0 %v5193
    %6970 = vmatpush1.bf16.msra.mxu0 %v5192
    %6971 = vmatprep.subr.bf16.mxu0 %v5177
    %6972 = vmatpush1.bf16.msra.mxu0 %v5176
    %6973 = vmatprep.subr.bf16.mxu0 %v5161
    %6974 = vmatpush1.bf16.msra.mxu0 %v5160
    %6975 = vmatprep.subr.bf16.mxu0 %v5145
    %6976 = vmatpush1.bf16.msra.mxu0 %v5144
    %6977 = vmatprep.subr.bf16.mxu0 %v5129
    %6978 = vmatpush1.bf16.msra.mxu0 %v5128
    %6979 = vmatprep.subr.bf16.mxu0 %v5113
    %6980 = vmatpush1.bf16.msra.mxu0 %v5112
    %6981 = vmatprep.subr.bf16.mxu0 %v5097
    %6982 = vmatpush1.bf16.msra.mxu0 %v5096
    %6983 = vmatprep.subr.bf16.mxu0 %v5081
    %6984 = vmatpush1.bf16.msra.mxu0 %v5080
    %6985 = vmatprep.subr.bf16.mxu0 %v5321
    %6986 = vmatpush2.bf16.msra.mxu0 %v5320
    %6987 = vmatprep.subr.bf16.mxu0 %v5305
    %6988 = vmatpush2.bf16.msra.mxu0 %v5304
    %6989 = vmatprep.subr.bf16.mxu0 %v5289
    %6990 = vmatpush2.bf16.msra.mxu0 %v5288
    %6991 = vmatprep.subr.bf16.mxu0 %v5273
    %6992 = vmatpush2.bf16.msra.mxu0 %v5272
    %6993 = vmatprep.subr.bf16.mxu0 %v5257
    %6994 = vmatpush2.bf16.msra.mxu0 %v5256
    %6995 = vmatprep.subr.bf16.mxu0 %v5241
    %6996 = vmatpush2.bf16.msra.mxu0 %v5240
    %6997 = vmatprep.subr.bf16.mxu0 %v5225
    %6998 = vmatpush2.bf16.msra.mxu0 %v5224
    %6999 = vmatprep.subr.bf16.mxu0 %v5209
    %7000 = vmatpush2.bf16.msra.mxu0 %v5208
    %7001 = vmatprep.mubr.bf16.mxu0 %v1225
    %7002 = vmatmul.mubr.bf16.gmra.mxu0 %v1224
    %v7003 = vpop.f32.mrf.mxu0
    %v7004 = vadd.f32 %v6963, %v7003
    %v7005 = vpop.f32.mrf.mxu0
    %v7006 = vadd.f32 %v6965, %v7005
    %v7007 = vpop.f32.mrf.mxu0
    %v7008 = vpop.f32.mrf.mxu0
    %7009 = vdwg.mxu0
    %7010 = vmatprep.subr.bf16.mxu0 %v4427
    %7011 = vmatpush1.bf16.msra.mxu0 %v4426
    %7012 = vmatprep.subr.bf16.mxu0 %v4411
    %7013 = vmatpush1.bf16.msra.mxu0 %v4410
    %7014 = vmatprep.subr.bf16.mxu0 %v4395
    %7015 = vmatpush1.bf16.msra.mxu0 %v4394
    %7016 = vmatprep.subr.bf16.mxu0 %v4379
    %7017 = vmatpush1.bf16.msra.mxu0 %v4378
    %7018 = vmatprep.subr.bf16.mxu0 %v4363
    %7019 = vmatpush1.bf16.msra.mxu0 %v4362
    %7020 = vmatprep.subr.bf16.mxu0 %v4347
    %7021 = vmatpush1.bf16.msra.mxu0 %v4346
    %7022 = vmatprep.subr.bf16.mxu0 %v4331
    %7023 = vmatpush1.bf16.msra.mxu0 %v4330
    %7024 = vmatprep.subr.bf16.mxu0 %v4315
    %7025 = vmatpush1.bf16.msra.mxu0 %v4314
    %7026 = vmatprep.subr.bf16.mxu0 %v4555
    %7027 = vmatpush2.bf16.msra.mxu0 %v4554
    %7028 = vmatprep.subr.bf16.mxu0 %v4539
    %7029 = vmatpush2.bf16.msra.mxu0 %v4538
    %7030 = vmatprep.subr.bf16.mxu0 %v4523
    %7031 = vmatpush2.bf16.msra.mxu0 %v4522
    %7032 = vmatprep.subr.bf16.mxu0 %v4507
    %7033 = vmatpush2.bf16.msra.mxu0 %v4506
    %7034 = vmatprep.subr.bf16.mxu0 %v4491
    %7035 = vmatpush2.bf16.msra.mxu0 %v4490
    %7036 = vmatprep.subr.bf16.mxu0 %v4475
    %7037 = vmatpush2.bf16.msra.mxu0 %v4474
    %7038 = vmatprep.subr.bf16.mxu0 %v4459
    %7039 = vmatpush2.bf16.msra.mxu0 %v4458
    %7040 = vmatprep.subr.bf16.mxu0 %v4443
    %7041 = vmatpush2.bf16.msra.mxu0 %v4442
    %7042 = vmatprep.mubr.bf16.mxu0 %v1219
    %7043 = vmatmul.mubr.bf16.gmra.mxu0 %v1218
    %v7044 = vpop.f32.mrf.mxu0
    %v7045 = vadd.f32 %v1161, %v7044
    %v7046 = vpop.f32.mrf.mxu0
    %v7047 = vadd.f32 %v1165, %v7046
    %v7048 = vpop.f32.mrf.mxu0
    %v7049 = vpop.f32.mrf.mxu0
    %7050 = vdwg.mxu0
    %7051 = vmatprep.subr.bf16.mxu0 %v4683
    %7052 = vmatpush1.bf16.msra.mxu0 %v4682
    %7053 = vmatprep.subr.bf16.mxu0 %v4667
    %7054 = vmatpush1.bf16.msra.mxu0 %v4666
    %7055 = vmatprep.subr.bf16.mxu0 %v4651
    %7056 = vmatpush1.bf16.msra.mxu0 %v4650
    %7057 = vmatprep.subr.bf16.mxu0 %v4635
    %7058 = vmatpush1.bf16.msra.mxu0 %v4634
    %7059 = vmatprep.subr.bf16.mxu0 %v4619
    %7060 = vmatpush1.bf16.msra.mxu0 %v4618
    %7061 = vmatprep.subr.bf16.mxu0 %v4603
    %7062 = vmatpush1.bf16.msra.mxu0 %v4602
    %7063 = vmatprep.subr.bf16.mxu0 %v4587
    %7064 = vmatpush1.bf16.msra.mxu0 %v4586
    %7065 = vmatprep.subr.bf16.mxu0 %v4571
    %7066 = vmatpush1.bf16.msra.mxu0 %v4570
    %7067 = vmatprep.subr.bf16.mxu0 %v4811
    %7068 = vmatpush2.bf16.msra.mxu0 %v4810
    %7069 = vmatprep.subr.bf16.mxu0 %v4795
    %7070 = vmatpush2.bf16.msra.mxu0 %v4794
    %7071 = vmatprep.subr.bf16.mxu0 %v4779
    %7072 = vmatpush2.bf16.msra.mxu0 %v4778
    %7073 = vmatprep.subr.bf16.mxu0 %v4763
    %7074 = vmatpush2.bf16.msra.mxu0 %v4762
    %7075 = vmatprep.subr.bf16.mxu0 %v4747
    %7076 = vmatpush2.bf16.msra.mxu0 %v4746
    %7077 = vmatprep.subr.bf16.mxu0 %v4731
    %7078 = vmatpush2.bf16.msra.mxu0 %v4730
    %7079 = vmatprep.subr.bf16.mxu0 %v4715
    %7080 = vmatpush2.bf16.msra.mxu0 %v4714
    %7081 = vmatprep.subr.bf16.mxu0 %v4699
    %7082 = vmatpush2.bf16.msra.mxu0 %v4698
    %7083 = vmatprep.mubr.bf16.mxu0 %v1221
    %7084 = vmatmul.mubr.bf16.gmra.mxu0 %v1220
    %v7085 = vpop.f32.mrf.mxu0
    %v7086 = vadd.f32 %v7045, %v7085
    %v7087 = vpop.f32.mrf.mxu0
    %v7088 = vadd.f32 %v7047, %v7087
    %v7089 = vpop.f32.mrf.mxu0
    %v7090 = vpop.f32.mrf.mxu0
    %7091 = vdwg.mxu0
    %7092 = vmatprep.subr.bf16.mxu0 %v4939
    %7093 = vmatpush1.bf16.msra.mxu0 %v4938
    %7094 = vmatprep.subr.bf16.mxu0 %v4923
    %7095 = vmatpush1.bf16.msra.mxu0 %v4922
    %7096 = vmatprep.subr.bf16.mxu0 %v4907
    %7097 = vmatpush1.bf16.msra.mxu0 %v4906
    %7098 = vmatprep.subr.bf16.mxu0 %v4891
    %7099 = vmatpush1.bf16.msra.mxu0 %v4890
    %7100 = vmatprep.subr.bf16.mxu0 %v4875
    %7101 = vmatpush1.bf16.msra.mxu0 %v4874
    %7102 = vmatprep.subr.bf16.mxu0 %v4859
    %7103 = vmatpush1.bf16.msra.mxu0 %v4858
    %7104 = vmatprep.subr.bf16.mxu0 %v4843
    %7105 = vmatpush1.bf16.msra.mxu0 %v4842
    %7106 = vmatprep.subr.bf16.mxu0 %v4827
    %7107 = vmatpush1.bf16.msra.mxu0 %v4826
    %7108 = vmatprep.subr.bf16.mxu0 %v5067
    %7109 = vmatpush2.bf16.msra.mxu0 %v5066
    %7110 = vmatprep.subr.bf16.mxu0 %v5051
    %7111 = vmatpush2.bf16.msra.mxu0 %v5050
    %7112 = vmatprep.subr.bf16.mxu0 %v5035
    %7113 = vmatpush2.bf16.msra.mxu0 %v5034
    %7114 = vmatprep.subr.bf16.mxu0 %v5019
    %7115 = vmatpush2.bf16.msra.mxu0 %v5018
    %7116 = vmatprep.subr.bf16.mxu0 %v5003
    %7117 = vmatpush2.bf16.msra.mxu0 %v5002
    %7118 = vmatprep.subr.bf16.mxu0 %v4987
    %7119 = vmatpush2.bf16.msra.mxu0 %v4986
    %7120 = vmatprep.subr.bf16.mxu0 %v4971
    %7121 = vmatpush2.bf16.msra.mxu0 %v4970
    %7122 = vmatprep.subr.bf16.mxu0 %v4955
    %7123 = vmatpush2.bf16.msra.mxu0 %v4954
    %7124 = vmatprep.mubr.bf16.mxu0 %v1223
    %7125 = vmatmul.mubr.bf16.gmra.mxu0 %v1222
    %v7126 = vpop.f32.mrf.mxu0
    %v7127 = vadd.f32 %v7086, %v7126
    %v7128 = vpop.f32.mrf.mxu0
    %v7129 = vadd.f32 %v7088, %v7128
    %v7130 = vpop.f32.mrf.mxu0
    %v7131 = vpop.f32.mrf.mxu0
    %7132 = vdwg.mxu0
    %7133 = vmatprep.subr.bf16.mxu0 %v5195
    %7134 = vmatpush1.bf16.msra.mxu0 %v5194
    %7135 = vmatprep.subr.bf16.mxu0 %v5179
    %7136 = vmatpush1.bf16.msra.mxu0 %v5178
    %7137 = vmatprep.subr.bf16.mxu0 %v5163
    %7138 = vmatpush1.bf16.msra.mxu0 %v5162
    %7139 = vmatprep.subr.bf16.mxu0 %v5147
    %7140 = vmatpush1.bf16.msra.mxu0 %v5146
    %7141 = vmatprep.subr.bf16.mxu0 %v5131
    %7142 = vmatpush1.bf16.msra.mxu0 %v5130
    %7143 = vmatprep.subr.bf16.mxu0 %v5115
    %7144 = vmatpush1.bf16.msra.mxu0 %v5114
    %7145 = vmatprep.subr.bf16.mxu0 %v5099
    %7146 = vmatpush1.bf16.msra.mxu0 %v5098
    %7147 = vmatprep.subr.bf16.mxu0 %v5083
    %7148 = vmatpush1.bf16.msra.mxu0 %v5082
    %7149 = vmatprep.subr.bf16.mxu0 %v5323
    %7150 = vmatpush2.bf16.msra.mxu0 %v5322
    %7151 = vmatprep.subr.bf16.mxu0 %v5307
    %7152 = vmatpush2.bf16.msra.mxu0 %v5306
    %7153 = vmatprep.subr.bf16.mxu0 %v5291
    %7154 = vmatpush2.bf16.msra.mxu0 %v5290
    %7155 = vmatprep.subr.bf16.mxu0 %v5275
    %7156 = vmatpush2.bf16.msra.mxu0 %v5274
    %7157 = vmatprep.subr.bf16.mxu0 %v5259
    %7158 = vmatpush2.bf16.msra.mxu0 %v5258
    %7159 = vmatprep.subr.bf16.mxu0 %v5243
    %7160 = vmatpush2.bf16.msra.mxu0 %v5242
    %7161 = vmatprep.subr.bf16.mxu0 %v5227
    %7162 = vmatpush2.bf16.msra.mxu0 %v5226
    %7163 = vmatprep.subr.bf16.mxu0 %v5211
    %7164 = vmatpush2.bf16.msra.mxu0 %v5210
    %7165 = vmatprep.mubr.bf16.mxu0 %v1225
    %7166 = vmatmul.mubr.bf16.gmra.mxu0 %v1224
    %v7167 = vpop.f32.mrf.mxu0
    %v7168 = vadd.f32 %v7127, %v7167
    %v7169 = vpop.f32.mrf.mxu0
    %v7170 = vadd.f32 %v7129, %v7169
    %v7171 = vpop.f32.mrf.mxu0
    %v7172 = vpop.f32.mrf.mxu0
    %7173 = vdwg.mxu0
    %7174 = vmatprep.subr.bf16.mxu0 %v4429
    %7175 = vmatpush1.bf16.msra.mxu0 %v4428
    %7176 = vmatprep.subr.bf16.mxu0 %v4413
    %7177 = vmatpush1.bf16.msra.mxu0 %v4412
    %7178 = vmatprep.subr.bf16.mxu0 %v4397
    %7179 = vmatpush1.bf16.msra.mxu0 %v4396
    %7180 = vmatprep.subr.bf16.mxu0 %v4381
    %7181 = vmatpush1.bf16.msra.mxu0 %v4380
    %7182 = vmatprep.subr.bf16.mxu0 %v4365
    %7183 = vmatpush1.bf16.msra.mxu0 %v4364
    %7184 = vmatprep.subr.bf16.mxu0 %v4349
    %7185 = vmatpush1.bf16.msra.mxu0 %v4348
    %7186 = vmatprep.subr.bf16.mxu0 %v4333
    %7187 = vmatpush1.bf16.msra.mxu0 %v4332
    %7188 = vmatprep.subr.bf16.mxu0 %v4317
    %7189 = vmatpush1.bf16.msra.mxu0 %v4316
    %7190 = vmatprep.subr.bf16.mxu0 %v4557
    %7191 = vmatpush2.bf16.msra.mxu0 %v4556
    %7192 = vmatprep.subr.bf16.mxu0 %v4541
    %7193 = vmatpush2.bf16.msra.mxu0 %v4540
    %7194 = vmatprep.subr.bf16.mxu0 %v4525
    %7195 = vmatpush2.bf16.msra.mxu0 %v4524
    %7196 = vmatprep.subr.bf16.mxu0 %v4509
    %7197 = vmatpush2.bf16.msra.mxu0 %v4508
    %7198 = vmatprep.subr.bf16.mxu0 %v4493
    %7199 = vmatpush2.bf16.msra.mxu0 %v4492
    %7200 = vmatprep.subr.bf16.mxu0 %v4477
    %7201 = vmatpush2.bf16.msra.mxu0 %v4476
    %7202 = vmatprep.subr.bf16.mxu0 %v4461
    %7203 = vmatpush2.bf16.msra.mxu0 %v4460
    %7204 = vmatprep.subr.bf16.mxu0 %v4445
    %7205 = vmatpush2.bf16.msra.mxu0 %v4444
    %7206 = vmatprep.mubr.bf16.mxu0 %v1219
    %7207 = vmatmul.mubr.bf16.gmra.mxu0 %v1218
    %v7208 = vpop.f32.mrf.mxu0
    %v7209 = vadd.f32 %v1169, %v7208
    %v7210 = vpop.f32.mrf.mxu0
    %v7211 = vadd.f32 %v1173, %v7210
    %v7212 = vpop.f32.mrf.mxu0
    %v7213 = vpop.f32.mrf.mxu0
    %7214 = vdwg.mxu0
    %7215 = vmatprep.subr.bf16.mxu0 %v4685
    %7216 = vmatpush1.bf16.msra.mxu0 %v4684
    %7217 = vmatprep.subr.bf16.mxu0 %v4669
    %7218 = vmatpush1.bf16.msra.mxu0 %v4668
    %7219 = vmatprep.subr.bf16.mxu0 %v4653
    %7220 = vmatpush1.bf16.msra.mxu0 %v4652
    %7221 = vmatprep.subr.bf16.mxu0 %v4637
    %7222 = vmatpush1.bf16.msra.mxu0 %v4636
    %7223 = vmatprep.subr.bf16.mxu0 %v4621
    %7224 = vmatpush1.bf16.msra.mxu0 %v4620
    %7225 = vmatprep.subr.bf16.mxu0 %v4605
    %7226 = vmatpush1.bf16.msra.mxu0 %v4604
    %7227 = vmatprep.subr.bf16.mxu0 %v4589
    %7228 = vmatpush1.bf16.msra.mxu0 %v4588
    %7229 = vmatprep.subr.bf16.mxu0 %v4573
    %7230 = vmatpush1.bf16.msra.mxu0 %v4572
    %7231 = vmatprep.subr.bf16.mxu0 %v4813
    %7232 = vmatpush2.bf16.msra.mxu0 %v4812
    %7233 = vmatprep.subr.bf16.mxu0 %v4797
    %7234 = vmatpush2.bf16.msra.mxu0 %v4796
    %7235 = vmatprep.subr.bf16.mxu0 %v4781
    %7236 = vmatpush2.bf16.msra.mxu0 %v4780
    %7237 = vmatprep.subr.bf16.mxu0 %v4765
    %7238 = vmatpush2.bf16.msra.mxu0 %v4764
    %7239 = vmatprep.subr.bf16.mxu0 %v4749
    %7240 = vmatpush2.bf16.msra.mxu0 %v4748
    %7241 = vmatprep.subr.bf16.mxu0 %v4733
    %7242 = vmatpush2.bf16.msra.mxu0 %v4732
    %7243 = vmatprep.subr.bf16.mxu0 %v4717
    %7244 = vmatpush2.bf16.msra.mxu0 %v4716
    %7245 = vmatprep.subr.bf16.mxu0 %v4701
    %7246 = vmatpush2.bf16.msra.mxu0 %v4700
    %7247 = vmatprep.mubr.bf16.mxu0 %v1221
    %7248 = vmatmul.mubr.bf16.gmra.mxu0 %v1220
    %v7249 = vpop.f32.mrf.mxu0
    %v7250 = vadd.f32 %v7209, %v7249
    %v7251 = vpop.f32.mrf.mxu0
    %v7252 = vadd.f32 %v7211, %v7251
    %v7253 = vpop.f32.mrf.mxu0
    %v7254 = vpop.f32.mrf.mxu0
    %7255 = vdwg.mxu0
    %7256 = vmatprep.subr.bf16.mxu0 %v4941
    %7257 = vmatpush1.bf16.msra.mxu0 %v4940
    %7258 = vmatprep.subr.bf16.mxu0 %v4925
    %7259 = vmatpush1.bf16.msra.mxu0 %v4924
    %7260 = vmatprep.subr.bf16.mxu0 %v4909
    %7261 = vmatpush1.bf16.msra.mxu0 %v4908
    %7262 = vmatprep.subr.bf16.mxu0 %v4893
    %7263 = vmatpush1.bf16.msra.mxu0 %v4892
    %7264 = vmatprep.subr.bf16.mxu0 %v4877
    %7265 = vmatpush1.bf16.msra.mxu0 %v4876
    %7266 = vmatprep.subr.bf16.mxu0 %v4861
    %7267 = vmatpush1.bf16.msra.mxu0 %v4860
    %7268 = vmatprep.subr.bf16.mxu0 %v4845
    %7269 = vmatpush1.bf16.msra.mxu0 %v4844
    %7270 = vmatprep.subr.bf16.mxu0 %v4829
    %7271 = vmatpush1.bf16.msra.mxu0 %v4828
    %7272 = vmatprep.subr.bf16.mxu0 %v5069
    %7273 = vmatpush2.bf16.msra.mxu0 %v5068
    %7274 = vmatprep.subr.bf16.mxu0 %v5053
    %7275 = vmatpush2.bf16.msra.mxu0 %v5052
    %7276 = vmatprep.subr.bf16.mxu0 %v5037
    %7277 = vmatpush2.bf16.msra.mxu0 %v5036
    %7278 = vmatprep.subr.bf16.mxu0 %v5021
    %7279 = vmatpush2.bf16.msra.mxu0 %v5020
    %7280 = vmatprep.subr.bf16.mxu0 %v5005
    %7281 = vmatpush2.bf16.msra.mxu0 %v5004
    %7282 = vmatprep.subr.bf16.mxu0 %v4989
    %7283 = vmatpush2.bf16.msra.mxu0 %v4988
    %7284 = vmatprep.subr.bf16.mxu0 %v4973
    %7285 = vmatpush2.bf16.msra.mxu0 %v4972
    %7286 = vmatprep.subr.bf16.mxu0 %v4957
    %7287 = vmatpush2.bf16.msra.mxu0 %v4956
    %7288 = vmatprep.mubr.bf16.mxu0 %v1223
    %7289 = vmatmul.mubr.bf16.gmra.mxu0 %v1222
    %v7290 = vpop.f32.mrf.mxu0
    %v7291 = vadd.f32 %v7250, %v7290
    %v7292 = vpop.f32.mrf.mxu0
    %v7293 = vadd.f32 %v7252, %v7292
    %v7294 = vpop.f32.mrf.mxu0
    %v7295 = vpop.f32.mrf.mxu0
    %7296 = vdwg.mxu0
    %7297 = vmatprep.subr.bf16.mxu0 %v5197
    %7298 = vmatpush1.bf16.msra.mxu0 %v5196
    %7299 = vmatprep.subr.bf16.mxu0 %v5181
    %7300 = vmatpush1.bf16.msra.mxu0 %v5180
    %7301 = vmatprep.subr.bf16.mxu0 %v5165
    %7302 = vmatpush1.bf16.msra.mxu0 %v5164
    %7303 = vmatprep.subr.bf16.mxu0 %v5149
    %7304 = vmatpush1.bf16.msra.mxu0 %v5148
    %7305 = vmatprep.subr.bf16.mxu0 %v5133
    %7306 = vmatpush1.bf16.msra.mxu0 %v5132
    %7307 = vmatprep.subr.bf16.mxu0 %v5117
    %7308 = vmatpush1.bf16.msra.mxu0 %v5116
    %7309 = vmatprep.subr.bf16.mxu0 %v5101
    %7310 = vmatpush1.bf16.msra.mxu0 %v5100
    %7311 = vmatprep.subr.bf16.mxu0 %v5085
    %7312 = vmatpush1.bf16.msra.mxu0 %v5084
    %7313 = vmatprep.subr.bf16.mxu0 %v5325
    %7314 = vmatpush2.bf16.msra.mxu0 %v5324
    %7315 = vmatprep.subr.bf16.mxu0 %v5309
    %7316 = vmatpush2.bf16.msra.mxu0 %v5308
    %7317 = vmatprep.subr.bf16.mxu0 %v5293
    %7318 = vmatpush2.bf16.msra.mxu0 %v5292
    %7319 = vmatprep.subr.bf16.mxu0 %v5277
    %7320 = vmatpush2.bf16.msra.mxu0 %v5276
    %7321 = vmatprep.subr.bf16.mxu0 %v5261
    %7322 = vmatpush2.bf16.msra.mxu0 %v5260
    %7323 = vmatprep.subr.bf16.mxu0 %v5245
    %7324 = vmatpush2.bf16.msra.mxu0 %v5244
    %7325 = vmatprep.subr.bf16.mxu0 %v5229
    %7326 = vmatpush2.bf16.msra.mxu0 %v5228
    %7327 = vmatprep.subr.bf16.mxu0 %v5213
    %7328 = vmatpush2.bf16.msra.mxu0 %v5212
    %7329 = vmatprep.mubr.bf16.mxu0 %v1225
    %7330 = vmatmul.mubr.bf16.gmra.mxu0 %v1224
    %v7331 = vpop.f32.mrf.mxu0
    %v7332 = vadd.f32 %v7291, %v7331
    %v7333 = vpop.f32.mrf.mxu0
    %v7334 = vadd.f32 %v7293, %v7333
    %v7335 = vpop.f32.mrf.mxu0
    %v7336 = vpop.f32.mrf.mxu0
    %7337 = vdwg.mxu0
    %7338 = vmatprep.subr.bf16.mxu0 %v4431
    %7339 = vmatpush1.bf16.msra.mxu0 %v4430
    %7340 = vmatprep.subr.bf16.mxu0 %v4415
    %7341 = vmatpush1.bf16.msra.mxu0 %v4414
    %7342 = vmatprep.subr.bf16.mxu0 %v4399
    %7343 = vmatpush1.bf16.msra.mxu0 %v4398
    %7344 = vmatprep.subr.bf16.mxu0 %v4383
    %7345 = vmatpush1.bf16.msra.mxu0 %v4382
    %7346 = vmatprep.subr.bf16.mxu0 %v4367
    %7347 = vmatpush1.bf16.msra.mxu0 %v4366
    %7348 = vmatprep.subr.bf16.mxu0 %v4351
    %7349 = vmatpush1.bf16.msra.mxu0 %v4350
    %7350 = vmatprep.subr.bf16.mxu0 %v4335
    %7351 = vmatpush1.bf16.msra.mxu0 %v4334
    %7352 = vmatprep.subr.bf16.mxu0 %v4319
    %7353 = vmatpush1.bf16.msra.mxu0 %v4318
    %7354 = vmatprep.subr.bf16.mxu0 %v4559
    %7355 = vmatpush2.bf16.msra.mxu0 %v4558
    %7356 = vmatprep.subr.bf16.mxu0 %v4543
    %7357 = vmatpush2.bf16.msra.mxu0 %v4542
    %7358 = vmatprep.subr.bf16.mxu0 %v4527
    %7359 = vmatpush2.bf16.msra.mxu0 %v4526
    %7360 = vmatprep.subr.bf16.mxu0 %v4511
    %7361 = vmatpush2.bf16.msra.mxu0 %v4510
    %7362 = vmatprep.subr.bf16.mxu0 %v4495
    %7363 = vmatpush2.bf16.msra.mxu0 %v4494
    %7364 = vmatprep.subr.bf16.mxu0 %v4479
    %7365 = vmatpush2.bf16.msra.mxu0 %v4478
    %7366 = vmatprep.subr.bf16.mxu0 %v4463
    %7367 = vmatpush2.bf16.msra.mxu0 %v4462
    %7368 = vmatprep.subr.bf16.mxu0 %v4447
    %7369 = vmatpush2.bf16.msra.mxu0 %v4446
    %7370 = vmatprep.mubr.bf16.mxu0 %v1219
    %7371 = vmatmul.mubr.bf16.gmra.mxu0 %v1218
    %v7372 = vpop.f32.mrf.mxu0
    %v7373 = vadd.f32 %v1177, %v7372
    %v7374 = vpop.f32.mrf.mxu0
    %v7375 = vadd.f32 %v1181, %v7374
    %v7376 = vpop.f32.mrf.mxu0
    %v7377 = vpop.f32.mrf.mxu0
    %7378 = vdwg.mxu0
    %7379 = vmatprep.subr.bf16.mxu0 %v4687
    %7380 = vmatpush1.bf16.msra.mxu0 %v4686
    %7381 = vmatprep.subr.bf16.mxu0 %v4671
    %7382 = vmatpush1.bf16.msra.mxu0 %v4670
    %7383 = vmatprep.subr.bf16.mxu0 %v4655
    %7384 = vmatpush1.bf16.msra.mxu0 %v4654
    %7385 = vmatprep.subr.bf16.mxu0 %v4639
    %7386 = vmatpush1.bf16.msra.mxu0 %v4638
    %7387 = vmatprep.subr.bf16.mxu0 %v4623
    %7388 = vmatpush1.bf16.msra.mxu0 %v4622
    %7389 = vmatprep.subr.bf16.mxu0 %v4607
    %7390 = vmatpush1.bf16.msra.mxu0 %v4606
    %7391 = vmatprep.subr.bf16.mxu0 %v4591
    %7392 = vmatpush1.bf16.msra.mxu0 %v4590
    %7393 = vmatprep.subr.bf16.mxu0 %v4575
    %7394 = vmatpush1.bf16.msra.mxu0 %v4574
    %7395 = vmatprep.subr.bf16.mxu0 %v4815
    %7396 = vmatpush2.bf16.msra.mxu0 %v4814
    %7397 = vmatprep.subr.bf16.mxu0 %v4799
    %7398 = vmatpush2.bf16.msra.mxu0 %v4798
    %7399 = vmatprep.subr.bf16.mxu0 %v4783
    %7400 = vmatpush2.bf16.msra.mxu0 %v4782
    %7401 = vmatprep.subr.bf16.mxu0 %v4767
    %7402 = vmatpush2.bf16.msra.mxu0 %v4766
    %7403 = vmatprep.subr.bf16.mxu0 %v4751
    %7404 = vmatpush2.bf16.msra.mxu0 %v4750
    %7405 = vmatprep.subr.bf16.mxu0 %v4735
    %7406 = vmatpush2.bf16.msra.mxu0 %v4734
    %7407 = vmatprep.subr.bf16.mxu0 %v4719
    %7408 = vmatpush2.bf16.msra.mxu0 %v4718
    %7409 = vmatprep.subr.bf16.mxu0 %v4703
    %7410 = vmatpush2.bf16.msra.mxu0 %v4702
    %7411 = vmatprep.mubr.bf16.mxu0 %v1221
    %7412 = vmatmul.mubr.bf16.gmra.mxu0 %v1220
    %v7413 = vpop.f32.mrf.mxu0
    %v7414 = vadd.f32 %v7373, %v7413
    %v7415 = vpop.f32.mrf.mxu0
    %v7416 = vadd.f32 %v7375, %v7415
    %v7417 = vpop.f32.mrf.mxu0
    %v7418 = vpop.f32.mrf.mxu0
    %7419 = vdwg.mxu0
    %7420 = vmatprep.subr.bf16.mxu0 %v4943
    %7421 = vmatpush1.bf16.msra.mxu0 %v4942
    %7422 = vmatprep.subr.bf16.mxu0 %v4927
    %7423 = vmatpush1.bf16.msra.mxu0 %v4926
    %7424 = vmatprep.subr.bf16.mxu0 %v4911
    %7425 = vmatpush1.bf16.msra.mxu0 %v4910
    %7426 = vmatprep.subr.bf16.mxu0 %v4895
    %7427 = vmatpush1.bf16.msra.mxu0 %v4894
    %7428 = vmatprep.subr.bf16.mxu0 %v4879
    %7429 = vmatpush1.bf16.msra.mxu0 %v4878
    %7430 = vmatprep.subr.bf16.mxu0 %v4863
    %7431 = vmatpush1.bf16.msra.mxu0 %v4862
    %7432 = vmatprep.subr.bf16.mxu0 %v4847
    %7433 = vmatpush1.bf16.msra.mxu0 %v4846
    %7434 = vmatprep.subr.bf16.mxu0 %v4831
    %7435 = vmatpush1.bf16.msra.mxu0 %v4830
    %7436 = vmatprep.subr.bf16.mxu0 %v5071
    %7437 = vmatpush2.bf16.msra.mxu0 %v5070
    %7438 = vmatprep.subr.bf16.mxu0 %v5055
    %7439 = vmatpush2.bf16.msra.mxu0 %v5054
    %7440 = vmatprep.subr.bf16.mxu0 %v5039
    %7441 = vmatpush2.bf16.msra.mxu0 %v5038
    %7442 = vmatprep.subr.bf16.mxu0 %v5023
    %7443 = vmatpush2.bf16.msra.mxu0 %v5022
    %7444 = vmatprep.subr.bf16.mxu0 %v5007
    %7445 = vmatpush2.bf16.msra.mxu0 %v5006
    %7446 = vmatprep.subr.bf16.mxu0 %v4991
    %7447 = vmatpush2.bf16.msra.mxu0 %v4990
    %7448 = vmatprep.subr.bf16.mxu0 %v4975
    %7449 = vmatpush2.bf16.msra.mxu0 %v4974
    %7450 = vmatprep.subr.bf16.mxu0 %v4959
    %7451 = vmatpush2.bf16.msra.mxu0 %v4958
    %7452 = vmatprep.mubr.bf16.mxu0 %v1223
    %7453 = vmatmul.mubr.bf16.gmra.mxu0 %v1222
    %v7454 = vpop.f32.mrf.mxu0
    %v7455 = vadd.f32 %v7414, %v7454
    %v7456 = vpop.f32.mrf.mxu0
    %v7457 = vadd.f32 %v7416, %v7456
    %v7458 = vpop.f32.mrf.mxu0
    %v7459 = vpop.f32.mrf.mxu0
    %7460 = vdwg.mxu0
    %7461 = vmatprep.subr.bf16.mxu0 %v5199
    %7462 = vmatpush1.bf16.msra.mxu0 %v5198
    %7463 = vmatprep.subr.bf16.mxu0 %v5183
    %7464 = vmatpush1.bf16.msra.mxu0 %v5182
    %7465 = vmatprep.subr.bf16.mxu0 %v5167
    %7466 = vmatpush1.bf16.msra.mxu0 %v5166
    %7467 = vmatprep.subr.bf16.mxu0 %v5151
    %7468 = vmatpush1.bf16.msra.mxu0 %v5150
    %7469 = vmatprep.subr.bf16.mxu0 %v5135
    %7470 = vmatpush1.bf16.msra.mxu0 %v5134
    %7471 = vmatprep.subr.bf16.mxu0 %v5119
    %7472 = vmatpush1.bf16.msra.mxu0 %v5118
    %7473 = vmatprep.subr.bf16.mxu0 %v5103
    %7474 = vmatpush1.bf16.msra.mxu0 %v5102
    %7475 = vmatprep.subr.bf16.mxu0 %v5087
    %7476 = vmatpush1.bf16.msra.mxu0 %v5086
    %7477 = vmatprep.subr.bf16.mxu0 %v5327
    %7478 = vmatpush2.bf16.msra.mxu0 %v5326
    %7479 = vmatprep.subr.bf16.mxu0 %v5311
    %7480 = vmatpush2.bf16.msra.mxu0 %v5310
    %7481 = vmatprep.subr.bf16.mxu0 %v5295
    %7482 = vmatpush2.bf16.msra.mxu0 %v5294
    %7483 = vmatprep.subr.bf16.mxu0 %v5279
    %7484 = vmatpush2.bf16.msra.mxu0 %v5278
    %7485 = vmatprep.subr.bf16.mxu0 %v5263
    %7486 = vmatpush2.bf16.msra.mxu0 %v5262
    %7487 = vmatprep.subr.bf16.mxu0 %v5247
    %7488 = vmatpush2.bf16.msra.mxu0 %v5246
    %7489 = vmatprep.subr.bf16.mxu0 %v5231
    %7490 = vmatpush2.bf16.msra.mxu0 %v5230
    %7491 = vmatprep.subr.bf16.mxu0 %v5215
    %7492 = vmatpush2.bf16.msra.mxu0 %v5214
    %7493 = vmatprep.mubr.bf16.mxu0 %v1225
    %7494 = vmatmul.mubr.bf16.gmra.mxu0 %v1224
    %v7495 = vpop.f32.mrf.mxu0
    %v7496 = vadd.f32 %v7455, %v7495
    %v7497 = vpop.f32.mrf.mxu0
    %v7498 = vadd.f32 %v7457, %v7497
    %v7499 = vpop.f32.mrf.mxu0
    %v7500 = vpop.f32.mrf.mxu0
    %7501 = vdwg.mxu0
    %7502 = vmatprep.subr.bf16.mxu0 %v4433
    %7503 = vmatpush1.bf16.msra.mxu0 %v4432
    %7504 = vmatprep.subr.bf16.mxu0 %v4417
    %7505 = vmatpush1.bf16.msra.mxu0 %v4416
    %7506 = vmatprep.subr.bf16.mxu0 %v4401
    %7507 = vmatpush1.bf16.msra.mxu0 %v4400
    %7508 = vmatprep.subr.bf16.mxu0 %v4385
    %7509 = vmatpush1.bf16.msra.mxu0 %v4384
    %7510 = vmatprep.subr.bf16.mxu0 %v4369
    %7511 = vmatpush1.bf16.msra.mxu0 %v4368
    %7512 = vmatprep.subr.bf16.mxu0 %v4353
    %7513 = vmatpush1.bf16.msra.mxu0 %v4352
    %7514 = vmatprep.subr.bf16.mxu0 %v4337
    %7515 = vmatpush1.bf16.msra.mxu0 %v4336
    %7516 = vmatprep.subr.bf16.mxu0 %v4321
    %7517 = vmatpush1.bf16.msra.mxu0 %v4320
    %7518 = vmatprep.subr.bf16.mxu0 %v4561
    %7519 = vmatpush2.bf16.msra.mxu0 %v4560
    %7520 = vmatprep.subr.bf16.mxu0 %v4545
    %7521 = vmatpush2.bf16.msra.mxu0 %v4544
    %7522 = vmatprep.subr.bf16.mxu0 %v4529
    %7523 = vmatpush2.bf16.msra.mxu0 %v4528
    %7524 = vmatprep.subr.bf16.mxu0 %v4513
    %7525 = vmatpush2.bf16.msra.mxu0 %v4512
    %7526 = vmatprep.subr.bf16.mxu0 %v4497
    %7527 = vmatpush2.bf16.msra.mxu0 %v4496
    %7528 = vmatprep.subr.bf16.mxu0 %v4481
    %7529 = vmatpush2.bf16.msra.mxu0 %v4480
    %7530 = vmatprep.subr.bf16.mxu0 %v4465
    %7531 = vmatpush2.bf16.msra.mxu0 %v4464
    %7532 = vmatprep.subr.bf16.mxu0 %v4449
    %7533 = vmatpush2.bf16.msra.mxu0 %v4448
    %7534 = vmatprep.mubr.bf16.mxu0 %v1219
    %7535 = vmatmul.mubr.bf16.gmra.mxu0 %v1218
    %v7536 = vpop.f32.mrf.mxu0
    %v7537 = vadd.f32 %v1185, %v7536
    %v7538 = vpop.f32.mrf.mxu0
    %v7539 = vadd.f32 %v1189, %v7538
    %v7540 = vpop.f32.mrf.mxu0
    %v7541 = vpop.f32.mrf.mxu0
    %7542 = vdwg.mxu0
    %7543 = vmatprep.subr.bf16.mxu0 %v4689
    %7544 = vmatpush1.bf16.msra.mxu0 %v4688
    %7545 = vmatprep.subr.bf16.mxu0 %v4673
    %7546 = vmatpush1.bf16.msra.mxu0 %v4672
    %7547 = vmatprep.subr.bf16.mxu0 %v4657
    %7548 = vmatpush1.bf16.msra.mxu0 %v4656
    %7549 = vmatprep.subr.bf16.mxu0 %v4641
    %7550 = vmatpush1.bf16.msra.mxu0 %v4640
    %7551 = vmatprep.subr.bf16.mxu0 %v4625
    %7552 = vmatpush1.bf16.msra.mxu0 %v4624
    %7553 = vmatprep.subr.bf16.mxu0 %v4609
    %7554 = vmatpush1.bf16.msra.mxu0 %v4608
    %7555 = vmatprep.subr.bf16.mxu0 %v4593
    %7556 = vmatpush1.bf16.msra.mxu0 %v4592
    %7557 = vmatprep.subr.bf16.mxu0 %v4577
    %7558 = vmatpush1.bf16.msra.mxu0 %v4576
    %7559 = vmatprep.subr.bf16.mxu0 %v4817
    %7560 = vmatpush2.bf16.msra.mxu0 %v4816
    %7561 = vmatprep.subr.bf16.mxu0 %v4801
    %7562 = vmatpush2.bf16.msra.mxu0 %v4800
    %7563 = vmatprep.subr.bf16.mxu0 %v4785
    %7564 = vmatpush2.bf16.msra.mxu0 %v4784
    %7565 = vmatprep.subr.bf16.mxu0 %v4769
    %7566 = vmatpush2.bf16.msra.mxu0 %v4768
    %7567 = vmatprep.subr.bf16.mxu0 %v4753
    %7568 = vmatpush2.bf16.msra.mxu0 %v4752
    %7569 = vmatprep.subr.bf16.mxu0 %v4737
    %7570 = vmatpush2.bf16.msra.mxu0 %v4736
    %7571 = vmatprep.subr.bf16.mxu0 %v4721
    %7572 = vmatpush2.bf16.msra.mxu0 %v4720
    %7573 = vmatprep.subr.bf16.mxu0 %v4705
    %7574 = vmatpush2.bf16.msra.mxu0 %v4704
    %7575 = vmatprep.mubr.bf16.mxu0 %v1221
    %7576 = vmatmul.mubr.bf16.gmra.mxu0 %v1220
    %v7577 = vpop.f32.mrf.mxu0
    %v7578 = vadd.f32 %v7537, %v7577
    %v7579 = vpop.f32.mrf.mxu0
    %v7580 = vadd.f32 %v7539, %v7579
    %v7581 = vpop.f32.mrf.mxu0
    %v7582 = vpop.f32.mrf.mxu0
    %7583 = vdwg.mxu0
    %7584 = vmatprep.subr.bf16.mxu0 %v4945
    %7585 = vmatpush1.bf16.msra.mxu0 %v4944
    %7586 = vmatprep.subr.bf16.mxu0 %v4929
    %7587 = vmatpush1.bf16.msra.mxu0 %v4928
    %7588 = vmatprep.subr.bf16.mxu0 %v4913
    %7589 = vmatpush1.bf16.msra.mxu0 %v4912
    %7590 = vmatprep.subr.bf16.mxu0 %v4897
    %7591 = vmatpush1.bf16.msra.mxu0 %v4896
    %7592 = vmatprep.subr.bf16.mxu0 %v4881
    %7593 = vmatpush1.bf16.msra.mxu0 %v4880
    %7594 = vmatprep.subr.bf16.mxu0 %v4865
    %7595 = vmatpush1.bf16.msra.mxu0 %v4864
    %7596 = vmatprep.subr.bf16.mxu0 %v4849
    %7597 = vmatpush1.bf16.msra.mxu0 %v4848
    %7598 = vmatprep.subr.bf16.mxu0 %v4833
    %7599 = vmatpush1.bf16.msra.mxu0 %v4832
    %7600 = vmatprep.subr.bf16.mxu0 %v5073
    %7601 = vmatpush2.bf16.msra.mxu0 %v5072
    %7602 = vmatprep.subr.bf16.mxu0 %v5057
    %7603 = vmatpush2.bf16.msra.mxu0 %v5056
    %7604 = vmatprep.subr.bf16.mxu0 %v5041
    %7605 = vmatpush2.bf16.msra.mxu0 %v5040
    %7606 = vmatprep.subr.bf16.mxu0 %v5025
    %7607 = vmatpush2.bf16.msra.mxu0 %v5024
    %7608 = vmatprep.subr.bf16.mxu0 %v5009
    %7609 = vmatpush2.bf16.msra.mxu0 %v5008
    %7610 = vmatprep.subr.bf16.mxu0 %v4993
    %7611 = vmatpush2.bf16.msra.mxu0 %v4992
    %7612 = vmatprep.subr.bf16.mxu0 %v4977
    %7613 = vmatpush2.bf16.msra.mxu0 %v4976
    %7614 = vmatprep.subr.bf16.mxu0 %v4961
    %7615 = vmatpush2.bf16.msra.mxu0 %v4960
    %7616 = vmatprep.mubr.bf16.mxu0 %v1223
    %7617 = vmatmul.mubr.bf16.gmra.mxu0 %v1222
    %v7618 = vpop.f32.mrf.mxu0
    %v7619 = vadd.f32 %v7578, %v7618
    %v7620 = vpop.f32.mrf.mxu0
    %v7621 = vadd.f32 %v7580, %v7620
    %v7622 = vpop.f32.mrf.mxu0
    %v7623 = vpop.f32.mrf.mxu0
    %7624 = vdwg.mxu0
    %7625 = vmatprep.subr.bf16.mxu0 %v5201
    %7626 = vmatpush1.bf16.msra.mxu0 %v5200
    %7627 = vmatprep.subr.bf16.mxu0 %v5185
    %7628 = vmatpush1.bf16.msra.mxu0 %v5184
    %7629 = vmatprep.subr.bf16.mxu0 %v5169
    %7630 = vmatpush1.bf16.msra.mxu0 %v5168
    %7631 = vmatprep.subr.bf16.mxu0 %v5153
    %7632 = vmatpush1.bf16.msra.mxu0 %v5152
    %7633 = vmatprep.subr.bf16.mxu0 %v5137
    %7634 = vmatpush1.bf16.msra.mxu0 %v5136
    %7635 = vmatprep.subr.bf16.mxu0 %v5121
    %7636 = vmatpush1.bf16.msra.mxu0 %v5120
    %7637 = vmatprep.subr.bf16.mxu0 %v5105
    %7638 = vmatpush1.bf16.msra.mxu0 %v5104
    %7639 = vmatprep.subr.bf16.mxu0 %v5089
    %7640 = vmatpush1.bf16.msra.mxu0 %v5088
    %7641 = vmatprep.subr.bf16.mxu0 %v5329
    %7642 = vmatpush2.bf16.msra.mxu0 %v5328
    %7643 = vmatprep.subr.bf16.mxu0 %v5313
    %7644 = vmatpush2.bf16.msra.mxu0 %v5312
    %7645 = vmatprep.subr.bf16.mxu0 %v5297
    %7646 = vmatpush2.bf16.msra.mxu0 %v5296
    %7647 = vmatprep.subr.bf16.mxu0 %v5281
    %7648 = vmatpush2.bf16.msra.mxu0 %v5280
    %7649 = vmatprep.subr.bf16.mxu0 %v5265
    %7650 = vmatpush2.bf16.msra.mxu0 %v5264
    %7651 = vmatprep.subr.bf16.mxu0 %v5249
    %7652 = vmatpush2.bf16.msra.mxu0 %v5248
    %7653 = vmatprep.subr.bf16.mxu0 %v5233
    %7654 = vmatpush2.bf16.msra.mxu0 %v5232
    %7655 = vmatprep.subr.bf16.mxu0 %v5217
    %7656 = vmatpush2.bf16.msra.mxu0 %v5216
    %7657 = vmatprep.mubr.bf16.mxu0 %v1225
    %7658 = vmatmul.mubr.bf16.gmra.mxu0 %v1224
    %v7659 = vpop.f32.mrf.mxu0
    %v7660 = vadd.f32 %v7619, %v7659
    %v7661 = vpop.f32.mrf.mxu0
    %v7662 = vadd.f32 %v7621, %v7661
    %v7663 = vpop.f32.mrf.mxu0
    %v7664 = vpop.f32.mrf.mxu0
    %7665 = vdwg.mxu0
    %v7666 = vmax.f32 %v6512, 0.0
    %v7667 = vmax.f32 %v6514, 0.0
    %v7668 = vmax.f32 %v6676, 0.0
    %v7669 = vmax.f32 %v6678, 0.0
    %v7670 = vmax.f32 %v6840, 0.0
    %v7671 = vmax.f32 %v6842, 0.0
    %v7672 = vmax.f32 %v7004, 0.0
    %v7673 = vmax.f32 %v7006, 0.0
    %v7674 = vmax.f32 %v7168, 0.0
    %v7675 = vmax.f32 %v7170, 0.0
    %v7676 = vmax.f32 %v7332, 0.0
    %v7677 = vmax.f32 %v7334, 0.0
    %v7678 = vmax.f32 %v7496, 0.0
    %v7679 = vmax.f32 %v7498, 0.0
    %v7680 = vmax.f32 %v7660, 0.0
    %v7681 = vmax.f32 %v7662, 0.0
    %v7682 = vmax.f32 %v7666, %v7670
    %v7683 = vmax.f32 %v7667, %v7671
    %v7684 = vmax.f32 %v7668, %v7672
    %v7685 = vmax.f32 %v7669, %v7673
    %v7686 = vmax.f32 %v7674, %v7678
    %v7687 = vmax.f32 %v7675, %v7679
    %v7688 = vmax.f32 %v7676, %v7680
    %v7689 = vmax.f32 %v7677, %v7681
    %v7690 = vmax.f32 %v7682, %v7686
    %v7691 = vmax.f32 %v7683, %v7687
    %v7692 = vmax.f32 %v7684, %v7688
    %v7693 = vmax.f32 %v7685, %v7689
    %v7694 = vpack.c.bf16 %v7690, %v7690
    %v7695 = vpack.c.bf16 %v7691, %v7691
    %v7696 = vpack.c.bf16 %v7692, %v7692
    %v7697 = vpack.c.bf16 %v7693, %v7693
    %v7698 = vld [vmem:[#allocation6] sm:$0xff]
    %v7699 = vld [vmem:[#allocation6 + $0x8] sm:$0xff]
    %v7700 = vld [vmem:[#allocation6 + $0x10] sm:$0xff]
    %v7701 = vld [vmem:[#allocation6 + $0x18] sm:$0xff]
    %v7702 = vld [vmem:[#allocation6 + $0x20] sm:$0xff]
    %v7703 = vld [vmem:[#allocation6 + $0x28] sm:$0xff]
    %v7704 = vld [vmem:[#allocation6 + $0x30] sm:$0xff]
    %v7705 = vld [vmem:[#allocation6 + $0x38] sm:$0xff]
    %v7706 = vld [vmem:[#allocation6 + $0x40] sm:$0xff]
    %v7707 = vld [vmem:[#allocation6 + $0x48] sm:$0xff]
    %v7708 = vld [vmem:[#allocation6 + $0x50] sm:$0xff]
    %v7709 = vld [vmem:[#allocation6 + $0x58] sm:$0xff]
    %v7710 = vld [vmem:[#allocation6 + $0x60] sm:$0xff]
    %v7711 = vld [vmem:[#allocation6 + $0x68] sm:$0xff]
    %v7712 = vld [vmem:[#allocation6 + $0x70] sm:$0xff]
    %v7713 = vld [vmem:[#allocation6 + $0x78] sm:$0xff]
    %v7714 = vld [vmem:[#allocation6 + $0x80] sm:$0xff]
    %v7715 = vld [vmem:[#allocation6 + $0x88] sm:$0xff]
    %v7716 = vld [vmem:[#allocation6 + $0x90] sm:$0xff]
    %v7717 = vld [vmem:[#allocation6 + $0x98] sm:$0xff]
    %v7718 = vld [vmem:[#allocation6 + $0xa0] sm:$0xff]
    %v7719 = vld [vmem:[#allocation6 + $0xa8] sm:$0xff]
    %v7720 = vld [vmem:[#allocation6 + $0xb0] sm:$0xff]
    %v7721 = vld [vmem:[#allocation6 + $0xb8] sm:$0xff]
    %v7722 = vld [vmem:[#allocation6 + $0xc0] sm:$0xff]
    %v7723 = vld [vmem:[#allocation6 + $0xc8] sm:$0xff]
    %v7724 = vld [vmem:[#allocation6 + $0xd0] sm:$0xff]
    %v7725 = vld [vmem:[#allocation6 + $0xd8] sm:$0xff]
    %v7726 = vld [vmem:[#allocation6 + $0xe0] sm:$0xff]
    %v7727 = vld [vmem:[#allocation6 + $0xe8] sm:$0xff]
    %v7728 = vld [vmem:[#allocation6 + $0xf0] sm:$0xff]
    %v7729 = vld [vmem:[#allocation6 + $0xf8] sm:$0xff]
    %v7730 = vld [vmem:[#allocation6 + $0x100] sm:$0xff]
    %v7731 = vld [vmem:[#allocation6 + $0x108] sm:$0xff]
    %v7732 = vld [vmem:[#allocation6 + $0x110] sm:$0xff]
    %v7733 = vld [vmem:[#allocation6 + $0x118] sm:$0xff]
    %v7734 = vld [vmem:[#allocation6 + $0x120] sm:$0xff]
    %v7735 = vld [vmem:[#allocation6 + $0x128] sm:$0xff]
    %v7736 = vld [vmem:[#allocation6 + $0x130] sm:$0xff]
    %v7737 = vld [vmem:[#allocation6 + $0x138] sm:$0xff]
    %v7738 = vld [vmem:[#allocation6 + $0x140] sm:$0xff]
    %v7739 = vld [vmem:[#allocation6 + $0x148] sm:$0xff]
    %v7740 = vld [vmem:[#allocation6 + $0x150] sm:$0xff]
    %v7741 = vld [vmem:[#allocation6 + $0x158] sm:$0xff]
    %v7742 = vld [vmem:[#allocation6 + $0x160] sm:$0xff]
    %v7743 = vld [vmem:[#allocation6 + $0x168] sm:$0xff]
    %v7744 = vld [vmem:[#allocation6 + $0x170] sm:$0xff]
    %v7745 = vld [vmem:[#allocation6 + $0x178] sm:$0xff]
    %v7746 = vld [vmem:[#allocation6 + $0x180] sm:$0xff]
    %v7747 = vld [vmem:[#allocation6 + $0x188] sm:$0xff]
    %v7748 = vld [vmem:[#allocation6 + $0x190] sm:$0xff]
    %v7749 = vld [vmem:[#allocation6 + $0x198] sm:$0xff]
    %v7750 = vld [vmem:[#allocation6 + $0x1a0] sm:$0xff]
    %v7751 = vld [vmem:[#allocation6 + $0x1a8] sm:$0xff]
    %v7752 = vld [vmem:[#allocation6 + $0x1b0] sm:$0xff]
    %v7753 = vld [vmem:[#allocation6 + $0x1b8] sm:$0xff]
    %v7754 = vld [vmem:[#allocation6 + $0x1c0] sm:$0xff]
    %v7755 = vld [vmem:[#allocation6 + $0x1c8] sm:$0xff]
    %v7756 = vld [vmem:[#allocation6 + $0x1d0] sm:$0xff]
    %v7757 = vld [vmem:[#allocation6 + $0x1d8] sm:$0xff]
    %v7758 = vld [vmem:[#allocation6 + $0x1e0] sm:$0xff]
    %v7759 = vld [vmem:[#allocation6 + $0x1e8] sm:$0xff]
    %v7760 = vld [vmem:[#allocation6 + $0x1f0] sm:$0xff]
    %v7761 = vld [vmem:[#allocation6 + $0x1f8] sm:$0xff]
    %v7762 = vld [vmem:[#allocation6 + $0x200] sm:$0xff]
    %v7763 = vld [vmem:[#allocation6 + $0x208] sm:$0xff]
    %v7764 = vld [vmem:[#allocation6 + $0x210] sm:$0xff]
    %v7765 = vld [vmem:[#allocation6 + $0x218] sm:$0xff]
    %v7766 = vld [vmem:[#allocation6 + $0x220] sm:$0xff]
    %v7767 = vld [vmem:[#allocation6 + $0x228] sm:$0xff]
    %v7768 = vld [vmem:[#allocation6 + $0x230] sm:$0xff]
    %v7769 = vld [vmem:[#allocation6 + $0x238] sm:$0xff]
    %v7770 = vld [vmem:[#allocation6 + $0x240] sm:$0xff]
    %v7771 = vld [vmem:[#allocation6 + $0x248] sm:$0xff]
    %v7772 = vld [vmem:[#allocation6 + $0x250] sm:$0xff]
    %v7773 = vld [vmem:[#allocation6 + $0x258] sm:$0xff]
    %v7774 = vld [vmem:[#allocation6 + $0x260] sm:$0xff]
    %v7775 = vld [vmem:[#allocation6 + $0x268] sm:$0xff]
    %v7776 = vld [vmem:[#allocation6 + $0x270] sm:$0xff]
    %v7777 = vld [vmem:[#allocation6 + $0x278] sm:$0xff]
    %v7778 = vld [vmem:[#allocation6 + $0x280] sm:$0xff]
    %v7779 = vld [vmem:[#allocation6 + $0x288] sm:$0xff]
    %v7780 = vld [vmem:[#allocation6 + $0x290] sm:$0xff]
    %v7781 = vld [vmem:[#allocation6 + $0x298] sm:$0xff]
    %v7782 = vld [vmem:[#allocation6 + $0x2a0] sm:$0xff]
    %v7783 = vld [vmem:[#allocation6 + $0x2a8] sm:$0xff]
    %v7784 = vld [vmem:[#allocation6 + $0x2b0] sm:$0xff]
    %v7785 = vld [vmem:[#allocation6 + $0x2b8] sm:$0xff]
    %v7786 = vld [vmem:[#allocation6 + $0x2c0] sm:$0xff]
    %v7787 = vld [vmem:[#allocation6 + $0x2c8] sm:$0xff]
    %v7788 = vld [vmem:[#allocation6 + $0x2d0] sm:$0xff]
    %v7789 = vld [vmem:[#allocation6 + $0x2d8] sm:$0xff]
    %v7790 = vld [vmem:[#allocation6 + $0x2e0] sm:$0xff]
    %v7791 = vld [vmem:[#allocation6 + $0x2e8] sm:$0xff]
    %v7792 = vld [vmem:[#allocation6 + $0x2f0] sm:$0xff]
    %v7793 = vld [vmem:[#allocation6 + $0x2f8] sm:$0xff]
    %v7794 = vld [vmem:[#allocation6 + $0x300] sm:$0xff]
    %v7795 = vld [vmem:[#allocation6 + $0x308] sm:$0xff]
    %v7796 = vld [vmem:[#allocation6 + $0x310] sm:$0xff]
    %v7797 = vld [vmem:[#allocation6 + $0x318] sm:$0xff]
    %v7798 = vld [vmem:[#allocation6 + $0x320] sm:$0xff]
    %v7799 = vld [vmem:[#allocation6 + $0x328] sm:$0xff]
    %v7800 = vld [vmem:[#allocation6 + $0x330] sm:$0xff]
    %v7801 = vld [vmem:[#allocation6 + $0x338] sm:$0xff]
    %v7802 = vld [vmem:[#allocation6 + $0x340] sm:$0xff]
    %v7803 = vld [vmem:[#allocation6 + $0x348] sm:$0xff]
    %v7804 = vld [vmem:[#allocation6 + $0x350] sm:$0xff]
    %v7805 = vld [vmem:[#allocation6 + $0x358] sm:$0xff]
    %v7806 = vld [vmem:[#allocation6 + $0x360] sm:$0xff]
    %v7807 = vld [vmem:[#allocation6 + $0x368] sm:$0xff]
    %v7808 = vld [vmem:[#allocation6 + $0x370] sm:$0xff]
    %v7809 = vld [vmem:[#allocation6 + $0x378] sm:$0xff]
    %v7810 = vld [vmem:[#allocation6 + $0x380] sm:$0xff]
    %v7811 = vld [vmem:[#allocation6 + $0x388] sm:$0xff]
    %v7812 = vld [vmem:[#allocation6 + $0x390] sm:$0xff]
    %v7813 = vld [vmem:[#allocation6 + $0x398] sm:$0xff]
    %v7814 = vld [vmem:[#allocation6 + $0x3a0] sm:$0xff]
    %v7815 = vld [vmem:[#allocation6 + $0x3a8] sm:$0xff]
    %v7816 = vld [vmem:[#allocation6 + $0x3b0] sm:$0xff]
    %v7817 = vld [vmem:[#allocation6 + $0x3b8] sm:$0xff]
    %v7818 = vld [vmem:[#allocation6 + $0x3c0] sm:$0xff]
    %v7819 = vld [vmem:[#allocation6 + $0x3c8] sm:$0xff]
    %v7820 = vld [vmem:[#allocation6 + $0x3d0] sm:$0xff]
    %v7821 = vld [vmem:[#allocation6 + $0x3d8] sm:$0xff]
    %v7822 = vld [vmem:[#allocation6 + $0x3e0] sm:$0xff]
    %v7823 = vld [vmem:[#allocation6 + $0x3e8] sm:$0xff]
    %v7824 = vld [vmem:[#allocation6 + $0x3f0] sm:$0xff]
    %v7825 = vld [vmem:[#allocation6 + $0x3f8] sm:$0xff]
    %v7826 = vld [vmem:[#allocation6 + $0x400] sm:$0xff]
    %v7827 = vld [vmem:[#allocation6 + $0x408] sm:$0xff]
    %v7828 = vld [vmem:[#allocation6 + $0x410] sm:$0xff]
    %v7829 = vld [vmem:[#allocation6 + $0x418] sm:$0xff]
    %v7830 = vld [vmem:[#allocation6 + $0x420] sm:$0xff]
    %v7831 = vld [vmem:[#allocation6 + $0x428] sm:$0xff]
    %v7832 = vld [vmem:[#allocation6 + $0x430] sm:$0xff]
    %v7833 = vld [vmem:[#allocation6 + $0x438] sm:$0xff]
    %v7834 = vld [vmem:[#allocation6 + $0x440] sm:$0xff]
    %v7835 = vld [vmem:[#allocation6 + $0x448] sm:$0xff]
    %v7836 = vld [vmem:[#allocation6 + $0x450] sm:$0xff]
    %v7837 = vld [vmem:[#allocation6 + $0x458] sm:$0xff]
    %v7838 = vld [vmem:[#allocation6 + $0x460] sm:$0xff]
    %v7839 = vld [vmem:[#allocation6 + $0x468] sm:$0xff]
    %v7840 = vld [vmem:[#allocation6 + $0x470] sm:$0xff]
    %v7841 = vld [vmem:[#allocation6 + $0x478] sm:$0xff]
    %v7842 = vld [vmem:[#allocation6 + $0x480] sm:$0xff]
    %v7843 = vld [vmem:[#allocation6 + $0x488] sm:$0xff]
    %v7844 = vld [vmem:[#allocation6 + $0x490] sm:$0xff]
    %v7845 = vld [vmem:[#allocation6 + $0x498] sm:$0xff]
    %v7846 = vld [vmem:[#allocation6 + $0x4a0] sm:$0xff]
    %v7847 = vld [vmem:[#allocation6 + $0x4a8] sm:$0xff]
    %v7848 = vld [vmem:[#allocation6 + $0x4b0] sm:$0xff]
    %v7849 = vld [vmem:[#allocation6 + $0x4b8] sm:$0xff]
    %v7850 = vld [vmem:[#allocation6 + $0x4c0] sm:$0xff]
    %v7851 = vld [vmem:[#allocation6 + $0x4c8] sm:$0xff]
    %v7852 = vld [vmem:[#allocation6 + $0x4d0] sm:$0xff]
    %v7853 = vld [vmem:[#allocation6 + $0x4d8] sm:$0xff]
    %v7854 = vld [vmem:[#allocation6 + $0x4e0] sm:$0xff]
    %v7855 = vld [vmem:[#allocation6 + $0x4e8] sm:$0xff]
    %v7856 = vld [vmem:[#allocation6 + $0x4f0] sm:$0xff]
    %v7857 = vld [vmem:[#allocation6 + $0x4f8] sm:$0xff]
    %v7858 = vld [vmem:[#allocation6 + $0x500] sm:$0xff]
    %v7859 = vld [vmem:[#allocation6 + $0x508] sm:$0xff]
    %v7860 = vld [vmem:[#allocation6 + $0x510] sm:$0xff]
    %v7861 = vld [vmem:[#allocation6 + $0x518] sm:$0xff]
    %v7862 = vld [vmem:[#allocation6 + $0x520] sm:$0xff]
    %v7863 = vld [vmem:[#allocation6 + $0x528] sm:$0xff]
    %v7864 = vld [vmem:[#allocation6 + $0x530] sm:$0xff]
    %v7865 = vld [vmem:[#allocation6 + $0x538] sm:$0xff]
    %v7866 = vld [vmem:[#allocation6 + $0x540] sm:$0xff]
    %v7867 = vld [vmem:[#allocation6 + $0x548] sm:$0xff]
    %v7868 = vld [vmem:[#allocation6 + $0x550] sm:$0xff]
    %v7869 = vld [vmem:[#allocation6 + $0x558] sm:$0xff]
    %v7870 = vld [vmem:[#allocation6 + $0x560] sm:$0xff]
    %v7871 = vld [vmem:[#allocation6 + $0x568] sm:$0xff]
    %v7872 = vld [vmem:[#allocation6 + $0x570] sm:$0xff]
    %v7873 = vld [vmem:[#allocation6 + $0x578] sm:$0xff]
    %v7874 = vld [vmem:[#allocation6 + $0x580] sm:$0xff]
    %v7875 = vld [vmem:[#allocation6 + $0x588] sm:$0xff]
    %v7876 = vld [vmem:[#allocation6 + $0x590] sm:$0xff]
    %v7877 = vld [vmem:[#allocation6 + $0x598] sm:$0xff]
    %v7878 = vld [vmem:[#allocation6 + $0x5a0] sm:$0xff]
    %v7879 = vld [vmem:[#allocation6 + $0x5a8] sm:$0xff]
    %v7880 = vld [vmem:[#allocation6 + $0x5b0] sm:$0xff]
    %v7881 = vld [vmem:[#allocation6 + $0x5b8] sm:$0xff]
    %v7882 = vld [vmem:[#allocation6 + $0x5c0] sm:$0xff]
    %v7883 = vld [vmem:[#allocation6 + $0x5c8] sm:$0xff]
    %v7884 = vld [vmem:[#allocation6 + $0x5d0] sm:$0xff]
    %v7885 = vld [vmem:[#allocation6 + $0x5d8] sm:$0xff]
    %v7886 = vld [vmem:[#allocation6 + $0x5e0] sm:$0xff]
    %v7887 = vld [vmem:[#allocation6 + $0x5e8] sm:$0xff]
    %v7888 = vld [vmem:[#allocation6 + $0x5f0] sm:$0xff]
    %v7889 = vld [vmem:[#allocation6 + $0x5f8] sm:$0xff]
    %v7890 = vld [vmem:[#allocation6 + $0x600] sm:$0xff]
    %v7891 = vld [vmem:[#allocation6 + $0x608] sm:$0xff]
    %v7892 = vld [vmem:[#allocation6 + $0x610] sm:$0xff]
    %v7893 = vld [vmem:[#allocation6 + $0x618] sm:$0xff]
    %v7894 = vld [vmem:[#allocation6 + $0x620] sm:$0xff]
    %v7895 = vld [vmem:[#allocation6 + $0x628] sm:$0xff]
    %v7896 = vld [vmem:[#allocation6 + $0x630] sm:$0xff]
    %v7897 = vld [vmem:[#allocation6 + $0x638] sm:$0xff]
    %v7898 = vld [vmem:[#allocation6 + $0x640] sm:$0xff]
    %v7899 = vld [vmem:[#allocation6 + $0x648] sm:$0xff]
    %v7900 = vld [vmem:[#allocation6 + $0x650] sm:$0xff]
    %v7901 = vld [vmem:[#allocation6 + $0x658] sm:$0xff]
    %v7902 = vld [vmem:[#allocation6 + $0x660] sm:$0xff]
    %v7903 = vld [vmem:[#allocation6 + $0x668] sm:$0xff]
    %v7904 = vld [vmem:[#allocation6 + $0x670] sm:$0xff]
    %v7905 = vld [vmem:[#allocation6 + $0x678] sm:$0xff]
    %v7906 = vld [vmem:[#allocation6 + $0x680] sm:$0xff]
    %v7907 = vld [vmem:[#allocation6 + $0x688] sm:$0xff]
    %v7908 = vld [vmem:[#allocation6 + $0x690] sm:$0xff]
    %v7909 = vld [vmem:[#allocation6 + $0x698] sm:$0xff]
    %v7910 = vld [vmem:[#allocation6 + $0x6a0] sm:$0xff]
    %v7911 = vld [vmem:[#allocation6 + $0x6a8] sm:$0xff]
    %v7912 = vld [vmem:[#allocation6 + $0x6b0] sm:$0xff]
    %v7913 = vld [vmem:[#allocation6 + $0x6b8] sm:$0xff]
    %v7914 = vld [vmem:[#allocation6 + $0x6c0] sm:$0xff]
    %v7915 = vld [vmem:[#allocation6 + $0x6c8] sm:$0xff]
    %v7916 = vld [vmem:[#allocation6 + $0x6d0] sm:$0xff]
    %v7917 = vld [vmem:[#allocation6 + $0x6d8] sm:$0xff]
    %v7918 = vld [vmem:[#allocation6 + $0x6e0] sm:$0xff]
    %v7919 = vld [vmem:[#allocation6 + $0x6e8] sm:$0xff]
    %v7920 = vld [vmem:[#allocation6 + $0x6f0] sm:$0xff]
    %v7921 = vld [vmem:[#allocation6 + $0x6f8] sm:$0xff]
    %v7922 = vld [vmem:[#allocation6 + $0x700] sm:$0xff]
    %v7923 = vld [vmem:[#allocation6 + $0x708] sm:$0xff]
    %v7924 = vld [vmem:[#allocation6 + $0x710] sm:$0xff]
    %v7925 = vld [vmem:[#allocation6 + $0x718] sm:$0xff]
    %v7926 = vld [vmem:[#allocation6 + $0x720] sm:$0xff]
    %v7927 = vld [vmem:[#allocation6 + $0x728] sm:$0xff]
    %v7928 = vld [vmem:[#allocation6 + $0x730] sm:$0xff]
    %v7929 = vld [vmem:[#allocation6 + $0x738] sm:$0xff]
    %v7930 = vld [vmem:[#allocation6 + $0x740] sm:$0xff]
    %v7931 = vld [vmem:[#allocation6 + $0x748] sm:$0xff]
    %v7932 = vld [vmem:[#allocation6 + $0x750] sm:$0xff]
    %v7933 = vld [vmem:[#allocation6 + $0x758] sm:$0xff]
    %v7934 = vld [vmem:[#allocation6 + $0x760] sm:$0xff]
    %v7935 = vld [vmem:[#allocation6 + $0x768] sm:$0xff]
    %v7936 = vld [vmem:[#allocation6 + $0x770] sm:$0xff]
    %v7937 = vld [vmem:[#allocation6 + $0x778] sm:$0xff]
    %v7938 = vld [vmem:[#allocation6 + $0x780] sm:$0xff]
    %v7939 = vld [vmem:[#allocation6 + $0x788] sm:$0xff]
    %v7940 = vld [vmem:[#allocation6 + $0x790] sm:$0xff]
    %v7941 = vld [vmem:[#allocation6 + $0x798] sm:$0xff]
    %v7942 = vld [vmem:[#allocation6 + $0x7a0] sm:$0xff]
    %v7943 = vld [vmem:[#allocation6 + $0x7a8] sm:$0xff]
    %v7944 = vld [vmem:[#allocation6 + $0x7b0] sm:$0xff]
    %v7945 = vld [vmem:[#allocation6 + $0x7b8] sm:$0xff]
    %v7946 = vld [vmem:[#allocation6 + $0x7c0] sm:$0xff]
    %v7947 = vld [vmem:[#allocation6 + $0x7c8] sm:$0xff]
    %v7948 = vld [vmem:[#allocation6 + $0x7d0] sm:$0xff]
    %v7949 = vld [vmem:[#allocation6 + $0x7d8] sm:$0xff]
    %v7950 = vld [vmem:[#allocation6 + $0x7e0] sm:$0xff]
    %v7951 = vld [vmem:[#allocation6 + $0x7e8] sm:$0xff]
    %v7952 = vld [vmem:[#allocation6 + $0x7f0] sm:$0xff]
    %v7953 = vld [vmem:[#allocation6 + $0x7f8] sm:$0xff]
    %v7954 = vld [vmem:[#allocation7] sm:$0xff]
    %v7956 = vlaneseq
    %v7957 = vshrl.u32 %v7956, 7
    %v7958 = vsub.s32 0, %v7957
    %v7959 = vrot.slane %v7954, %v7958
    %v7960 = vlaneseq
    %v7961 = vshrl.u32 %v7960, 7
    %v7962 = vsub.s32 1, %v7961
    %v7963 = vrot.slane %v7954, %v7962
    %v7964 = vlaneseq
    %v7965 = vshrl.u32 %v7964, 7
    %v7966 = vsub.s32 2, %v7965
    %v7967 = vrot.slane %v7954, %v7966
    %v7968 = vlaneseq
    %v7969 = vshrl.u32 %v7968, 7
    %v7970 = vsub.s32 3, %v7969
    %v7971 = vrot.slane %v7954, %v7970
    %v7972 = vlaneseq
    %v7973 = vshrl.u32 %v7972, 7
    %v7974 = vsub.s32 4, %v7973
    %v7975 = vrot.slane %v7954, %v7974
    %v7976 = vlaneseq
    %v7977 = vshrl.u32 %v7976, 7
    %v7978 = vsub.s32 5, %v7977
    %v7979 = vrot.slane %v7954, %v7978
    %v7980 = vlaneseq
    %v7981 = vshrl.u32 %v7980, 7
    %v7982 = vsub.s32 6, %v7981
    %v7983 = vrot.slane %v7954, %v7982
    %v7984 = vlaneseq
    %v7985 = vshrl.u32 %v7984, 7
    %v7986 = vsub.s32 7, %v7985
    %v7987 = vrot.slane %v7954, %v7986
    %v8252 = vunpack.c.l.b16 %v7698
    %v8253 = vunpack.c.h.b16 %v7698
    %v8254 = vunpack.c.l.b16 %v7699
    %v8255 = vunpack.c.h.b16 %v7699
    %v8256 = vunpack.c.l.b16 %v7700
    %v8257 = vunpack.c.h.b16 %v7700
    %v8258 = vunpack.c.l.b16 %v7701
    %v8259 = vunpack.c.h.b16 %v7701
    %v8260 = vunpack.c.l.b16 %v7702
    %v8261 = vunpack.c.h.b16 %v7702
    %v8262 = vunpack.c.l.b16 %v7703
    %v8263 = vunpack.c.h.b16 %v7703
    %v8264 = vunpack.c.l.b16 %v7704
    %v8265 = vunpack.c.h.b16 %v7704
    %v8266 = vunpack.c.l.b16 %v7705
    %v8267 = vunpack.c.h.b16 %v7705
    %v8268 = vunpack.c.l.b16 %v7706
    %v8269 = vunpack.c.h.b16 %v7706
    %v8270 = vunpack.c.l.b16 %v7707
    %v8271 = vunpack.c.h.b16 %v7707
    %v8272 = vunpack.c.l.b16 %v7708
    %v8273 = vunpack.c.h.b16 %v7708
    %v8274 = vunpack.c.l.b16 %v7709
    %v8275 = vunpack.c.h.b16 %v7709
    %v8276 = vunpack.c.l.b16 %v7710
    %v8277 = vunpack.c.h.b16 %v7710
    %v8278 = vunpack.c.l.b16 %v7711
    %v8279 = vunpack.c.h.b16 %v7711
    %v8280 = vunpack.c.l.b16 %v7712
    %v8281 = vunpack.c.h.b16 %v7712
    %v8282 = vunpack.c.l.b16 %v7713
    %v8283 = vunpack.c.h.b16 %v7713
    %v8284 = vunpack.c.l.b16 %v7714
    %v8285 = vunpack.c.h.b16 %v7714
    %v8286 = vunpack.c.l.b16 %v7715
    %v8287 = vunpack.c.h.b16 %v7715
    %v8288 = vunpack.c.l.b16 %v7716
    %v8289 = vunpack.c.h.b16 %v7716
    %v8290 = vunpack.c.l.b16 %v7717
    %v8291 = vunpack.c.h.b16 %v7717
    %v8292 = vunpack.c.l.b16 %v7718
    %v8293 = vunpack.c.h.b16 %v7718
    %v8294 = vunpack.c.l.b16 %v7719
    %v8295 = vunpack.c.h.b16 %v7719
    %v8296 = vunpack.c.l.b16 %v7720
    %v8297 = vunpack.c.h.b16 %v7720
    %v8298 = vunpack.c.l.b16 %v7721
    %v8299 = vunpack.c.h.b16 %v7721
    %v8300 = vunpack.c.l.b16 %v7722
    %v8301 = vunpack.c.h.b16 %v7722
    %v8302 = vunpack.c.l.b16 %v7723
    %v8303 = vunpack.c.h.b16 %v7723
    %v8304 = vunpack.c.l.b16 %v7724
    %v8305 = vunpack.c.h.b16 %v7724
    %v8306 = vunpack.c.l.b16 %v7725
    %v8307 = vunpack.c.h.b16 %v7725
    %v8308 = vunpack.c.l.b16 %v7726
    %v8309 = vunpack.c.h.b16 %v7726
    %v8310 = vunpack.c.l.b16 %v7727
    %v8311 = vunpack.c.h.b16 %v7727
    %v8312 = vunpack.c.l.b16 %v7728
    %v8313 = vunpack.c.h.b16 %v7728
    %v8314 = vunpack.c.l.b16 %v7729
    %v8315 = vunpack.c.h.b16 %v7729
    %v8316 = vunpack.c.l.b16 %v7730
    %v8317 = vunpack.c.h.b16 %v7730
    %v8318 = vunpack.c.l.b16 %v7731
    %v8319 = vunpack.c.h.b16 %v7731
    %v8320 = vunpack.c.l.b16 %v7732
    %v8321 = vunpack.c.h.b16 %v7732
    %v8322 = vunpack.c.l.b16 %v7733
    %v8323 = vunpack.c.h.b16 %v7733
    %v8324 = vunpack.c.l.b16 %v7734
    %v8325 = vunpack.c.h.b16 %v7734
    %v8326 = vunpack.c.l.b16 %v7735
    %v8327 = vunpack.c.h.b16 %v7735
    %v8328 = vunpack.c.l.b16 %v7736
    %v8329 = vunpack.c.h.b16 %v7736
    %v8330 = vunpack.c.l.b16 %v7737
    %v8331 = vunpack.c.h.b16 %v7737
    %v8332 = vunpack.c.l.b16 %v7738
    %v8333 = vunpack.c.h.b16 %v7738
    %v8334 = vunpack.c.l.b16 %v7739
    %v8335 = vunpack.c.h.b16 %v7739
    %v8336 = vunpack.c.l.b16 %v7740
    %v8337 = vunpack.c.h.b16 %v7740
    %v8338 = vunpack.c.l.b16 %v7741
    %v8339 = vunpack.c.h.b16 %v7741
    %v8340 = vunpack.c.l.b16 %v7742
    %v8341 = vunpack.c.h.b16 %v7742
    %v8342 = vunpack.c.l.b16 %v7743
    %v8343 = vunpack.c.h.b16 %v7743
    %v8344 = vunpack.c.l.b16 %v7744
    %v8345 = vunpack.c.h.b16 %v7744
    %v8346 = vunpack.c.l.b16 %v7745
    %v8347 = vunpack.c.h.b16 %v7745
    %v8348 = vunpack.c.l.b16 %v7746
    %v8349 = vunpack.c.h.b16 %v7746
    %v8350 = vunpack.c.l.b16 %v7747
    %v8351 = vunpack.c.h.b16 %v7747
    %v8352 = vunpack.c.l.b16 %v7748
    %v8353 = vunpack.c.h.b16 %v7748
    %v8354 = vunpack.c.l.b16 %v7749
    %v8355 = vunpack.c.h.b16 %v7749
    %v8356 = vunpack.c.l.b16 %v7750
    %v8357 = vunpack.c.h.b16 %v7750
    %v8358 = vunpack.c.l.b16 %v7751
    %v8359 = vunpack.c.h.b16 %v7751
    %v8360 = vunpack.c.l.b16 %v7752
    %v8361 = vunpack.c.h.b16 %v7752
    %v8362 = vunpack.c.l.b16 %v7753
    %v8363 = vunpack.c.h.b16 %v7753
    %v8364 = vunpack.c.l.b16 %v7754
    %v8365 = vunpack.c.h.b16 %v7754
    %v8366 = vunpack.c.l.b16 %v7755
    %v8367 = vunpack.c.h.b16 %v7755
    %v8368 = vunpack.c.l.b16 %v7756
    %v8369 = vunpack.c.h.b16 %v7756
    %v8370 = vunpack.c.l.b16 %v7757
    %v8371 = vunpack.c.h.b16 %v7757
    %v8372 = vunpack.c.l.b16 %v7758
    %v8373 = vunpack.c.h.b16 %v7758
    %v8374 = vunpack.c.l.b16 %v7759
    %v8375 = vunpack.c.h.b16 %v7759
    %v8376 = vunpack.c.l.b16 %v7760
    %v8377 = vunpack.c.h.b16 %v7760
    %v8378 = vunpack.c.l.b16 %v7761
    %v8379 = vunpack.c.h.b16 %v7761
    %v8380 = vunpack.c.l.b16 %v7762
    %v8381 = vunpack.c.h.b16 %v7762
    %v8382 = vunpack.c.l.b16 %v7763
    %v8383 = vunpack.c.h.b16 %v7763
    %v8384 = vunpack.c.l.b16 %v7764
    %v8385 = vunpack.c.h.b16 %v7764
    %v8386 = vunpack.c.l.b16 %v7765
    %v8387 = vunpack.c.h.b16 %v7765
    %v8388 = vunpack.c.l.b16 %v7766
    %v8389 = vunpack.c.h.b16 %v7766
    %v8390 = vunpack.c.l.b16 %v7767
    %v8391 = vunpack.c.h.b16 %v7767
    %v8392 = vunpack.c.l.b16 %v7768
    %v8393 = vunpack.c.h.b16 %v7768
    %v8394 = vunpack.c.l.b16 %v7769
    %v8395 = vunpack.c.h.b16 %v7769
    %v8396 = vunpack.c.l.b16 %v7770
    %v8397 = vunpack.c.h.b16 %v7770
    %v8398 = vunpack.c.l.b16 %v7771
    %v8399 = vunpack.c.h.b16 %v7771
    %v8400 = vunpack.c.l.b16 %v7772
    %v8401 = vunpack.c.h.b16 %v7772
    %v8402 = vunpack.c.l.b16 %v7773
    %v8403 = vunpack.c.h.b16 %v7773
    %v8404 = vunpack.c.l.b16 %v7774
    %v8405 = vunpack.c.h.b16 %v7774
    %v8406 = vunpack.c.l.b16 %v7775
    %v8407 = vunpack.c.h.b16 %v7775
    %v8408 = vunpack.c.l.b16 %v7776
    %v8409 = vunpack.c.h.b16 %v7776
    %v8410 = vunpack.c.l.b16 %v7777
    %v8411 = vunpack.c.h.b16 %v7777
    %v8412 = vunpack.c.l.b16 %v7778
    %v8413 = vunpack.c.h.b16 %v7778
    %v8414 = vunpack.c.l.b16 %v7779
    %v8415 = vunpack.c.h.b16 %v7779
    %v8416 = vunpack.c.l.b16 %v7780
    %v8417 = vunpack.c.h.b16 %v7780
    %v8418 = vunpack.c.l.b16 %v7781
    %v8419 = vunpack.c.h.b16 %v7781
    %v8420 = vunpack.c.l.b16 %v7782
    %v8421 = vunpack.c.h.b16 %v7782
    %v8422 = vunpack.c.l.b16 %v7783
    %v8423 = vunpack.c.h.b16 %v7783
    %v8424 = vunpack.c.l.b16 %v7784
    %v8425 = vunpack.c.h.b16 %v7784
    %v8426 = vunpack.c.l.b16 %v7785
    %v8427 = vunpack.c.h.b16 %v7785
    %v8428 = vunpack.c.l.b16 %v7786
    %v8429 = vunpack.c.h.b16 %v7786
    %v8430 = vunpack.c.l.b16 %v7787
    %v8431 = vunpack.c.h.b16 %v7787
    %v8432 = vunpack.c.l.b16 %v7788
    %v8433 = vunpack.c.h.b16 %v7788
    %v8434 = vunpack.c.l.b16 %v7789
    %v8435 = vunpack.c.h.b16 %v7789
    %v8436 = vunpack.c.l.b16 %v7790
    %v8437 = vunpack.c.h.b16 %v7790
    %v8438 = vunpack.c.l.b16 %v7791
    %v8439 = vunpack.c.h.b16 %v7791
    %v8440 = vunpack.c.l.b16 %v7792
    %v8441 = vunpack.c.h.b16 %v7792
    %v8442 = vunpack.c.l.b16 %v7793
    %v8443 = vunpack.c.h.b16 %v7793
    %v8444 = vunpack.c.l.b16 %v7794
    %v8445 = vunpack.c.h.b16 %v7794
    %v8446 = vunpack.c.l.b16 %v7795
    %v8447 = vunpack.c.h.b16 %v7795
    %v8448 = vunpack.c.l.b16 %v7796
    %v8449 = vunpack.c.h.b16 %v7796
    %v8450 = vunpack.c.l.b16 %v7797
    %v8451 = vunpack.c.h.b16 %v7797
    %v8452 = vunpack.c.l.b16 %v7798
    %v8453 = vunpack.c.h.b16 %v7798
    %v8454 = vunpack.c.l.b16 %v7799
    %v8455 = vunpack.c.h.b16 %v7799
    %v8456 = vunpack.c.l.b16 %v7800
    %v8457 = vunpack.c.h.b16 %v7800
    %v8458 = vunpack.c.l.b16 %v7801
    %v8459 = vunpack.c.h.b16 %v7801
    %v8460 = vunpack.c.l.b16 %v7802
    %v8461 = vunpack.c.h.b16 %v7802
    %v8462 = vunpack.c.l.b16 %v7803
    %v8463 = vunpack.c.h.b16 %v7803
    %v8464 = vunpack.c.l.b16 %v7804
    %v8465 = vunpack.c.h.b16 %v7804
    %v8466 = vunpack.c.l.b16 %v7805
    %v8467 = vunpack.c.h.b16 %v7805
    %v8468 = vunpack.c.l.b16 %v7806
    %v8469 = vunpack.c.h.b16 %v7806
    %v8470 = vunpack.c.l.b16 %v7807
    %v8471 = vunpack.c.h.b16 %v7807
    %v8472 = vunpack.c.l.b16 %v7808
    %v8473 = vunpack.c.h.b16 %v7808
    %v8474 = vunpack.c.l.b16 %v7809
    %v8475 = vunpack.c.h.b16 %v7809
    %v8476 = vunpack.c.l.b16 %v7810
    %v8477 = vunpack.c.h.b16 %v7810
    %v8478 = vunpack.c.l.b16 %v7811
    %v8479 = vunpack.c.h.b16 %v7811
    %v8480 = vunpack.c.l.b16 %v7812
    %v8481 = vunpack.c.h.b16 %v7812
    %v8482 = vunpack.c.l.b16 %v7813
    %v8483 = vunpack.c.h.b16 %v7813
    %v8484 = vunpack.c.l.b16 %v7814
    %v8485 = vunpack.c.h.b16 %v7814
    %v8486 = vunpack.c.l.b16 %v7815
    %v8487 = vunpack.c.h.b16 %v7815
    %v8488 = vunpack.c.l.b16 %v7816
    %v8489 = vunpack.c.h.b16 %v7816
    %v8490 = vunpack.c.l.b16 %v7817
    %v8491 = vunpack.c.h.b16 %v7817
    %v8492 = vunpack.c.l.b16 %v7818
    %v8493 = vunpack.c.h.b16 %v7818
    %v8494 = vunpack.c.l.b16 %v7819
    %v8495 = vunpack.c.h.b16 %v7819
    %v8496 = vunpack.c.l.b16 %v7820
    %v8497 = vunpack.c.h.b16 %v7820
    %v8498 = vunpack.c.l.b16 %v7821
    %v8499 = vunpack.c.h.b16 %v7821
    %v8500 = vunpack.c.l.b16 %v7822
    %v8501 = vunpack.c.h.b16 %v7822
    %v8502 = vunpack.c.l.b16 %v7823
    %v8503 = vunpack.c.h.b16 %v7823
    %v8504 = vunpack.c.l.b16 %v7824
    %v8505 = vunpack.c.h.b16 %v7824
    %v8506 = vunpack.c.l.b16 %v7825
    %v8507 = vunpack.c.h.b16 %v7825
    %v8508 = vunpack.c.l.b16 %v7826
    %v8509 = vunpack.c.h.b16 %v7826
    %v8510 = vunpack.c.l.b16 %v7827
    %v8511 = vunpack.c.h.b16 %v7827
    %v8512 = vunpack.c.l.b16 %v7828
    %v8513 = vunpack.c.h.b16 %v7828
    %v8514 = vunpack.c.l.b16 %v7829
    %v8515 = vunpack.c.h.b16 %v7829
    %v8516 = vunpack.c.l.b16 %v7830
    %v8517 = vunpack.c.h.b16 %v7830
    %v8518 = vunpack.c.l.b16 %v7831
    %v8519 = vunpack.c.h.b16 %v7831
    %v8520 = vunpack.c.l.b16 %v7832
    %v8521 = vunpack.c.h.b16 %v7832
    %v8522 = vunpack.c.l.b16 %v7833
    %v8523 = vunpack.c.h.b16 %v7833
    %v8524 = vunpack.c.l.b16 %v7834
    %v8525 = vunpack.c.h.b16 %v7834
    %v8526 = vunpack.c.l.b16 %v7835
    %v8527 = vunpack.c.h.b16 %v7835
    %v8528 = vunpack.c.l.b16 %v7836
    %v8529 = vunpack.c.h.b16 %v7836
    %v8530 = vunpack.c.l.b16 %v7837
    %v8531 = vunpack.c.h.b16 %v7837
    %v8532 = vunpack.c.l.b16 %v7838
    %v8533 = vunpack.c.h.b16 %v7838
    %v8534 = vunpack.c.l.b16 %v7839
    %v8535 = vunpack.c.h.b16 %v7839
    %v8536 = vunpack.c.l.b16 %v7840
    %v8537 = vunpack.c.h.b16 %v7840
    %v8538 = vunpack.c.l.b16 %v7841
    %v8539 = vunpack.c.h.b16 %v7841
    %v8540 = vunpack.c.l.b16 %v7842
    %v8541 = vunpack.c.h.b16 %v7842
    %v8542 = vunpack.c.l.b16 %v7843
    %v8543 = vunpack.c.h.b16 %v7843
    %v8544 = vunpack.c.l.b16 %v7844
    %v8545 = vunpack.c.h.b16 %v7844
    %v8546 = vunpack.c.l.b16 %v7845
    %v8547 = vunpack.c.h.b16 %v7845
    %v8548 = vunpack.c.l.b16 %v7846
    %v8549 = vunpack.c.h.b16 %v7846
    %v8550 = vunpack.c.l.b16 %v7847
    %v8551 = vunpack.c.h.b16 %v7847
    %v8552 = vunpack.c.l.b16 %v7848
    %v8553 = vunpack.c.h.b16 %v7848
    %v8554 = vunpack.c.l.b16 %v7849
    %v8555 = vunpack.c.h.b16 %v7849
    %v8556 = vunpack.c.l.b16 %v7850
    %v8557 = vunpack.c.h.b16 %v7850
    %v8558 = vunpack.c.l.b16 %v7851
    %v8559 = vunpack.c.h.b16 %v7851
    %v8560 = vunpack.c.l.b16 %v7852
    %v8561 = vunpack.c.h.b16 %v7852
    %v8562 = vunpack.c.l.b16 %v7853
    %v8563 = vunpack.c.h.b16 %v7853
    %v8564 = vunpack.c.l.b16 %v7854
    %v8565 = vunpack.c.h.b16 %v7854
    %v8566 = vunpack.c.l.b16 %v7855
    %v8567 = vunpack.c.h.b16 %v7855
    %v8568 = vunpack.c.l.b16 %v7856
    %v8569 = vunpack.c.h.b16 %v7856
    %v8570 = vunpack.c.l.b16 %v7857
    %v8571 = vunpack.c.h.b16 %v7857
    %v8572 = vunpack.c.l.b16 %v7858
    %v8573 = vunpack.c.h.b16 %v7858
    %v8574 = vunpack.c.l.b16 %v7859
    %v8575 = vunpack.c.h.b16 %v7859
    %v8576 = vunpack.c.l.b16 %v7860
    %v8577 = vunpack.c.h.b16 %v7860
    %v8578 = vunpack.c.l.b16 %v7861
    %v8579 = vunpack.c.h.b16 %v7861
    %v8580 = vunpack.c.l.b16 %v7862
    %v8581 = vunpack.c.h.b16 %v7862
    %v8582 = vunpack.c.l.b16 %v7863
    %v8583 = vunpack.c.h.b16 %v7863
    %v8584 = vunpack.c.l.b16 %v7864
    %v8585 = vunpack.c.h.b16 %v7864
    %v8586 = vunpack.c.l.b16 %v7865
    %v8587 = vunpack.c.h.b16 %v7865
    %v8588 = vunpack.c.l.b16 %v7866
    %v8589 = vunpack.c.h.b16 %v7866
    %v8590 = vunpack.c.l.b16 %v7867
    %v8591 = vunpack.c.h.b16 %v7867
    %v8592 = vunpack.c.l.b16 %v7868
    %v8593 = vunpack.c.h.b16 %v7868
    %v8594 = vunpack.c.l.b16 %v7869
    %v8595 = vunpack.c.h.b16 %v7869
    %v8596 = vunpack.c.l.b16 %v7870
    %v8597 = vunpack.c.h.b16 %v7870
    %v8598 = vunpack.c.l.b16 %v7871
    %v8599 = vunpack.c.h.b16 %v7871
    %v8600 = vunpack.c.l.b16 %v7872
    %v8601 = vunpack.c.h.b16 %v7872
    %v8602 = vunpack.c.l.b16 %v7873
    %v8603 = vunpack.c.h.b16 %v7873
    %v8604 = vunpack.c.l.b16 %v7874
    %v8605 = vunpack.c.h.b16 %v7874
    %v8606 = vunpack.c.l.b16 %v7875
    %v8607 = vunpack.c.h.b16 %v7875
    %v8608 = vunpack.c.l.b16 %v7876
    %v8609 = vunpack.c.h.b16 %v7876
    %v8610 = vunpack.c.l.b16 %v7877
    %v8611 = vunpack.c.h.b16 %v7877
    %v8612 = vunpack.c.l.b16 %v7878
    %v8613 = vunpack.c.h.b16 %v7878
    %v8614 = vunpack.c.l.b16 %v7879
    %v8615 = vunpack.c.h.b16 %v7879
    %v8616 = vunpack.c.l.b16 %v7880
    %v8617 = vunpack.c.h.b16 %v7880
    %v8618 = vunpack.c.l.b16 %v7881
    %v8619 = vunpack.c.h.b16 %v7881
    %v8620 = vunpack.c.l.b16 %v7882
    %v8621 = vunpack.c.h.b16 %v7882
    %v8622 = vunpack.c.l.b16 %v7883
    %v8623 = vunpack.c.h.b16 %v7883
    %v8624 = vunpack.c.l.b16 %v7884
    %v8625 = vunpack.c.h.b16 %v7884
    %v8626 = vunpack.c.l.b16 %v7885
    %v8627 = vunpack.c.h.b16 %v7885
    %v8628 = vunpack.c.l.b16 %v7886
    %v8629 = vunpack.c.h.b16 %v7886
    %v8630 = vunpack.c.l.b16 %v7887
    %v8631 = vunpack.c.h.b16 %v7887
    %v8632 = vunpack.c.l.b16 %v7888
    %v8633 = vunpack.c.h.b16 %v7888
    %v8634 = vunpack.c.l.b16 %v7889
    %v8635 = vunpack.c.h.b16 %v7889
    %v8636 = vunpack.c.l.b16 %v7890
    %v8637 = vunpack.c.h.b16 %v7890
    %v8638 = vunpack.c.l.b16 %v7891
    %v8639 = vunpack.c.h.b16 %v7891
    %v8640 = vunpack.c.l.b16 %v7892
    %v8641 = vunpack.c.h.b16 %v7892
    %v8642 = vunpack.c.l.b16 %v7893
    %v8643 = vunpack.c.h.b16 %v7893
    %v8644 = vunpack.c.l.b16 %v7894
    %v8645 = vunpack.c.h.b16 %v7894
    %v8646 = vunpack.c.l.b16 %v7895
    %v8647 = vunpack.c.h.b16 %v7895
    %v8648 = vunpack.c.l.b16 %v7896
    %v8649 = vunpack.c.h.b16 %v7896
    %v8650 = vunpack.c.l.b16 %v7897
    %v8651 = vunpack.c.h.b16 %v7897
    %v8652 = vunpack.c.l.b16 %v7898
    %v8653 = vunpack.c.h.b16 %v7898
    %v8654 = vunpack.c.l.b16 %v7899
    %v8655 = vunpack.c.h.b16 %v7899
    %v8656 = vunpack.c.l.b16 %v7900
    %v8657 = vunpack.c.h.b16 %v7900
    %v8658 = vunpack.c.l.b16 %v7901
    %v8659 = vunpack.c.h.b16 %v7901
    %v8660 = vunpack.c.l.b16 %v7902
    %v8661 = vunpack.c.h.b16 %v7902
    %v8662 = vunpack.c.l.b16 %v7903
    %v8663 = vunpack.c.h.b16 %v7903
    %v8664 = vunpack.c.l.b16 %v7904
    %v8665 = vunpack.c.h.b16 %v7904
    %v8666 = vunpack.c.l.b16 %v7905
    %v8667 = vunpack.c.h.b16 %v7905
    %v8668 = vunpack.c.l.b16 %v7906
    %v8669 = vunpack.c.h.b16 %v7906
    %v8670 = vunpack.c.l.b16 %v7907
    %v8671 = vunpack.c.h.b16 %v7907
    %v8672 = vunpack.c.l.b16 %v7908
    %v8673 = vunpack.c.h.b16 %v7908
    %v8674 = vunpack.c.l.b16 %v7909
    %v8675 = vunpack.c.h.b16 %v7909
    %v8676 = vunpack.c.l.b16 %v7910
    %v8677 = vunpack.c.h.b16 %v7910
    %v8678 = vunpack.c.l.b16 %v7911
    %v8679 = vunpack.c.h.b16 %v7911
    %v8680 = vunpack.c.l.b16 %v7912
    %v8681 = vunpack.c.h.b16 %v7912
    %v8682 = vunpack.c.l.b16 %v7913
    %v8683 = vunpack.c.h.b16 %v7913
    %v8684 = vunpack.c.l.b16 %v7914
    %v8685 = vunpack.c.h.b16 %v7914
    %v8686 = vunpack.c.l.b16 %v7915
    %v8687 = vunpack.c.h.b16 %v7915
    %v8688 = vunpack.c.l.b16 %v7916
    %v8689 = vunpack.c.h.b16 %v7916
    %v8690 = vunpack.c.l.b16 %v7917
    %v8691 = vunpack.c.h.b16 %v7917
    %v8692 = vunpack.c.l.b16 %v7918
    %v8693 = vunpack.c.h.b16 %v7918
    %v8694 = vunpack.c.l.b16 %v7919
    %v8695 = vunpack.c.h.b16 %v7919
    %v8696 = vunpack.c.l.b16 %v7920
    %v8697 = vunpack.c.h.b16 %v7920
    %v8698 = vunpack.c.l.b16 %v7921
    %v8699 = vunpack.c.h.b16 %v7921
    %v8700 = vunpack.c.l.b16 %v7922
    %v8701 = vunpack.c.h.b16 %v7922
    %v8702 = vunpack.c.l.b16 %v7923
    %v8703 = vunpack.c.h.b16 %v7923
    %v8704 = vunpack.c.l.b16 %v7924
    %v8705 = vunpack.c.h.b16 %v7924
    %v8706 = vunpack.c.l.b16 %v7925
    %v8707 = vunpack.c.h.b16 %v7925
    %v8708 = vunpack.c.l.b16 %v7926
    %v8709 = vunpack.c.h.b16 %v7926
    %v8710 = vunpack.c.l.b16 %v7927
    %v8711 = vunpack.c.h.b16 %v7927
    %v8712 = vunpack.c.l.b16 %v7928
    %v8713 = vunpack.c.h.b16 %v7928
    %v8714 = vunpack.c.l.b16 %v7929
    %v8715 = vunpack.c.h.b16 %v7929
    %v8716 = vunpack.c.l.b16 %v7930
    %v8717 = vunpack.c.h.b16 %v7930
    %v8718 = vunpack.c.l.b16 %v7931
    %v8719 = vunpack.c.h.b16 %v7931
    %v8720 = vunpack.c.l.b16 %v7932
    %v8721 = vunpack.c.h.b16 %v7932
    %v8722 = vunpack.c.l.b16 %v7933
    %v8723 = vunpack.c.h.b16 %v7933
    %v8724 = vunpack.c.l.b16 %v7934
    %v8725 = vunpack.c.h.b16 %v7934
    %v8726 = vunpack.c.l.b16 %v7935
    %v8727 = vunpack.c.h.b16 %v7935
    %v8728 = vunpack.c.l.b16 %v7936
    %v8729 = vunpack.c.h.b16 %v7936
    %v8730 = vunpack.c.l.b16 %v7937
    %v8731 = vunpack.c.h.b16 %v7937
    %v8732 = vunpack.c.l.b16 %v7938
    %v8733 = vunpack.c.h.b16 %v7938
    %v8734 = vunpack.c.l.b16 %v7939
    %v8735 = vunpack.c.h.b16 %v7939
    %v8736 = vunpack.c.l.b16 %v7940
    %v8737 = vunpack.c.h.b16 %v7940
    %v8738 = vunpack.c.l.b16 %v7941
    %v8739 = vunpack.c.h.b16 %v7941
    %v8740 = vunpack.c.l.b16 %v7942
    %v8741 = vunpack.c.h.b16 %v7942
    %v8742 = vunpack.c.l.b16 %v7943
    %v8743 = vunpack.c.h.b16 %v7943
    %v8744 = vunpack.c.l.b16 %v7944
    %v8745 = vunpack.c.h.b16 %v7944
    %v8746 = vunpack.c.l.b16 %v7945
    %v8747 = vunpack.c.h.b16 %v7945
    %v8748 = vunpack.c.l.b16 %v7946
    %v8749 = vunpack.c.h.b16 %v7946
    %v8750 = vunpack.c.l.b16 %v7947
    %v8751 = vunpack.c.h.b16 %v7947
    %v8752 = vunpack.c.l.b16 %v7948
    %v8753 = vunpack.c.h.b16 %v7948
    %v8754 = vunpack.c.l.b16 %v7949
    %v8755 = vunpack.c.h.b16 %v7949
    %v8756 = vunpack.c.l.b16 %v7950
    %v8757 = vunpack.c.h.b16 %v7950
    %v8758 = vunpack.c.l.b16 %v7951
    %v8759 = vunpack.c.h.b16 %v7951
    %v8760 = vunpack.c.l.b16 %v7952
    %v8761 = vunpack.c.h.b16 %v7952
    %v8762 = vunpack.c.l.b16 %v7953
    %v8763 = vunpack.c.h.b16 %v7953
    %v8764 = vpack.c.b16 %v8260, %v8252
    %v8765 = vpack.c.b16 %v8261, %v8253
    %v8766 = vpack.c.b16 %v8262, %v8254
    %v8767 = vpack.c.b16 %v8263, %v8255
    %v8768 = vpack.c.b16 %v8264, %v8256
    %v8769 = vpack.c.b16 %v8265, %v8257
    %v8770 = vpack.c.b16 %v8266, %v8258
    %v8771 = vpack.c.b16 %v8267, %v8259
    %v8772 = vpack.c.b16 %v8276, %v8268
    %v8773 = vpack.c.b16 %v8277, %v8269
    %v8774 = vpack.c.b16 %v8278, %v8270
    %v8775 = vpack.c.b16 %v8279, %v8271
    %v8776 = vpack.c.b16 %v8280, %v8272
    %v8777 = vpack.c.b16 %v8281, %v8273
    %v8778 = vpack.c.b16 %v8282, %v8274
    %v8779 = vpack.c.b16 %v8283, %v8275
    %v8780 = vpack.c.b16 %v8292, %v8284
    %v8781 = vpack.c.b16 %v8293, %v8285
    %v8782 = vpack.c.b16 %v8294, %v8286
    %v8783 = vpack.c.b16 %v8295, %v8287
    %v8784 = vpack.c.b16 %v8296, %v8288
    %v8785 = vpack.c.b16 %v8297, %v8289
    %v8786 = vpack.c.b16 %v8298, %v8290
    %v8787 = vpack.c.b16 %v8299, %v8291
    %v8788 = vpack.c.b16 %v8308, %v8300
    %v8789 = vpack.c.b16 %v8309, %v8301
    %v8790 = vpack.c.b16 %v8310, %v8302
    %v8791 = vpack.c.b16 %v8311, %v8303
    %v8792 = vpack.c.b16 %v8312, %v8304
    %v8793 = vpack.c.b16 %v8313, %v8305
    %v8794 = vpack.c.b16 %v8314, %v8306
    %v8795 = vpack.c.b16 %v8315, %v8307
    %v8796 = vpack.c.b16 %v8324, %v8316
    %v8797 = vpack.c.b16 %v8325, %v8317
    %v8798 = vpack.c.b16 %v8326, %v8318
    %v8799 = vpack.c.b16 %v8327, %v8319
    %v8800 = vpack.c.b16 %v8328, %v8320
    %v8801 = vpack.c.b16 %v8329, %v8321
    %v8802 = vpack.c.b16 %v8330, %v8322
    %v8803 = vpack.c.b16 %v8331, %v8323
    %v8804 = vpack.c.b16 %v8340, %v8332
    %v8805 = vpack.c.b16 %v8341, %v8333
    %v8806 = vpack.c.b16 %v8342, %v8334
    %v8807 = vpack.c.b16 %v8343, %v8335
    %v8808 = vpack.c.b16 %v8344, %v8336
    %v8809 = vpack.c.b16 %v8345, %v8337
    %v8810 = vpack.c.b16 %v8346, %v8338
    %v8811 = vpack.c.b16 %v8347, %v8339
    %v8812 = vpack.c.b16 %v8356, %v8348
    %v8813 = vpack.c.b16 %v8357, %v8349
    %v8814 = vpack.c.b16 %v8358, %v8350
    %v8815 = vpack.c.b16 %v8359, %v8351
    %v8816 = vpack.c.b16 %v8360, %v8352
    %v8817 = vpack.c.b16 %v8361, %v8353
    %v8818 = vpack.c.b16 %v8362, %v8354
    %v8819 = vpack.c.b16 %v8363, %v8355
    %v8820 = vpack.c.b16 %v8372, %v8364
    %v8821 = vpack.c.b16 %v8373, %v8365
    %v8822 = vpack.c.b16 %v8374, %v8366
    %v8823 = vpack.c.b16 %v8375, %v8367
    %v8824 = vpack.c.b16 %v8376, %v8368
    %v8825 = vpack.c.b16 %v8377, %v8369
    %v8826 = vpack.c.b16 %v8378, %v8370
    %v8827 = vpack.c.b16 %v8379, %v8371
    %v8828 = vpack.c.b16 %v8388, %v8380
    %v8829 = vpack.c.b16 %v8389, %v8381
    %v8830 = vpack.c.b16 %v8390, %v8382
    %v8831 = vpack.c.b16 %v8391, %v8383
    %v8832 = vpack.c.b16 %v8392, %v8384
    %v8833 = vpack.c.b16 %v8393, %v8385
    %v8834 = vpack.c.b16 %v8394, %v8386
    %v8835 = vpack.c.b16 %v8395, %v8387
    %v8836 = vpack.c.b16 %v8404, %v8396
    %v8837 = vpack.c.b16 %v8405, %v8397
    %v8838 = vpack.c.b16 %v8406, %v8398
    %v8839 = vpack.c.b16 %v8407, %v8399
    %v8840 = vpack.c.b16 %v8408, %v8400
    %v8841 = vpack.c.b16 %v8409, %v8401
    %v8842 = vpack.c.b16 %v8410, %v8402
    %v8843 = vpack.c.b16 %v8411, %v8403
    %v8844 = vpack.c.b16 %v8420, %v8412
    %v8845 = vpack.c.b16 %v8421, %v8413
    %v8846 = vpack.c.b16 %v8422, %v8414
    %v8847 = vpack.c.b16 %v8423, %v8415
    %v8848 = vpack.c.b16 %v8424, %v8416
    %v8849 = vpack.c.b16 %v8425, %v8417
    %v8850 = vpack.c.b16 %v8426, %v8418
    %v8851 = vpack.c.b16 %v8427, %v8419
    %v8852 = vpack.c.b16 %v8436, %v8428
    %v8853 = vpack.c.b16 %v8437, %v8429
    %v8854 = vpack.c.b16 %v8438, %v8430
    %v8855 = vpack.c.b16 %v8439, %v8431
    %v8856 = vpack.c.b16 %v8440, %v8432
    %v8857 = vpack.c.b16 %v8441, %v8433
    %v8858 = vpack.c.b16 %v8442, %v8434
    %v8859 = vpack.c.b16 %v8443, %v8435
    %v8860 = vpack.c.b16 %v8452, %v8444
    %v8861 = vpack.c.b16 %v8453, %v8445
    %v8862 = vpack.c.b16 %v8454, %v8446
    %v8863 = vpack.c.b16 %v8455, %v8447
    %v8864 = vpack.c.b16 %v8456, %v8448
    %v8865 = vpack.c.b16 %v8457, %v8449
    %v8866 = vpack.c.b16 %v8458, %v8450
    %v8867 = vpack.c.b16 %v8459, %v8451
    %v8868 = vpack.c.b16 %v8468, %v8460
    %v8869 = vpack.c.b16 %v8469, %v8461
    %v8870 = vpack.c.b16 %v8470, %v8462
    %v8871 = vpack.c.b16 %v8471, %v8463
    %v8872 = vpack.c.b16 %v8472, %v8464
    %v8873 = vpack.c.b16 %v8473, %v8465
    %v8874 = vpack.c.b16 %v8474, %v8466
    %v8875 = vpack.c.b16 %v8475, %v8467
    %v8876 = vpack.c.b16 %v8484, %v8476
    %v8877 = vpack.c.b16 %v8485, %v8477
    %v8878 = vpack.c.b16 %v8486, %v8478
    %v8879 = vpack.c.b16 %v8487, %v8479
    %v8880 = vpack.c.b16 %v8488, %v8480
    %v8881 = vpack.c.b16 %v8489, %v8481
    %v8882 = vpack.c.b16 %v8490, %v8482
    %v8883 = vpack.c.b16 %v8491, %v8483
    %v8884 = vpack.c.b16 %v8500, %v8492
    %v8885 = vpack.c.b16 %v8501, %v8493
    %v8886 = vpack.c.b16 %v8502, %v8494
    %v8887 = vpack.c.b16 %v8503, %v8495
    %v8888 = vpack.c.b16 %v8504, %v8496
    %v8889 = vpack.c.b16 %v8505, %v8497
    %v8890 = vpack.c.b16 %v8506, %v8498
    %v8891 = vpack.c.b16 %v8507, %v8499
    %v8892 = vpack.c.b16 %v8516, %v8508
    %v8893 = vpack.c.b16 %v8517, %v8509
    %v8894 = vpack.c.b16 %v8518, %v8510
    %v8895 = vpack.c.b16 %v8519, %v8511
    %v8896 = vpack.c.b16 %v8520, %v8512
    %v8897 = vpack.c.b16 %v8521, %v8513
    %v8898 = vpack.c.b16 %v8522, %v8514
    %v8899 = vpack.c.b16 %v8523, %v8515
    %v8900 = vpack.c.b16 %v8532, %v8524
    %v8901 = vpack.c.b16 %v8533, %v8525
    %v8902 = vpack.c.b16 %v8534, %v8526
    %v8903 = vpack.c.b16 %v8535, %v8527
    %v8904 = vpack.c.b16 %v8536, %v8528
    %v8905 = vpack.c.b16 %v8537, %v8529
    %v8906 = vpack.c.b16 %v8538, %v8530
    %v8907 = vpack.c.b16 %v8539, %v8531
    %v8908 = vpack.c.b16 %v8548, %v8540
    %v8909 = vpack.c.b16 %v8549, %v8541
    %v8910 = vpack.c.b16 %v8550, %v8542
    %v8911 = vpack.c.b16 %v8551, %v8543
    %v8912 = vpack.c.b16 %v8552, %v8544
    %v8913 = vpack.c.b16 %v8553, %v8545
    %v8914 = vpack.c.b16 %v8554, %v8546
    %v8915 = vpack.c.b16 %v8555, %v8547
    %v8916 = vpack.c.b16 %v8564, %v8556
    %v8917 = vpack.c.b16 %v8565, %v8557
    %v8918 = vpack.c.b16 %v8566, %v8558
    %v8919 = vpack.c.b16 %v8567, %v8559
    %v8920 = vpack.c.b16 %v8568, %v8560
    %v8921 = vpack.c.b16 %v8569, %v8561
    %v8922 = vpack.c.b16 %v8570, %v8562
    %v8923 = vpack.c.b16 %v8571, %v8563
    %v8924 = vpack.c.b16 %v8580, %v8572
    %v8925 = vpack.c.b16 %v8581, %v8573
    %v8926 = vpack.c.b16 %v8582, %v8574
    %v8927 = vpack.c.b16 %v8583, %v8575
    %v8928 = vpack.c.b16 %v8584, %v8576
    %v8929 = vpack.c.b16 %v8585, %v8577
    %v8930 = vpack.c.b16 %v8586, %v8578
    %v8931 = vpack.c.b16 %v8587, %v8579
    %v8932 = vpack.c.b16 %v8596, %v8588
    %v8933 = vpack.c.b16 %v8597, %v8589
    %v8934 = vpack.c.b16 %v8598, %v8590
    %v8935 = vpack.c.b16 %v8599, %v8591
    %v8936 = vpack.c.b16 %v8600, %v8592
    %v8937 = vpack.c.b16 %v8601, %v8593
    %v8938 = vpack.c.b16 %v8602, %v8594
    %v8939 = vpack.c.b16 %v8603, %v8595
    %v8940 = vpack.c.b16 %v8612, %v8604
    %v8941 = vpack.c.b16 %v8613, %v8605
    %v8942 = vpack.c.b16 %v8614, %v8606
    %v8943 = vpack.c.b16 %v8615, %v8607
    %v8944 = vpack.c.b16 %v8616, %v8608
    %v8945 = vpack.c.b16 %v8617, %v8609
    %v8946 = vpack.c.b16 %v8618, %v8610
    %v8947 = vpack.c.b16 %v8619, %v8611
    %v8948 = vpack.c.b16 %v8628, %v8620
    %v8949 = vpack.c.b16 %v8629, %v8621
    %v8950 = vpack.c.b16 %v8630, %v8622
    %v8951 = vpack.c.b16 %v8631, %v8623
    %v8952 = vpack.c.b16 %v8632, %v8624
    %v8953 = vpack.c.b16 %v8633, %v8625
    %v8954 = vpack.c.b16 %v8634, %v8626
    %v8955 = vpack.c.b16 %v8635, %v8627
    %v8956 = vpack.c.b16 %v8644, %v8636
    %v8957 = vpack.c.b16 %v8645, %v8637
    %v8958 = vpack.c.b16 %v8646, %v8638
    %v8959 = vpack.c.b16 %v8647, %v8639
    %v8960 = vpack.c.b16 %v8648, %v8640
    %v8961 = vpack.c.b16 %v8649, %v8641
    %v8962 = vpack.c.b16 %v8650, %v8642
    %v8963 = vpack.c.b16 %v8651, %v8643
    %v8964 = vpack.c.b16 %v8660, %v8652
    %v8965 = vpack.c.b16 %v8661, %v8653
    %v8966 = vpack.c.b16 %v8662, %v8654
    %v8967 = vpack.c.b16 %v8663, %v8655
    %v8968 = vpack.c.b16 %v8664, %v8656
    %v8969 = vpack.c.b16 %v8665, %v8657
    %v8970 = vpack.c.b16 %v8666, %v8658
    %v8971 = vpack.c.b16 %v8667, %v8659
    %v8972 = vpack.c.b16 %v8676, %v8668
    %v8973 = vpack.c.b16 %v8677, %v8669
    %v8974 = vpack.c.b16 %v8678, %v8670
    %v8975 = vpack.c.b16 %v8679, %v8671
    %v8976 = vpack.c.b16 %v8680, %v8672
    %v8977 = vpack.c.b16 %v8681, %v8673
    %v8978 = vpack.c.b16 %v8682, %v8674
    %v8979 = vpack.c.b16 %v8683, %v8675
    %v8980 = vpack.c.b16 %v8692, %v8684
    %v8981 = vpack.c.b16 %v8693, %v8685
    %v8982 = vpack.c.b16 %v8694, %v8686
    %v8983 = vpack.c.b16 %v8695, %v8687
    %v8984 = vpack.c.b16 %v8696, %v8688
    %v8985 = vpack.c.b16 %v8697, %v8689
    %v8986 = vpack.c.b16 %v8698, %v8690
    %v8987 = vpack.c.b16 %v8699, %v8691
    %v8988 = vpack.c.b16 %v8708, %v8700
    %v8989 = vpack.c.b16 %v8709, %v8701
    %v8990 = vpack.c.b16 %v8710, %v8702
    %v8991 = vpack.c.b16 %v8711, %v8703
    %v8992 = vpack.c.b16 %v8712, %v8704
    %v8993 = vpack.c.b16 %v8713, %v8705
    %v8994 = vpack.c.b16 %v8714, %v8706
    %v8995 = vpack.c.b16 %v8715, %v8707
    %v8996 = vpack.c.b16 %v8724, %v8716
    %v8997 = vpack.c.b16 %v8725, %v8717
    %v8998 = vpack.c.b16 %v8726, %v8718
    %v8999 = vpack.c.b16 %v8727, %v8719
    %v9000 = vpack.c.b16 %v8728, %v8720
    %v9001 = vpack.c.b16 %v8729, %v8721
    %v9002 = vpack.c.b16 %v8730, %v8722
    %v9003 = vpack.c.b16 %v8731, %v8723
    %v9004 = vpack.c.b16 %v8740, %v8732
    %v9005 = vpack.c.b16 %v8741, %v8733
    %v9006 = vpack.c.b16 %v8742, %v8734
    %v9007 = vpack.c.b16 %v8743, %v8735
    %v9008 = vpack.c.b16 %v8744, %v8736
    %v9009 = vpack.c.b16 %v8745, %v8737
    %v9010 = vpack.c.b16 %v8746, %v8738
    %v9011 = vpack.c.b16 %v8747, %v8739
    %v9012 = vpack.c.b16 %v8756, %v8748
    %v9013 = vpack.c.b16 %v8757, %v8749
    %v9014 = vpack.c.b16 %v8758, %v8750
    %v9015 = vpack.c.b16 %v8759, %v8751
    %v9016 = vpack.c.b16 %v8760, %v8752
    %v9017 = vpack.c.b16 %v8761, %v8753
    %v9018 = vpack.c.b16 %v8762, %v8754
    %v9019 = vpack.c.b16 %v8763, %v8755
    %9276 = vmatprep.subr.bf16.mxu0 %v8821
    %9277 = vmatpush1.bf16.msra.mxu0 %v8820
    %9278 = vmatprep.subr.bf16.mxu0 %v8813
    %9279 = vmatpush1.bf16.msra.mxu0 %v8812
    %9280 = vmatprep.subr.bf16.mxu0 %v8805
    %9281 = vmatpush1.bf16.msra.mxu0 %v8804
    %9282 = vmatprep.subr.bf16.mxu0 %v8797
    %9283 = vmatpush1.bf16.msra.mxu0 %v8796
    %9284 = vmatprep.subr.bf16.mxu0 %v8789
    %9285 = vmatpush1.bf16.msra.mxu0 %v8788
    %9286 = vmatprep.subr.bf16.mxu0 %v8781
    %9287 = vmatpush1.bf16.msra.mxu0 %v8780
    %9288 = vmatprep.subr.bf16.mxu0 %v8773
    %9289 = vmatpush1.bf16.msra.mxu0 %v8772
    %9290 = vmatprep.subr.bf16.mxu0 %v8765
    %9291 = vmatpush1.bf16.msra.mxu0 %v8764
    %9292 = vmatprep.subr.bf16.mxu0 %v8885
    %9293 = vmatpush2.bf16.msra.mxu0 %v8884
    %9294 = vmatprep.subr.bf16.mxu0 %v8877
    %9295 = vmatpush2.bf16.msra.mxu0 %v8876
    %9296 = vmatprep.subr.bf16.mxu0 %v8869
    %9297 = vmatpush2.bf16.msra.mxu0 %v8868
    %9298 = vmatprep.subr.bf16.mxu0 %v8861
    %9299 = vmatpush2.bf16.msra.mxu0 %v8860
    %9300 = vmatprep.subr.bf16.mxu0 %v8853
    %9301 = vmatpush2.bf16.msra.mxu0 %v8852
    %9302 = vmatprep.subr.bf16.mxu0 %v8845
    %9303 = vmatpush2.bf16.msra.mxu0 %v8844
    %9304 = vmatprep.subr.bf16.mxu0 %v8837
    %9305 = vmatpush2.bf16.msra.mxu0 %v8836
    %9306 = vmatprep.subr.bf16.mxu0 %v8829
    %9307 = vmatpush2.bf16.msra.mxu0 %v8828
    %9308 = vmatprep.mubr.bf16.mxu0 %v7695
    %9309 = vmatmul.mubr.bf16.gmra.mxu0 %v7694
    %v9310 = vpop.f32.mrf.mxu0
    %v9311 = vadd.f32 %v7959, %v9310
    %v9312 = vpop.f32.mrf.mxu0
    %v9313 = vadd.f32 %v7963, %v9312
    %v9314 = vpop.f32.mrf.mxu0
    %v9315 = vpop.f32.mrf.mxu0
    %9316 = vdwg.mxu0
    %9317 = vmatprep.subr.bf16.mxu0 %v8949
    %9318 = vmatpush1.bf16.msra.mxu0 %v8948
    %9319 = vmatprep.subr.bf16.mxu0 %v8941
    %9320 = vmatpush1.bf16.msra.mxu0 %v8940
    %9321 = vmatprep.subr.bf16.mxu0 %v8933
    %9322 = vmatpush1.bf16.msra.mxu0 %v8932
    %9323 = vmatprep.subr.bf16.mxu0 %v8925
    %9324 = vmatpush1.bf16.msra.mxu0 %v8924
    %9325 = vmatprep.subr.bf16.mxu0 %v8917
    %9326 = vmatpush1.bf16.msra.mxu0 %v8916
    %9327 = vmatprep.subr.bf16.mxu0 %v8909
    %9328 = vmatpush1.bf16.msra.mxu0 %v8908
    %9329 = vmatprep.subr.bf16.mxu0 %v8901
    %9330 = vmatpush1.bf16.msra.mxu0 %v8900
    %9331 = vmatprep.subr.bf16.mxu0 %v8893
    %9332 = vmatpush1.bf16.msra.mxu0 %v8892
    %9333 = vmatprep.subr.bf16.mxu0 %v9013
    %9334 = vmatpush2.bf16.msra.mxu0 %v9012
    %9335 = vmatprep.subr.bf16.mxu0 %v9005
    %9336 = vmatpush2.bf16.msra.mxu0 %v9004
    %9337 = vmatprep.subr.bf16.mxu0 %v8997
    %9338 = vmatpush2.bf16.msra.mxu0 %v8996
    %9339 = vmatprep.subr.bf16.mxu0 %v8989
    %9340 = vmatpush2.bf16.msra.mxu0 %v8988
    %9341 = vmatprep.subr.bf16.mxu0 %v8981
    %9342 = vmatpush2.bf16.msra.mxu0 %v8980
    %9343 = vmatprep.subr.bf16.mxu0 %v8973
    %9344 = vmatpush2.bf16.msra.mxu0 %v8972
    %9345 = vmatprep.subr.bf16.mxu0 %v8965
    %9346 = vmatpush2.bf16.msra.mxu0 %v8964
    %9347 = vmatprep.subr.bf16.mxu0 %v8957
    %9348 = vmatpush2.bf16.msra.mxu0 %v8956
    %9349 = vmatprep.mubr.bf16.mxu0 %v7697
    %9350 = vmatmul.mubr.bf16.gmra.mxu0 %v7696
    %v9351 = vpop.f32.mrf.mxu0
    %v9352 = vadd.f32 %v9311, %v9351
    %v9353 = vpop.f32.mrf.mxu0
    %v9354 = vadd.f32 %v9313, %v9353
    %v9355 = vpop.f32.mrf.mxu0
    %v9356 = vpop.f32.mrf.mxu0
    %9357 = vdwg.mxu0
    %9358 = vmatprep.subr.bf16.mxu0 %v8823
    %9359 = vmatpush1.bf16.msra.mxu0 %v8822
    %9360 = vmatprep.subr.bf16.mxu0 %v8815
    %9361 = vmatpush1.bf16.msra.mxu0 %v8814
    %9362 = vmatprep.subr.bf16.mxu0 %v8807
    %9363 = vmatpush1.bf16.msra.mxu0 %v8806
    %9364 = vmatprep.subr.bf16.mxu0 %v8799
    %9365 = vmatpush1.bf16.msra.mxu0 %v8798
    %9366 = vmatprep.subr.bf16.mxu0 %v8791
    %9367 = vmatpush1.bf16.msra.mxu0 %v8790
    %9368 = vmatprep.subr.bf16.mxu0 %v8783
    %9369 = vmatpush1.bf16.msra.mxu0 %v8782
    %9370 = vmatprep.subr.bf16.mxu0 %v8775
    %9371 = vmatpush1.bf16.msra.mxu0 %v8774
    %9372 = vmatprep.subr.bf16.mxu0 %v8767
    %9373 = vmatpush1.bf16.msra.mxu0 %v8766
    %9374 = vmatprep.subr.bf16.mxu0 %v8887
    %9375 = vmatpush2.bf16.msra.mxu0 %v8886
    %9376 = vmatprep.subr.bf16.mxu0 %v8879
    %9377 = vmatpush2.bf16.msra.mxu0 %v8878
    %9378 = vmatprep.subr.bf16.mxu0 %v8871
    %9379 = vmatpush2.bf16.msra.mxu0 %v8870
    %9380 = vmatprep.subr.bf16.mxu0 %v8863
    %9381 = vmatpush2.bf16.msra.mxu0 %v8862
    %9382 = vmatprep.subr.bf16.mxu0 %v8855
    %9383 = vmatpush2.bf16.msra.mxu0 %v8854
    %9384 = vmatprep.subr.bf16.mxu0 %v8847
    %9385 = vmatpush2.bf16.msra.mxu0 %v8846
    %9386 = vmatprep.subr.bf16.mxu0 %v8839
    %9387 = vmatpush2.bf16.msra.mxu0 %v8838
    %9388 = vmatprep.subr.bf16.mxu0 %v8831
    %9389 = vmatpush2.bf16.msra.mxu0 %v8830
    %9390 = vmatprep.mubr.bf16.mxu0 %v7695
    %9391 = vmatmul.mubr.bf16.gmra.mxu0 %v7694
    %v9392 = vpop.f32.mrf.mxu0
    %v9393 = vadd.f32 %v7967, %v9392
    %v9394 = vpop.f32.mrf.mxu0
    %v9395 = vadd.f32 %v7971, %v9394
    %v9396 = vpop.f32.mrf.mxu0
    %v9397 = vpop.f32.mrf.mxu0
    %9398 = vdwg.mxu0
    %9399 = vmatprep.subr.bf16.mxu0 %v8951
    %9400 = vmatpush1.bf16.msra.mxu0 %v8950
    %9401 = vmatprep.subr.bf16.mxu0 %v8943
    %9402 = vmatpush1.bf16.msra.mxu0 %v8942
    %9403 = vmatprep.subr.bf16.mxu0 %v8935
    %9404 = vmatpush1.bf16.msra.mxu0 %v8934
    %9405 = vmatprep.subr.bf16.mxu0 %v8927
    %9406 = vmatpush1.bf16.msra.mxu0 %v8926
    %9407 = vmatprep.subr.bf16.mxu0 %v8919
    %9408 = vmatpush1.bf16.msra.mxu0 %v8918
    %9409 = vmatprep.subr.bf16.mxu0 %v8911
    %9410 = vmatpush1.bf16.msra.mxu0 %v8910
    %9411 = vmatprep.subr.bf16.mxu0 %v8903
    %9412 = vmatpush1.bf16.msra.mxu0 %v8902
    %9413 = vmatprep.subr.bf16.mxu0 %v8895
    %9414 = vmatpush1.bf16.msra.mxu0 %v8894
    %9415 = vmatprep.subr.bf16.mxu0 %v9015
    %9416 = vmatpush2.bf16.msra.mxu0 %v9014
    %9417 = vmatprep.subr.bf16.mxu0 %v9007
    %9418 = vmatpush2.bf16.msra.mxu0 %v9006
    %9419 = vmatprep.subr.bf16.mxu0 %v8999
    %9420 = vmatpush2.bf16.msra.mxu0 %v8998
    %9421 = vmatprep.subr.bf16.mxu0 %v8991
    %9422 = vmatpush2.bf16.msra.mxu0 %v8990
    %9423 = vmatprep.subr.bf16.mxu0 %v8983
    %9424 = vmatpush2.bf16.msra.mxu0 %v8982
    %9425 = vmatprep.subr.bf16.mxu0 %v8975
    %9426 = vmatpush2.bf16.msra.mxu0 %v8974
    %9427 = vmatprep.subr.bf16.mxu0 %v8967
    %9428 = vmatpush2.bf16.msra.mxu0 %v8966
    %9429 = vmatprep.subr.bf16.mxu0 %v8959
    %9430 = vmatpush2.bf16.msra.mxu0 %v8958
    %9431 = vmatprep.mubr.bf16.mxu0 %v7697
    %9432 = vmatmul.mubr.bf16.gmra.mxu0 %v7696
    %v9433 = vpop.f32.mrf.mxu0
    %v9434 = vadd.f32 %v9393, %v9433
    %v9435 = vpop.f32.mrf.mxu0
    %v9436 = vadd.f32 %v9395, %v9435
    %v9437 = vpop.f32.mrf.mxu0
    %v9438 = vpop.f32.mrf.mxu0
    %9439 = vdwg.mxu0
    %9440 = vmatprep.subr.bf16.mxu0 %v8825
    %9441 = vmatpush1.bf16.msra.mxu0 %v8824
    %9442 = vmatprep.subr.bf16.mxu0 %v8817
    %9443 = vmatpush1.bf16.msra.mxu0 %v8816
    %9444 = vmatprep.subr.bf16.mxu0 %v8809
    %9445 = vmatpush1.bf16.msra.mxu0 %v8808
    %9446 = vmatprep.subr.bf16.mxu0 %v8801
    %9447 = vmatpush1.bf16.msra.mxu0 %v8800
    %9448 = vmatprep.subr.bf16.mxu0 %v8793
    %9449 = vmatpush1.bf16.msra.mxu0 %v8792
    %9450 = vmatprep.subr.bf16.mxu0 %v8785
    %9451 = vmatpush1.bf16.msra.mxu0 %v8784
    %9452 = vmatprep.subr.bf16.mxu0 %v8777
    %9453 = vmatpush1.bf16.msra.mxu0 %v8776
    %9454 = vmatprep.subr.bf16.mxu0 %v8769
    %9455 = vmatpush1.bf16.msra.mxu0 %v8768
    %9456 = vmatprep.subr.bf16.mxu0 %v8889
    %9457 = vmatpush2.bf16.msra.mxu0 %v8888
    %9458 = vmatprep.subr.bf16.mxu0 %v8881
    %9459 = vmatpush2.bf16.msra.mxu0 %v8880
    %9460 = vmatprep.subr.bf16.mxu0 %v8873
    %9461 = vmatpush2.bf16.msra.mxu0 %v8872
    %9462 = vmatprep.subr.bf16.mxu0 %v8865
    %9463 = vmatpush2.bf16.msra.mxu0 %v8864
    %9464 = vmatprep.subr.bf16.mxu0 %v8857
    %9465 = vmatpush2.bf16.msra.mxu0 %v8856
    %9466 = vmatprep.subr.bf16.mxu0 %v8849
    %9467 = vmatpush2.bf16.msra.mxu0 %v8848
    %9468 = vmatprep.subr.bf16.mxu0 %v8841
    %9469 = vmatpush2.bf16.msra.mxu0 %v8840
    %9470 = vmatprep.subr.bf16.mxu0 %v8833
    %9471 = vmatpush2.bf16.msra.mxu0 %v8832
    %9472 = vmatprep.mubr.bf16.mxu0 %v7695
    %9473 = vmatmul.mubr.bf16.gmra.mxu0 %v7694
    %v9474 = vpop.f32.mrf.mxu0
    %v9475 = vadd.f32 %v7975, %v9474
    %v9476 = vpop.f32.mrf.mxu0
    %v9477 = vadd.f32 %v7979, %v9476
    %v9478 = vpop.f32.mrf.mxu0
    %v9479 = vpop.f32.mrf.mxu0
    %9480 = vdwg.mxu0
    %9481 = vmatprep.subr.bf16.mxu0 %v8953
    %9482 = vmatpush1.bf16.msra.mxu0 %v8952
    %9483 = vmatprep.subr.bf16.mxu0 %v8945
    %9484 = vmatpush1.bf16.msra.mxu0 %v8944
    %9485 = vmatprep.subr.bf16.mxu0 %v8937
    %9486 = vmatpush1.bf16.msra.mxu0 %v8936
    %9487 = vmatprep.subr.bf16.mxu0 %v8929
    %9488 = vmatpush1.bf16.msra.mxu0 %v8928
    %9489 = vmatprep.subr.bf16.mxu0 %v8921
    %9490 = vmatpush1.bf16.msra.mxu0 %v8920
    %9491 = vmatprep.subr.bf16.mxu0 %v8913
    %9492 = vmatpush1.bf16.msra.mxu0 %v8912
    %9493 = vmatprep.subr.bf16.mxu0 %v8905
    %9494 = vmatpush1.bf16.msra.mxu0 %v8904
    %9495 = vmatprep.subr.bf16.mxu0 %v8897
    %9496 = vmatpush1.bf16.msra.mxu0 %v8896
    %9497 = vmatprep.subr.bf16.mxu0 %v9017
    %9498 = vmatpush2.bf16.msra.mxu0 %v9016
    %9499 = vmatprep.subr.bf16.mxu0 %v9009
    %9500 = vmatpush2.bf16.msra.mxu0 %v9008
    %9501 = vmatprep.subr.bf16.mxu0 %v9001
    %9502 = vmatpush2.bf16.msra.mxu0 %v9000
    %9503 = vmatprep.subr.bf16.mxu0 %v8993
    %9504 = vmatpush2.bf16.msra.mxu0 %v8992
    %9505 = vmatprep.subr.bf16.mxu0 %v8985
    %9506 = vmatpush2.bf16.msra.mxu0 %v8984
    %9507 = vmatprep.subr.bf16.mxu0 %v8977
    %9508 = vmatpush2.bf16.msra.mxu0 %v8976
    %9509 = vmatprep.subr.bf16.mxu0 %v8969
    %9510 = vmatpush2.bf16.msra.mxu0 %v8968
    %9511 = vmatprep.subr.bf16.mxu0 %v8961
    %9512 = vmatpush2.bf16.msra.mxu0 %v8960
    %9513 = vmatprep.mubr.bf16.mxu0 %v7697
    %9514 = vmatmul.mubr.bf16.gmra.mxu0 %v7696
    %v9515 = vpop.f32.mrf.mxu0
    %v9516 = vadd.f32 %v9475, %v9515
    %v9517 = vpop.f32.mrf.mxu0
    %v9518 = vadd.f32 %v9477, %v9517
    %v9519 = vpop.f32.mrf.mxu0
    %v9520 = vpop.f32.mrf.mxu0
    %9521 = vdwg.mxu0
    %9522 = vmatprep.subr.bf16.mxu0 %v8827
    %9523 = vmatpush1.bf16.msra.mxu0 %v8826
    %9524 = vmatprep.subr.bf16.mxu0 %v8819
    %9525 = vmatpush1.bf16.msra.mxu0 %v8818
    %9526 = vmatprep.subr.bf16.mxu0 %v8811
    %9527 = vmatpush1.bf16.msra.mxu0 %v8810
    %9528 = vmatprep.subr.bf16.mxu0 %v8803
    %9529 = vmatpush1.bf16.msra.mxu0 %v8802
    %9530 = vmatprep.subr.bf16.mxu0 %v8795
    %9531 = vmatpush1.bf16.msra.mxu0 %v8794
    %9532 = vmatprep.subr.bf16.mxu0 %v8787
    %9533 = vmatpush1.bf16.msra.mxu0 %v8786
    %9534 = vmatprep.subr.bf16.mxu0 %v8779
    %9535 = vmatpush1.bf16.msra.mxu0 %v8778
    %9536 = vmatprep.subr.bf16.mxu0 %v8771
    %9537 = vmatpush1.bf16.msra.mxu0 %v8770
    %9538 = vmatprep.subr.bf16.mxu0 %v8891
    %9539 = vmatpush2.bf16.msra.mxu0 %v8890
    %9540 = vmatprep.subr.bf16.mxu0 %v8883
    %9541 = vmatpush2.bf16.msra.mxu0 %v8882
    %9542 = vmatprep.subr.bf16.mxu0 %v8875
    %9543 = vmatpush2.bf16.msra.mxu0 %v8874
    %9544 = vmatprep.subr.bf16.mxu0 %v8867
    %9545 = vmatpush2.bf16.msra.mxu0 %v8866
    %9546 = vmatprep.subr.bf16.mxu0 %v8859
    %9547 = vmatpush2.bf16.msra.mxu0 %v8858
    %9548 = vmatprep.subr.bf16.mxu0 %v8851
    %9549 = vmatpush2.bf16.msra.mxu0 %v8850
    %9550 = vmatprep.subr.bf16.mxu0 %v8843
    %9551 = vmatpush2.bf16.msra.mxu0 %v8842
    %9552 = vmatprep.subr.bf16.mxu0 %v8835
    %9553 = vmatpush2.bf16.msra.mxu0 %v8834
    %9554 = vmatprep.mubr.bf16.mxu0 %v7695
    %9555 = vmatmul.mubr.bf16.gmra.mxu0 %v7694
    %v9556 = vpop.f32.mrf.mxu0
    %v9557 = vadd.f32 %v7983, %v9556
    %v9558 = vpop.f32.mrf.mxu0
    %v9559 = vadd.f32 %v7987, %v9558
    %v9560 = vpop.f32.mrf.mxu0
    %v9561 = vpop.f32.mrf.mxu0
    %9562 = vdwg.mxu0
    %9563 = vmatprep.subr.bf16.mxu0 %v8955
    %9564 = vmatpush1.bf16.msra.mxu0 %v8954
    %9565 = vmatprep.subr.bf16.mxu0 %v8947
    %9566 = vmatpush1.bf16.msra.mxu0 %v8946
    %9567 = vmatprep.subr.bf16.mxu0 %v8939
    %9568 = vmatpush1.bf16.msra.mxu0 %v8938
    %9569 = vmatprep.subr.bf16.mxu0 %v8931
    %9570 = vmatpush1.bf16.msra.mxu0 %v8930
    %9571 = vmatprep.subr.bf16.mxu0 %v8923
    %9572 = vmatpush1.bf16.msra.mxu0 %v8922
    %9573 = vmatprep.subr.bf16.mxu0 %v8915
    %9574 = vmatpush1.bf16.msra.mxu0 %v8914
    %9575 = vmatprep.subr.bf16.mxu0 %v8907
    %9576 = vmatpush1.bf16.msra.mxu0 %v8906
    %9577 = vmatprep.subr.bf16.mxu0 %v8899
    %9578 = vmatpush1.bf16.msra.mxu0 %v8898
    %9579 = vmatprep.subr.bf16.mxu0 %v9019
    %9580 = vmatpush2.bf16.msra.mxu0 %v9018
    %9581 = vmatprep.subr.bf16.mxu0 %v9011
    %9582 = vmatpush2.bf16.msra.mxu0 %v9010
    %9583 = vmatprep.subr.bf16.mxu0 %v9003
    %9584 = vmatpush2.bf16.msra.mxu0 %v9002
    %9585 = vmatprep.subr.bf16.mxu0 %v8995
    %9586 = vmatpush2.bf16.msra.mxu0 %v8994
    %9587 = vmatprep.subr.bf16.mxu0 %v8987
    %9588 = vmatpush2.bf16.msra.mxu0 %v8986
    %9589 = vmatprep.subr.bf16.mxu0 %v8979
    %9590 = vmatpush2.bf16.msra.mxu0 %v8978
    %9591 = vmatprep.subr.bf16.mxu0 %v8971
    %9592 = vmatpush2.bf16.msra.mxu0 %v8970
    %9593 = vmatprep.subr.bf16.mxu0 %v8963
    %9594 = vmatpush2.bf16.msra.mxu0 %v8962
    %9595 = vmatprep.mubr.bf16.mxu0 %v7697
    %9596 = vmatmul.mubr.bf16.gmra.mxu0 %v7696
    %v9597 = vpop.f32.mrf.mxu0
    %v9598 = vadd.f32 %v9557, %v9597
    %v9599 = vpop.f32.mrf.mxu0
    %v9600 = vadd.f32 %v9559, %v9599
    %v9601 = vpop.f32.mrf.mxu0
    %v9602 = vpop.f32.mrf.mxu0
    %9603 = vdwg.mxu0
    %v9604 = vmax.f32 %v9352, 0.0
    %v9605 = vmax.f32 %v9354, 0.0
    %v9606 = vmax.f32 %v9434, 0.0
    %v9607 = vmax.f32 %v9436, 0.0
    %v9608 = vmax.f32 %v9516, 0.0
    %v9609 = vmax.f32 %v9518, 0.0
    %v9610 = vmax.f32 %v9598, 0.0
    %v9611 = vmax.f32 %v9600, 0.0
    %v9612 = vmax.f32 %v9604, %v9606
    %v9613 = vmax.f32 %v9605, %v9607
    %v9614 = vmax.f32 %v9608, %v9610
    %v9615 = vmax.f32 %v9609, %v9611
    %v9616 = vmax.f32 %v9612, %v9614
    %v9617 = vmax.f32 %v9613, %v9615
    %v9618 = vld [vmem:[%s5] sm:$0xff]
    %v9619 = vld [vmem:[%s5 + $0x8] sm:$0xff]
    %v9620 = vld [vmem:[%s5 + $0x10] sm:$0xff]
    %v9621 = vld [vmem:[%s5 + $0x18] sm:$0xff]
    %v9622 = vld [vmem:[%s5 + $0x20] sm:$0xff]
    %v9623 = vld [vmem:[%s5 + $0x28] sm:$0xff]
    %v9624 = vld [vmem:[%s5 + $0x30] sm:$0xff]
    %v9625 = vld [vmem:[%s5 + $0x38] sm:$0xff]
    %v9626 = vld [vmem:[%s5 + $0x40] sm:$0xff]
    %v9627 = vld [vmem:[%s5 + $0x48] sm:$0xff]
    %v9628 = vld [vmem:[%s5 + $0x50] sm:$0xff]
    %v9629 = vld [vmem:[%s5 + $0x58] sm:$0xff]
    %v9630 = vld [vmem:[%s5 + $0x60] sm:$0xff]
    %v9631 = vld [vmem:[%s5 + $0x68] sm:$0xff]
    %v9632 = vld [vmem:[%s5 + $0x70] sm:$0xff]
    %v9633 = vld [vmem:[%s5 + $0x78] sm:$0xff]
    %v9634 = vld [vmem:[%s5 + $0x80] sm:$0xff]
    %v9635 = vld [vmem:[%s5 + $0x88] sm:$0xff]
    %v9636 = vld [vmem:[%s5 + $0x90] sm:$0xff]
    %v9637 = vld [vmem:[%s5 + $0x98] sm:$0xff]
    %v9638 = vld [vmem:[%s5 + $0xa0] sm:$0xff]
    %v9639 = vld [vmem:[%s5 + $0xa8] sm:$0xff]
    %v9640 = vld [vmem:[%s5 + $0xb0] sm:$0xff]
    %v9641 = vld [vmem:[%s5 + $0xb8] sm:$0xff]
    %v9642 = vld [vmem:[%s5 + $0xc0] sm:$0xff]
    %v9643 = vld [vmem:[%s5 + $0xc8] sm:$0xff]
    %v9644 = vld [vmem:[%s5 + $0xd0] sm:$0xff]
    %v9645 = vld [vmem:[%s5 + $0xd8] sm:$0xff]
    %v9646 = vld [vmem:[%s5 + $0xe0] sm:$0xff]
    %v9647 = vld [vmem:[%s5 + $0xe8] sm:$0xff]
    %v9648 = vld [vmem:[%s5 + $0xf0] sm:$0xff]
    %v9649 = vld [vmem:[%s5 + $0xf8] sm:$0xff]
    %v9650 = vld [vmem:[#allocation9] sm:$0x1]
    %v9652 = vlaneseq
    %v9653 = vshrl.u32 %v9652, 7
    %v9654 = vsub.s32 0, %v9653
    %v9655 = vrot.slane %v9650, %v9654
    %9657 = vmatprep.subr.mxu0 0.0
    %9658 = vmatpush1.msra.mxu0 %v9633
    %9659 = vmatprep.subr.mxu0 0.0
    %9660 = vmatpush1.msra.mxu0 %v9632
    %9661 = vmatprep.subr.mxu0 0.0
    %9662 = vmatpush1.msra.mxu0 %v9631
    %9663 = vmatprep.subr.mxu0 0.0
    %9664 = vmatpush1.msra.mxu0 %v9630
    %9665 = vmatprep.subr.mxu0 0.0
    %9666 = vmatpush1.msra.mxu0 %v9629
    %9667 = vmatprep.subr.mxu0 0.0
    %9668 = vmatpush1.msra.mxu0 %v9628
    %9669 = vmatprep.subr.mxu0 0.0
    %9670 = vmatpush1.msra.mxu0 %v9627
    %9671 = vmatprep.subr.mxu0 0.0
    %9672 = vmatpush1.msra.mxu0 %v9626
    %9673 = vmatprep.subr.mxu0 0.0
    %9674 = vmatpush1.msra.mxu0 %v9625
    %9675 = vmatprep.subr.mxu0 0.0
    %9676 = vmatpush1.msra.mxu0 %v9624
    %9677 = vmatprep.subr.mxu0 0.0
    %9678 = vmatpush1.msra.mxu0 %v9623
    %9679 = vmatprep.subr.mxu0 0.0
    %9680 = vmatpush1.msra.mxu0 %v9622
    %9681 = vmatprep.subr.mxu0 0.0
    %9682 = vmatpush1.msra.mxu0 %v9621
    %9683 = vmatprep.subr.mxu0 0.0
    %9684 = vmatpush1.msra.mxu0 %v9620
    %9685 = vmatprep.subr.mxu0 0.0
    %9686 = vmatpush1.msra.mxu0 %v9619
    %9687 = vmatprep.subr.mxu0 0.0
    %9688 = vmatpush1.msra.mxu0 %v9618
    %9689 = vmatprep.subr.mxu0 0.0
    %9690 = vmatpush2.msra.mxu0 %v9649
    %9691 = vmatprep.subr.mxu0 0.0
    %9692 = vmatpush2.msra.mxu0 %v9648
    %9693 = vmatprep.subr.mxu0 0.0
    %9694 = vmatpush2.msra.mxu0 %v9647
    %9695 = vmatprep.subr.mxu0 0.0
    %9696 = vmatpush2.msra.mxu0 %v9646
    %9697 = vmatprep.subr.mxu0 0.0
    %9698 = vmatpush2.msra.mxu0 %v9645
    %9699 = vmatprep.subr.mxu0 0.0
    %9700 = vmatpush2.msra.mxu0 %v9644
    %9701 = vmatprep.subr.mxu0 0.0
    %9702 = vmatpush2.msra.mxu0 %v9643
    %9703 = vmatprep.subr.mxu0 0.0
    %9704 = vmatpush2.msra.mxu0 %v9642
    %9705 = vmatprep.subr.mxu0 0.0
    %9706 = vmatpush2.msra.mxu0 %v9641
    %9707 = vmatprep.subr.mxu0 0.0
    %9708 = vmatpush2.msra.mxu0 %v9640
    %9709 = vmatprep.subr.mxu0 0.0
    %9710 = vmatpush2.msra.mxu0 %v9639
    %9711 = vmatprep.subr.mxu0 0.0
    %9712 = vmatpush2.msra.mxu0 %v9638
    %9713 = vmatprep.subr.mxu0 0.0
    %9714 = vmatpush2.msra.mxu0 %v9637
    %9715 = vmatprep.subr.mxu0 0.0
    %9716 = vmatpush2.msra.mxu0 %v9636
    %9717 = vmatprep.subr.mxu0 0.0
    %9718 = vmatpush2.msra.mxu0 %v9635
    %9719 = vmatprep.subr.mxu0 0.0
    %9720 = vmatpush2.msra.mxu0 %v9634
    %9721 = vmatprep.mubr.f32.mxu0 %v9617
    %9722 = vmatmul.mubr.f32.gmra.mxu0 %v9616
    %v9723 = vpop.f32.mrf.mxu0
    %v9724 = vadd.f32 %v9655, %v9723
    %v9725 = vpop.f32.mrf.mxu0
    %9726 = vdwg.mxu0
    %v9727 = vmax.f32 %v9724, 0.0
    %v9728 = vld [vmem:[%s7] sm:$0xff]
    %v9729 = vld [vmem:[%s7 + $0x8] sm:$0xff]
    %v9730 = vld [vmem:[%s7 + $0x10] sm:$0xff]
    %v9731 = vld [vmem:[%s7 + $0x18] sm:$0xff]
    %v9732 = vld [vmem:[%s8] sm:$0x1]
    %v9734 = vlaneseq
    %v9735 = vshrl.u32 %v9734, 7
    %v9736 = vsub.s32 0, %v9735
    %v9737 = vrot.slane %v9732, %v9736
    %vm9739 = vcmask 261120
    %v9741 = vsel %vm9739, %v9727, 0
    %9743 = vmatprep.subr.mxu0 0.0
    %9744 = vmatpush1.msra.mxu0 0.0
    %9745 = vmatprep.subr.mxu0 0.0
    %9746 = vmatpush1.msra.mxu0 0.0
    %9747 = vmatprep.subr.mxu0 0.0
    %9748 = vmatpush1.msra.mxu0 0.0
    %9749 = vmatprep.subr.mxu0 0.0
    %9750 = vmatpush1.msra.mxu0 0.0
    %9751 = vmatprep.subr.mxu0 0.0
    %9752 = vmatpush1.msra.mxu0 0.0
    %9753 = vmatprep.subr.mxu0 0.0
    %9754 = vmatpush1.msra.mxu0 0.0
    %9755 = vmatprep.subr.mxu0 0.0
    %9756 = vmatpush1.msra.mxu0 0.0
    %9757 = vmatprep.subr.mxu0 0.0
    %9758 = vmatpush1.msra.mxu0 0.0
    %9759 = vmatprep.subr.mxu0 0.0
    %9760 = vmatpush1.msra.mxu0 0.0
    %9761 = vmatprep.subr.mxu0 0.0
    %9762 = vmatpush1.msra.mxu0 0.0
    %9763 = vmatprep.subr.mxu0 0.0
    %9764 = vmatpush1.msra.mxu0 0.0
    %9765 = vmatprep.subr.mxu0 0.0
    %9766 = vmatpush1.msra.mxu0 0.0
    %9767 = vmatprep.subr.mxu0 0.0
    %9768 = vmatpush1.msra.mxu0 %v9731
    %9769 = vmatprep.subr.mxu0 0.0
    %9770 = vmatpush1.msra.mxu0 %v9730
    %9771 = vmatprep.subr.mxu0 0.0
    %9772 = vmatpush1.msra.mxu0 %v9729
    %9773 = vmatprep.subr.mxu0 0.0
    %9774 = vmatpush1.msra.mxu0 %v9728
    %9775 = vmatprep.subr.mxu0 0.0
    %9776 = vmatpush2.msra.mxu0 0.0
    %9777 = vmatprep.subr.mxu0 0.0
    %9778 = vmatpush2.msra.mxu0 0.0
    %9779 = vmatprep.subr.mxu0 0.0
    %9780 = vmatpush2.msra.mxu0 0.0
    %9781 = vmatprep.subr.mxu0 0.0
    %9782 = vmatpush2.msra.mxu0 0.0
    %9783 = vmatprep.subr.mxu0 0.0
    %9784 = vmatpush2.msra.mxu0 0.0
    %9785 = vmatprep.subr.mxu0 0.0
    %9786 = vmatpush2.msra.mxu0 0.0
    %9787 = vmatprep.subr.mxu0 0.0
    %9788 = vmatpush2.msra.mxu0 0.0
    %9789 = vmatprep.subr.mxu0 0.0
    %9790 = vmatpush2.msra.mxu0 0.0
    %9791 = vmatprep.subr.mxu0 0.0
    %9792 = vmatpush2.msra.mxu0 0.0
    %9793 = vmatprep.subr.mxu0 0.0
    %9794 = vmatpush2.msra.mxu0 0.0
    %9795 = vmatprep.subr.mxu0 0.0
    %9796 = vmatpush2.msra.mxu0 0.0
    %9797 = vmatprep.subr.mxu0 0.0
    %9798 = vmatpush2.msra.mxu0 0.0
    %9799 = vmatprep.subr.mxu0 0.0
    %9800 = vmatpush2.msra.mxu0 0.0
    %9801 = vmatprep.subr.mxu0 0.0
    %9802 = vmatpush2.msra.mxu0 0.0
    %9803 = vmatprep.subr.mxu0 0.0
    %9804 = vmatpush2.msra.mxu0 0.0
    %9805 = vmatprep.subr.mxu0 0.0
    %9806 = vmatpush2.msra.mxu0 0.0
    %9807 = vmatprep.mubr.f32.mxu0 0.0
    %9808 = vmatmul.mubr.f32.gmra.mxu0 %v9741
    %v9809 = vpop.f32.mrf.mxu0
    %v9810 = vadd.f32 %v9737, %v9809
    %v9811 = vpop.f32.mrf.mxu0
    %9812 = vdwg.mxu0
    %9813 = vst [vmem:[%s9] sm:$0xff] %v9810
    // Predicated region
    $region58: #{convnet_forward.1} parent=1 // pred_check
      _
    $region59: #{convnet_forward.1} parent=1 // pred_check_branch
      %9815 = sbr.rel (0) target = $region61
    $region60: #{convnet_forward.1} parent=1 // pred_region
      _
    $region61: #{convnet_forward.1} parent=1 // pred_fallthru
      _
    // Predicated region
    $region62: #{convnet_forward.1} parent=1 // pred_check
      _
    $region63: #{convnet_forward.1} parent=1 // pred_check_branch
      %9817 = sbr.rel (0) target = $region65
    $region64: #{convnet_forward.1} parent=1 // pred_region
      _
    $region65: #{convnet_forward.1} parent=1 // pred_fallthru
      _
    %9818 = vsyncpa [#allocation3], 1
    %9819 = vsyncpa [#allocation5], 1
    %9820 = vsyncpa [#allocation8], 1

</llo_original>
